<compile_context>
chip_gen: v7x
topology: tpu7x:2x2x1
jax: 0.10.0
libtpu: 0.0.40
codegen_flags: <defaults>
</compile_context>

<pallas_src>
import jax
import jax.numpy as jnp
from jax.experimental import pallas as pl
from jax.experimental.pallas import tpu as pltpu

RGB_W = (0.299, 0.587, 0.114)              # rgb2gray buffer from the module
_PRED_MEAN_RGB = (0.5, 0.5, 0.5)           # pred_mean default
_PRED_STD_RGB = (0.225, 0.225, 0.225)      # pred_std default
# The gray-channel weight fold below requires uniform per-channel mean/std
# (true for the module defaults).
assert len(set(_PRED_MEAN_RGB)) == 1 and len(set(_PRED_STD_RGB)) == 1
PRED_MEAN = float(_PRED_MEAN_RGB[0])
PRED_STD = float(_PRED_STD_RGB[0])
COLOR_WEIGHT = 1.0                         # color_weight default
OUTPUT_WEIGHT = 1.0                        # layers=(), weight_scaler=2 -> {'output': 1.0}


# ----------------------------------------------------------------------------
# Kernel 1: fused rgb2gray + normalisation + 3x3 conv1 + bias + ReLU for both
# branches, plus the color-loss (MSE) partial sum accumulated in SMEM.
# ----------------------------------------------------------------------------
def _conv1_color_kernel(xp_ref, xt_ref, w1_ref, b1_ref,
                        h1p_ref, h1t_ref, mse_ref):
    # xp_ref / xt_ref : (1, 3, H, W) f32 raw NCHW pred / target blocks.
    # w1_ref          : (9, C1) f32 conv1 weights, input-channel axis summed.
    # b1_ref          : (1, C1) f32.
    # h1p_ref/h1t_ref : (1, H, W, C1) bf16 lane-dense conv1 activations.
    # mse_ref         : (1, 1) f32 SMEM accumulator for sum((pred - target)^2).
    @pl.when(pl.program_id(0) == 0)
    def _():
        mse_ref[0, 0] = 0.0

    xp = xp_ref[0]                                           # (3, H, W)
    xt = xt_ref[0]

    # ---- color loss partial: data already in VMEM, no extra HBM pass ------
    d = xp - xt
    mse_ref[0, 0] += jnp.sum(d * d)

    def conv1_branch(x, out_ref):
        _, h, w = x.shape
        c1 = out_ref.shape[-1]
        # rgb2gray (scalar weights) + scalar mean/std normalisation: VPU only.
        gray = x[0] * RGB_W[0] + x[1] * RGB_W[1] + x[2] * RGB_W[2]   # (H, W)
        gn = (gray - PRED_MEAN) * (1.0 / PRED_STD)
        # Zero-pad to (H+2, W+2) in-register (no padded HBM intermediate).
        zr = jnp.zeros((1, w), jnp.float32)
        zc = jnp.zeros((h + 2, 1), jnp.float32)
        gp = jnp.concatenate([zr, gn, zr], axis=0)
        gp = jnp.concatenate([zc, gp, zc], axis=1)                   # (H+2, W+2)
        # Single gray input channel -> 9 broadcast-MACs on the VPU (the MXU
        # would run nearly empty at K<=9 anyway).
        acc = jnp.zeros((h, w, c1), jnp.float32)
        for dy in range(3):
            for dx in range(3):
                tap = gp[dy:dy + h, dx:dx + w]                       # (H, W)
                wk = w1_ref[3 * dy + dx]                             # (C1,)
                acc = acc + tap[:, :, None] * wk[None, None, :]
        acc = acc + b1_ref[0][None, None, :]
        out_ref[0] = jnp.maximum(acc, 0.0).astype(out_ref.dtype)

    conv1_branch(xp, h1p_ref)
    conv1_branch(xt, h1t_ref)


# ----------------------------------------------------------------------------
# Kernel 2: 3x3 conv2 + bias + ReLU (im2col single MXU matmul, bf16 operands,
# f32 accumulation) for both branches, with the L1 partial sum accumulated
# into an SMEM scalar.  Feature maps never leave VMEM.
# ----------------------------------------------------------------------------
def _conv2_l1_kernel(h1p_ref, h1t_ref, w2_ref, b2_ref, l1_ref):
    # h1p_ref/h1t_ref : (1, H, W, C1) bf16.
    # w2_ref          : (9*C1, C2) bf16, im2col weight layout.
    # b2_ref          : (1, C2) f32.
    # l1_ref          : (1, 1) f32 SMEM accumulator for sum|fp - ft|.
    @pl.when(pl.program_id(0) == 0)
    def _():
        l1_ref[0, 0] = 0.0

    def conv2_relu(h):
        hh, ww, c1 = h.shape
        zr = jnp.zeros((1, ww, c1), h.dtype)
        zc = jnp.zeros((hh + 2, 1, c1), h.dtype)
        xpad = jnp.concatenate([zr, h, zr], axis=0)
        xpad = jnp.concatenate([zc, xpad, zc], axis=1)       # (H+2, W+2, C1)
        # im2col -> one lane-dense (H*W, 9*C1) @ (9*C1, C2) bf16 matmul with
        # f32 accumulation instead of 9 small K dots.
        cols = [xpad[dy:dy + hh, dx:dx + ww, :].reshape(hh * ww, c1)
                for dy in range(3) for dx in range(3)]
        patches = jnp.concatenate(cols, axis=1)              # (H*W, 9*C1)
        acc = jnp.dot(patches, w2_ref[...],
                      preferred_element_type=jnp.float32)    # (H*W, C2) f32
        return jnp.maximum(acc + b2_ref[0], 0.0)

    fp = conv2_relu(h1p_ref[0])
    ft = conv2_relu(h1t_ref[0])
    l1_ref[0, 0] += jnp.sum(jnp.abs(fp - ft))


# ----------------------------------------------------------------------------
# Synthetic perception network parameters (stand-in for pretrained vgg19_bn).
# Channel widths are 128 so every conv output / intermediate is lane-dense.
# ----------------------------------------------------------------------------
def make_perception_params(key, c1=128, c2=128):
    k1, k2, k3, k4 = jax.random.split(key, 4)
    return {
        "w1": 0.10 * jax.random.normal(k1, (3, 3, 3, c1), jnp.float32),
        "b1": 0.10 * jax.random.normal(k2, (c1,), jnp.float32),
        "w2": 0.05 * jax.random.normal(k3, (3, 3, c1, c2), jnp.float32),
        "b2": 0.10 * jax.random.normal(k4, (c2,), jnp.float32),
    }


# ----------------------------------------------------------------------------
# Full forward pass of AnimeGANContentLoss.
# ----------------------------------------------------------------------------
@jax.jit
def anime_gan_content_loss(pred_nchw, target_nchw, params):
    pred = pred_nchw.astype(jnp.float32)
    target = jax.lax.stop_gradient(target_nchw.astype(jnp.float32))
    n, c, h, w = pred.shape
    assert c == 3
    c1 = params["w1"].shape[-1]
    c2 = params["w2"].shape[-1]

    # Fold rgb2gray's 3-channel replication (+ uniform normalisation) into
    # conv1: sum the input-channel axis of w1 -> (9, C1).
    w1_eff = params["w1"].sum(axis=2).reshape(9, c1).astype(jnp.float32)
    b1 = params["b1"].reshape(1, c1).astype(jnp.float32)
    # im2col weight layout for conv2; bf16 operands for the MXU (accumulation
    # stays f32 inside the kernel; elementwise math stays f32 for v5e).
    w2_flat = params["w2"].reshape(9 * c1, c2).astype(jnp.bfloat16)
    b2 = params["b2"].reshape(1, c2).astype(jnp.float32)

    h1_pred, h1_tgt, mse_sum = pl.pallas_call(
        _conv1_color_kernel,
        grid=(n,),
        in_specs=[
            pl.BlockSpec((1, 3, h, w), lambda i: (i, 0, 0, 0)),
            pl.BlockSpec((1, 3, h, w), lambda i: (i, 0, 0, 0)),
            pl.BlockSpec((9, c1), lambda i: (0, 0)),
            pl.BlockSpec((1, c1), lambda i: (0, 0)),
        ],
        out_specs=[
            pl.BlockSpec((1, h, w, c1), lambda i: (i, 0, 0, 0)),
            pl.BlockSpec((1, h, w, c1), lambda i: (i, 0, 0, 0)),
            pl.BlockSpec(memory_space=pltpu.MemorySpace.SMEM),
        ],
        out_shape=[
            jax.ShapeDtypeStruct((n, h, w, c1), jnp.bfloat16),
            jax.ShapeDtypeStruct((n, h, w, c1), jnp.bfloat16),
            jax.ShapeDtypeStruct((1, 1), jnp.float32),
        ],
        compiler_params=pltpu.CompilerParams(
            dimension_semantics=("arbitrary",)),
    )(pred, target, w1_eff, b1)

    l1_sum = pl.pallas_call(
        _conv2_l1_kernel,
        grid=(n,),
        in_specs=[
            pl.BlockSpec((1, h, w, c1), lambda i: (i, 0, 0, 0)),
            pl.BlockSpec((1, h, w, c1), lambda i: (i, 0, 0, 0)),
            pl.BlockSpec((9 * c1, c2), lambda i: (0, 0)),
            pl.BlockSpec((1, c2), lambda i: (0, 0)),
        ],
        out_specs=pl.BlockSpec(memory_space=pltpu.MemorySpace.SMEM),
        out_shape=jax.ShapeDtypeStruct((1, 1), jnp.float32),
        compiler_params=pltpu.CompilerParams(
            dimension_semantics=("arbitrary",)),
    )(h1_pred, h1_tgt, w2_flat, b2)

    # layers == {'output': 1.0}, apply_norm=False -> single weighted L1 term.
    content = (l1_sum[0, 0] / float(n * h * w * c2)) * OUTPUT_WEIGHT
    color = mse_sum[0, 0] / float(pred_nchw.size)
    return content + color * COLOR_WEIGHT


if __name__ == "__main__":
    key = jax.random.PRNGKey(0)
    kp, kt, kw = jax.random.split(key, 3)
    N, C, H, W = 2, 3, 16, 16
    pred = jax.random.uniform(kp, (N, C, H, W), jnp.float32)
    target = jax.random.uniform(kt, (N, C, H, W), jnp.float32)
    params = make_perception_params(kw)

    out = anime_gan_content_loss(pred, target, params)
    out = jax.block_until_ready(out)
    assert out.shape == () and bool(jnp.isfinite(out))
    print("KERNEL_OK")
</pallas_src>

<mosaic_0001>
module attributes {stable_mosaic.version = 11 : i64} {
  func.func @_conv1_color_kernel(%arg0: i32, %arg1: memref<1x3x16x16xf32, #tpu.memory_space<vmem>>, %arg2: memref<1x3x16x16xf32, #tpu.memory_space<vmem>>, %arg3: memref<9x128xf32, #tpu.memory_space<vmem>>, %arg4: memref<1x128xf32, #tpu.memory_space<vmem>>, %arg5: memref<1x16x16x128xbf16, #tpu.memory_space<vmem>>, %arg6: memref<1x16x16x128xbf16, #tpu.memory_space<vmem>>, %arg7: memref<1x1xf32, #tpu.memory_space<smem>>) attributes {dimension_semantics = [#tpu.dimension_semantics<arbitrary>], iteration_bounds = array<i64: 2>, scalar_prefetch = 0 : i64, scratch_operands = 0 : i64, tpu.core_type = #tpu.core_type<tc>, window_params = [{transform_indices = @transform_0, window_bounds = array<i64: 1, 3, 16, 16>}, {transform_indices = @transform_1, window_bounds = array<i64: 1, 3, 16, 16>}, {pipeline_mode = #tpu.pipeline_mode<synchronous>, transform_indices = @transform_2, window_bounds = array<i64: 9, 128>}, {pipeline_mode = #tpu.pipeline_mode<synchronous>, transform_indices = @transform_3, window_bounds = array<i64: 1, 128>}, {transform_indices = @transform_4, window_bounds = array<i64: 1, 16, 16, 128>}, {transform_indices = @transform_5, window_bounds = array<i64: 1, 16, 16, 128>}, {transform_indices = @transform_6, window_bounds = array<i64: 1, 1>}]} {
    %c0_i32 = arith.constant 0 : i32
    %0 = arith.cmpi eq, %arg0, %c0_i32 : i32
    %1 = arith.extui %0 : i1 to i32
    %c0_i32_0 = arith.constant 0 : i32
    %2 = arith.cmpi ne, %1, %c0_i32_0 : i32
    scf.if %2 {
      %cst_70 = arith.constant 0.000000e+00 : f32
      %c0_71 = arith.constant 0 : index
      %c0_72 = arith.constant 0 : index
      %246 = memref.load %arg7[%c0_71, %c0_72] : memref<1x1xf32, #tpu.memory_space<smem>>
      memref.store %cst_70, %arg7[%c0_71, %c0_72] : memref<1x1xf32, #tpu.memory_space<smem>>
    } else {
    }
    %c0 = arith.constant 0 : index
    %c0_1 = arith.constant 0 : index
    %c0_2 = arith.constant 0 : index
    %c0_3 = arith.constant 0 : index
    %3 = vector.load %arg1[%c0, %c0_1, %c0_2, %c0_3] : memref<1x3x16x16xf32, #tpu.memory_space<vmem>>, vector<1x3x16x16xf32>
    %4 = vector.shape_cast %3 : vector<1x3x16x16xf32> to vector<3x16x16xf32>
    %c0_4 = arith.constant 0 : index
    %c0_5 = arith.constant 0 : index
    %c0_6 = arith.constant 0 : index
    %c0_7 = arith.constant 0 : index
    %5 = vector.load %arg2[%c0_4, %c0_5, %c0_6, %c0_7] : memref<1x3x16x16xf32, #tpu.memory_space<vmem>>, vector<1x3x16x16xf32>
    %6 = vector.shape_cast %5 : vector<1x3x16x16xf32> to vector<3x16x16xf32>
    %7 = arith.subf %4, %6 : vector<3x16x16xf32>
    %c0_8 = arith.constant 0 : index
    %c0_9 = arith.constant 0 : index
    %8 = memref.load %arg7[%c0_8, %c0_9] : memref<1x1xf32, #tpu.memory_space<smem>>
    %9 = arith.mulf %7, %7 : vector<3x16x16xf32>
    %10 = vector.shape_cast %9 : vector<3x16x16xf32> to vector<1x3x16x16xf32>
    %cst = arith.constant dense<0.000000e+00> : vector<1xf32>
    %11 = vector.multi_reduction <add>, %10, %cst [1, 2, 3] : vector<1x3x16x16xf32> to vector<1xf32>
    %12 = vector.shape_cast %11 : vector<1xf32> to vector<1x1x1x1xf32>
    %13 = vector.extract %12[0, 0, 0, 0] : f32 from vector<1x1x1x1xf32>
    %14 = arith.addf %8, %13 : f32
    %c0_10 = arith.constant 0 : index
    %c0_11 = arith.constant 0 : index
    %15 = memref.load %arg7[%c0_10, %c0_11] : memref<1x1xf32, #tpu.memory_space<smem>>
    memref.store %14, %arg7[%c0_10, %c0_11] : memref<1x1xf32, #tpu.memory_space<smem>>
    %16 = vector.extract_strided_slice %4 {offsets = [0, 0, 0], sizes = [1, 16, 16], strides = [1, 1, 1]} : vector<3x16x16xf32> to vector<1x16x16xf32>
    %17 = vector.shape_cast %16 : vector<1x16x16xf32> to vector<16x16xf32>
    %cst_12 = arith.constant 2.990000e-01 : f32
    %18 = vector.broadcast %cst_12 : f32 to vector<16x16xf32>
    %19 = arith.mulf %17, %18 : vector<16x16xf32>
    %20 = vector.extract_strided_slice %4 {offsets = [1, 0, 0], sizes = [1, 16, 16], strides = [1, 1, 1]} : vector<3x16x16xf32> to vector<1x16x16xf32>
    %21 = vector.shape_cast %20 : vector<1x16x16xf32> to vector<16x16xf32>
    %cst_13 = arith.constant 5.870000e-01 : f32
    %22 = vector.broadcast %cst_13 : f32 to vector<16x16xf32>
    %23 = arith.mulf %21, %22 : vector<16x16xf32>
    %24 = arith.addf %19, %23 : vector<16x16xf32>
    %25 = vector.extract_strided_slice %4 {offsets = [2, 0, 0], sizes = [1, 16, 16], strides = [1, 1, 1]} : vector<3x16x16xf32> to vector<1x16x16xf32>
    %26 = vector.shape_cast %25 : vector<1x16x16xf32> to vector<16x16xf32>
    %cst_14 = arith.constant 1.140000e-01 : f32
    %27 = vector.broadcast %cst_14 : f32 to vector<16x16xf32>
    %28 = arith.mulf %26, %27 : vector<16x16xf32>
    %29 = arith.addf %24, %28 : vector<16x16xf32>
    %cst_15 = arith.constant 5.000000e-01 : f32
    %30 = vector.broadcast %cst_15 : f32 to vector<16x16xf32>
    %31 = arith.subf %29, %30 : vector<16x16xf32>
    %cst_16 = arith.constant 4.44444466 : f32
    %32 = vector.broadcast %cst_16 : f32 to vector<16x16xf32>
    %33 = arith.mulf %31, %32 : vector<16x16xf32>
    %cst_17 = arith.constant 0.000000e+00 : f32
    %34 = vector.broadcast %cst_17 : f32 to vector<1x16xf32>
    %cst_18 = arith.constant 0.000000e+00 : f32
    %35 = vector.broadcast %cst_18 : f32 to vector<18x1xf32>
    %36 = tpu.concatenate %34, %33, %34 in 0 : vector<1x16xf32>, vector<16x16xf32>, vector<1x16xf32> -> vector<18x16xf32>
    %37 = tpu.concatenate %35, %36, %35 in 1 : vector<18x1xf32>, vector<18x16xf32>, vector<18x1xf32> -> vector<18x18xf32>
    %cst_19 = arith.constant 0.000000e+00 : f32
    %38 = vector.broadcast %cst_19 : f32 to vector<16x16x128xf32>
    %39 = vector.extract_strided_slice %37 {offsets = [0, 0], sizes = [16, 16], strides = [1, 1]} : vector<18x18xf32> to vector<16x16xf32>
    %c0_20 = arith.constant 0 : index
    %c0_21 = arith.constant 0 : index
    %40 = vector.load %arg3[%c0_20, %c0_21] : memref<9x128xf32, #tpu.memory_space<vmem>>, vector<1x128xf32>
    %41 = vector.shape_cast %40 : vector<1x128xf32> to vector<128xf32>
    %42 = vector.shape_cast %39 : vector<16x16xf32> to vector<16x16x1xf32>
    %43 = vector.shape_cast %41 : vector<128xf32> to vector<1x1x128xf32>
    %44 = vector.broadcast %42 : vector<16x16x1xf32> to vector<16x16x128xf32>
    %45 = vector.broadcast %43 : vector<1x1x128xf32> to vector<16x16x128xf32>
    %46 = arith.mulf %44, %45 : vector<16x16x128xf32>
    %47 = arith.addf %38, %46 : vector<16x16x128xf32>
    %48 = vector.extract_strided_slice %37 {offsets = [0, 1], sizes = [16, 16], strides = [1, 1]} : vector<18x18xf32> to vector<16x16xf32>
    %c1 = arith.constant 1 : index
    %c0_22 = arith.constant 0 : index
    %49 = vector.load %arg3[%c1, %c0_22] : memref<9x128xf32, #tpu.memory_space<vmem>>, vector<1x128xf32>
    %50 = vector.shape_cast %49 : vector<1x128xf32> to vector<128xf32>
    %51 = vector.shape_cast %48 : vector<16x16xf32> to vector<16x16x1xf32>
    %52 = vector.shape_cast %50 : vector<128xf32> to vector<1x1x128xf32>
    %53 = vector.broadcast %51 : vector<16x16x1xf32> to vector<16x16x128xf32>
    %54 = vector.broadcast %52 : vector<1x1x128xf32> to vector<16x16x128xf32>
    %55 = arith.mulf %53, %54 : vector<16x16x128xf32>
    %56 = arith.addf %47, %55 : vector<16x16x128xf32>
    %57 = vector.extract_strided_slice %37 {offsets = [0, 2], sizes = [16, 16], strides = [1, 1]} : vector<18x18xf32> to vector<16x16xf32>
    %c2 = arith.constant 2 : index
    %c0_23 = arith.constant 0 : index
    %58 = vector.load %arg3[%c2, %c0_23] : memref<9x128xf32, #tpu.memory_space<vmem>>, vector<1x128xf32>
    %59 = vector.shape_cast %58 : vector<1x128xf32> to vector<128xf32>
    %60 = vector.shape_cast %57 : vector<16x16xf32> to vector<16x16x1xf32>
    %61 = vector.shape_cast %59 : vector<128xf32> to vector<1x1x128xf32>
    %62 = vector.broadcast %60 : vector<16x16x1xf32> to vector<16x16x128xf32>
    %63 = vector.broadcast %61 : vector<1x1x128xf32> to vector<16x16x128xf32>
    %64 = arith.mulf %62, %63 : vector<16x16x128xf32>
    %65 = arith.addf %56, %64 : vector<16x16x128xf32>
    %66 = vector.extract_strided_slice %37 {offsets = [1, 0], sizes = [16, 16], strides = [1, 1]} : vector<18x18xf32> to vector<16x16xf32>
    %c3 = arith.constant 3 : index
    %c0_24 = arith.constant 0 : index
    %67 = vector.load %arg3[%c3, %c0_24] : memref<9x128xf32, #tpu.memory_space<vmem>>, vector<1x128xf32>
    %68 = vector.shape_cast %67 : vector<1x128xf32> to vector<128xf32>
    %69 = vector.shape_cast %66 : vector<16x16xf32> to vector<16x16x1xf32>
    %70 = vector.shape_cast %68 : vector<128xf32> to vector<1x1x128xf32>
    %71 = vector.broadcast %69 : vector<16x16x1xf32> to vector<16x16x128xf32>
    %72 = vector.broadcast %70 : vector<1x1x128xf32> to vector<16x16x128xf32>
    %73 = arith.mulf %71, %72 : vector<16x16x128xf32>
    %74 = arith.addf %65, %73 : vector<16x16x128xf32>
    %75 = vector.extract_strided_slice %37 {offsets = [1, 1], sizes = [16, 16], strides = [1, 1]} : vector<18x18xf32> to vector<16x16xf32>
    %c4 = arith.constant 4 : index
    %c0_25 = arith.constant 0 : index
    %76 = vector.load %arg3[%c4, %c0_25] : memref<9x128xf32, #tpu.memory_space<vmem>>, vector<1x128xf32>
    %77 = vector.shape_cast %76 : vector<1x128xf32> to vector<128xf32>
    %78 = vector.shape_cast %75 : vector<16x16xf32> to vector<16x16x1xf32>
    %79 = vector.shape_cast %77 : vector<128xf32> to vector<1x1x128xf32>
    %80 = vector.broadcast %78 : vector<16x16x1xf32> to vector<16x16x128xf32>
    %81 = vector.broadcast %79 : vector<1x1x128xf32> to vector<16x16x128xf32>
    %82 = arith.mulf %80, %81 : vector<16x16x128xf32>
    %83 = arith.addf %74, %82 : vector<16x16x128xf32>
    %84 = vector.extract_strided_slice %37 {offsets = [1, 2], sizes = [16, 16], strides = [1, 1]} : vector<18x18xf32> to vector<16x16xf32>
    %c5 = arith.constant 5 : index
    %c0_26 = arith.constant 0 : index
    %85 = vector.load %arg3[%c5, %c0_26] : memref<9x128xf32, #tpu.memory_space<vmem>>, vector<1x128xf32>
    %86 = vector.shape_cast %85 : vector<1x128xf32> to vector<128xf32>
    %87 = vector.shape_cast %84 : vector<16x16xf32> to vector<16x16x1xf32>
    %88 = vector.shape_cast %86 : vector<128xf32> to vector<1x1x128xf32>
    %89 = vector.broadcast %87 : vector<16x16x1xf32> to vector<16x16x128xf32>
    %90 = vector.broadcast %88 : vector<1x1x128xf32> to vector<16x16x128xf32>
    %91 = arith.mulf %89, %90 : vector<16x16x128xf32>
    %92 = arith.addf %83, %91 : vector<16x16x128xf32>
    %93 = vector.extract_strided_slice %37 {offsets = [2, 0], sizes = [16, 16], strides = [1, 1]} : vector<18x18xf32> to vector<16x16xf32>
    %c6 = arith.constant 6 : index
    %c0_27 = arith.constant 0 : index
    %94 = vector.load %arg3[%c6, %c0_27] : memref<9x128xf32, #tpu.memory_space<vmem>>, vector<1x128xf32>
    %95 = vector.shape_cast %94 : vector<1x128xf32> to vector<128xf32>
    %96 = vector.shape_cast %93 : vector<16x16xf32> to vector<16x16x1xf32>
    %97 = vector.shape_cast %95 : vector<128xf32> to vector<1x1x128xf32>
    %98 = vector.broadcast %96 : vector<16x16x1xf32> to vector<16x16x128xf32>
    %99 = vector.broadcast %97 : vector<1x1x128xf32> to vector<16x16x128xf32>
    %100 = arith.mulf %98, %99 : vector<16x16x128xf32>
    %101 = arith.addf %92, %100 : vector<16x16x128xf32>
    %102 = vector.extract_strided_slice %37 {offsets = [2, 1], sizes = [16, 16], strides = [1, 1]} : vector<18x18xf32> to vector<16x16xf32>
    %c7 = arith.constant 7 : index
    %c0_28 = arith.constant 0 : index
    %103 = vector.load %arg3[%c7, %c0_28] : memref<9x128xf32, #tpu.memory_space<vmem>>, vector<1x128xf32>
    %104 = vector.shape_cast %103 : vector<1x128xf32> to vector<128xf32>
    %105 = vector.shape_cast %102 : vector<16x16xf32> to vector<16x16x1xf32>
    %106 = vector.shape_cast %104 : vector<128xf32> to vector<1x1x128xf32>
    %107 = vector.broadcast %105 : vector<16x16x1xf32> to vector<16x16x128xf32>
    %108 = vector.broadcast %106 : vector<1x1x128xf32> to vector<16x16x128xf32>
    %109 = arith.mulf %107, %108 : vector<16x16x128xf32>
    %110 = arith.addf %101, %109 : vector<16x16x128xf32>
    %111 = vector.extract_strided_slice %37 {offsets = [2, 2], sizes = [16, 16], strides = [1, 1]} : vector<18x18xf32> to vector<16x16xf32>
    %c8 = arith.constant 8 : index
    %c0_29 = arith.constant 0 : index
    %112 = vector.load %arg3[%c8, %c0_29] : memref<9x128xf32, #tpu.memory_space<vmem>>, vector<1x128xf32>
    %113 = vector.shape_cast %112 : vector<1x128xf32> to vector<128xf32>
    %114 = vector.shape_cast %111 : vector<16x16xf32> to vector<16x16x1xf32>
    %115 = vector.shape_cast %113 : vector<128xf32> to vector<1x1x128xf32>
    %116 = vector.broadcast %114 : vector<16x16x1xf32> to vector<16x16x128xf32>
    %117 = vector.broadcast %115 : vector<1x1x128xf32> to vector<16x16x128xf32>
    %118 = arith.mulf %116, %117 : vector<16x16x128xf32>
    %119 = arith.addf %110, %118 : vector<16x16x128xf32>
    %c0_30 = arith.constant 0 : index
    %c0_31 = arith.constant 0 : index
    %120 = vector.load %arg4[%c0_30, %c0_31] : memref<1x128xf32, #tpu.memory_space<vmem>>, vector<1x128xf32>
    %121 = vector.shape_cast %120 : vector<1x128xf32> to vector<128xf32>
    %122 = vector.shape_cast %121 : vector<128xf32> to vector<1x1x128xf32>
    %123 = vector.broadcast %122 : vector<1x1x128xf32> to vector<16x16x128xf32>
    %124 = arith.addf %119, %123 : vector<16x16x128xf32>
    %cst_32 = arith.constant 0.000000e+00 : f32
    %125 = vector.broadcast %cst_32 : f32 to vector<16x16x128xf32>
    %126 = arith.maximumf %124, %125 : vector<16x16x128xf32>
    %127 = arith.truncf %126 : vector<16x16x128xf32> to vector<16x16x128xbf16>
    %c0_33 = arith.constant 0 : index
    %c0_34 = arith.constant 0 : index
    %c0_35 = arith.constant 0 : index
    %c0_36 = arith.constant 0 : index
    %128 = vector.load %arg5[%c0_33, %c0_34, %c0_35, %c0_36] : memref<1x16x16x128xbf16, #tpu.memory_space<vmem>>, vector<1x16x16x128xbf16>
    %129 = vector.shape_cast %128 : vector<1x16x16x128xbf16> to vector<16x16x128xbf16>
    %130 = vector.shape_cast %127 : vector<16x16x128xbf16> to vector<1x16x16x128xbf16>
    tpu.vector_store %arg5[%c0_33, %c0_34, %c0_35, %c0_36], %130 {strides = array<i32>} : memref<1x16x16x128xbf16, #tpu.memory_space<vmem>>, vector<1x16x16x128xbf16>,
    %131 = vector.extract_strided_slice %6 {offsets = [0, 0, 0], sizes = [1, 16, 16], strides = [1, 1, 1]} : vector<3x16x16xf32> to vector<1x16x16xf32>
    %132 = vector.shape_cast %131 : vector<1x16x16xf32> to vector<16x16xf32>
    %cst_37 = arith.constant 2.990000e-01 : f32
    %133 = vector.broadcast %cst_37 : f32 to vector<16x16xf32>
    %134 = arith.mulf %132, %133 : vector<16x16xf32>
    %135 = vector.extract_strided_slice %6 {offsets = [1, 0, 0], sizes = [1, 16, 16], strides = [1, 1, 1]} : vector<3x16x16xf32> to vector<1x16x16xf32>
    %136 = vector.shape_cast %135 : vector<1x16x16xf32> to vector<16x16xf32>
    %cst_38 = arith.constant 5.870000e-01 : f32
    %137 = vector.broadcast %cst_38 : f32 to vector<16x16xf32>
    %138 = arith.mulf %136, %137 : vector<16x16xf32>
    %139 = arith.addf %134, %138 : vector<16x16xf32>
    %140 = vector.extract_strided_slice %6 {offsets = [2, 0, 0], sizes = [1, 16, 16], strides = [1, 1, 1]} : vector<3x16x16xf32> to vector<1x16x16xf32>
    %141 = vector.shape_cast %140 : vector<1x16x16xf32> to vector<16x16xf32>
    %cst_39 = arith.constant 1.140000e-01 : f32
    %142 = vector.broadcast %cst_39 : f32 to vector<16x16xf32>
    %143 = arith.mulf %141, %142 : vector<16x16xf32>
    %144 = arith.addf %139, %143 : vector<16x16xf32>
    %cst_40 = arith.constant 5.000000e-01 : f32
    %145 = vector.broadcast %cst_40 : f32 to vector<16x16xf32>
    %146 = arith.subf %144, %145 : vector<16x16xf32>
    %cst_41 = arith.constant 4.44444466 : f32
    %147 = vector.broadcast %cst_41 : f32 to vector<16x16xf32>
    %148 = arith.mulf %146, %147 : vector<16x16xf32>
    %cst_42 = arith.constant 0.000000e+00 : f32
    %149 = vector.broadcast %cst_42 : f32 to vector<1x16xf32>
    %cst_43 = arith.constant 0.000000e+00 : f32
    %150 = vector.broadcast %cst_43 : f32 to vector<18x1xf32>
    %151 = tpu.concatenate %149, %148, %149 in 0 : vector<1x16xf32>, vector<16x16xf32>, vector<1x16xf32> -> vector<18x16xf32>
    %152 = tpu.concatenate %150, %151, %150 in 1 : vector<18x1xf32>, vector<18x16xf32>, vector<18x1xf32> -> vector<18x18xf32>
    %cst_44 = arith.constant 0.000000e+00 : f32
    %153 = vector.broadcast %cst_44 : f32 to vector<16x16x128xf32>
    %154 = vector.extract_strided_slice %152 {offsets = [0, 0], sizes = [16, 16], strides = [1, 1]} : vector<18x18xf32> to vector<16x16xf32>
    %c0_45 = arith.constant 0 : index
    %c0_46 = arith.constant 0 : index
    %155 = vector.load %arg3[%c0_45, %c0_46] : memref<9x128xf32, #tpu.memory_space<vmem>>, vector<1x128xf32>
    %156 = vector.shape_cast %155 : vector<1x128xf32> to vector<128xf32>
    %157 = vector.shape_cast %154 : vector<16x16xf32> to vector<16x16x1xf32>
    %158 = vector.shape_cast %156 : vector<128xf32> to vector<1x1x128xf32>
    %159 = vector.broadcast %157 : vector<16x16x1xf32> to vector<16x16x128xf32>
    %160 = vector.broadcast %158 : vector<1x1x128xf32> to vector<16x16x128xf32>
    %161 = arith.mulf %159, %160 : vector<16x16x128xf32>
    %162 = arith.addf %153, %161 : vector<16x16x128xf32>
    %163 = vector.extract_strided_slice %152 {offsets = [0, 1], sizes = [16, 16], strides = [1, 1]} : vector<18x18xf32> to vector<16x16xf32>
    %c1_47 = arith.constant 1 : index
    %c0_48 = arith.constant 0 : index
    %164 = vector.load %arg3[%c1_47, %c0_48] : memref<9x128xf32, #tpu.memory_space<vmem>>, vector<1x128xf32>
    %165 = vector.shape_cast %164 : vector<1x128xf32> to vector<128xf32>
    %166 = vector.shape_cast %163 : vector<16x16xf32> to vector<16x16x1xf32>
    %167 = vector.shape_cast %165 : vector<128xf32> to vector<1x1x128xf32>
    %168 = vector.broadcast %166 : vector<16x16x1xf32> to vector<16x16x128xf32>
    %169 = vector.broadcast %167 : vector<1x1x128xf32> to vector<16x16x128xf32>
    %170 = arith.mulf %168, %169 : vector<16x16x128xf32>
    %171 = arith.addf %162, %170 : vector<16x16x128xf32>
    %172 = vector.extract_strided_slice %152 {offsets = [0, 2], sizes = [16, 16], strides = [1, 1]} : vector<18x18xf32> to vector<16x16xf32>
    %c2_49 = arith.constant 2 : index
    %c0_50 = arith.constant 0 : index
    %173 = vector.load %arg3[%c2_49, %c0_50] : memref<9x128xf32, #tpu.memory_space<vmem>>, vector<1x128xf32>
    %174 = vector.shape_cast %173 : vector<1x128xf32> to vector<128xf32>
    %175 = vector.shape_cast %172 : vector<16x16xf32> to vector<16x16x1xf32>
    %176 = vector.shape_cast %174 : vector<128xf32> to vector<1x1x128xf32>
    %177 = vector.broadcast %175 : vector<16x16x1xf32> to vector<16x16x128xf32>
    %178 = vector.broadcast %176 : vector<1x1x128xf32> to vector<16x16x128xf32>
    %179 = arith.mulf %177, %178 : vector<16x16x128xf32>
    %180 = arith.addf %171, %179 : vector<16x16x128xf32>
    %181 = vector.extract_strided_slice %152 {offsets = [1, 0], sizes = [16, 16], strides = [1, 1]} : vector<18x18xf32> to vector<16x16xf32>
    %c3_51 = arith.constant 3 : index
    %c0_52 = arith.constant 0 : index
    %182 = vector.load %arg3[%c3_51, %c0_52] : memref<9x128xf32, #tpu.memory_space<vmem>>, vector<1x128xf32>
    %183 = vector.shape_cast %182 : vector<1x128xf32> to vector<128xf32>
    %184 = vector.shape_cast %181 : vector<16x16xf32> to vector<16x16x1xf32>
    %185 = vector.shape_cast %183 : vector<128xf32> to vector<1x1x128xf32>
    %186 = vector.broadcast %184 : vector<16x16x1xf32> to vector<16x16x128xf32>
    %187 = vector.broadcast %185 : vector<1x1x128xf32> to vector<16x16x128xf32>
    %188 = arith.mulf %186, %187 : vector<16x16x128xf32>
    %189 = arith.addf %180, %188 : vector<16x16x128xf32>
    %190 = vector.extract_strided_slice %152 {offsets = [1, 1], sizes = [16, 16], strides = [1, 1]} : vector<18x18xf32> to vector<16x16xf32>
    %c4_53 = arith.constant 4 : index
    %c0_54 = arith.constant 0 : index
    %191 = vector.load %arg3[%c4_53, %c0_54] : memref<9x128xf32, #tpu.memory_space<vmem>>, vector<1x128xf32>
    %192 = vector.shape_cast %191 : vector<1x128xf32> to vector<128xf32>
    %193 = vector.shape_cast %190 : vector<16x16xf32> to vector<16x16x1xf32>
    %194 = vector.shape_cast %192 : vector<128xf32> to vector<1x1x128xf32>
    %195 = vector.broadcast %193 : vector<16x16x1xf32> to vector<16x16x128xf32>
    %196 = vector.broadcast %194 : vector<1x1x128xf32> to vector<16x16x128xf32>
    %197 = arith.mulf %195, %196 : vector<16x16x128xf32>
    %198 = arith.addf %189, %197 : vector<16x16x128xf32>
    %199 = vector.extract_strided_slice %152 {offsets = [1, 2], sizes = [16, 16], strides = [1, 1]} : vector<18x18xf32> to vector<16x16xf32>
    %c5_55 = arith.constant 5 : index
    %c0_56 = arith.constant 0 : index
    %200 = vector.load %arg3[%c5_55, %c0_56] : memref<9x128xf32, #tpu.memory_space<vmem>>, vector<1x128xf32>
    %201 = vector.shape_cast %200 : vector<1x128xf32> to vector<128xf32>
    %202 = vector.shape_cast %199 : vector<16x16xf32> to vector<16x16x1xf32>
    %203 = vector.shape_cast %201 : vector<128xf32> to vector<1x1x128xf32>
    %204 = vector.broadcast %202 : vector<16x16x1xf32> to vector<16x16x128xf32>
    %205 = vector.broadcast %203 : vector<1x1x128xf32> to vector<16x16x128xf32>
    %206 = arith.mulf %204, %205 : vector<16x16x128xf32>
    %207 = arith.addf %198, %206 : vector<16x16x128xf32>
    %208 = vector.extract_strided_slice %152 {offsets = [2, 0], sizes = [16, 16], strides = [1, 1]} : vector<18x18xf32> to vector<16x16xf32>
    %c6_57 = arith.constant 6 : index
    %c0_58 = arith.constant 0 : index
    %209 = vector.load %arg3[%c6_57, %c0_58] : memref<9x128xf32, #tpu.memory_space<vmem>>, vector<1x128xf32>
    %210 = vector.shape_cast %209 : vector<1x128xf32> to vector<128xf32>
    %211 = vector.shape_cast %208 : vector<16x16xf32> to vector<16x16x1xf32>
    %212 = vector.shape_cast %210 : vector<128xf32> to vector<1x1x128xf32>
    %213 = vector.broadcast %211 : vector<16x16x1xf32> to vector<16x16x128xf32>
    %214 = vector.broadcast %212 : vector<1x1x128xf32> to vector<16x16x128xf32>
    %215 = arith.mulf %213, %214 : vector<16x16x128xf32>
    %216 = arith.addf %207, %215 : vector<16x16x128xf32>
    %217 = vector.extract_strided_slice %152 {offsets = [2, 1], sizes = [16, 16], strides = [1, 1]} : vector<18x18xf32> to vector<16x16xf32>
    %c7_59 = arith.constant 7 : index
    %c0_60 = arith.constant 0 : index
    %218 = vector.load %arg3[%c7_59, %c0_60] : memref<9x128xf32, #tpu.memory_space<vmem>>, vector<1x128xf32>
    %219 = vector.shape_cast %218 : vector<1x128xf32> to vector<128xf32>
    %220 = vector.shape_cast %217 : vector<16x16xf32> to vector<16x16x1xf32>
    %221 = vector.shape_cast %219 : vector<128xf32> to vector<1x1x128xf32>
    %222 = vector.broadcast %220 : vector<16x16x1xf32> to vector<16x16x128xf32>
    %223 = vector.broadcast %221 : vector<1x1x128xf32> to vector<16x16x128xf32>
    %224 = arith.mulf %222, %223 : vector<16x16x128xf32>
    %225 = arith.addf %216, %224 : vector<16x16x128xf32>
    %226 = vector.extract_strided_slice %152 {offsets = [2, 2], sizes = [16, 16], strides = [1, 1]} : vector<18x18xf32> to vector<16x16xf32>
    %c8_61 = arith.constant 8 : index
    %c0_62 = arith.constant 0 : index
    %227 = vector.load %arg3[%c8_61, %c0_62] : memref<9x128xf32, #tpu.memory_space<vmem>>, vector<1x128xf32>
    %228 = vector.shape_cast %227 : vector<1x128xf32> to vector<128xf32>
    %229 = vector.shape_cast %226 : vector<16x16xf32> to vector<16x16x1xf32>
    %230 = vector.shape_cast %228 : vector<128xf32> to vector<1x1x128xf32>
    %231 = vector.broadcast %229 : vector<16x16x1xf32> to vector<16x16x128xf32>
    %232 = vector.broadcast %230 : vector<1x1x128xf32> to vector<16x16x128xf32>
    %233 = arith.mulf %231, %232 : vector<16x16x128xf32>
    %234 = arith.addf %225, %233 : vector<16x16x128xf32>
    %c0_63 = arith.constant 0 : index
    %c0_64 = arith.constant 0 : index
    %235 = vector.load %arg4[%c0_63, %c0_64] : memref<1x128xf32, #tpu.memory_space<vmem>>, vector<1x128xf32>
    %236 = vector.shape_cast %235 : vector<1x128xf32> to vector<128xf32>
    %237 = vector.shape_cast %236 : vector<128xf32> to vector<1x1x128xf32>
    %238 = vector.broadcast %237 : vector<1x1x128xf32> to vector<16x16x128xf32>
    %239 = arith.addf %234, %238 : vector<16x16x128xf32>
    %cst_65 = arith.constant 0.000000e+00 : f32
    %240 = vector.broadcast %cst_65 : f32 to vector<16x16x128xf32>
    %241 = arith.maximumf %239, %240 : vector<16x16x128xf32>
    %242 = arith.truncf %241 : vector<16x16x128xf32> to vector<16x16x128xbf16>
    %c0_66 = arith.constant 0 : index
    %c0_67 = arith.constant 0 : index
    %c0_68 = arith.constant 0 : index
    %c0_69 = arith.constant 0 : index
    %243 = vector.load %arg6[%c0_66, %c0_67, %c0_68, %c0_69] : memref<1x16x16x128xbf16, #tpu.memory_space<vmem>>, vector<1x16x16x128xbf16>
    %244 = vector.shape_cast %243 : vector<1x16x16x128xbf16> to vector<16x16x128xbf16>
    %245 = vector.shape_cast %242 : vector<16x16x128xbf16> to vector<1x16x16x128xbf16>
    tpu.vector_store %arg6[%c0_66, %c0_67, %c0_68, %c0_69], %245 {strides = array<i32>} : memref<1x16x16x128xbf16, #tpu.memory_space<vmem>>, vector<1x16x16x128xbf16>,
    return
  }
  func.func @transform_0(%arg0: i32) -> (i32, i32, i32, i32) {
    %c0_i32 = arith.constant 0 : i32
    %c0_i32_0 = arith.constant 0 : i32
    %c0_i32_1 = arith.constant 0 : i32
    %c0_i32_2 = arith.constant 0 : i32
    return %arg0, %c0_i32, %c0_i32_0, %c0_i32_1 : i32, i32, i32, i32
  }
  func.func @transform_1(%arg0: i32) -> (i32, i32, i32, i32) {
    %c0_i32 = arith.constant 0 : i32
    %c0_i32_0 = arith.constant 0 : i32
    %c0_i32_1 = arith.constant 0 : i32
    %c0_i32_2 = arith.constant 0 : i32
    return %arg0, %c0_i32, %c0_i32_0, %c0_i32_1 : i32, i32, i32, i32
  }
  func.func @transform_2(%arg0: i32) -> (i32, i32) {
    %c0_i32 = arith.constant 0 : i32
    %c0_i32_0 = arith.constant 0 : i32
    %c0_i32_1 = arith.constant 0 : i32
    return %c0_i32, %c0_i32_0 : i32, i32
  }
  func.func @transform_3(%arg0: i32) -> (i32, i32) {
    %c0_i32 = arith.constant 0 : i32
    %c0_i32_0 = arith.constant 0 : i32
    %c0_i32_1 = arith.constant 0 : i32
    return %c0_i32, %c0_i32_0 : i32, i32
  }
  func.func @transform_4(%arg0: i32) -> (i32, i32, i32, i32) {
    %c0_i32 = arith.constant 0 : i32
    %c0_i32_0 = arith.constant 0 : i32
    %c0_i32_1 = arith.constant 0 : i32
    %c0_i32_2 = arith.constant 0 : i32
    return %arg0, %c0_i32, %c0_i32_0, %c0_i32_1 : i32, i32, i32, i32
  }
  func.func @transform_5(%arg0: i32) -> (i32, i32, i32, i32) {
    %c0_i32 = arith.constant 0 : i32
    %c0_i32_0 = arith.constant 0 : i32
    %c0_i32_1 = arith.constant 0 : i32
    %c0_i32_2 = arith.constant 0 : i32
    return %arg0, %c0_i32, %c0_i32_0, %c0_i32_1 : i32, i32, i32, i32
  }
  func.func @transform_6(%arg0: i32) -> (i32, i32) {
    %c0_i32 = arith.constant 0 : i32
    %c0_i32_0 = arith.constant 0 : i32
    %c0_i32_1 = arith.constant 0 : i32
    return %c0_i32, %c0_i32_0 : i32, i32
  }
}

module attributes {stable_mosaic.version = 11 : i64} {
  func.func @_conv2_l1_kernel(%arg0: i32, %arg1: memref<1x16x16x128xbf16, #tpu.memory_space<vmem>>, %arg2: memref<1x16x16x128xbf16, #tpu.memory_space<vmem>>, %arg3: memref<1152x128xbf16, #tpu.memory_space<vmem>>, %arg4: memref<1x128xf32, #tpu.memory_space<vmem>>, %arg5: memref<1x1xf32, #tpu.memory_space<smem>>) attributes {dimension_semantics = [#tpu.dimension_semantics<arbitrary>], iteration_bounds = array<i64: 2>, scalar_prefetch = 0 : i64, scratch_operands = 0 : i64, tpu.core_type = #tpu.core_type<tc>, window_params = [{transform_indices = @transform_0, window_bounds = array<i64: 1, 16, 16, 128>}, {transform_indices = @transform_1, window_bounds = array<i64: 1, 16, 16, 128>}, {pipeline_mode = #tpu.pipeline_mode<synchronous>, transform_indices = @transform_2, window_bounds = array<i64: 1152, 128>}, {pipeline_mode = #tpu.pipeline_mode<synchronous>, transform_indices = @transform_3, window_bounds = array<i64: 1, 128>}, {transform_indices = @transform_4, window_bounds = array<i64: 1, 1>}]} {
    %c0_i32 = arith.constant 0 : i32
    %0 = arith.cmpi eq, %arg0, %c0_i32 : i32
    %1 = arith.extui %0 : i1 to i32
    %c0_i32_0 = arith.constant 0 : i32
    %2 = arith.cmpi ne, %1, %c0_i32_0 : i32
    scf.if %2 {
      %cst_28 = arith.constant 0.000000e+00 : f32
      %c0_29 = arith.constant 0 : index
      %c0_30 = arith.constant 0 : index
      %80 = memref.load %arg5[%c0_29, %c0_30] : memref<1x1xf32, #tpu.memory_space<smem>>
      memref.store %cst_28, %arg5[%c0_29, %c0_30] : memref<1x1xf32, #tpu.memory_space<smem>>
    } else {
    }
    %c0 = arith.constant 0 : index
    %c0_1 = arith.constant 0 : index
    %c0_2 = arith.constant 0 : index
    %c0_3 = arith.constant 0 : index
    %3 = vector.load %arg1[%c0, %c0_1, %c0_2, %c0_3] : memref<1x16x16x128xbf16, #tpu.memory_space<vmem>>, vector<1x16x16x128xbf16>
    %4 = vector.shape_cast %3 : vector<1x16x16x128xbf16> to vector<16x16x128xbf16>
    %cst = arith.constant 0.000000e+00 : bf16
    %5 = vector.broadcast %cst : bf16 to vector<1x16x128xbf16>
    %cst_4 = arith.constant 0.000000e+00 : bf16
    %6 = vector.broadcast %cst_4 : bf16 to vector<18x1x128xbf16>
    %7 = tpu.concatenate %5, %4, %5 in 0 : vector<1x16x128xbf16>, vector<16x16x128xbf16>, vector<1x16x128xbf16> -> vector<18x16x128xbf16>
    %8 = tpu.concatenate %6, %7, %6 in 1 : vector<18x1x128xbf16>, vector<18x16x128xbf16>, vector<18x1x128xbf16> -> vector<18x18x128xbf16>
    %9 = vector.extract_strided_slice %8 {offsets = [0, 0, 0], sizes = [16, 16, 128], strides = [1, 1, 1]} : vector<18x18x128xbf16> to vector<16x16x128xbf16>
    %10 = vector.shape_cast %9 : vector<16x16x128xbf16> to vector<256x128xbf16>
    %11 = vector.extract_strided_slice %8 {offsets = [0, 1, 0], sizes = [16, 16, 128], strides = [1, 1, 1]} : vector<18x18x128xbf16> to vector<16x16x128xbf16>
    %12 = vector.shape_cast %11 : vector<16x16x128xbf16> to vector<256x128xbf16>
    %13 = vector.extract_strided_slice %8 {offsets = [0, 2, 0], sizes = [16, 16, 128], strides = [1, 1, 1]} : vector<18x18x128xbf16> to vector<16x16x128xbf16>
    %14 = vector.shape_cast %13 : vector<16x16x128xbf16> to vector<256x128xbf16>
    %15 = vector.extract_strided_slice %8 {offsets = [1, 0, 0], sizes = [16, 16, 128], strides = [1, 1, 1]} : vector<18x18x128xbf16> to vector<16x16x128xbf16>
    %16 = vector.shape_cast %15 : vector<16x16x128xbf16> to vector<256x128xbf16>
    %17 = vector.extract_strided_slice %8 {offsets = [1, 1, 0], sizes = [16, 16, 128], strides = [1, 1, 1]} : vector<18x18x128xbf16> to vector<16x16x128xbf16>
    %18 = vector.shape_cast %17 : vector<16x16x128xbf16> to vector<256x128xbf16>
    %19 = vector.extract_strided_slice %8 {offsets = [1, 2, 0], sizes = [16, 16, 128], strides = [1, 1, 1]} : vector<18x18x128xbf16> to vector<16x16x128xbf16>
    %20 = vector.shape_cast %19 : vector<16x16x128xbf16> to vector<256x128xbf16>
    %21 = vector.extract_strided_slice %8 {offsets = [2, 0, 0], sizes = [16, 16, 128], strides = [1, 1, 1]} : vector<18x18x128xbf16> to vector<16x16x128xbf16>
    %22 = vector.shape_cast %21 : vector<16x16x128xbf16> to vector<256x128xbf16>
    %23 = vector.extract_strided_slice %8 {offsets = [2, 1, 0], sizes = [16, 16, 128], strides = [1, 1, 1]} : vector<18x18x128xbf16> to vector<16x16x128xbf16>
    %24 = vector.shape_cast %23 : vector<16x16x128xbf16> to vector<256x128xbf16>
    %25 = vector.extract_strided_slice %8 {offsets = [2, 2, 0], sizes = [16, 16, 128], strides = [1, 1, 1]} : vector<18x18x128xbf16> to vector<16x16x128xbf16>
    %26 = vector.shape_cast %25 : vector<16x16x128xbf16> to vector<256x128xbf16>
    %27 = tpu.concatenate %10, %12, %14, %16, %18, %20, %22, %24, %26 in 1 : vector<256x128xbf16>, vector<256x128xbf16>, vector<256x128xbf16>, vector<256x128xbf16>, vector<256x128xbf16>, vector<256x128xbf16>, vector<256x128xbf16>, vector<256x128xbf16>, vector<256x128xbf16> -> vector<256x1152xbf16>
    %c0_5 = arith.constant 0 : index
    %c0_6 = arith.constant 0 : index
    %28 = vector.load %arg3[%c0_5, %c0_6] : memref<1152x128xbf16, #tpu.memory_space<vmem>>, vector<1152x128xbf16>
    %cst_7 = arith.constant dense<0.000000e+00> : vector<256x128xf32>
    %29 = tpu.matmul %27, %28, %cst_7 {dimension_numbers = #tpu.dot_dimension_numbers<[1], [0], [0], [1], [0, 0, 1, 1], [], []>} : vector<256x1152xbf16>, vector<1152x128xbf16>, vector<256x128xf32> -> vector<256x128xf32>
    %c0_8 = arith.constant 0 : index
    %c0_9 = arith.constant 0 : index
    %30 = vector.load %arg4[%c0_8, %c0_9] : memref<1x128xf32, #tpu.memory_space<vmem>>, vector<1x128xf32>
    %31 = vector.shape_cast %30 : vector<1x128xf32> to vector<128xf32>
    %32 = vector.shape_cast %31 : vector<128xf32> to vector<1x128xf32>
    %33 = vector.broadcast %32 : vector<1x128xf32> to vector<256x128xf32>
    %34 = arith.addf %29, %33 : vector<256x128xf32>
    %cst_10 = arith.constant 0.000000e+00 : f32
    %35 = vector.broadcast %cst_10 : f32 to vector<256x128xf32>
    %36 = arith.maximumf %34, %35 : vector<256x128xf32>
    %c0_11 = arith.constant 0 : index
    %c0_12 = arith.constant 0 : index
    %c0_13 = arith.constant 0 : index
    %c0_14 = arith.constant 0 : index
    %37 = vector.load %arg2[%c0_11, %c0_12, %c0_13, %c0_14] : memref<1x16x16x128xbf16, #tpu.memory_space<vmem>>, vector<1x16x16x128xbf16>
    %38 = vector.shape_cast %37 : vector<1x16x16x128xbf16> to vector<16x16x128xbf16>
    %cst_15 = arith.constant 0.000000e+00 : bf16
    %39 = vector.broadcast %cst_15 : bf16 to vector<1x16x128xbf16>
    %cst_16 = arith.constant 0.000000e+00 : bf16
    %40 = vector.broadcast %cst_16 : bf16 to vector<18x1x128xbf16>
    %41 = tpu.concatenate %39, %38, %39 in 0 : vector<1x16x128xbf16>, vector<16x16x128xbf16>, vector<1x16x128xbf16> -> vector<18x16x128xbf16>
    %42 = tpu.concatenate %40, %41, %40 in 1 : vector<18x1x128xbf16>, vector<18x16x128xbf16>, vector<18x1x128xbf16> -> vector<18x18x128xbf16>
    %43 = vector.extract_strided_slice %42 {offsets = [0, 0, 0], sizes = [16, 16, 128], strides = [1, 1, 1]} : vector<18x18x128xbf16> to vector<16x16x128xbf16>
    %44 = vector.shape_cast %43 : vector<16x16x128xbf16> to vector<256x128xbf16>
    %45 = vector.extract_strided_slice %42 {offsets = [0, 1, 0], sizes = [16, 16, 128], strides = [1, 1, 1]} : vector<18x18x128xbf16> to vector<16x16x128xbf16>
    %46 = vector.shape_cast %45 : vector<16x16x128xbf16> to vector<256x128xbf16>
    %47 = vector.extract_strided_slice %42 {offsets = [0, 2, 0], sizes = [16, 16, 128], strides = [1, 1, 1]} : vector<18x18x128xbf16> to vector<16x16x128xbf16>
    %48 = vector.shape_cast %47 : vector<16x16x128xbf16> to vector<256x128xbf16>
    %49 = vector.extract_strided_slice %42 {offsets = [1, 0, 0], sizes = [16, 16, 128], strides = [1, 1, 1]} : vector<18x18x128xbf16> to vector<16x16x128xbf16>
    %50 = vector.shape_cast %49 : vector<16x16x128xbf16> to vector<256x128xbf16>
    %51 = vector.extract_strided_slice %42 {offsets = [1, 1, 0], sizes = [16, 16, 128], strides = [1, 1, 1]} : vector<18x18x128xbf16> to vector<16x16x128xbf16>
    %52 = vector.shape_cast %51 : vector<16x16x128xbf16> to vector<256x128xbf16>
    %53 = vector.extract_strided_slice %42 {offsets = [1, 2, 0], sizes = [16, 16, 128], strides = [1, 1, 1]} : vector<18x18x128xbf16> to vector<16x16x128xbf16>
    %54 = vector.shape_cast %53 : vector<16x16x128xbf16> to vector<256x128xbf16>
    %55 = vector.extract_strided_slice %42 {offsets = [2, 0, 0], sizes = [16, 16, 128], strides = [1, 1, 1]} : vector<18x18x128xbf16> to vector<16x16x128xbf16>
    %56 = vector.shape_cast %55 : vector<16x16x128xbf16> to vector<256x128xbf16>
    %57 = vector.extract_strided_slice %42 {offsets = [2, 1, 0], sizes = [16, 16, 128], strides = [1, 1, 1]} : vector<18x18x128xbf16> to vector<16x16x128xbf16>
    %58 = vector.shape_cast %57 : vector<16x16x128xbf16> to vector<256x128xbf16>
    %59 = vector.extract_strided_slice %42 {offsets = [2, 2, 0], sizes = [16, 16, 128], strides = [1, 1, 1]} : vector<18x18x128xbf16> to vector<16x16x128xbf16>
    %60 = vector.shape_cast %59 : vector<16x16x128xbf16> to vector<256x128xbf16>
    %61 = tpu.concatenate %44, %46, %48, %50, %52, %54, %56, %58, %60 in 1 : vector<256x128xbf16>, vector<256x128xbf16>, vector<256x128xbf16>, vector<256x128xbf16>, vector<256x128xbf16>, vector<256x128xbf16>, vector<256x128xbf16>, vector<256x128xbf16>, vector<256x128xbf16> -> vector<256x1152xbf16>
    %c0_17 = arith.constant 0 : index
    %c0_18 = arith.constant 0 : index
    %62 = vector.load %arg3[%c0_17, %c0_18] : memref<1152x128xbf16, #tpu.memory_space<vmem>>, vector<1152x128xbf16>
    %cst_19 = arith.constant dense<0.000000e+00> : vector<256x128xf32>
    %63 = tpu.matmul %61, %62, %cst_19 {dimension_numbers = #tpu.dot_dimension_numbers<[1], [0], [0], [1], [0, 0, 1, 1], [], []>} : vector<256x1152xbf16>, vector<1152x128xbf16>, vector<256x128xf32> -> vector<256x128xf32>
    %c0_20 = arith.constant 0 : index
    %c0_21 = arith.constant 0 : index
    %64 = vector.load %arg4[%c0_20, %c0_21] : memref<1x128xf32, #tpu.memory_space<vmem>>, vector<1x128xf32>
    %65 = vector.shape_cast %64 : vector<1x128xf32> to vector<128xf32>
    %66 = vector.shape_cast %65 : vector<128xf32> to vector<1x128xf32>
    %67 = vector.broadcast %66 : vector<1x128xf32> to vector<256x128xf32>
    %68 = arith.addf %63, %67 : vector<256x128xf32>
    %cst_22 = arith.constant 0.000000e+00 : f32
    %69 = vector.broadcast %cst_22 : f32 to vector<256x128xf32>
    %70 = arith.maximumf %68, %69 : vector<256x128xf32>
    %c0_23 = arith.constant 0 : index
    %c0_24 = arith.constant 0 : index
    %71 = memref.load %arg5[%c0_23, %c0_24] : memref<1x1xf32, #tpu.memory_space<smem>>
    %72 = arith.subf %36, %70 : vector<256x128xf32>
    %73 = math.absf %72 : vector<256x128xf32>
    %74 = vector.shape_cast %73 : vector<256x128xf32> to vector<1x256x128xf32>
    %cst_25 = arith.constant dense<0.000000e+00> : vector<1xf32>
    %75 = vector.multi_reduction <add>, %74, %cst_25 [1, 2] : vector<1x256x128xf32> to vector<1xf32>
    %76 = vector.shape_cast %75 : vector<1xf32> to vector<1x1x1xf32>
    %77 = vector.extract %76[0, 0, 0] : f32 from vector<1x1x1xf32>
    %78 = arith.addf %71, %77 : f32
    %c0_26 = arith.constant 0 : index
    %c0_27 = arith.constant 0 : index
    %79 = memref.load %arg5[%c0_26, %c0_27] : memref<1x1xf32, #tpu.memory_space<smem>>
    memref.store %78, %arg5[%c0_26, %c0_27] : memref<1x1xf32, #tpu.memory_space<smem>>
    return
  }
  func.func @transform_0(%arg0: i32) -> (i32, i32, i32, i32) {
    %c0_i32 = arith.constant 0 : i32
    %c0_i32_0 = arith.constant 0 : i32
    %c0_i32_1 = arith.constant 0 : i32
    %c0_i32_2 = arith.constant 0 : i32
    return %arg0, %c0_i32, %c0_i32_0, %c0_i32_1 : i32, i32, i32, i32
  }
  func.func @transform_1(%arg0: i32) -> (i32, i32, i32, i32) {
    %c0_i32 = arith.constant 0 : i32
    %c0_i32_0 = arith.constant 0 : i32
    %c0_i32_1 = arith.constant 0 : i32
    %c0_i32_2 = arith.constant 0 : i32
    return %arg0, %c0_i32, %c0_i32_0, %c0_i32_1 : i32, i32, i32, i32
  }
  func.func @transform_2(%arg0: i32) -> (i32, i32) {
    %c0_i32 = arith.constant 0 : i32
    %c0_i32_0 = arith.constant 0 : i32
    %c0_i32_1 = arith.constant 0 : i32
    return %c0_i32, %c0_i32_0 : i32, i32
  }
  func.func @transform_3(%arg0: i32) -> (i32, i32) {
    %c0_i32 = arith.constant 0 : i32
    %c0_i32_0 = arith.constant 0 : i32
    %c0_i32_1 = arith.constant 0 : i32
    return %c0_i32, %c0_i32_0 : i32, i32
  }
  func.func @transform_4(%arg0: i32) -> (i32, i32) {
    %c0_i32 = arith.constant 0 : i32
    %c0_i32_0 = arith.constant 0 : i32
    %c0_i32_1 = arith.constant 0 : i32
    return %c0_i32, %c0_i32_0 : i32, i32
  }
}

</mosaic_0001>

<llo_original>
// kernel: anime_gan_content_loss.2
$region0: #{anime_gan_content_loss.2}
  #allocation0 [shape = 'u32[]', space=smem, size = 0x4, offset = 0x4, fixed_abs, tag = 'smem constant byte address 0x4 - core index']
  #allocation1 [shape = 'u32[144,128]{1,0:T(1,128)}', space=vmem, size = 0x12000, scoped, tag = 'internal scratch']
  %s0 = inlined_call_operand.hbm [shape: f32[2,3,16,16], index: 0, kind: input, shape index: {}]
  %s1 = inlined_call_operand.hbm [shape: f32[2,3,16,16], index: 1, kind: input, shape index: {}]
  %s2 = inlined_call_operand.vmem [shape: f32[9,128], index: 2, kind: input, shape index: {}]
  %s3 = inlined_call_operand.vmem [shape: f32[1,128], index: 3, kind: input, shape index: {}]
  %s4 = inlined_call_operand.vmem [shape: bf16[2,16,16,128], index: 4, kind: output, shape index: {0}]
  %s5 = inlined_call_operand.vmem [shape: bf16[2,16,16,128], index: 5, kind: output, shape index: {1}]
  %s6 = inlined_call_operand.hbm [shape: f32[1,1], index: 6, kind: output, shape index: {2}]
  %7 = xla_tuple %s4, %s5, %s6
  %s8 = sld [smem:[#allocation0]]
  $region77: #{anime_gan_content_loss.2} parent=0
    _
  %s10 = ssub.s32 1, %s8
  %s11 = scalar_select 0, %s10, %s8
  $region1: #{anime_gan_content_loss.2} parent=0
    #allocation2 [shape = 'u8[49152]{0}', space=vmem, size = 0xc000, scoped, tag = 'input window, operand 0']
    #allocation3 [shape = 's32[2]{0}', space=sflag, size = 0x8, scoped, tag = 'scoped memory for anime_gan_content_loss.2']
    #allocation4 [shape = 's32[2]{0}', space=sflag, size = 0x8, scoped, tag = 'scoped memory for anime_gan_content_loss.2']
    #allocation5 [shape = 'u8[49152]{0}', space=vmem, size = 0xc000, scoped, tag = 'input window, operand 1']
    #allocation6 [shape = 's32[2]{0}', space=sflag, size = 0x8, scoped, tag = 'scoped memory for anime_gan_content_loss.2']
    #allocation7 [shape = 'u8[512]{0}', space=smem, size = 0x200, scoped, tag = 'output window, operand 2, single buffered']
    %12 = vsyncpa [#allocation3], 0
    %s13 = scalar_lea.sflag [#allocation3], 1
    %14 = vsyncpa %s13, 0
    %15 = vsyncpa [#allocation6], 0
    %s16 = scalar_lea.sflag [#allocation6], 1
    %17 = vsyncpa %s16, 0
    %18 = vsyncpa [#allocation4], 0
    loop: start=0, step=1, limit=4
    $region2: #{anime_gan_content_loss.2} parent=1 // loop_pre_header
      _
    $region3: #{anime_gan_content_loss.2} parent=1 // loop_header
      %s20 = sphi 0, %s24
      %p21 = scmp.ge.s32.totalorder %s20, 4
      %s30 = sphi 0, %s32
      %s33 = sphi 0, %s30
      %s34 = sphi 0, %s33
      %s50 = sphi 0, %s34
      %s56 = sphi 0, %s58
      %s59 = sphi 0, %s56
      %s60 = sphi 0, %s59
      %s76 = sphi 0, %s60
      %s80 = sphi 0, %s80
      %s82 = sphi 0, %s80
      %s83 = sphi 0, %s82
      %s97 = sphi 0, %s83
      %s101 = sphi 0, %s101
      %s103 = sphi 0, %s101
      %s104 = sphi 0, %s103
      %s118 = sphi 0, %s104
      %s124 = sphi 0, %s126
      %s127 = sphi 0, %s124
      %s128 = sphi 0, %s127
      %s144 = sphi 0, %s128
      %s150 = sphi 0, %s152
      %s153 = sphi 0, %s150
      %s154 = sphi 0, %s153
      %s170 = sphi 0, %s154
      %s174 = sphi 0, %s174
      %s176 = sphi 0, %s174
      %s177 = sphi 0, %s176
      %s191 = sphi 0, %s177
    $region4: #{anime_gan_content_loss.2} parent=1 // loop_header_branch
      %23 = sbr.rel (%p21) target = $region8
    $region5: #{anime_gan_content_loss.2} parent=1 // loop_body
      %s25 = ssub.s32 %s20, 1
      %s26 = ssub.s32 %s20, 2
      %s27 = sadd.s32 %s20, 1
      %s28 = ssub.s32 %s20, %s27
      %p29 = scmp.eq.s32.totalorder %s28, 0
      %s31 = sadd.s32 %s30, 1
      %s32 = scalar_select %p29, %s30, %s31
      %p35 = pneg %p29
      %p36 = scmp.eq.s32.totalorder %s20, 1
      %p37 = por %p35, %p36
      %p38 = scmp.ne.s32.totalorder %s30, %s33
      %p39 = scmp.eq.s32.totalorder %s20, 0
      %p40 = por %p38, %p39
      %p41 = scmp.ne.s32.totalorder %s30, %s33
      %p42 = scmp.eq.s32.totalorder %s25, 1
      %p43 = por %p41, %p42
      %p44 = scmp.ne.s32.totalorder %s33, %s34
      %p45 = scmp.eq.s32.totalorder %s25, 0
      %p46 = por %p44, %p45
      %p47 = scmp.ne.s32.totalorder %s33, %s34
      %p48 = scmp.eq.s32.totalorder %s26, 1
      %p49 = por %p47, %p48
      %p51 = scmp.ne.s32.totalorder %s34, %s50
      %p52 = scmp.eq.s32.totalorder %s26, 0
      %p53 = por %p51, %p52
      %s54 = ssub.s32 %s20, %s27
      %p55 = scmp.eq.s32.totalorder %s54, 0
      %s57 = sadd.s32 %s56, 1
      %s58 = scalar_select %p55, %s56, %s57
      %p61 = pneg %p55
      %p62 = scmp.eq.s32.totalorder %s20, 1
      %p63 = por %p61, %p62
      %p64 = scmp.ne.s32.totalorder %s56, %s59
      %p65 = scmp.eq.s32.totalorder %s20, 0
      %p66 = por %p64, %p65
      %p67 = scmp.ne.s32.totalorder %s56, %s59
      %p68 = scmp.eq.s32.totalorder %s25, 1
      %p69 = por %p67, %p68
      %p70 = scmp.ne.s32.totalorder %s59, %s60
      %p71 = scmp.eq.s32.totalorder %s25, 0
      %p72 = por %p70, %p71
      %p73 = scmp.ne.s32.totalorder %s59, %s60
      %p74 = scmp.eq.s32.totalorder %s26, 1
      %p75 = por %p73, %p74
      %p77 = scmp.ne.s32.totalorder %s60, %s76
      %p78 = scmp.eq.s32.totalorder %s26, 0
      %p79 = por %p77, %p78
      %s81 = sadd.s32 %s80, 1
      %p84 = scmp.eq.s32.totalorder %s20, 1
      %p85 = scmp.ne.s32.totalorder %s80, %s82
      %p86 = scmp.eq.s32.totalorder %s20, 0
      %p87 = por %p85, %p86
      %p88 = scmp.ne.s32.totalorder %s80, %s82
      %p89 = scmp.eq.s32.totalorder %s25, 1
      %p90 = por %p88, %p89
      %p91 = scmp.ne.s32.totalorder %s82, %s83
      %p92 = scmp.eq.s32.totalorder %s25, 0
      %p93 = por %p91, %p92
      %p94 = scmp.ne.s32.totalorder %s82, %s83
      %p95 = scmp.eq.s32.totalorder %s26, 1
      %p96 = por %p94, %p95
      %p98 = scmp.ne.s32.totalorder %s83, %s97
      %p99 = scmp.eq.s32.totalorder %s26, 0
      %p100 = por %p98, %p99
      %s102 = sadd.s32 %s101, 1
      %p105 = scmp.eq.s32.totalorder %s20, 1
      %p106 = scmp.ne.s32.totalorder %s101, %s103
      %p107 = scmp.eq.s32.totalorder %s20, 0
      %p108 = por %p106, %p107
      %p109 = scmp.ne.s32.totalorder %s101, %s103
      %p110 = scmp.eq.s32.totalorder %s25, 1
      %p111 = por %p109, %p110
      %p112 = scmp.ne.s32.totalorder %s103, %s104
      %p113 = scmp.eq.s32.totalorder %s25, 0
      %p114 = por %p112, %p113
      %p115 = scmp.ne.s32.totalorder %s103, %s104
      %p116 = scmp.eq.s32.totalorder %s26, 1
      %p117 = por %p115, %p116
      %p119 = scmp.ne.s32.totalorder %s104, %s118
      %p120 = scmp.eq.s32.totalorder %s26, 0
      %p121 = por %p119, %p120
      %s122 = ssub.s32 %s20, %s27
      %p123 = scmp.eq.s32.totalorder %s122, 0
      %s125 = sadd.s32 %s124, 1
      %s126 = scalar_select %p123, %s124, %s125
      %p129 = pneg %p123
      %p130 = scmp.eq.s32.totalorder %s20, 1
      %p131 = por %p129, %p130
      %p132 = scmp.ne.s32.totalorder %s124, %s127
      %p133 = scmp.eq.s32.totalorder %s20, 0
      %p134 = por %p132, %p133
      %p135 = scmp.ne.s32.totalorder %s124, %s127
      %p136 = scmp.eq.s32.totalorder %s25, 1
      %p137 = por %p135, %p136
      %p138 = scmp.ne.s32.totalorder %s127, %s128
      %p139 = scmp.eq.s32.totalorder %s25, 0
      %p140 = por %p138, %p139
      %p141 = scmp.ne.s32.totalorder %s127, %s128
      %p142 = scmp.eq.s32.totalorder %s26, 1
      %p143 = por %p141, %p142
      %p145 = scmp.ne.s32.totalorder %s128, %s144
      %p146 = scmp.eq.s32.totalorder %s26, 0
      %p147 = por %p145, %p146
      %s148 = ssub.s32 %s20, %s27
      %p149 = scmp.eq.s32.totalorder %s148, 0
      %s151 = sadd.s32 %s150, 1
      %s152 = scalar_select %p149, %s150, %s151
      %p155 = pneg %p149
      %p156 = scmp.eq.s32.totalorder %s20, 1
      %p157 = por %p155, %p156
      %p158 = scmp.ne.s32.totalorder %s150, %s153
      %p159 = scmp.eq.s32.totalorder %s20, 0
      %p160 = por %p158, %p159
      %p161 = scmp.ne.s32.totalorder %s150, %s153
      %p162 = scmp.eq.s32.totalorder %s25, 1
      %p163 = por %p161, %p162
      %p164 = scmp.ne.s32.totalorder %s153, %s154
      %p165 = scmp.eq.s32.totalorder %s25, 0
      %p166 = por %p164, %p165
      %p167 = scmp.ne.s32.totalorder %s153, %s154
      %p168 = scmp.eq.s32.totalorder %s26, 1
      %p169 = por %p167, %p168
      %p171 = scmp.ne.s32.totalorder %s154, %s170
      %p172 = scmp.eq.s32.totalorder %s26, 0
      %p173 = por %p171, %p172
      %s175 = sadd.s32 %s174, 1
      %p178 = scmp.eq.s32.totalorder %s20, 1
      %p179 = scmp.ne.s32.totalorder %s174, %s176
      %p180 = scmp.eq.s32.totalorder %s20, 0
      %p181 = por %p179, %p180
      %p182 = scmp.ne.s32.totalorder %s174, %s176
      %p183 = scmp.eq.s32.totalorder %s25, 1
      %p184 = por %p182, %p183
      %p185 = scmp.ne.s32.totalorder %s176, %s177
      %p186 = scmp.eq.s32.totalorder %s25, 0
      %p187 = por %p185, %p186
      %p188 = scmp.ne.s32.totalorder %s176, %s177
      %p189 = scmp.eq.s32.totalorder %s26, 1
      %p190 = por %p188, %p189
      %p192 = scmp.ne.s32.totalorder %s177, %s191
      %p193 = scmp.eq.s32.totalorder %s26, 0
      %p194 = por %p192, %p193
      %p195 = scmp.le.s32.totalorder 1, %s20
      %p196 = scmp.lt.s32.totalorder %s20, 3
      %p197 = pnand %p195, %p196
      %p198 = pneg %p197
      // Predicated region
      $region9: #{anime_gan_content_loss.2} parent=5 // pred_check
        _
      $region10: #{anime_gan_content_loss.2} parent=5 // pred_check_branch
        %200 = sbr.rel (%p197) target = $region12
      $region11: #{anime_gan_content_loss.2} parent=5 // pred_region
        %s201 = ssub.s32 %s20, 1
        // Predicated region
        $region13: #{anime_gan_content_loss.2} parent=11 // pred_check
          %p202 = pneg %p93
        $region14: #{anime_gan_content_loss.2} parent=11 // pred_check_branch
          %204 = sbr.rel (%p202) target = $region16
        $region15: #{anime_gan_content_loss.2} parent=11 // pred_region
          _
        $region16: #{anime_gan_content_loss.2} parent=11 // pred_fallthru
          _
        // Predicated region
        $region17: #{anime_gan_content_loss.2} parent=11 // pred_check
          %p205 = pneg %p114
        $region18: #{anime_gan_content_loss.2} parent=11 // pred_check_branch
          %207 = sbr.rel (%p205) target = $region20
        $region19: #{anime_gan_content_loss.2} parent=11 // pred_region
          _
        $region20: #{anime_gan_content_loss.2} parent=11 // pred_fallthru
          _
      $region12: #{anime_gan_content_loss.2} parent=5 // pred_fallthru
        _
      %p208 = scmp.lt.s32.totalorder %s20, 2
      // Predicated region
      $region21: #{anime_gan_content_loss.2} parent=5 // pred_check
        %p209 = pneg %p208
      $region22: #{anime_gan_content_loss.2} parent=5 // pred_check_branch
        %211 = sbr.rel (%p209) target = $region24
      $region23: #{anime_gan_content_loss.2} parent=5 // pred_region
        // Predicated region
        $region25: #{anime_gan_content_loss.2} parent=23 // pred_check
          %p212 = pneg %p40
        $region26: #{anime_gan_content_loss.2} parent=23 // pred_check_branch
          %214 = sbr.rel (%p212) target = $region28
        $region27: #{anime_gan_content_loss.2} parent=23 // pred_region
          %s215 = sand.u32 %s30, 1
          %s216 = scalar_lea.sflag [#allocation3], %s215
          %s217 = sand.u32 %s30, 1
          %s218 = smul.addr %s217, 48
          %s219 = scalar_lea.vmem [#allocation2], %s218
          %s221 = ssub.s32 768, 768
          %222 = vsyncadd %s216, %s221
          %s223 = smul.addr %s20, 6
          %s224 = smul.addr %s223, 128
          %s225 = scalar_lea.hbm %s0, %s224
          %s226 = sshll.u32 %s219, 4
          %s227 = int_to_ptr.vmem [resolvable:$true] %s226
          %232 = dma.hbm_to_vmem [thread:$0]  %s225, 768, %s227, %s216, 128, 128, 8
        $region28: #{anime_gan_content_loss.2} parent=23 // pred_fallthru
          _
        // Predicated region
        $region29: #{anime_gan_content_loss.2} parent=23 // pred_check
          %p233 = pneg %p66
        $region30: #{anime_gan_content_loss.2} parent=23 // pred_check_branch
          %235 = sbr.rel (%p233) target = $region32
        $region31: #{anime_gan_content_loss.2} parent=23 // pred_region
          %s236 = sand.u32 %s56, 1
          %s237 = scalar_lea.sflag [#allocation6], %s236
          %s238 = sand.u32 %s56, 1
          %s239 = smul.addr %s238, 48
          %s240 = scalar_lea.vmem [#allocation5], %s239
          %s242 = ssub.s32 768, 768
          %243 = vsyncadd %s237, %s242
          %s244 = smul.addr %s20, 6
          %s245 = smul.addr %s244, 128
          %s246 = scalar_lea.hbm %s1, %s245
          %s247 = sshll.u32 %s240, 4
          %s248 = int_to_ptr.vmem [resolvable:$true] %s247
          %253 = dma.hbm_to_vmem [thread:$0]  %s246, 768, %s248, %s237, 128, 128, 8
        $region32: #{anime_gan_content_loss.2} parent=23 // pred_fallthru
          _
      $region24: #{anime_gan_content_loss.2} parent=5 // pred_fallthru
        _
      %p254 = scmp.le.s32.totalorder 1, %s20
      %p255 = scmp.lt.s32.totalorder %s20, 3
      %p256 = pnand %p254, %p255
      %p257 = pneg %p256
      // Predicated region
      $region33: #{anime_gan_content_loss.2} parent=5 // pred_check
        _
      $region34: #{anime_gan_content_loss.2} parent=5 // pred_check_branch
        %259 = sbr.rel (%p256) target = $region36
      $region35: #{anime_gan_content_loss.2} parent=5 // pred_region
        %s260 = ssub.s32 %s20, 1
        %s261 = sand.u32 %s33, 1
        %s262 = scalar_lea.sflag [#allocation3], %s261
        %s263 = sand.u32 %s33, 1
        %s264 = smul.addr %s263, 48
        %s265 = scalar_lea.vmem [#allocation2], %s264
        // Predicated region
        $region37: #{anime_gan_content_loss.2} parent=35 // pred_check
          %p266 = pneg %p46
        $region38: #{anime_gan_content_loss.2} parent=35 // pred_check_branch
          %268 = sbr.rel (%p266) target = $region40
        $region39: #{anime_gan_content_loss.2} parent=35 // pred_region
          %269 = dma.done %s262, 768
        $region40: #{anime_gan_content_loss.2} parent=35 // pred_fallthru
          _
        %s270 = sand.u32 %s59, 1
        %s271 = scalar_lea.sflag [#allocation6], %s270
        %s272 = sand.u32 %s59, 1
        %s273 = smul.addr %s272, 48
        %s274 = scalar_lea.vmem [#allocation5], %s273
        // Predicated region
        $region41: #{anime_gan_content_loss.2} parent=35 // pred_check
          %p275 = pneg %p72
        $region42: #{anime_gan_content_loss.2} parent=35 // pred_check_branch
          %277 = sbr.rel (%p275) target = $region44
        $region43: #{anime_gan_content_loss.2} parent=35 // pred_region
          %278 = dma.done %s271, 768
        $region44: #{anime_gan_content_loss.2} parent=35 // pred_fallthru
          _
        %s279 = sand.u32 %s33, 1
        %s280 = scalar_lea.sflag [#allocation3], %s279
        %s281 = sand.u32 %s33, 1
        %s282 = smul.addr %s281, 48
        %s283 = scalar_lea.vmem [#allocation2], %s282
        %p284 = pneg %p46
        %p285 = pneg %p43
        %s286 = sand.u32 %s59, 1
        %s287 = scalar_lea.sflag [#allocation6], %s286
        %s288 = sand.u32 %s59, 1
        %s289 = smul.addr %s288, 48
        %s290 = scalar_lea.vmem [#allocation5], %s289
        %p291 = pneg %p72
        %p292 = pneg %p69
        %p293 = pneg %p93
        %p294 = pneg %p90
        %p295 = pneg %p114
        %p296 = pneg %p111
        %p297 = pneg %p140
        %p298 = pneg %p137
        %p299 = scmp.lt.s32.totalorder %s25, 1
        %s300 = scalar_select %p299, %s25, 1
        %s301 = smul.addr %s300, 32
        %s302 = smul.addr %s301, 4
        %s303 = scalar_lea.vmem %s4, %s302
        %p304 = pneg %p166
        %p305 = pneg %p163
        %p306 = scmp.lt.s32.totalorder %s25, 1
        %s307 = scalar_select %p306, %s25, 1
        %s308 = smul.addr %s307, 32
        %s309 = smul.addr %s308, 4
        %s310 = scalar_lea.vmem %s5, %s309
        %p311 = pneg %p187
        %p312 = pneg %p184
        %p313 = scmp.lt.s32.totalorder %s25, 1
        %s314 = scalar_select %p313, %s25, 1
        %s315 = smul.addr %s314, 32
        %s316 = smul.addr %s315, 4
        %s317 = scalar_lea.vmem %s4, %s316
        %p318 = scmp.lt.s32.totalorder %s25, 1
        %s319 = scalar_select %p318, %s25, 1
        %s320 = smul.addr %s319, 32
        %s321 = smul.addr %s320, 4
        %s322 = scalar_lea.vmem %s5, %s321
        %p323 = scmp.eq.s32.totalorder %s25, 0
        // Predicated region
        $region45: #{anime_gan_content_loss.2} parent=35 // pred_check
          %p324 = pneg %p323
        $region46: #{anime_gan_content_loss.2} parent=35 // pred_check_branch
          %326 = sbr.rel (%p324) target = $region48
        $region47: #{anime_gan_content_loss.2} parent=35 // pred_region
          %s327 = scalar_lea.smem [#allocation7], 0
          %328 = sst [smem:[%s327]] 0.0
        $region48: #{anime_gan_content_loss.2} parent=35 // pred_fallthru
          _
        %v329 = vld [vmem:[%s265] sm:$0xff]
        %v330 = vld [vmem:[%s265 + $0x8] sm:$0xff]
        %v331 = vld [vmem:[%s265 + $0x10] sm:$0xff]
        %v332 = vld [vmem:[%s265 + $0x18] sm:$0xff]
        %v333 = vld [vmem:[%s265 + $0x20] sm:$0xff]
        %v334 = vld [vmem:[%s265 + $0x28] sm:$0xff]
        %v335 = vld [vmem:[%s274] sm:$0xff]
        %v336 = vld [vmem:[%s274 + $0x8] sm:$0xff]
        %v337 = vld [vmem:[%s274 + $0x10] sm:$0xff]
        %v338 = vld [vmem:[%s274 + $0x18] sm:$0xff]
        %v339 = vld [vmem:[%s274 + $0x20] sm:$0xff]
        %v340 = vld [vmem:[%s274 + $0x28] sm:$0xff]
        %v341 = vsub.f32 %v329, %v335
        %v342 = vsub.f32 %v330, %v336
        %v343 = vsub.f32 %v331, %v337
        %v344 = vsub.f32 %v332, %v338
        %v345 = vsub.f32 %v333, %v339
        %v346 = vsub.f32 %v334, %v340
        %s347 = sld [smem:[#allocation7]]
        %v348 = vmul.f32 %v341, %v341
        %v349 = vmul.f32 %v342, %v342
        %v350 = vmul.f32 %v343, %v343
        %v351 = vmul.f32 %v344, %v344
        %v352 = vmul.f32 %v345, %v345
        %v353 = vmul.f32 %v346, %v346
        %vm354 = vcmask 130048
        %v355 = vsel %vm354, %v348, 0.0
        %v356 = vsel %vm354, %v349, 0.0
        %v357 = vadd.f32 %v355, %v356
        %v358 = vsel %vm354, %v350, 0.0
        %v359 = vadd.f32 %v357, %v358
        %v360 = vsel %vm354, %v351, 0.0
        %v361 = vadd.f32 %v359, %v360
        %v362 = vsel %vm354, %v352, 0.0
        %v363 = vadd.f32 %v361, %v362
        %v364 = vsel %vm354, %v353, 0.0
        %v365 = vadd.f32 %v363, %v364
        %366 = vadd.xlane.f32.xlu0 %v365
        %v367 = vpop.xlane.xlu0 %366
        %v368 = vrot.slane %v367, 4
        %v369 = vadd.f32 %v367, %v368
        %v370 = vrot.slane %v369, 2
        %v371 = vadd.f32 %v369, %v370
        %v372 = vrot.slane %v371, 1
        %v373 = vadd.f32 %v371, %v372
        %s374 = vtos %v373
        %s375 = sadd.f32 %s347, %s374
        %s376 = scalar_lea.smem [#allocation7], 0
        %377 = sst [smem:[%s376]] %s375
        %v378 = vmul.f32 %v329, 0.299
        %v379 = vmul.f32 %v330, 0.299
        %v380 = vmul.f32 %v331, 0.587
        %v381 = vmul.f32 %v332, 0.587
        %v382 = vadd.f32 %v378, %v380
        %v383 = vadd.f32 %v379, %v381
        %v384 = vmul.f32 %v333, 0.114
        %v385 = vmul.f32 %v334, 0.114
        %v386 = vadd.f32 %v382, %v384
        %v387 = vadd.f32 %v383, %v385
        %v388 = vsub.f32 %v386, 0.5
        %v389 = vsub.f32 %v387, 0.5
        %v390 = vmul.f32 %v388, 4.4444447
        %v391 = vmul.f32 %v389, 4.4444447
        %vm394 = vcmask 1040384
        %v395 = vrot.slane %v390, 7
        %v396 = vrot.slane %v391, 7
        %v397 = vsel %vm394, %v395, %v396
        %v400 = vsel %vm394, 0.0, %v395
        %v401 = vsel %vm394, %v396, 0.0
        %404 = vrot.lane.b32.xlu0 %v400, 1
        %v405 = vpop.permute.xlu0 %404
        %406 = vrot.lane.b32.xlu0 %v397, 1
        %v407 = vpop.permute.xlu0 %406
        %408 = vrot.lane.b32.xlu0 %v401, 1
        %v409 = vpop.permute.xlu0 %408
        %vm413 = vcmask 7168
        %v414 = vsel %vm413, 0.0, %v405
        %v415 = vsel %vm413, 0.0, %v407
        %v416 = vsel %vm413, 0.0, %v409
        %vm417 = vcmask 138240
        %v418 = vsel %vm417, %v414, 0.0
        %v419 = vsel %vm417, %v415, 0.0
        %v420 = vsel %vm417, %v416, 0.0
        %v421 = vld [vmem:[%s2] sm:$0x1]
        %v422 = vlaneseq
        %v423 = vshrl.u32 %v422, 7
        %v424 = vsub.s32 0, %v423
        %v425 = vrot.slane %v418, %v424
        %427 = vbcast.lane.b32.xlu0 %v425, 256
        %v428 = vpop.permute.xlu0 %427
        %s430 = sor.u32 256, 8
        %431 = vbcast.lane.b32.xlu0 %v425, %s430
        %v432 = vpop.permute.xlu0 %431
        %v433 = vlaneseq
        %v434 = vshrl.u32 %v433, 7
        %v435 = vsub.s32 1, %v434
        %v436 = vrot.slane %v418, %v435
        %438 = vbcast.lane.b32.xlu0 %v436, 256
        %v439 = vpop.permute.xlu0 %438
        %s441 = sor.u32 256, 8
        %442 = vbcast.lane.b32.xlu0 %v436, %s441
        %v443 = vpop.permute.xlu0 %442
        %v444 = vlaneseq
        %v445 = vshrl.u32 %v444, 7
        %v446 = vsub.s32 2, %v445
        %v447 = vrot.slane %v418, %v446
        %449 = vbcast.lane.b32.xlu0 %v447, 256
        %v450 = vpop.permute.xlu0 %449
        %s452 = sor.u32 256, 8
        %453 = vbcast.lane.b32.xlu0 %v447, %s452
        %v454 = vpop.permute.xlu0 %453
        %v455 = vlaneseq
        %v456 = vshrl.u32 %v455, 7
        %v457 = vsub.s32 3, %v456
        %v458 = vrot.slane %v418, %v457
        %460 = vbcast.lane.b32.xlu0 %v458, 256
        %v461 = vpop.permute.xlu0 %460
        %s463 = sor.u32 256, 8
        %464 = vbcast.lane.b32.xlu0 %v458, %s463
        %v465 = vpop.permute.xlu0 %464
        %v466 = vlaneseq
        %v467 = vshrl.u32 %v466, 7
        %v468 = vsub.s32 4, %v467
        %v469 = vrot.slane %v418, %v468
        %471 = vbcast.lane.b32.xlu0 %v469, 256
        %v472 = vpop.permute.xlu0 %471
        %s474 = sor.u32 256, 8
        %475 = vbcast.lane.b32.xlu0 %v469, %s474
        %v476 = vpop.permute.xlu0 %475
        %v477 = vlaneseq
        %v478 = vshrl.u32 %v477, 7
        %v479 = vsub.s32 5, %v478
        %v480 = vrot.slane %v418, %v479
        %482 = vbcast.lane.b32.xlu0 %v480, 256
        %v483 = vpop.permute.xlu0 %482
        %s485 = sor.u32 256, 8
        %486 = vbcast.lane.b32.xlu0 %v480, %s485
        %v487 = vpop.permute.xlu0 %486
        %v488 = vlaneseq
        %v489 = vshrl.u32 %v488, 7
        %v490 = vsub.s32 6, %v489
        %v491 = vrot.slane %v418, %v490
        %493 = vbcast.lane.b32.xlu0 %v491, 256
        %v494 = vpop.permute.xlu0 %493
        %s496 = sor.u32 256, 8
        %497 = vbcast.lane.b32.xlu0 %v491, %s496
        %v498 = vpop.permute.xlu0 %497
        %v499 = vlaneseq
        %v500 = vshrl.u32 %v499, 7
        %v501 = vsub.s32 7, %v500
        %v502 = vrot.slane %v418, %v501
        %504 = vbcast.lane.b32.xlu0 %v502, 256
        %v505 = vpop.permute.xlu0 %504
        %s507 = sor.u32 256, 8
        %508 = vbcast.lane.b32.xlu0 %v502, %s507
        %v509 = vpop.permute.xlu0 %508
        %v510 = vlaneseq
        %v511 = vshrl.u32 %v510, 7
        %v512 = vsub.s32 0, %v511
        %v513 = vrot.slane %v419, %v512
        %515 = vbcast.lane.b32.xlu0 %v513, 256
        %v516 = vpop.permute.xlu0 %515
        %s518 = sor.u32 256, 8
        %519 = vbcast.lane.b32.xlu0 %v513, %s518
        %v520 = vpop.permute.xlu0 %519
        %v521 = vlaneseq
        %v522 = vshrl.u32 %v521, 7
        %v523 = vsub.s32 1, %v522
        %v524 = vrot.slane %v419, %v523
        %526 = vbcast.lane.b32.xlu0 %v524, 256
        %v527 = vpop.permute.xlu0 %526
        %s529 = sor.u32 256, 8
        %530 = vbcast.lane.b32.xlu0 %v524, %s529
        %v531 = vpop.permute.xlu0 %530
        %v532 = vlaneseq
        %v533 = vshrl.u32 %v532, 7
        %v534 = vsub.s32 2, %v533
        %v535 = vrot.slane %v419, %v534
        %537 = vbcast.lane.b32.xlu0 %v535, 256
        %v538 = vpop.permute.xlu0 %537
        %s540 = sor.u32 256, 8
        %541 = vbcast.lane.b32.xlu0 %v535, %s540
        %v542 = vpop.permute.xlu0 %541
        %v543 = vlaneseq
        %v544 = vshrl.u32 %v543, 7
        %v545 = vsub.s32 3, %v544
        %v546 = vrot.slane %v419, %v545
        %548 = vbcast.lane.b32.xlu0 %v546, 256
        %v549 = vpop.permute.xlu0 %548
        %s551 = sor.u32 256, 8
        %552 = vbcast.lane.b32.xlu0 %v546, %s551
        %v553 = vpop.permute.xlu0 %552
        %v554 = vlaneseq
        %v555 = vshrl.u32 %v554, 7
        %v556 = vsub.s32 4, %v555
        %v557 = vrot.slane %v419, %v556
        %559 = vbcast.lane.b32.xlu0 %v557, 256
        %v560 = vpop.permute.xlu0 %559
        %s562 = sor.u32 256, 8
        %563 = vbcast.lane.b32.xlu0 %v557, %s562
        %v564 = vpop.permute.xlu0 %563
        %v565 = vlaneseq
        %v566 = vshrl.u32 %v565, 7
        %v567 = vsub.s32 5, %v566
        %v568 = vrot.slane %v419, %v567
        %570 = vbcast.lane.b32.xlu0 %v568, 256
        %v571 = vpop.permute.xlu0 %570
        %s573 = sor.u32 256, 8
        %574 = vbcast.lane.b32.xlu0 %v568, %s573
        %v575 = vpop.permute.xlu0 %574
        %v576 = vlaneseq
        %v577 = vshrl.u32 %v576, 7
        %v578 = vsub.s32 6, %v577
        %v579 = vrot.slane %v419, %v578
        %581 = vbcast.lane.b32.xlu0 %v579, 256
        %v582 = vpop.permute.xlu0 %581
        %s584 = sor.u32 256, 8
        %585 = vbcast.lane.b32.xlu0 %v579, %s584
        %v586 = vpop.permute.xlu0 %585
        %v587 = vlaneseq
        %v588 = vshrl.u32 %v587, 7
        %v589 = vsub.s32 7, %v588
        %v590 = vrot.slane %v419, %v589
        %592 = vbcast.lane.b32.xlu0 %v590, 256
        %v593 = vpop.permute.xlu0 %592
        %s595 = sor.u32 256, 8
        %596 = vbcast.lane.b32.xlu0 %v590, %s595
        %v597 = vpop.permute.xlu0 %596
        %v598 = vlaneseq
        %v599 = vshrl.u32 %v598, 7
        %v600 = vsub.s32 0, %v599
        %v601 = vrot.slane %v421, %v600
        %v602 = vmul.f32 %v428, %v601
        %v603 = vmul.f32 %v432, %v601
        %v604 = vmul.f32 %v439, %v601
        %v605 = vmul.f32 %v443, %v601
        %v606 = vmul.f32 %v450, %v601
        %v607 = vmul.f32 %v454, %v601
        %v608 = vmul.f32 %v461, %v601
        %v609 = vmul.f32 %v465, %v601
        %v610 = vmul.f32 %v472, %v601
        %v611 = vmul.f32 %v476, %v601
        %v612 = vmul.f32 %v483, %v601
        %v613 = vmul.f32 %v487, %v601
        %v614 = vmul.f32 %v494, %v601
        %v615 = vmul.f32 %v498, %v601
        %v616 = vmul.f32 %v505, %v601
        %v617 = vmul.f32 %v509, %v601
        %v618 = vmul.f32 %v516, %v601
        %v619 = vmul.f32 %v520, %v601
        %v620 = vmul.f32 %v527, %v601
        %v621 = vmul.f32 %v531, %v601
        %v622 = vmul.f32 %v538, %v601
        %v623 = vmul.f32 %v542, %v601
        %v624 = vmul.f32 %v549, %v601
        %v625 = vmul.f32 %v553, %v601
        %v626 = vmul.f32 %v560, %v601
        %v627 = vmul.f32 %v564, %v601
        %v628 = vmul.f32 %v571, %v601
        %v629 = vmul.f32 %v575, %v601
        %v630 = vmul.f32 %v582, %v601
        %v631 = vmul.f32 %v586, %v601
        %v632 = vmul.f32 %v593, %v601
        %v633 = vmul.f32 %v597, %v601
        %v634 = vadd.f32 %v602, 0.0
        %v635 = vadd.f32 %v603, 0.0
        %v636 = vadd.f32 %v604, 0.0
        %v637 = vadd.f32 %v605, 0.0
        %v638 = vadd.f32 %v606, 0.0
        %v639 = vadd.f32 %v607, 0.0
        %v640 = vadd.f32 %v608, 0.0
        %v641 = vadd.f32 %v609, 0.0
        %v642 = vadd.f32 %v610, 0.0
        %v643 = vadd.f32 %v611, 0.0
        %v644 = vadd.f32 %v612, 0.0
        %v645 = vadd.f32 %v613, 0.0
        %v646 = vadd.f32 %v614, 0.0
        %v647 = vadd.f32 %v615, 0.0
        %v648 = vadd.f32 %v616, 0.0
        %v649 = vadd.f32 %v617, 0.0
        %v650 = vadd.f32 %v618, 0.0
        %v651 = vadd.f32 %v619, 0.0
        %v652 = vadd.f32 %v620, 0.0
        %v653 = vadd.f32 %v621, 0.0
        %v654 = vadd.f32 %v622, 0.0
        %v655 = vadd.f32 %v623, 0.0
        %v656 = vadd.f32 %v624, 0.0
        %v657 = vadd.f32 %v625, 0.0
        %v658 = vadd.f32 %v626, 0.0
        %v659 = vadd.f32 %v627, 0.0
        %v660 = vadd.f32 %v628, 0.0
        %v661 = vadd.f32 %v629, 0.0
        %v662 = vadd.f32 %v630, 0.0
        %v663 = vadd.f32 %v631, 0.0
        %v664 = vadd.f32 %v632, 0.0
        %v665 = vadd.f32 %v633, 0.0
        %v666 = vld [vmem:[%s2 + $0x1] sm:$0x1]
        %s668 = sor.u32 256, 1
        %669 = vbcast.lane.b32.xlu0 %v425, %s668
        %v670 = vpop.permute.xlu0 %669
        %s672 = sor.u32 256, 9
        %673 = vbcast.lane.b32.xlu0 %v425, %s672
        %v674 = vpop.permute.xlu0 %673
        %s676 = sor.u32 256, 1
        %677 = vbcast.lane.b32.xlu0 %v436, %s676
        %v678 = vpop.permute.xlu0 %677
        %s680 = sor.u32 256, 9
        %681 = vbcast.lane.b32.xlu0 %v436, %s680
        %v682 = vpop.permute.xlu0 %681
        %s684 = sor.u32 256, 1
        %685 = vbcast.lane.b32.xlu0 %v447, %s684
        %v686 = vpop.permute.xlu0 %685
        %s688 = sor.u32 256, 9
        %689 = vbcast.lane.b32.xlu0 %v447, %s688
        %v690 = vpop.permute.xlu0 %689
        %s692 = sor.u32 256, 1
        %693 = vbcast.lane.b32.xlu0 %v458, %s692
        %v694 = vpop.permute.xlu0 %693
        %s696 = sor.u32 256, 9
        %697 = vbcast.lane.b32.xlu0 %v458, %s696
        %v698 = vpop.permute.xlu0 %697
        %s700 = sor.u32 256, 1
        %701 = vbcast.lane.b32.xlu0 %v469, %s700
        %v702 = vpop.permute.xlu0 %701
        %s704 = sor.u32 256, 9
        %705 = vbcast.lane.b32.xlu0 %v469, %s704
        %v706 = vpop.permute.xlu0 %705
        %s708 = sor.u32 256, 1
        %709 = vbcast.lane.b32.xlu0 %v480, %s708
        %v710 = vpop.permute.xlu0 %709
        %s712 = sor.u32 256, 9
        %713 = vbcast.lane.b32.xlu0 %v480, %s712
        %v714 = vpop.permute.xlu0 %713
        %s716 = sor.u32 256, 1
        %717 = vbcast.lane.b32.xlu0 %v491, %s716
        %v718 = vpop.permute.xlu0 %717
        %s720 = sor.u32 256, 9
        %721 = vbcast.lane.b32.xlu0 %v491, %s720
        %v722 = vpop.permute.xlu0 %721
        %s724 = sor.u32 256, 1
        %725 = vbcast.lane.b32.xlu0 %v502, %s724
        %v726 = vpop.permute.xlu0 %725
        %s728 = sor.u32 256, 9
        %729 = vbcast.lane.b32.xlu0 %v502, %s728
        %v730 = vpop.permute.xlu0 %729
        %s732 = sor.u32 256, 1
        %733 = vbcast.lane.b32.xlu0 %v513, %s732
        %v734 = vpop.permute.xlu0 %733
        %s736 = sor.u32 256, 9
        %737 = vbcast.lane.b32.xlu0 %v513, %s736
        %v738 = vpop.permute.xlu0 %737
        %s740 = sor.u32 256, 1
        %741 = vbcast.lane.b32.xlu0 %v524, %s740
        %v742 = vpop.permute.xlu0 %741
        %s744 = sor.u32 256, 9
        %745 = vbcast.lane.b32.xlu0 %v524, %s744
        %v746 = vpop.permute.xlu0 %745
        %s748 = sor.u32 256, 1
        %749 = vbcast.lane.b32.xlu0 %v535, %s748
        %v750 = vpop.permute.xlu0 %749
        %s752 = sor.u32 256, 9
        %753 = vbcast.lane.b32.xlu0 %v535, %s752
        %v754 = vpop.permute.xlu0 %753
        %s756 = sor.u32 256, 1
        %757 = vbcast.lane.b32.xlu0 %v546, %s756
        %v758 = vpop.permute.xlu0 %757
        %s760 = sor.u32 256, 9
        %761 = vbcast.lane.b32.xlu0 %v546, %s760
        %v762 = vpop.permute.xlu0 %761
        %s764 = sor.u32 256, 1
        %765 = vbcast.lane.b32.xlu0 %v557, %s764
        %v766 = vpop.permute.xlu0 %765
        %s768 = sor.u32 256, 9
        %769 = vbcast.lane.b32.xlu0 %v557, %s768
        %v770 = vpop.permute.xlu0 %769
        %s772 = sor.u32 256, 1
        %773 = vbcast.lane.b32.xlu0 %v568, %s772
        %v774 = vpop.permute.xlu0 %773
        %s776 = sor.u32 256, 9
        %777 = vbcast.lane.b32.xlu0 %v568, %s776
        %v778 = vpop.permute.xlu0 %777
        %s780 = sor.u32 256, 1
        %781 = vbcast.lane.b32.xlu0 %v579, %s780
        %v782 = vpop.permute.xlu0 %781
        %s784 = sor.u32 256, 9
        %785 = vbcast.lane.b32.xlu0 %v579, %s784
        %v786 = vpop.permute.xlu0 %785
        %s788 = sor.u32 256, 1
        %789 = vbcast.lane.b32.xlu0 %v590, %s788
        %v790 = vpop.permute.xlu0 %789
        %s792 = sor.u32 256, 9
        %793 = vbcast.lane.b32.xlu0 %v590, %s792
        %v794 = vpop.permute.xlu0 %793
        %v795 = vlaneseq
        %v796 = vshrl.u32 %v795, 7
        %v797 = vsub.s32 0, %v796
        %v798 = vrot.slane %v666, %v797
        %v799 = vmul.f32 %v670, %v798
        %v800 = vmul.f32 %v674, %v798
        %v801 = vmul.f32 %v678, %v798
        %v802 = vmul.f32 %v682, %v798
        %v803 = vmul.f32 %v686, %v798
        %v804 = vmul.f32 %v690, %v798
        %v805 = vmul.f32 %v694, %v798
        %v806 = vmul.f32 %v698, %v798
        %v807 = vmul.f32 %v702, %v798
        %v808 = vmul.f32 %v706, %v798
        %v809 = vmul.f32 %v710, %v798
        %v810 = vmul.f32 %v714, %v798
        %v811 = vmul.f32 %v718, %v798
        %v812 = vmul.f32 %v722, %v798
        %v813 = vmul.f32 %v726, %v798
        %v814 = vmul.f32 %v730, %v798
        %v815 = vmul.f32 %v734, %v798
        %v816 = vmul.f32 %v738, %v798
        %v817 = vmul.f32 %v742, %v798
        %v818 = vmul.f32 %v746, %v798
        %v819 = vmul.f32 %v750, %v798
        %v820 = vmul.f32 %v754, %v798
        %v821 = vmul.f32 %v758, %v798
        %v822 = vmul.f32 %v762, %v798
        %v823 = vmul.f32 %v766, %v798
        %v824 = vmul.f32 %v770, %v798
        %v825 = vmul.f32 %v774, %v798
        %v826 = vmul.f32 %v778, %v798
        %v827 = vmul.f32 %v782, %v798
        %v828 = vmul.f32 %v786, %v798
        %v829 = vmul.f32 %v790, %v798
        %v830 = vmul.f32 %v794, %v798
        %v831 = vadd.f32 %v634, %v799
        %v832 = vadd.f32 %v635, %v800
        %v833 = vadd.f32 %v636, %v801
        %v834 = vadd.f32 %v637, %v802
        %v835 = vadd.f32 %v638, %v803
        %v836 = vadd.f32 %v639, %v804
        %v837 = vadd.f32 %v640, %v805
        %v838 = vadd.f32 %v641, %v806
        %v839 = vadd.f32 %v642, %v807
        %v840 = vadd.f32 %v643, %v808
        %v841 = vadd.f32 %v644, %v809
        %v842 = vadd.f32 %v645, %v810
        %v843 = vadd.f32 %v646, %v811
        %v844 = vadd.f32 %v647, %v812
        %v845 = vadd.f32 %v648, %v813
        %v846 = vadd.f32 %v649, %v814
        %v847 = vadd.f32 %v650, %v815
        %v848 = vadd.f32 %v651, %v816
        %v849 = vadd.f32 %v652, %v817
        %v850 = vadd.f32 %v653, %v818
        %v851 = vadd.f32 %v654, %v819
        %v852 = vadd.f32 %v655, %v820
        %v853 = vadd.f32 %v656, %v821
        %v854 = vadd.f32 %v657, %v822
        %v855 = vadd.f32 %v658, %v823
        %v856 = vadd.f32 %v659, %v824
        %v857 = vadd.f32 %v660, %v825
        %v858 = vadd.f32 %v661, %v826
        %v859 = vadd.f32 %v662, %v827
        %v860 = vadd.f32 %v663, %v828
        %v861 = vadd.f32 %v664, %v829
        %v862 = vadd.f32 %v665, %v830
        %v863 = vld [vmem:[%s2 + $0x2] sm:$0x1]
        %s865 = sor.u32 256, 2
        %866 = vbcast.lane.b32.xlu0 %v425, %s865
        %v867 = vpop.permute.xlu0 %866
        %s869 = sor.u32 256, 10
        %870 = vbcast.lane.b32.xlu0 %v425, %s869
        %v871 = vpop.permute.xlu0 %870
        %s873 = sor.u32 256, 2
        %874 = vbcast.lane.b32.xlu0 %v436, %s873
        %v875 = vpop.permute.xlu0 %874
        %s877 = sor.u32 256, 10
        %878 = vbcast.lane.b32.xlu0 %v436, %s877
        %v879 = vpop.permute.xlu0 %878
        %s881 = sor.u32 256, 2
        %882 = vbcast.lane.b32.xlu0 %v447, %s881
        %v883 = vpop.permute.xlu0 %882
        %s885 = sor.u32 256, 10
        %886 = vbcast.lane.b32.xlu0 %v447, %s885
        %v887 = vpop.permute.xlu0 %886
        %s889 = sor.u32 256, 2
        %890 = vbcast.lane.b32.xlu0 %v458, %s889
        %v891 = vpop.permute.xlu0 %890
        %s893 = sor.u32 256, 10
        %894 = vbcast.lane.b32.xlu0 %v458, %s893
        %v895 = vpop.permute.xlu0 %894
        %s897 = sor.u32 256, 2
        %898 = vbcast.lane.b32.xlu0 %v469, %s897
        %v899 = vpop.permute.xlu0 %898
        %s901 = sor.u32 256, 10
        %902 = vbcast.lane.b32.xlu0 %v469, %s901
        %v903 = vpop.permute.xlu0 %902
        %s905 = sor.u32 256, 2
        %906 = vbcast.lane.b32.xlu0 %v480, %s905
        %v907 = vpop.permute.xlu0 %906
        %s909 = sor.u32 256, 10
        %910 = vbcast.lane.b32.xlu0 %v480, %s909
        %v911 = vpop.permute.xlu0 %910
        %s913 = sor.u32 256, 2
        %914 = vbcast.lane.b32.xlu0 %v491, %s913
        %v915 = vpop.permute.xlu0 %914
        %s917 = sor.u32 256, 10
        %918 = vbcast.lane.b32.xlu0 %v491, %s917
        %v919 = vpop.permute.xlu0 %918
        %s921 = sor.u32 256, 2
        %922 = vbcast.lane.b32.xlu0 %v502, %s921
        %v923 = vpop.permute.xlu0 %922
        %s925 = sor.u32 256, 10
        %926 = vbcast.lane.b32.xlu0 %v502, %s925
        %v927 = vpop.permute.xlu0 %926
        %s929 = sor.u32 256, 2
        %930 = vbcast.lane.b32.xlu0 %v513, %s929
        %v931 = vpop.permute.xlu0 %930
        %s933 = sor.u32 256, 10
        %934 = vbcast.lane.b32.xlu0 %v513, %s933
        %v935 = vpop.permute.xlu0 %934
        %s937 = sor.u32 256, 2
        %938 = vbcast.lane.b32.xlu0 %v524, %s937
        %v939 = vpop.permute.xlu0 %938
        %s941 = sor.u32 256, 10
        %942 = vbcast.lane.b32.xlu0 %v524, %s941
        %v943 = vpop.permute.xlu0 %942
        %s945 = sor.u32 256, 2
        %946 = vbcast.lane.b32.xlu0 %v535, %s945
        %v947 = vpop.permute.xlu0 %946
        %s949 = sor.u32 256, 10
        %950 = vbcast.lane.b32.xlu0 %v535, %s949
        %v951 = vpop.permute.xlu0 %950
        %s953 = sor.u32 256, 2
        %954 = vbcast.lane.b32.xlu0 %v546, %s953
        %v955 = vpop.permute.xlu0 %954
        %s957 = sor.u32 256, 10
        %958 = vbcast.lane.b32.xlu0 %v546, %s957
        %v959 = vpop.permute.xlu0 %958
        %s961 = sor.u32 256, 2
        %962 = vbcast.lane.b32.xlu0 %v557, %s961
        %v963 = vpop.permute.xlu0 %962
        %s965 = sor.u32 256, 10
        %966 = vbcast.lane.b32.xlu0 %v557, %s965
        %v967 = vpop.permute.xlu0 %966
        %s969 = sor.u32 256, 2
        %970 = vbcast.lane.b32.xlu0 %v568, %s969
        %v971 = vpop.permute.xlu0 %970
        %s973 = sor.u32 256, 10
        %974 = vbcast.lane.b32.xlu0 %v568, %s973
        %v975 = vpop.permute.xlu0 %974
        %s977 = sor.u32 256, 2
        %978 = vbcast.lane.b32.xlu0 %v579, %s977
        %v979 = vpop.permute.xlu0 %978
        %s981 = sor.u32 256, 10
        %982 = vbcast.lane.b32.xlu0 %v579, %s981
        %v983 = vpop.permute.xlu0 %982
        %s985 = sor.u32 256, 2
        %986 = vbcast.lane.b32.xlu0 %v590, %s985
        %v987 = vpop.permute.xlu0 %986
        %s989 = sor.u32 256, 10
        %990 = vbcast.lane.b32.xlu0 %v590, %s989
        %v991 = vpop.permute.xlu0 %990
        %v992 = vlaneseq
        %v993 = vshrl.u32 %v992, 7
        %v994 = vsub.s32 0, %v993
        %v995 = vrot.slane %v863, %v994
        %v996 = vmul.f32 %v867, %v995
        %v997 = vmul.f32 %v871, %v995
        %v998 = vmul.f32 %v875, %v995
        %v999 = vmul.f32 %v879, %v995
        %v1000 = vmul.f32 %v883, %v995
        %v1001 = vmul.f32 %v887, %v995
        %v1002 = vmul.f32 %v891, %v995
        %v1003 = vmul.f32 %v895, %v995
        %v1004 = vmul.f32 %v899, %v995
        %v1005 = vmul.f32 %v903, %v995
        %v1006 = vmul.f32 %v907, %v995
        %v1007 = vmul.f32 %v911, %v995
        %v1008 = vmul.f32 %v915, %v995
        %v1009 = vmul.f32 %v919, %v995
        %v1010 = vmul.f32 %v923, %v995
        %v1011 = vmul.f32 %v927, %v995
        %v1012 = vmul.f32 %v931, %v995
        %v1013 = vmul.f32 %v935, %v995
        %v1014 = vmul.f32 %v939, %v995
        %v1015 = vmul.f32 %v943, %v995
        %v1016 = vmul.f32 %v947, %v995
        %v1017 = vmul.f32 %v951, %v995
        %v1018 = vmul.f32 %v955, %v995
        %v1019 = vmul.f32 %v959, %v995
        %v1020 = vmul.f32 %v963, %v995
        %v1021 = vmul.f32 %v967, %v995
        %v1022 = vmul.f32 %v971, %v995
        %v1023 = vmul.f32 %v975, %v995
        %v1024 = vmul.f32 %v979, %v995
        %v1025 = vmul.f32 %v983, %v995
        %v1026 = vmul.f32 %v987, %v995
        %v1027 = vmul.f32 %v991, %v995
        %v1028 = vadd.f32 %v831, %v996
        %v1029 = vadd.f32 %v832, %v997
        %v1030 = vadd.f32 %v833, %v998
        %v1031 = vadd.f32 %v834, %v999
        %v1032 = vadd.f32 %v835, %v1000
        %v1033 = vadd.f32 %v836, %v1001
        %v1034 = vadd.f32 %v837, %v1002
        %v1035 = vadd.f32 %v838, %v1003
        %v1036 = vadd.f32 %v839, %v1004
        %v1037 = vadd.f32 %v840, %v1005
        %v1038 = vadd.f32 %v841, %v1006
        %v1039 = vadd.f32 %v842, %v1007
        %v1040 = vadd.f32 %v843, %v1008
        %v1041 = vadd.f32 %v844, %v1009
        %v1042 = vadd.f32 %v845, %v1010
        %v1043 = vadd.f32 %v846, %v1011
        %v1044 = vadd.f32 %v847, %v1012
        %v1045 = vadd.f32 %v848, %v1013
        %v1046 = vadd.f32 %v849, %v1014
        %v1047 = vadd.f32 %v850, %v1015
        %v1048 = vadd.f32 %v851, %v1016
        %v1049 = vadd.f32 %v852, %v1017
        %v1050 = vadd.f32 %v853, %v1018
        %v1051 = vadd.f32 %v854, %v1019
        %v1052 = vadd.f32 %v855, %v1020
        %v1053 = vadd.f32 %v856, %v1021
        %v1054 = vadd.f32 %v857, %v1022
        %v1055 = vadd.f32 %v858, %v1023
        %v1056 = vadd.f32 %v859, %v1024
        %v1057 = vadd.f32 %v860, %v1025
        %v1058 = vadd.f32 %v861, %v1026
        %v1059 = vadd.f32 %v862, %v1027
        %v1060 = vld [vmem:[%s2 + $0x3] sm:$0x1]
        %v1061 = vlaneseq
        %v1062 = vshrl.u32 %v1061, 7
        %v1063 = vsub.s32 0, %v1062
        %v1064 = vrot.slane %v420, %v1063
        %1066 = vbcast.lane.b32.xlu0 %v1064, 256
        %v1067 = vpop.permute.xlu0 %1066
        %s1069 = sor.u32 256, 8
        %1070 = vbcast.lane.b32.xlu0 %v1064, %s1069
        %v1071 = vpop.permute.xlu0 %1070
        %v1072 = vlaneseq
        %v1073 = vshrl.u32 %v1072, 7
        %v1074 = vsub.s32 0, %v1073
        %v1075 = vrot.slane %v1060, %v1074
        %v1076 = vmul.f32 %v439, %v1075
        %v1077 = vmul.f32 %v443, %v1075
        %v1078 = vmul.f32 %v450, %v1075
        %v1079 = vmul.f32 %v454, %v1075
        %v1080 = vmul.f32 %v461, %v1075
        %v1081 = vmul.f32 %v465, %v1075
        %v1082 = vmul.f32 %v472, %v1075
        %v1083 = vmul.f32 %v476, %v1075
        %v1084 = vmul.f32 %v483, %v1075
        %v1085 = vmul.f32 %v487, %v1075
        %v1086 = vmul.f32 %v494, %v1075
        %v1087 = vmul.f32 %v498, %v1075
        %v1088 = vmul.f32 %v505, %v1075
        %v1089 = vmul.f32 %v509, %v1075
        %v1090 = vmul.f32 %v516, %v1075
        %v1091 = vmul.f32 %v520, %v1075
        %v1092 = vmul.f32 %v527, %v1075
        %v1093 = vmul.f32 %v531, %v1075
        %v1094 = vmul.f32 %v538, %v1075
        %v1095 = vmul.f32 %v542, %v1075
        %v1096 = vmul.f32 %v549, %v1075
        %v1097 = vmul.f32 %v553, %v1075
        %v1098 = vmul.f32 %v560, %v1075
        %v1099 = vmul.f32 %v564, %v1075
        %v1100 = vmul.f32 %v571, %v1075
        %v1101 = vmul.f32 %v575, %v1075
        %v1102 = vmul.f32 %v582, %v1075
        %v1103 = vmul.f32 %v586, %v1075
        %v1104 = vmul.f32 %v593, %v1075
        %v1105 = vmul.f32 %v597, %v1075
        %v1106 = vmul.f32 %v1067, %v1075
        %v1107 = vmul.f32 %v1071, %v1075
        %v1108 = vadd.f32 %v1028, %v1076
        %v1109 = vadd.f32 %v1029, %v1077
        %v1110 = vadd.f32 %v1030, %v1078
        %v1111 = vadd.f32 %v1031, %v1079
        %v1112 = vadd.f32 %v1032, %v1080
        %v1113 = vadd.f32 %v1033, %v1081
        %v1114 = vadd.f32 %v1034, %v1082
        %v1115 = vadd.f32 %v1035, %v1083
        %v1116 = vadd.f32 %v1036, %v1084
        %v1117 = vadd.f32 %v1037, %v1085
        %v1118 = vadd.f32 %v1038, %v1086
        %v1119 = vadd.f32 %v1039, %v1087
        %v1120 = vadd.f32 %v1040, %v1088
        %v1121 = vadd.f32 %v1041, %v1089
        %v1122 = vadd.f32 %v1042, %v1090
        %v1123 = vadd.f32 %v1043, %v1091
        %v1124 = vadd.f32 %v1044, %v1092
        %v1125 = vadd.f32 %v1045, %v1093
        %v1126 = vadd.f32 %v1046, %v1094
        %v1127 = vadd.f32 %v1047, %v1095
        %v1128 = vadd.f32 %v1048, %v1096
        %v1129 = vadd.f32 %v1049, %v1097
        %v1130 = vadd.f32 %v1050, %v1098
        %v1131 = vadd.f32 %v1051, %v1099
        %v1132 = vadd.f32 %v1052, %v1100
        %v1133 = vadd.f32 %v1053, %v1101
        %v1134 = vadd.f32 %v1054, %v1102
        %v1135 = vadd.f32 %v1055, %v1103
        %v1136 = vadd.f32 %v1056, %v1104
        %v1137 = vadd.f32 %v1057, %v1105
        %v1138 = vadd.f32 %v1058, %v1106
        %v1139 = vadd.f32 %v1059, %v1107
        %v1140 = vld [vmem:[%s2 + $0x4] sm:$0x1]
        %s1142 = sor.u32 256, 1
        %1143 = vbcast.lane.b32.xlu0 %v1064, %s1142
        %v1144 = vpop.permute.xlu0 %1143
        %s1146 = sor.u32 256, 9
        %1147 = vbcast.lane.b32.xlu0 %v1064, %s1146
        %v1148 = vpop.permute.xlu0 %1147
        %v1149 = vlaneseq
        %v1150 = vshrl.u32 %v1149, 7
        %v1151 = vsub.s32 0, %v1150
        %v1152 = vrot.slane %v1140, %v1151
        %v1153 = vmul.f32 %v678, %v1152
        %v1154 = vmul.f32 %v682, %v1152
        %v1155 = vmul.f32 %v686, %v1152
        %v1156 = vmul.f32 %v690, %v1152
        %v1157 = vmul.f32 %v694, %v1152
        %v1158 = vmul.f32 %v698, %v1152
        %v1159 = vmul.f32 %v702, %v1152
        %v1160 = vmul.f32 %v706, %v1152
        %v1161 = vmul.f32 %v710, %v1152
        %v1162 = vmul.f32 %v714, %v1152
        %v1163 = vmul.f32 %v718, %v1152
        %v1164 = vmul.f32 %v722, %v1152
        %v1165 = vmul.f32 %v726, %v1152
        %v1166 = vmul.f32 %v730, %v1152
        %v1167 = vmul.f32 %v734, %v1152
        %v1168 = vmul.f32 %v738, %v1152
        %v1169 = vmul.f32 %v742, %v1152
        %v1170 = vmul.f32 %v746, %v1152
        %v1171 = vmul.f32 %v750, %v1152
        %v1172 = vmul.f32 %v754, %v1152
        %v1173 = vmul.f32 %v758, %v1152
        %v1174 = vmul.f32 %v762, %v1152
        %v1175 = vmul.f32 %v766, %v1152
        %v1176 = vmul.f32 %v770, %v1152
        %v1177 = vmul.f32 %v774, %v1152
        %v1178 = vmul.f32 %v778, %v1152
        %v1179 = vmul.f32 %v782, %v1152
        %v1180 = vmul.f32 %v786, %v1152
        %v1181 = vmul.f32 %v790, %v1152
        %v1182 = vmul.f32 %v794, %v1152
        %v1183 = vmul.f32 %v1144, %v1152
        %v1184 = vmul.f32 %v1148, %v1152
        %v1185 = vadd.f32 %v1108, %v1153
        %v1186 = vadd.f32 %v1109, %v1154
        %v1187 = vadd.f32 %v1110, %v1155
        %v1188 = vadd.f32 %v1111, %v1156
        %v1189 = vadd.f32 %v1112, %v1157
        %v1190 = vadd.f32 %v1113, %v1158
        %v1191 = vadd.f32 %v1114, %v1159
        %v1192 = vadd.f32 %v1115, %v1160
        %v1193 = vadd.f32 %v1116, %v1161
        %v1194 = vadd.f32 %v1117, %v1162
        %v1195 = vadd.f32 %v1118, %v1163
        %v1196 = vadd.f32 %v1119, %v1164
        %v1197 = vadd.f32 %v1120, %v1165
        %v1198 = vadd.f32 %v1121, %v1166
        %v1199 = vadd.f32 %v1122, %v1167
        %v1200 = vadd.f32 %v1123, %v1168
        %v1201 = vadd.f32 %v1124, %v1169
        %v1202 = vadd.f32 %v1125, %v1170
        %v1203 = vadd.f32 %v1126, %v1171
        %v1204 = vadd.f32 %v1127, %v1172
        %v1205 = vadd.f32 %v1128, %v1173
        %v1206 = vadd.f32 %v1129, %v1174
        %v1207 = vadd.f32 %v1130, %v1175
        %v1208 = vadd.f32 %v1131, %v1176
        %v1209 = vadd.f32 %v1132, %v1177
        %v1210 = vadd.f32 %v1133, %v1178
        %v1211 = vadd.f32 %v1134, %v1179
        %v1212 = vadd.f32 %v1135, %v1180
        %v1213 = vadd.f32 %v1136, %v1181
        %v1214 = vadd.f32 %v1137, %v1182
        %v1215 = vadd.f32 %v1138, %v1183
        %v1216 = vadd.f32 %v1139, %v1184
        %v1217 = vld [vmem:[%s2 + $0x5] sm:$0x1]
        %s1219 = sor.u32 256, 2
        %1220 = vbcast.lane.b32.xlu0 %v1064, %s1219
        %v1221 = vpop.permute.xlu0 %1220
        %s1223 = sor.u32 256, 10
        %1224 = vbcast.lane.b32.xlu0 %v1064, %s1223
        %v1225 = vpop.permute.xlu0 %1224
        %v1226 = vlaneseq
        %v1227 = vshrl.u32 %v1226, 7
        %v1228 = vsub.s32 0, %v1227
        %v1229 = vrot.slane %v1217, %v1228
        %v1230 = vmul.f32 %v875, %v1229
        %v1231 = vmul.f32 %v879, %v1229
        %v1232 = vmul.f32 %v883, %v1229
        %v1233 = vmul.f32 %v887, %v1229
        %v1234 = vmul.f32 %v891, %v1229
        %v1235 = vmul.f32 %v895, %v1229
        %v1236 = vmul.f32 %v899, %v1229
        %v1237 = vmul.f32 %v903, %v1229
        %v1238 = vmul.f32 %v907, %v1229
        %v1239 = vmul.f32 %v911, %v1229
        %v1240 = vmul.f32 %v915, %v1229
        %v1241 = vmul.f32 %v919, %v1229
        %v1242 = vmul.f32 %v923, %v1229
        %v1243 = vmul.f32 %v927, %v1229
        %v1244 = vmul.f32 %v931, %v1229
        %v1245 = vmul.f32 %v935, %v1229
        %v1246 = vmul.f32 %v939, %v1229
        %v1247 = vmul.f32 %v943, %v1229
        %v1248 = vmul.f32 %v947, %v1229
        %v1249 = vmul.f32 %v951, %v1229
        %v1250 = vmul.f32 %v955, %v1229
        %v1251 = vmul.f32 %v959, %v1229
        %v1252 = vmul.f32 %v963, %v1229
        %v1253 = vmul.f32 %v967, %v1229
        %v1254 = vmul.f32 %v971, %v1229
        %v1255 = vmul.f32 %v975, %v1229
        %v1256 = vmul.f32 %v979, %v1229
        %v1257 = vmul.f32 %v983, %v1229
        %v1258 = vmul.f32 %v987, %v1229
        %v1259 = vmul.f32 %v991, %v1229
        %v1260 = vmul.f32 %v1221, %v1229
        %v1261 = vmul.f32 %v1225, %v1229
        %v1262 = vadd.f32 %v1185, %v1230
        %v1263 = vadd.f32 %v1186, %v1231
        %v1264 = vadd.f32 %v1187, %v1232
        %v1265 = vadd.f32 %v1188, %v1233
        %v1266 = vadd.f32 %v1189, %v1234
        %v1267 = vadd.f32 %v1190, %v1235
        %v1268 = vadd.f32 %v1191, %v1236
        %v1269 = vadd.f32 %v1192, %v1237
        %v1270 = vadd.f32 %v1193, %v1238
        %v1271 = vadd.f32 %v1194, %v1239
        %v1272 = vadd.f32 %v1195, %v1240
        %v1273 = vadd.f32 %v1196, %v1241
        %v1274 = vadd.f32 %v1197, %v1242
        %v1275 = vadd.f32 %v1198, %v1243
        %v1276 = vadd.f32 %v1199, %v1244
        %v1277 = vadd.f32 %v1200, %v1245
        %v1278 = vadd.f32 %v1201, %v1246
        %v1279 = vadd.f32 %v1202, %v1247
        %v1280 = vadd.f32 %v1203, %v1248
        %v1281 = vadd.f32 %v1204, %v1249
        %v1282 = vadd.f32 %v1205, %v1250
        %v1283 = vadd.f32 %v1206, %v1251
        %v1284 = vadd.f32 %v1207, %v1252
        %v1285 = vadd.f32 %v1208, %v1253
        %v1286 = vadd.f32 %v1209, %v1254
        %v1287 = vadd.f32 %v1210, %v1255
        %v1288 = vadd.f32 %v1211, %v1256
        %v1289 = vadd.f32 %v1212, %v1257
        %v1290 = vadd.f32 %v1213, %v1258
        %v1291 = vadd.f32 %v1214, %v1259
        %v1292 = vadd.f32 %v1215, %v1260
        %v1293 = vadd.f32 %v1216, %v1261
        %v1294 = vld [vmem:[%s2 + $0x6] sm:$0x1]
        %v1295 = vlaneseq
        %v1296 = vshrl.u32 %v1295, 7
        %v1297 = vsub.s32 1, %v1296
        %v1298 = vrot.slane %v420, %v1297
        %1300 = vbcast.lane.b32.xlu0 %v1298, 256
        %v1301 = vpop.permute.xlu0 %1300
        %s1303 = sor.u32 256, 8
        %1304 = vbcast.lane.b32.xlu0 %v1298, %s1303
        %v1305 = vpop.permute.xlu0 %1304
        %v1306 = vlaneseq
        %v1307 = vshrl.u32 %v1306, 7
        %v1308 = vsub.s32 0, %v1307
        %v1309 = vrot.slane %v1294, %v1308
        %v1310 = vmul.f32 %v450, %v1309
        %v1311 = vmul.f32 %v454, %v1309
        %v1312 = vmul.f32 %v461, %v1309
        %v1313 = vmul.f32 %v465, %v1309
        %v1314 = vmul.f32 %v472, %v1309
        %v1315 = vmul.f32 %v476, %v1309
        %v1316 = vmul.f32 %v483, %v1309
        %v1317 = vmul.f32 %v487, %v1309
        %v1318 = vmul.f32 %v494, %v1309
        %v1319 = vmul.f32 %v498, %v1309
        %v1320 = vmul.f32 %v505, %v1309
        %v1321 = vmul.f32 %v509, %v1309
        %v1322 = vmul.f32 %v516, %v1309
        %v1323 = vmul.f32 %v520, %v1309
        %v1324 = vmul.f32 %v527, %v1309
        %v1325 = vmul.f32 %v531, %v1309
        %v1326 = vmul.f32 %v538, %v1309
        %v1327 = vmul.f32 %v542, %v1309
        %v1328 = vmul.f32 %v549, %v1309
        %v1329 = vmul.f32 %v553, %v1309
        %v1330 = vmul.f32 %v560, %v1309
        %v1331 = vmul.f32 %v564, %v1309
        %v1332 = vmul.f32 %v571, %v1309
        %v1333 = vmul.f32 %v575, %v1309
        %v1334 = vmul.f32 %v582, %v1309
        %v1335 = vmul.f32 %v586, %v1309
        %v1336 = vmul.f32 %v593, %v1309
        %v1337 = vmul.f32 %v597, %v1309
        %v1338 = vmul.f32 %v1067, %v1309
        %v1339 = vmul.f32 %v1071, %v1309
        %v1340 = vmul.f32 %v1301, %v1309
        %v1341 = vmul.f32 %v1305, %v1309
        %v1342 = vadd.f32 %v1262, %v1310
        %v1343 = vadd.f32 %v1263, %v1311
        %v1344 = vadd.f32 %v1264, %v1312
        %v1345 = vadd.f32 %v1265, %v1313
        %v1346 = vadd.f32 %v1266, %v1314
        %v1347 = vadd.f32 %v1267, %v1315
        %v1348 = vadd.f32 %v1268, %v1316
        %v1349 = vadd.f32 %v1269, %v1317
        %v1350 = vadd.f32 %v1270, %v1318
        %v1351 = vadd.f32 %v1271, %v1319
        %v1352 = vadd.f32 %v1272, %v1320
        %v1353 = vadd.f32 %v1273, %v1321
        %v1354 = vadd.f32 %v1274, %v1322
        %v1355 = vadd.f32 %v1275, %v1323
        %v1356 = vadd.f32 %v1276, %v1324
        %v1357 = vadd.f32 %v1277, %v1325
        %v1358 = vadd.f32 %v1278, %v1326
        %v1359 = vadd.f32 %v1279, %v1327
        %v1360 = vadd.f32 %v1280, %v1328
        %v1361 = vadd.f32 %v1281, %v1329
        %v1362 = vadd.f32 %v1282, %v1330
        %v1363 = vadd.f32 %v1283, %v1331
        %v1364 = vadd.f32 %v1284, %v1332
        %v1365 = vadd.f32 %v1285, %v1333
        %v1366 = vadd.f32 %v1286, %v1334
        %v1367 = vadd.f32 %v1287, %v1335
        %v1368 = vadd.f32 %v1288, %v1336
        %v1369 = vadd.f32 %v1289, %v1337
        %v1370 = vadd.f32 %v1290, %v1338
        %v1371 = vadd.f32 %v1291, %v1339
        %v1372 = vadd.f32 %v1292, %v1340
        %v1373 = vadd.f32 %v1293, %v1341
        %v1374 = vld [vmem:[%s2 + $0x7] sm:$0x1]
        %s1376 = sor.u32 256, 1
        %1377 = vbcast.lane.b32.xlu0 %v1298, %s1376
        %v1378 = vpop.permute.xlu0 %1377
        %s1380 = sor.u32 256, 9
        %1381 = vbcast.lane.b32.xlu0 %v1298, %s1380
        %v1382 = vpop.permute.xlu0 %1381
        %v1383 = vlaneseq
        %v1384 = vshrl.u32 %v1383, 7
        %v1385 = vsub.s32 0, %v1384
        %v1386 = vrot.slane %v1374, %v1385
        %v1387 = vmul.f32 %v686, %v1386
        %v1388 = vmul.f32 %v690, %v1386
        %v1389 = vmul.f32 %v694, %v1386
        %v1390 = vmul.f32 %v698, %v1386
        %v1391 = vmul.f32 %v702, %v1386
        %v1392 = vmul.f32 %v706, %v1386
        %v1393 = vmul.f32 %v710, %v1386
        %v1394 = vmul.f32 %v714, %v1386
        %v1395 = vmul.f32 %v718, %v1386
        %v1396 = vmul.f32 %v722, %v1386
        %v1397 = vmul.f32 %v726, %v1386
        %v1398 = vmul.f32 %v730, %v1386
        %v1399 = vmul.f32 %v734, %v1386
        %v1400 = vmul.f32 %v738, %v1386
        %v1401 = vmul.f32 %v742, %v1386
        %v1402 = vmul.f32 %v746, %v1386
        %v1403 = vmul.f32 %v750, %v1386
        %v1404 = vmul.f32 %v754, %v1386
        %v1405 = vmul.f32 %v758, %v1386
        %v1406 = vmul.f32 %v762, %v1386
        %v1407 = vmul.f32 %v766, %v1386
        %v1408 = vmul.f32 %v770, %v1386
        %v1409 = vmul.f32 %v774, %v1386
        %v1410 = vmul.f32 %v778, %v1386
        %v1411 = vmul.f32 %v782, %v1386
        %v1412 = vmul.f32 %v786, %v1386
        %v1413 = vmul.f32 %v790, %v1386
        %v1414 = vmul.f32 %v794, %v1386
        %v1415 = vmul.f32 %v1144, %v1386
        %v1416 = vmul.f32 %v1148, %v1386
        %v1417 = vmul.f32 %v1378, %v1386
        %v1418 = vmul.f32 %v1382, %v1386
        %v1419 = vadd.f32 %v1342, %v1387
        %v1420 = vadd.f32 %v1343, %v1388
        %v1421 = vadd.f32 %v1344, %v1389
        %v1422 = vadd.f32 %v1345, %v1390
        %v1423 = vadd.f32 %v1346, %v1391
        %v1424 = vadd.f32 %v1347, %v1392
        %v1425 = vadd.f32 %v1348, %v1393
        %v1426 = vadd.f32 %v1349, %v1394
        %v1427 = vadd.f32 %v1350, %v1395
        %v1428 = vadd.f32 %v1351, %v1396
        %v1429 = vadd.f32 %v1352, %v1397
        %v1430 = vadd.f32 %v1353, %v1398
        %v1431 = vadd.f32 %v1354, %v1399
        %v1432 = vadd.f32 %v1355, %v1400
        %v1433 = vadd.f32 %v1356, %v1401
        %v1434 = vadd.f32 %v1357, %v1402
        %v1435 = vadd.f32 %v1358, %v1403
        %v1436 = vadd.f32 %v1359, %v1404
        %v1437 = vadd.f32 %v1360, %v1405
        %v1438 = vadd.f32 %v1361, %v1406
        %v1439 = vadd.f32 %v1362, %v1407
        %v1440 = vadd.f32 %v1363, %v1408
        %v1441 = vadd.f32 %v1364, %v1409
        %v1442 = vadd.f32 %v1365, %v1410
        %v1443 = vadd.f32 %v1366, %v1411
        %v1444 = vadd.f32 %v1367, %v1412
        %v1445 = vadd.f32 %v1368, %v1413
        %v1446 = vadd.f32 %v1369, %v1414
        %v1447 = vadd.f32 %v1370, %v1415
        %v1448 = vadd.f32 %v1371, %v1416
        %v1449 = vadd.f32 %v1372, %v1417
        %v1450 = vadd.f32 %v1373, %v1418
        %v1451 = vld [vmem:[%s2 + $0x8] sm:$0x1]
        %s1453 = sor.u32 256, 2
        %1454 = vbcast.lane.b32.xlu0 %v1298, %s1453
        %v1455 = vpop.permute.xlu0 %1454
        %s1457 = sor.u32 256, 10
        %1458 = vbcast.lane.b32.xlu0 %v1298, %s1457
        %v1459 = vpop.permute.xlu0 %1458
        %v1460 = vlaneseq
        %v1461 = vshrl.u32 %v1460, 7
        %v1462 = vsub.s32 0, %v1461
        %v1463 = vrot.slane %v1451, %v1462
        %v1464 = vmul.f32 %v883, %v1463
        %v1465 = vmul.f32 %v887, %v1463
        %v1466 = vmul.f32 %v891, %v1463
        %v1467 = vmul.f32 %v895, %v1463
        %v1468 = vmul.f32 %v899, %v1463
        %v1469 = vmul.f32 %v903, %v1463
        %v1470 = vmul.f32 %v907, %v1463
        %v1471 = vmul.f32 %v911, %v1463
        %v1472 = vmul.f32 %v915, %v1463
        %v1473 = vmul.f32 %v919, %v1463
        %v1474 = vmul.f32 %v923, %v1463
        %v1475 = vmul.f32 %v927, %v1463
        %v1476 = vmul.f32 %v931, %v1463
        %v1477 = vmul.f32 %v935, %v1463
        %v1478 = vmul.f32 %v939, %v1463
        %v1479 = vmul.f32 %v943, %v1463
        %v1480 = vmul.f32 %v947, %v1463
        %v1481 = vmul.f32 %v951, %v1463
        %v1482 = vmul.f32 %v955, %v1463
        %v1483 = vmul.f32 %v959, %v1463
        %v1484 = vmul.f32 %v963, %v1463
        %v1485 = vmul.f32 %v967, %v1463
        %v1486 = vmul.f32 %v971, %v1463
        %v1487 = vmul.f32 %v975, %v1463
        %v1488 = vmul.f32 %v979, %v1463
        %v1489 = vmul.f32 %v983, %v1463
        %v1490 = vmul.f32 %v987, %v1463
        %v1491 = vmul.f32 %v991, %v1463
        %v1492 = vmul.f32 %v1221, %v1463
        %v1493 = vmul.f32 %v1225, %v1463
        %v1494 = vmul.f32 %v1455, %v1463
        %v1495 = vmul.f32 %v1459, %v1463
        %v1496 = vadd.f32 %v1419, %v1464
        %v1497 = vadd.f32 %v1420, %v1465
        %v1498 = vadd.f32 %v1421, %v1466
        %v1499 = vadd.f32 %v1422, %v1467
        %v1500 = vadd.f32 %v1423, %v1468
        %v1501 = vadd.f32 %v1424, %v1469
        %v1502 = vadd.f32 %v1425, %v1470
        %v1503 = vadd.f32 %v1426, %v1471
        %v1504 = vadd.f32 %v1427, %v1472
        %v1505 = vadd.f32 %v1428, %v1473
        %v1506 = vadd.f32 %v1429, %v1474
        %v1507 = vadd.f32 %v1430, %v1475
        %v1508 = vadd.f32 %v1431, %v1476
        %v1509 = vadd.f32 %v1432, %v1477
        %v1510 = vadd.f32 %v1433, %v1478
        %v1511 = vadd.f32 %v1434, %v1479
        %v1512 = vadd.f32 %v1435, %v1480
        %v1513 = vadd.f32 %v1436, %v1481
        %v1514 = vadd.f32 %v1437, %v1482
        %v1515 = vadd.f32 %v1438, %v1483
        %v1516 = vadd.f32 %v1439, %v1484
        %v1517 = vadd.f32 %v1440, %v1485
        %v1518 = vadd.f32 %v1441, %v1486
        %v1519 = vadd.f32 %v1442, %v1487
        %v1520 = vadd.f32 %v1443, %v1488
        %v1521 = vadd.f32 %v1444, %v1489
        %v1522 = vadd.f32 %v1445, %v1490
        %v1523 = vadd.f32 %v1446, %v1491
        %v1524 = vadd.f32 %v1447, %v1492
        %v1525 = vadd.f32 %v1448, %v1493
        %v1526 = vadd.f32 %v1449, %v1494
        %v1527 = vadd.f32 %v1450, %v1495
        %v1528 = vld [vmem:[%s3] sm:$0x1]
        %v1530 = vlaneseq
        %v1531 = vshrl.u32 %v1530, 7
        %v1532 = vsub.s32 0, %v1531
        %v1533 = vrot.slane %v1528, %v1532
        %v1535 = vadd.f32 %v1496, %v1533
        %v1536 = vadd.f32 %v1497, %v1533
        %v1537 = vadd.f32 %v1498, %v1533
        %v1538 = vadd.f32 %v1499, %v1533
        %v1539 = vadd.f32 %v1500, %v1533
        %v1540 = vadd.f32 %v1501, %v1533
        %v1541 = vadd.f32 %v1502, %v1533
        %v1542 = vadd.f32 %v1503, %v1533
        %v1543 = vadd.f32 %v1504, %v1533
        %v1544 = vadd.f32 %v1505, %v1533
        %v1545 = vadd.f32 %v1506, %v1533
        %v1546 = vadd.f32 %v1507, %v1533
        %v1547 = vadd.f32 %v1508, %v1533
        %v1548 = vadd.f32 %v1509, %v1533
        %v1549 = vadd.f32 %v1510, %v1533
        %v1550 = vadd.f32 %v1511, %v1533
        %v1551 = vadd.f32 %v1512, %v1533
        %v1552 = vadd.f32 %v1513, %v1533
        %v1553 = vadd.f32 %v1514, %v1533
        %v1554 = vadd.f32 %v1515, %v1533
        %v1555 = vadd.f32 %v1516, %v1533
        %v1556 = vadd.f32 %v1517, %v1533
        %v1557 = vadd.f32 %v1518, %v1533
        %v1558 = vadd.f32 %v1519, %v1533
        %v1559 = vadd.f32 %v1520, %v1533
        %v1560 = vadd.f32 %v1521, %v1533
        %v1561 = vadd.f32 %v1522, %v1533
        %v1562 = vadd.f32 %v1523, %v1533
        %v1563 = vadd.f32 %v1524, %v1533
        %v1564 = vadd.f32 %v1525, %v1533
        %v1565 = vadd.f32 %v1526, %v1533
        %v1566 = vadd.f32 %v1527, %v1533
        %v1567 = vmax.f32 %v1535, 0.0
        %v1568 = vmax.f32 %v1536, 0.0
        %v1569 = vmax.f32 %v1537, 0.0
        %v1570 = vmax.f32 %v1538, 0.0
        %v1571 = vmax.f32 %v1539, 0.0
        %v1572 = vmax.f32 %v1540, 0.0
        %v1573 = vmax.f32 %v1541, 0.0
        %v1574 = vmax.f32 %v1542, 0.0
        %v1575 = vmax.f32 %v1543, 0.0
        %v1576 = vmax.f32 %v1544, 0.0
        %v1577 = vmax.f32 %v1545, 0.0
        %v1578 = vmax.f32 %v1546, 0.0
        %v1579 = vmax.f32 %v1547, 0.0
        %v1580 = vmax.f32 %v1548, 0.0
        %v1581 = vmax.f32 %v1549, 0.0
        %v1582 = vmax.f32 %v1550, 0.0
        %v1583 = vmax.f32 %v1551, 0.0
        %v1584 = vmax.f32 %v1552, 0.0
        %v1585 = vmax.f32 %v1553, 0.0
        %v1586 = vmax.f32 %v1554, 0.0
        %v1587 = vmax.f32 %v1555, 0.0
        %v1588 = vmax.f32 %v1556, 0.0
        %v1589 = vmax.f32 %v1557, 0.0
        %v1590 = vmax.f32 %v1558, 0.0
        %v1591 = vmax.f32 %v1559, 0.0
        %v1592 = vmax.f32 %v1560, 0.0
        %v1593 = vmax.f32 %v1561, 0.0
        %v1594 = vmax.f32 %v1562, 0.0
        %v1595 = vmax.f32 %v1563, 0.0
        %v1596 = vmax.f32 %v1564, 0.0
        %v1597 = vmax.f32 %v1565, 0.0
        %v1598 = vmax.f32 %v1566, 0.0
        %v1599 = vpack.c.bf16 %v1568, %v1567
        %v1600 = vpack.c.bf16 %v1570, %v1569
        %v1601 = vpack.c.bf16 %v1572, %v1571
        %v1602 = vpack.c.bf16 %v1574, %v1573
        %v1603 = vpack.c.bf16 %v1576, %v1575
        %v1604 = vpack.c.bf16 %v1578, %v1577
        %v1605 = vpack.c.bf16 %v1580, %v1579
        %v1606 = vpack.c.bf16 %v1582, %v1581
        %v1607 = vpack.c.bf16 %v1584, %v1583
        %v1608 = vpack.c.bf16 %v1586, %v1585
        %v1609 = vpack.c.bf16 %v1588, %v1587
        %v1610 = vpack.c.bf16 %v1590, %v1589
        %v1611 = vpack.c.bf16 %v1592, %v1591
        %v1612 = vpack.c.bf16 %v1594, %v1593
        %v1613 = vpack.c.bf16 %v1596, %v1595
        %v1614 = vpack.c.bf16 %v1598, %v1597
        %v1631 = vunpack.c.l.b16 %v1599
        %v1632 = vunpack.c.h.b16 %v1599
        %v1633 = vunpack.c.l.b16 %v1600
        %v1634 = vunpack.c.h.b16 %v1600
        %v1635 = vunpack.c.l.b16 %v1601
        %v1636 = vunpack.c.h.b16 %v1601
        %v1637 = vunpack.c.l.b16 %v1602
        %v1638 = vunpack.c.h.b16 %v1602
        %v1639 = vunpack.c.l.b16 %v1603
        %v1640 = vunpack.c.h.b16 %v1603
        %v1641 = vunpack.c.l.b16 %v1604
        %v1642 = vunpack.c.h.b16 %v1604
        %v1643 = vunpack.c.l.b16 %v1605
        %v1644 = vunpack.c.h.b16 %v1605
        %v1645 = vunpack.c.l.b16 %v1606
        %v1646 = vunpack.c.h.b16 %v1606
        %v1647 = vunpack.c.l.b16 %v1607
        %v1648 = vunpack.c.h.b16 %v1607
        %v1649 = vunpack.c.l.b16 %v1608
        %v1650 = vunpack.c.h.b16 %v1608
        %v1651 = vunpack.c.l.b16 %v1609
        %v1652 = vunpack.c.h.b16 %v1609
        %v1653 = vunpack.c.l.b16 %v1610
        %v1654 = vunpack.c.h.b16 %v1610
        %v1655 = vunpack.c.l.b16 %v1611
        %v1656 = vunpack.c.h.b16 %v1611
        %v1657 = vunpack.c.l.b16 %v1612
        %v1658 = vunpack.c.h.b16 %v1612
        %v1659 = vunpack.c.l.b16 %v1613
        %v1660 = vunpack.c.h.b16 %v1613
        %v1661 = vunpack.c.l.b16 %v1614
        %v1662 = vunpack.c.h.b16 %v1614
        %v1663 = vpack.c.b16 %v1631, %v1631
        %v1664 = vpack.c.b16 %v1632, %v1632
        %v1665 = vpack.c.b16 %v1633, %v1633
        %v1666 = vpack.c.b16 %v1634, %v1634
        %v1667 = vpack.c.b16 %v1635, %v1635
        %v1668 = vpack.c.b16 %v1636, %v1636
        %v1669 = vpack.c.b16 %v1637, %v1637
        %v1670 = vpack.c.b16 %v1638, %v1638
        %v1671 = vpack.c.b16 %v1639, %v1639
        %v1672 = vpack.c.b16 %v1640, %v1640
        %v1673 = vpack.c.b16 %v1641, %v1641
        %v1674 = vpack.c.b16 %v1642, %v1642
        %v1675 = vpack.c.b16 %v1643, %v1643
        %v1676 = vpack.c.b16 %v1644, %v1644
        %v1677 = vpack.c.b16 %v1645, %v1645
        %v1678 = vpack.c.b16 %v1646, %v1646
        %v1679 = vpack.c.b16 %v1647, %v1647
        %v1680 = vpack.c.b16 %v1648, %v1648
        %v1681 = vpack.c.b16 %v1649, %v1649
        %v1682 = vpack.c.b16 %v1650, %v1650
        %v1683 = vpack.c.b16 %v1651, %v1651
        %v1684 = vpack.c.b16 %v1652, %v1652
        %v1685 = vpack.c.b16 %v1653, %v1653
        %v1686 = vpack.c.b16 %v1654, %v1654
        %v1687 = vpack.c.b16 %v1655, %v1655
        %v1688 = vpack.c.b16 %v1656, %v1656
        %v1689 = vpack.c.b16 %v1657, %v1657
        %v1690 = vpack.c.b16 %v1658, %v1658
        %v1691 = vpack.c.b16 %v1659, %v1659
        %v1692 = vpack.c.b16 %v1660, %v1660
        %v1693 = vpack.c.b16 %v1661, %v1661
        %v1694 = vpack.c.b16 %v1662, %v1662
        %1727 = vst [vmem:[%s317] sm:$0xf] %v1663
        %1728 = vst [vmem:[%s317 + $0x4] sm:$0xf] %v1664
        %1729 = vst [vmem:[%s317 + $0x8] sm:$0xf] %v1665
        %1730 = vst [vmem:[%s317 + $0xc] sm:$0xf] %v1666
        %1731 = vst [vmem:[%s317 + $0x10] sm:$0xf] %v1667
        %1732 = vst [vmem:[%s317 + $0x14] sm:$0xf] %v1668
        %1733 = vst [vmem:[%s317 + $0x18] sm:$0xf] %v1669
        %1734 = vst [vmem:[%s317 + $0x1c] sm:$0xf] %v1670
        %1735 = vst [vmem:[%s317 + $0x20] sm:$0xf] %v1671
        %1736 = vst [vmem:[%s317 + $0x24] sm:$0xf] %v1672
        %1737 = vst [vmem:[%s317 + $0x28] sm:$0xf] %v1673
        %1738 = vst [vmem:[%s317 + $0x2c] sm:$0xf] %v1674
        %1739 = vst [vmem:[%s317 + $0x30] sm:$0xf] %v1675
        %1740 = vst [vmem:[%s317 + $0x34] sm:$0xf] %v1676
        %1741 = vst [vmem:[%s317 + $0x38] sm:$0xf] %v1677
        %1742 = vst [vmem:[%s317 + $0x3c] sm:$0xf] %v1678
        %1743 = vst [vmem:[%s317 + $0x40] sm:$0xf] %v1679
        %1744 = vst [vmem:[%s317 + $0x44] sm:$0xf] %v1680
        %1745 = vst [vmem:[%s317 + $0x48] sm:$0xf] %v1681
        %1746 = vst [vmem:[%s317 + $0x4c] sm:$0xf] %v1682
        %1747 = vst [vmem:[%s317 + $0x50] sm:$0xf] %v1683
        %1748 = vst [vmem:[%s317 + $0x54] sm:$0xf] %v1684
        %1749 = vst [vmem:[%s317 + $0x58] sm:$0xf] %v1685
        %1750 = vst [vmem:[%s317 + $0x5c] sm:$0xf] %v1686
        %1751 = vst [vmem:[%s317 + $0x60] sm:$0xf] %v1687
        %1752 = vst [vmem:[%s317 + $0x64] sm:$0xf] %v1688
        %1753 = vst [vmem:[%s317 + $0x68] sm:$0xf] %v1689
        %1754 = vst [vmem:[%s317 + $0x6c] sm:$0xf] %v1690
        %1755 = vst [vmem:[%s317 + $0x70] sm:$0xf] %v1691
        %1756 = vst [vmem:[%s317 + $0x74] sm:$0xf] %v1692
        %1757 = vst [vmem:[%s317 + $0x78] sm:$0xf] %v1693
        %1758 = vst [vmem:[%s317 + $0x7c] sm:$0xf] %v1694
        %v1759 = vmul.f32 %v335, 0.299
        %v1760 = vmul.f32 %v336, 0.299
        %v1761 = vmul.f32 %v337, 0.587
        %v1762 = vmul.f32 %v338, 0.587
        %v1763 = vadd.f32 %v1759, %v1761
        %v1764 = vadd.f32 %v1760, %v1762
        %v1765 = vmul.f32 %v339, 0.114
        %v1766 = vmul.f32 %v340, 0.114
        %v1767 = vadd.f32 %v1763, %v1765
        %v1768 = vadd.f32 %v1764, %v1766
        %v1769 = vsub.f32 %v1767, 0.5
        %v1770 = vsub.f32 %v1768, 0.5
        %v1771 = vmul.f32 %v1769, 4.4444447
        %v1772 = vmul.f32 %v1770, 4.4444447
        %v1775 = vrot.slane %v1771, 7
        %v1776 = vrot.slane %v1772, 7
        %v1777 = vsel %vm394, %v1775, %v1776
        %v1780 = vsel %vm394, 0.0, %v1775
        %v1781 = vsel %vm394, %v1776, 0.0
        %1784 = vrot.lane.b32.xlu0 %v1780, 1
        %v1785 = vpop.permute.xlu0 %1784
        %1786 = vrot.lane.b32.xlu0 %v1777, 1
        %v1787 = vpop.permute.xlu0 %1786
        %1788 = vrot.lane.b32.xlu0 %v1781, 1
        %v1789 = vpop.permute.xlu0 %1788
        %v1793 = vsel %vm413, 0.0, %v1785
        %v1794 = vsel %vm413, 0.0, %v1787
        %v1795 = vsel %vm413, 0.0, %v1789
        %v1796 = vsel %vm417, %v1793, 0.0
        %v1797 = vsel %vm417, %v1794, 0.0
        %v1798 = vsel %vm417, %v1795, 0.0
        %v1799 = vld [vmem:[%s2] sm:$0x1]
        %v1800 = vlaneseq
        %v1801 = vshrl.u32 %v1800, 7
        %v1802 = vsub.s32 0, %v1801
        %v1803 = vrot.slane %v1796, %v1802
        %1805 = vbcast.lane.b32.xlu0 %v1803, 256
        %v1806 = vpop.permute.xlu0 %1805
        %s1808 = sor.u32 256, 8
        %1809 = vbcast.lane.b32.xlu0 %v1803, %s1808
        %v1810 = vpop.permute.xlu0 %1809
        %v1811 = vlaneseq
        %v1812 = vshrl.u32 %v1811, 7
        %v1813 = vsub.s32 1, %v1812
        %v1814 = vrot.slane %v1796, %v1813
        %1816 = vbcast.lane.b32.xlu0 %v1814, 256
        %v1817 = vpop.permute.xlu0 %1816
        %s1819 = sor.u32 256, 8
        %1820 = vbcast.lane.b32.xlu0 %v1814, %s1819
        %v1821 = vpop.permute.xlu0 %1820
        %v1822 = vlaneseq
        %v1823 = vshrl.u32 %v1822, 7
        %v1824 = vsub.s32 2, %v1823
        %v1825 = vrot.slane %v1796, %v1824
        %1827 = vbcast.lane.b32.xlu0 %v1825, 256
        %v1828 = vpop.permute.xlu0 %1827
        %s1830 = sor.u32 256, 8
        %1831 = vbcast.lane.b32.xlu0 %v1825, %s1830
        %v1832 = vpop.permute.xlu0 %1831
        %v1833 = vlaneseq
        %v1834 = vshrl.u32 %v1833, 7
        %v1835 = vsub.s32 3, %v1834
        %v1836 = vrot.slane %v1796, %v1835
        %1838 = vbcast.lane.b32.xlu0 %v1836, 256
        %v1839 = vpop.permute.xlu0 %1838
        %s1841 = sor.u32 256, 8
        %1842 = vbcast.lane.b32.xlu0 %v1836, %s1841
        %v1843 = vpop.permute.xlu0 %1842
        %v1844 = vlaneseq
        %v1845 = vshrl.u32 %v1844, 7
        %v1846 = vsub.s32 4, %v1845
        %v1847 = vrot.slane %v1796, %v1846
        %1849 = vbcast.lane.b32.xlu0 %v1847, 256
        %v1850 = vpop.permute.xlu0 %1849
        %s1852 = sor.u32 256, 8
        %1853 = vbcast.lane.b32.xlu0 %v1847, %s1852
        %v1854 = vpop.permute.xlu0 %1853
        %v1855 = vlaneseq
        %v1856 = vshrl.u32 %v1855, 7
        %v1857 = vsub.s32 5, %v1856
        %v1858 = vrot.slane %v1796, %v1857
        %1860 = vbcast.lane.b32.xlu0 %v1858, 256
        %v1861 = vpop.permute.xlu0 %1860
        %s1863 = sor.u32 256, 8
        %1864 = vbcast.lane.b32.xlu0 %v1858, %s1863
        %v1865 = vpop.permute.xlu0 %1864
        %v1866 = vlaneseq
        %v1867 = vshrl.u32 %v1866, 7
        %v1868 = vsub.s32 6, %v1867
        %v1869 = vrot.slane %v1796, %v1868
        %1871 = vbcast.lane.b32.xlu0 %v1869, 256
        %v1872 = vpop.permute.xlu0 %1871
        %s1874 = sor.u32 256, 8
        %1875 = vbcast.lane.b32.xlu0 %v1869, %s1874
        %v1876 = vpop.permute.xlu0 %1875
        %v1877 = vlaneseq
        %v1878 = vshrl.u32 %v1877, 7
        %v1879 = vsub.s32 7, %v1878
        %v1880 = vrot.slane %v1796, %v1879
        %1882 = vbcast.lane.b32.xlu0 %v1880, 256
        %v1883 = vpop.permute.xlu0 %1882
        %s1885 = sor.u32 256, 8
        %1886 = vbcast.lane.b32.xlu0 %v1880, %s1885
        %v1887 = vpop.permute.xlu0 %1886
        %v1888 = vlaneseq
        %v1889 = vshrl.u32 %v1888, 7
        %v1890 = vsub.s32 0, %v1889
        %v1891 = vrot.slane %v1797, %v1890
        %1893 = vbcast.lane.b32.xlu0 %v1891, 256
        %v1894 = vpop.permute.xlu0 %1893
        %s1896 = sor.u32 256, 8
        %1897 = vbcast.lane.b32.xlu0 %v1891, %s1896
        %v1898 = vpop.permute.xlu0 %1897
        %v1899 = vlaneseq
        %v1900 = vshrl.u32 %v1899, 7
        %v1901 = vsub.s32 1, %v1900
        %v1902 = vrot.slane %v1797, %v1901
        %1904 = vbcast.lane.b32.xlu0 %v1902, 256
        %v1905 = vpop.permute.xlu0 %1904
        %s1907 = sor.u32 256, 8
        %1908 = vbcast.lane.b32.xlu0 %v1902, %s1907
        %v1909 = vpop.permute.xlu0 %1908
        %v1910 = vlaneseq
        %v1911 = vshrl.u32 %v1910, 7
        %v1912 = vsub.s32 2, %v1911
        %v1913 = vrot.slane %v1797, %v1912
        %1915 = vbcast.lane.b32.xlu0 %v1913, 256
        %v1916 = vpop.permute.xlu0 %1915
        %s1918 = sor.u32 256, 8
        %1919 = vbcast.lane.b32.xlu0 %v1913, %s1918
        %v1920 = vpop.permute.xlu0 %1919
        %v1921 = vlaneseq
        %v1922 = vshrl.u32 %v1921, 7
        %v1923 = vsub.s32 3, %v1922
        %v1924 = vrot.slane %v1797, %v1923
        %1926 = vbcast.lane.b32.xlu0 %v1924, 256
        %v1927 = vpop.permute.xlu0 %1926
        %s1929 = sor.u32 256, 8
        %1930 = vbcast.lane.b32.xlu0 %v1924, %s1929
        %v1931 = vpop.permute.xlu0 %1930
        %v1932 = vlaneseq
        %v1933 = vshrl.u32 %v1932, 7
        %v1934 = vsub.s32 4, %v1933
        %v1935 = vrot.slane %v1797, %v1934
        %1937 = vbcast.lane.b32.xlu0 %v1935, 256
        %v1938 = vpop.permute.xlu0 %1937
        %s1940 = sor.u32 256, 8
        %1941 = vbcast.lane.b32.xlu0 %v1935, %s1940
        %v1942 = vpop.permute.xlu0 %1941
        %v1943 = vlaneseq
        %v1944 = vshrl.u32 %v1943, 7
        %v1945 = vsub.s32 5, %v1944
        %v1946 = vrot.slane %v1797, %v1945
        %1948 = vbcast.lane.b32.xlu0 %v1946, 256
        %v1949 = vpop.permute.xlu0 %1948
        %s1951 = sor.u32 256, 8
        %1952 = vbcast.lane.b32.xlu0 %v1946, %s1951
        %v1953 = vpop.permute.xlu0 %1952
        %v1954 = vlaneseq
        %v1955 = vshrl.u32 %v1954, 7
        %v1956 = vsub.s32 6, %v1955
        %v1957 = vrot.slane %v1797, %v1956
        %1959 = vbcast.lane.b32.xlu0 %v1957, 256
        %v1960 = vpop.permute.xlu0 %1959
        %s1962 = sor.u32 256, 8
        %1963 = vbcast.lane.b32.xlu0 %v1957, %s1962
        %v1964 = vpop.permute.xlu0 %1963
        %v1965 = vlaneseq
        %v1966 = vshrl.u32 %v1965, 7
        %v1967 = vsub.s32 7, %v1966
        %v1968 = vrot.slane %v1797, %v1967
        %1970 = vbcast.lane.b32.xlu0 %v1968, 256
        %v1971 = vpop.permute.xlu0 %1970
        %s1973 = sor.u32 256, 8
        %1974 = vbcast.lane.b32.xlu0 %v1968, %s1973
        %v1975 = vpop.permute.xlu0 %1974
        %v1976 = vlaneseq
        %v1977 = vshrl.u32 %v1976, 7
        %v1978 = vsub.s32 0, %v1977
        %v1979 = vrot.slane %v1799, %v1978
        %v1980 = vmul.f32 %v1806, %v1979
        %v1981 = vmul.f32 %v1810, %v1979
        %v1982 = vmul.f32 %v1817, %v1979
        %v1983 = vmul.f32 %v1821, %v1979
        %v1984 = vmul.f32 %v1828, %v1979
        %v1985 = vmul.f32 %v1832, %v1979
        %v1986 = vmul.f32 %v1839, %v1979
        %v1987 = vmul.f32 %v1843, %v1979
        %v1988 = vmul.f32 %v1850, %v1979
        %v1989 = vmul.f32 %v1854, %v1979
        %v1990 = vmul.f32 %v1861, %v1979
        %v1991 = vmul.f32 %v1865, %v1979
        %v1992 = vmul.f32 %v1872, %v1979
        %v1993 = vmul.f32 %v1876, %v1979
        %v1994 = vmul.f32 %v1883, %v1979
        %v1995 = vmul.f32 %v1887, %v1979
        %v1996 = vmul.f32 %v1894, %v1979
        %v1997 = vmul.f32 %v1898, %v1979
        %v1998 = vmul.f32 %v1905, %v1979
        %v1999 = vmul.f32 %v1909, %v1979
        %v2000 = vmul.f32 %v1916, %v1979
        %v2001 = vmul.f32 %v1920, %v1979
        %v2002 = vmul.f32 %v1927, %v1979
        %v2003 = vmul.f32 %v1931, %v1979
        %v2004 = vmul.f32 %v1938, %v1979
        %v2005 = vmul.f32 %v1942, %v1979
        %v2006 = vmul.f32 %v1949, %v1979
        %v2007 = vmul.f32 %v1953, %v1979
        %v2008 = vmul.f32 %v1960, %v1979
        %v2009 = vmul.f32 %v1964, %v1979
        %v2010 = vmul.f32 %v1971, %v1979
        %v2011 = vmul.f32 %v1975, %v1979
        %v2012 = vadd.f32 %v1980, 0.0
        %v2013 = vadd.f32 %v1981, 0.0
        %v2014 = vadd.f32 %v1982, 0.0
        %v2015 = vadd.f32 %v1983, 0.0
        %v2016 = vadd.f32 %v1984, 0.0
        %v2017 = vadd.f32 %v1985, 0.0
        %v2018 = vadd.f32 %v1986, 0.0
        %v2019 = vadd.f32 %v1987, 0.0
        %v2020 = vadd.f32 %v1988, 0.0
        %v2021 = vadd.f32 %v1989, 0.0
        %v2022 = vadd.f32 %v1990, 0.0
        %v2023 = vadd.f32 %v1991, 0.0
        %v2024 = vadd.f32 %v1992, 0.0
        %v2025 = vadd.f32 %v1993, 0.0
        %v2026 = vadd.f32 %v1994, 0.0
        %v2027 = vadd.f32 %v1995, 0.0
        %v2028 = vadd.f32 %v1996, 0.0
        %v2029 = vadd.f32 %v1997, 0.0
        %v2030 = vadd.f32 %v1998, 0.0
        %v2031 = vadd.f32 %v1999, 0.0
        %v2032 = vadd.f32 %v2000, 0.0
        %v2033 = vadd.f32 %v2001, 0.0
        %v2034 = vadd.f32 %v2002, 0.0
        %v2035 = vadd.f32 %v2003, 0.0
        %v2036 = vadd.f32 %v2004, 0.0
        %v2037 = vadd.f32 %v2005, 0.0
        %v2038 = vadd.f32 %v2006, 0.0
        %v2039 = vadd.f32 %v2007, 0.0
        %v2040 = vadd.f32 %v2008, 0.0
        %v2041 = vadd.f32 %v2009, 0.0
        %v2042 = vadd.f32 %v2010, 0.0
        %v2043 = vadd.f32 %v2011, 0.0
        %v2044 = vld [vmem:[%s2 + $0x1] sm:$0x1]
        %s2046 = sor.u32 256, 1
        %2047 = vbcast.lane.b32.xlu0 %v1803, %s2046
        %v2048 = vpop.permute.xlu0 %2047
        %s2050 = sor.u32 256, 9
        %2051 = vbcast.lane.b32.xlu0 %v1803, %s2050
        %v2052 = vpop.permute.xlu0 %2051
        %s2054 = sor.u32 256, 1
        %2055 = vbcast.lane.b32.xlu0 %v1814, %s2054
        %v2056 = vpop.permute.xlu0 %2055
        %s2058 = sor.u32 256, 9
        %2059 = vbcast.lane.b32.xlu0 %v1814, %s2058
        %v2060 = vpop.permute.xlu0 %2059
        %s2062 = sor.u32 256, 1
        %2063 = vbcast.lane.b32.xlu0 %v1825, %s2062
        %v2064 = vpop.permute.xlu0 %2063
        %s2066 = sor.u32 256, 9
        %2067 = vbcast.lane.b32.xlu0 %v1825, %s2066
        %v2068 = vpop.permute.xlu0 %2067
        %s2070 = sor.u32 256, 1
        %2071 = vbcast.lane.b32.xlu0 %v1836, %s2070
        %v2072 = vpop.permute.xlu0 %2071
        %s2074 = sor.u32 256, 9
        %2075 = vbcast.lane.b32.xlu0 %v1836, %s2074
        %v2076 = vpop.permute.xlu0 %2075
        %s2078 = sor.u32 256, 1
        %2079 = vbcast.lane.b32.xlu0 %v1847, %s2078
        %v2080 = vpop.permute.xlu0 %2079
        %s2082 = sor.u32 256, 9
        %2083 = vbcast.lane.b32.xlu0 %v1847, %s2082
        %v2084 = vpop.permute.xlu0 %2083
        %s2086 = sor.u32 256, 1
        %2087 = vbcast.lane.b32.xlu0 %v1858, %s2086
        %v2088 = vpop.permute.xlu0 %2087
        %s2090 = sor.u32 256, 9
        %2091 = vbcast.lane.b32.xlu0 %v1858, %s2090
        %v2092 = vpop.permute.xlu0 %2091
        %s2094 = sor.u32 256, 1
        %2095 = vbcast.lane.b32.xlu0 %v1869, %s2094
        %v2096 = vpop.permute.xlu0 %2095
        %s2098 = sor.u32 256, 9
        %2099 = vbcast.lane.b32.xlu0 %v1869, %s2098
        %v2100 = vpop.permute.xlu0 %2099
        %s2102 = sor.u32 256, 1
        %2103 = vbcast.lane.b32.xlu0 %v1880, %s2102
        %v2104 = vpop.permute.xlu0 %2103
        %s2106 = sor.u32 256, 9
        %2107 = vbcast.lane.b32.xlu0 %v1880, %s2106
        %v2108 = vpop.permute.xlu0 %2107
        %s2110 = sor.u32 256, 1
        %2111 = vbcast.lane.b32.xlu0 %v1891, %s2110
        %v2112 = vpop.permute.xlu0 %2111
        %s2114 = sor.u32 256, 9
        %2115 = vbcast.lane.b32.xlu0 %v1891, %s2114
        %v2116 = vpop.permute.xlu0 %2115
        %s2118 = sor.u32 256, 1
        %2119 = vbcast.lane.b32.xlu0 %v1902, %s2118
        %v2120 = vpop.permute.xlu0 %2119
        %s2122 = sor.u32 256, 9
        %2123 = vbcast.lane.b32.xlu0 %v1902, %s2122
        %v2124 = vpop.permute.xlu0 %2123
        %s2126 = sor.u32 256, 1
        %2127 = vbcast.lane.b32.xlu0 %v1913, %s2126
        %v2128 = vpop.permute.xlu0 %2127
        %s2130 = sor.u32 256, 9
        %2131 = vbcast.lane.b32.xlu0 %v1913, %s2130
        %v2132 = vpop.permute.xlu0 %2131
        %s2134 = sor.u32 256, 1
        %2135 = vbcast.lane.b32.xlu0 %v1924, %s2134
        %v2136 = vpop.permute.xlu0 %2135
        %s2138 = sor.u32 256, 9
        %2139 = vbcast.lane.b32.xlu0 %v1924, %s2138
        %v2140 = vpop.permute.xlu0 %2139
        %s2142 = sor.u32 256, 1
        %2143 = vbcast.lane.b32.xlu0 %v1935, %s2142
        %v2144 = vpop.permute.xlu0 %2143
        %s2146 = sor.u32 256, 9
        %2147 = vbcast.lane.b32.xlu0 %v1935, %s2146
        %v2148 = vpop.permute.xlu0 %2147
        %s2150 = sor.u32 256, 1
        %2151 = vbcast.lane.b32.xlu0 %v1946, %s2150
        %v2152 = vpop.permute.xlu0 %2151
        %s2154 = sor.u32 256, 9
        %2155 = vbcast.lane.b32.xlu0 %v1946, %s2154
        %v2156 = vpop.permute.xlu0 %2155
        %s2158 = sor.u32 256, 1
        %2159 = vbcast.lane.b32.xlu0 %v1957, %s2158
        %v2160 = vpop.permute.xlu0 %2159
        %s2162 = sor.u32 256, 9
        %2163 = vbcast.lane.b32.xlu0 %v1957, %s2162
        %v2164 = vpop.permute.xlu0 %2163
        %s2166 = sor.u32 256, 1
        %2167 = vbcast.lane.b32.xlu0 %v1968, %s2166
        %v2168 = vpop.permute.xlu0 %2167
        %s2170 = sor.u32 256, 9
        %2171 = vbcast.lane.b32.xlu0 %v1968, %s2170
        %v2172 = vpop.permute.xlu0 %2171
        %v2173 = vlaneseq
        %v2174 = vshrl.u32 %v2173, 7
        %v2175 = vsub.s32 0, %v2174
        %v2176 = vrot.slane %v2044, %v2175
        %v2177 = vmul.f32 %v2048, %v2176
        %v2178 = vmul.f32 %v2052, %v2176
        %v2179 = vmul.f32 %v2056, %v2176
        %v2180 = vmul.f32 %v2060, %v2176
        %v2181 = vmul.f32 %v2064, %v2176
        %v2182 = vmul.f32 %v2068, %v2176
        %v2183 = vmul.f32 %v2072, %v2176
        %v2184 = vmul.f32 %v2076, %v2176
        %v2185 = vmul.f32 %v2080, %v2176
        %v2186 = vmul.f32 %v2084, %v2176
        %v2187 = vmul.f32 %v2088, %v2176
        %v2188 = vmul.f32 %v2092, %v2176
        %v2189 = vmul.f32 %v2096, %v2176
        %v2190 = vmul.f32 %v2100, %v2176
        %v2191 = vmul.f32 %v2104, %v2176
        %v2192 = vmul.f32 %v2108, %v2176
        %v2193 = vmul.f32 %v2112, %v2176
        %v2194 = vmul.f32 %v2116, %v2176
        %v2195 = vmul.f32 %v2120, %v2176
        %v2196 = vmul.f32 %v2124, %v2176
        %v2197 = vmul.f32 %v2128, %v2176
        %v2198 = vmul.f32 %v2132, %v2176
        %v2199 = vmul.f32 %v2136, %v2176
        %v2200 = vmul.f32 %v2140, %v2176
        %v2201 = vmul.f32 %v2144, %v2176
        %v2202 = vmul.f32 %v2148, %v2176
        %v2203 = vmul.f32 %v2152, %v2176
        %v2204 = vmul.f32 %v2156, %v2176
        %v2205 = vmul.f32 %v2160, %v2176
        %v2206 = vmul.f32 %v2164, %v2176
        %v2207 = vmul.f32 %v2168, %v2176
        %v2208 = vmul.f32 %v2172, %v2176
        %v2209 = vadd.f32 %v2012, %v2177
        %v2210 = vadd.f32 %v2013, %v2178
        %v2211 = vadd.f32 %v2014, %v2179
        %v2212 = vadd.f32 %v2015, %v2180
        %v2213 = vadd.f32 %v2016, %v2181
        %v2214 = vadd.f32 %v2017, %v2182
        %v2215 = vadd.f32 %v2018, %v2183
        %v2216 = vadd.f32 %v2019, %v2184
        %v2217 = vadd.f32 %v2020, %v2185
        %v2218 = vadd.f32 %v2021, %v2186
        %v2219 = vadd.f32 %v2022, %v2187
        %v2220 = vadd.f32 %v2023, %v2188
        %v2221 = vadd.f32 %v2024, %v2189
        %v2222 = vadd.f32 %v2025, %v2190
        %v2223 = vadd.f32 %v2026, %v2191
        %v2224 = vadd.f32 %v2027, %v2192
        %v2225 = vadd.f32 %v2028, %v2193
        %v2226 = vadd.f32 %v2029, %v2194
        %v2227 = vadd.f32 %v2030, %v2195
        %v2228 = vadd.f32 %v2031, %v2196
        %v2229 = vadd.f32 %v2032, %v2197
        %v2230 = vadd.f32 %v2033, %v2198
        %v2231 = vadd.f32 %v2034, %v2199
        %v2232 = vadd.f32 %v2035, %v2200
        %v2233 = vadd.f32 %v2036, %v2201
        %v2234 = vadd.f32 %v2037, %v2202
        %v2235 = vadd.f32 %v2038, %v2203
        %v2236 = vadd.f32 %v2039, %v2204
        %v2237 = vadd.f32 %v2040, %v2205
        %v2238 = vadd.f32 %v2041, %v2206
        %v2239 = vadd.f32 %v2042, %v2207
        %v2240 = vadd.f32 %v2043, %v2208
        %v2241 = vld [vmem:[%s2 + $0x2] sm:$0x1]
        %s2243 = sor.u32 256, 2
        %2244 = vbcast.lane.b32.xlu0 %v1803, %s2243
        %v2245 = vpop.permute.xlu0 %2244
        %s2247 = sor.u32 256, 10
        %2248 = vbcast.lane.b32.xlu0 %v1803, %s2247
        %v2249 = vpop.permute.xlu0 %2248
        %s2251 = sor.u32 256, 2
        %2252 = vbcast.lane.b32.xlu0 %v1814, %s2251
        %v2253 = vpop.permute.xlu0 %2252
        %s2255 = sor.u32 256, 10
        %2256 = vbcast.lane.b32.xlu0 %v1814, %s2255
        %v2257 = vpop.permute.xlu0 %2256
        %s2259 = sor.u32 256, 2
        %2260 = vbcast.lane.b32.xlu0 %v1825, %s2259
        %v2261 = vpop.permute.xlu0 %2260
        %s2263 = sor.u32 256, 10
        %2264 = vbcast.lane.b32.xlu0 %v1825, %s2263
        %v2265 = vpop.permute.xlu0 %2264
        %s2267 = sor.u32 256, 2
        %2268 = vbcast.lane.b32.xlu0 %v1836, %s2267
        %v2269 = vpop.permute.xlu0 %2268
        %s2271 = sor.u32 256, 10
        %2272 = vbcast.lane.b32.xlu0 %v1836, %s2271
        %v2273 = vpop.permute.xlu0 %2272
        %s2275 = sor.u32 256, 2
        %2276 = vbcast.lane.b32.xlu0 %v1847, %s2275
        %v2277 = vpop.permute.xlu0 %2276
        %s2279 = sor.u32 256, 10
        %2280 = vbcast.lane.b32.xlu0 %v1847, %s2279
        %v2281 = vpop.permute.xlu0 %2280
        %s2283 = sor.u32 256, 2
        %2284 = vbcast.lane.b32.xlu0 %v1858, %s2283
        %v2285 = vpop.permute.xlu0 %2284
        %s2287 = sor.u32 256, 10
        %2288 = vbcast.lane.b32.xlu0 %v1858, %s2287
        %v2289 = vpop.permute.xlu0 %2288
        %s2291 = sor.u32 256, 2
        %2292 = vbcast.lane.b32.xlu0 %v1869, %s2291
        %v2293 = vpop.permute.xlu0 %2292
        %s2295 = sor.u32 256, 10
        %2296 = vbcast.lane.b32.xlu0 %v1869, %s2295
        %v2297 = vpop.permute.xlu0 %2296
        %s2299 = sor.u32 256, 2
        %2300 = vbcast.lane.b32.xlu0 %v1880, %s2299
        %v2301 = vpop.permute.xlu0 %2300
        %s2303 = sor.u32 256, 10
        %2304 = vbcast.lane.b32.xlu0 %v1880, %s2303
        %v2305 = vpop.permute.xlu0 %2304
        %s2307 = sor.u32 256, 2
        %2308 = vbcast.lane.b32.xlu0 %v1891, %s2307
        %v2309 = vpop.permute.xlu0 %2308
        %s2311 = sor.u32 256, 10
        %2312 = vbcast.lane.b32.xlu0 %v1891, %s2311
        %v2313 = vpop.permute.xlu0 %2312
        %s2315 = sor.u32 256, 2
        %2316 = vbcast.lane.b32.xlu0 %v1902, %s2315
        %v2317 = vpop.permute.xlu0 %2316
        %s2319 = sor.u32 256, 10
        %2320 = vbcast.lane.b32.xlu0 %v1902, %s2319
        %v2321 = vpop.permute.xlu0 %2320
        %s2323 = sor.u32 256, 2
        %2324 = vbcast.lane.b32.xlu0 %v1913, %s2323
        %v2325 = vpop.permute.xlu0 %2324
        %s2327 = sor.u32 256, 10
        %2328 = vbcast.lane.b32.xlu0 %v1913, %s2327
        %v2329 = vpop.permute.xlu0 %2328
        %s2331 = sor.u32 256, 2
        %2332 = vbcast.lane.b32.xlu0 %v1924, %s2331
        %v2333 = vpop.permute.xlu0 %2332
        %s2335 = sor.u32 256, 10
        %2336 = vbcast.lane.b32.xlu0 %v1924, %s2335
        %v2337 = vpop.permute.xlu0 %2336
        %s2339 = sor.u32 256, 2
        %2340 = vbcast.lane.b32.xlu0 %v1935, %s2339
        %v2341 = vpop.permute.xlu0 %2340
        %s2343 = sor.u32 256, 10
        %2344 = vbcast.lane.b32.xlu0 %v1935, %s2343
        %v2345 = vpop.permute.xlu0 %2344
        %s2347 = sor.u32 256, 2
        %2348 = vbcast.lane.b32.xlu0 %v1946, %s2347
        %v2349 = vpop.permute.xlu0 %2348
        %s2351 = sor.u32 256, 10
        %2352 = vbcast.lane.b32.xlu0 %v1946, %s2351
        %v2353 = vpop.permute.xlu0 %2352
        %s2355 = sor.u32 256, 2
        %2356 = vbcast.lane.b32.xlu0 %v1957, %s2355
        %v2357 = vpop.permute.xlu0 %2356
        %s2359 = sor.u32 256, 10
        %2360 = vbcast.lane.b32.xlu0 %v1957, %s2359
        %v2361 = vpop.permute.xlu0 %2360
        %s2363 = sor.u32 256, 2
        %2364 = vbcast.lane.b32.xlu0 %v1968, %s2363
        %v2365 = vpop.permute.xlu0 %2364
        %s2367 = sor.u32 256, 10
        %2368 = vbcast.lane.b32.xlu0 %v1968, %s2367
        %v2369 = vpop.permute.xlu0 %2368
        %v2370 = vlaneseq
        %v2371 = vshrl.u32 %v2370, 7
        %v2372 = vsub.s32 0, %v2371
        %v2373 = vrot.slane %v2241, %v2372
        %v2374 = vmul.f32 %v2245, %v2373
        %v2375 = vmul.f32 %v2249, %v2373
        %v2376 = vmul.f32 %v2253, %v2373
        %v2377 = vmul.f32 %v2257, %v2373
        %v2378 = vmul.f32 %v2261, %v2373
        %v2379 = vmul.f32 %v2265, %v2373
        %v2380 = vmul.f32 %v2269, %v2373
        %v2381 = vmul.f32 %v2273, %v2373
        %v2382 = vmul.f32 %v2277, %v2373
        %v2383 = vmul.f32 %v2281, %v2373
        %v2384 = vmul.f32 %v2285, %v2373
        %v2385 = vmul.f32 %v2289, %v2373
        %v2386 = vmul.f32 %v2293, %v2373
        %v2387 = vmul.f32 %v2297, %v2373
        %v2388 = vmul.f32 %v2301, %v2373
        %v2389 = vmul.f32 %v2305, %v2373
        %v2390 = vmul.f32 %v2309, %v2373
        %v2391 = vmul.f32 %v2313, %v2373
        %v2392 = vmul.f32 %v2317, %v2373
        %v2393 = vmul.f32 %v2321, %v2373
        %v2394 = vmul.f32 %v2325, %v2373
        %v2395 = vmul.f32 %v2329, %v2373
        %v2396 = vmul.f32 %v2333, %v2373
        %v2397 = vmul.f32 %v2337, %v2373
        %v2398 = vmul.f32 %v2341, %v2373
        %v2399 = vmul.f32 %v2345, %v2373
        %v2400 = vmul.f32 %v2349, %v2373
        %v2401 = vmul.f32 %v2353, %v2373
        %v2402 = vmul.f32 %v2357, %v2373
        %v2403 = vmul.f32 %v2361, %v2373
        %v2404 = vmul.f32 %v2365, %v2373
        %v2405 = vmul.f32 %v2369, %v2373
        %v2406 = vadd.f32 %v2209, %v2374
        %v2407 = vadd.f32 %v2210, %v2375
        %v2408 = vadd.f32 %v2211, %v2376
        %v2409 = vadd.f32 %v2212, %v2377
        %v2410 = vadd.f32 %v2213, %v2378
        %v2411 = vadd.f32 %v2214, %v2379
        %v2412 = vadd.f32 %v2215, %v2380
        %v2413 = vadd.f32 %v2216, %v2381
        %v2414 = vadd.f32 %v2217, %v2382
        %v2415 = vadd.f32 %v2218, %v2383
        %v2416 = vadd.f32 %v2219, %v2384
        %v2417 = vadd.f32 %v2220, %v2385
        %v2418 = vadd.f32 %v2221, %v2386
        %v2419 = vadd.f32 %v2222, %v2387
        %v2420 = vadd.f32 %v2223, %v2388
        %v2421 = vadd.f32 %v2224, %v2389
        %v2422 = vadd.f32 %v2225, %v2390
        %v2423 = vadd.f32 %v2226, %v2391
        %v2424 = vadd.f32 %v2227, %v2392
        %v2425 = vadd.f32 %v2228, %v2393
        %v2426 = vadd.f32 %v2229, %v2394
        %v2427 = vadd.f32 %v2230, %v2395
        %v2428 = vadd.f32 %v2231, %v2396
        %v2429 = vadd.f32 %v2232, %v2397
        %v2430 = vadd.f32 %v2233, %v2398
        %v2431 = vadd.f32 %v2234, %v2399
        %v2432 = vadd.f32 %v2235, %v2400
        %v2433 = vadd.f32 %v2236, %v2401
        %v2434 = vadd.f32 %v2237, %v2402
        %v2435 = vadd.f32 %v2238, %v2403
        %v2436 = vadd.f32 %v2239, %v2404
        %v2437 = vadd.f32 %v2240, %v2405
        %v2438 = vld [vmem:[%s2 + $0x3] sm:$0x1]
        %v2439 = vlaneseq
        %v2440 = vshrl.u32 %v2439, 7
        %v2441 = vsub.s32 0, %v2440
        %v2442 = vrot.slane %v1798, %v2441
        %2444 = vbcast.lane.b32.xlu0 %v2442, 256
        %v2445 = vpop.permute.xlu0 %2444
        %s2447 = sor.u32 256, 8
        %2448 = vbcast.lane.b32.xlu0 %v2442, %s2447
        %v2449 = vpop.permute.xlu0 %2448
        %v2450 = vlaneseq
        %v2451 = vshrl.u32 %v2450, 7
        %v2452 = vsub.s32 0, %v2451
        %v2453 = vrot.slane %v2438, %v2452
        %v2454 = vmul.f32 %v1817, %v2453
        %v2455 = vmul.f32 %v1821, %v2453
        %v2456 = vmul.f32 %v1828, %v2453
        %v2457 = vmul.f32 %v1832, %v2453
        %v2458 = vmul.f32 %v1839, %v2453
        %v2459 = vmul.f32 %v1843, %v2453
        %v2460 = vmul.f32 %v1850, %v2453
        %v2461 = vmul.f32 %v1854, %v2453
        %v2462 = vmul.f32 %v1861, %v2453
        %v2463 = vmul.f32 %v1865, %v2453
        %v2464 = vmul.f32 %v1872, %v2453
        %v2465 = vmul.f32 %v1876, %v2453
        %v2466 = vmul.f32 %v1883, %v2453
        %v2467 = vmul.f32 %v1887, %v2453
        %v2468 = vmul.f32 %v1894, %v2453
        %v2469 = vmul.f32 %v1898, %v2453
        %v2470 = vmul.f32 %v1905, %v2453
        %v2471 = vmul.f32 %v1909, %v2453
        %v2472 = vmul.f32 %v1916, %v2453
        %v2473 = vmul.f32 %v1920, %v2453
        %v2474 = vmul.f32 %v1927, %v2453
        %v2475 = vmul.f32 %v1931, %v2453
        %v2476 = vmul.f32 %v1938, %v2453
        %v2477 = vmul.f32 %v1942, %v2453
        %v2478 = vmul.f32 %v1949, %v2453
        %v2479 = vmul.f32 %v1953, %v2453
        %v2480 = vmul.f32 %v1960, %v2453
        %v2481 = vmul.f32 %v1964, %v2453
        %v2482 = vmul.f32 %v1971, %v2453
        %v2483 = vmul.f32 %v1975, %v2453
        %v2484 = vmul.f32 %v2445, %v2453
        %v2485 = vmul.f32 %v2449, %v2453
        %v2486 = vadd.f32 %v2406, %v2454
        %v2487 = vadd.f32 %v2407, %v2455
        %v2488 = vadd.f32 %v2408, %v2456
        %v2489 = vadd.f32 %v2409, %v2457
        %v2490 = vadd.f32 %v2410, %v2458
        %v2491 = vadd.f32 %v2411, %v2459
        %v2492 = vadd.f32 %v2412, %v2460
        %v2493 = vadd.f32 %v2413, %v2461
        %v2494 = vadd.f32 %v2414, %v2462
        %v2495 = vadd.f32 %v2415, %v2463
        %v2496 = vadd.f32 %v2416, %v2464
        %v2497 = vadd.f32 %v2417, %v2465
        %v2498 = vadd.f32 %v2418, %v2466
        %v2499 = vadd.f32 %v2419, %v2467
        %v2500 = vadd.f32 %v2420, %v2468
        %v2501 = vadd.f32 %v2421, %v2469
        %v2502 = vadd.f32 %v2422, %v2470
        %v2503 = vadd.f32 %v2423, %v2471
        %v2504 = vadd.f32 %v2424, %v2472
        %v2505 = vadd.f32 %v2425, %v2473
        %v2506 = vadd.f32 %v2426, %v2474
        %v2507 = vadd.f32 %v2427, %v2475
        %v2508 = vadd.f32 %v2428, %v2476
        %v2509 = vadd.f32 %v2429, %v2477
        %v2510 = vadd.f32 %v2430, %v2478
        %v2511 = vadd.f32 %v2431, %v2479
        %v2512 = vadd.f32 %v2432, %v2480
        %v2513 = vadd.f32 %v2433, %v2481
        %v2514 = vadd.f32 %v2434, %v2482
        %v2515 = vadd.f32 %v2435, %v2483
        %v2516 = vadd.f32 %v2436, %v2484
        %v2517 = vadd.f32 %v2437, %v2485
        %v2518 = vld [vmem:[%s2 + $0x4] sm:$0x1]
        %s2520 = sor.u32 256, 1
        %2521 = vbcast.lane.b32.xlu0 %v2442, %s2520
        %v2522 = vpop.permute.xlu0 %2521
        %s2524 = sor.u32 256, 9
        %2525 = vbcast.lane.b32.xlu0 %v2442, %s2524
        %v2526 = vpop.permute.xlu0 %2525
        %v2527 = vlaneseq
        %v2528 = vshrl.u32 %v2527, 7
        %v2529 = vsub.s32 0, %v2528
        %v2530 = vrot.slane %v2518, %v2529
        %v2531 = vmul.f32 %v2056, %v2530
        %v2532 = vmul.f32 %v2060, %v2530
        %v2533 = vmul.f32 %v2064, %v2530
        %v2534 = vmul.f32 %v2068, %v2530
        %v2535 = vmul.f32 %v2072, %v2530
        %v2536 = vmul.f32 %v2076, %v2530
        %v2537 = vmul.f32 %v2080, %v2530
        %v2538 = vmul.f32 %v2084, %v2530
        %v2539 = vmul.f32 %v2088, %v2530
        %v2540 = vmul.f32 %v2092, %v2530
        %v2541 = vmul.f32 %v2096, %v2530
        %v2542 = vmul.f32 %v2100, %v2530
        %v2543 = vmul.f32 %v2104, %v2530
        %v2544 = vmul.f32 %v2108, %v2530
        %v2545 = vmul.f32 %v2112, %v2530
        %v2546 = vmul.f32 %v2116, %v2530
        %v2547 = vmul.f32 %v2120, %v2530
        %v2548 = vmul.f32 %v2124, %v2530
        %v2549 = vmul.f32 %v2128, %v2530
        %v2550 = vmul.f32 %v2132, %v2530
        %v2551 = vmul.f32 %v2136, %v2530
        %v2552 = vmul.f32 %v2140, %v2530
        %v2553 = vmul.f32 %v2144, %v2530
        %v2554 = vmul.f32 %v2148, %v2530
        %v2555 = vmul.f32 %v2152, %v2530
        %v2556 = vmul.f32 %v2156, %v2530
        %v2557 = vmul.f32 %v2160, %v2530
        %v2558 = vmul.f32 %v2164, %v2530
        %v2559 = vmul.f32 %v2168, %v2530
        %v2560 = vmul.f32 %v2172, %v2530
        %v2561 = vmul.f32 %v2522, %v2530
        %v2562 = vmul.f32 %v2526, %v2530
        %v2563 = vadd.f32 %v2486, %v2531
        %v2564 = vadd.f32 %v2487, %v2532
        %v2565 = vadd.f32 %v2488, %v2533
        %v2566 = vadd.f32 %v2489, %v2534
        %v2567 = vadd.f32 %v2490, %v2535
        %v2568 = vadd.f32 %v2491, %v2536
        %v2569 = vadd.f32 %v2492, %v2537
        %v2570 = vadd.f32 %v2493, %v2538
        %v2571 = vadd.f32 %v2494, %v2539
        %v2572 = vadd.f32 %v2495, %v2540
        %v2573 = vadd.f32 %v2496, %v2541
        %v2574 = vadd.f32 %v2497, %v2542
        %v2575 = vadd.f32 %v2498, %v2543
        %v2576 = vadd.f32 %v2499, %v2544
        %v2577 = vadd.f32 %v2500, %v2545
        %v2578 = vadd.f32 %v2501, %v2546
        %v2579 = vadd.f32 %v2502, %v2547
        %v2580 = vadd.f32 %v2503, %v2548
        %v2581 = vadd.f32 %v2504, %v2549
        %v2582 = vadd.f32 %v2505, %v2550
        %v2583 = vadd.f32 %v2506, %v2551
        %v2584 = vadd.f32 %v2507, %v2552
        %v2585 = vadd.f32 %v2508, %v2553
        %v2586 = vadd.f32 %v2509, %v2554
        %v2587 = vadd.f32 %v2510, %v2555
        %v2588 = vadd.f32 %v2511, %v2556
        %v2589 = vadd.f32 %v2512, %v2557
        %v2590 = vadd.f32 %v2513, %v2558
        %v2591 = vadd.f32 %v2514, %v2559
        %v2592 = vadd.f32 %v2515, %v2560
        %v2593 = vadd.f32 %v2516, %v2561
        %v2594 = vadd.f32 %v2517, %v2562
        %v2595 = vld [vmem:[%s2 + $0x5] sm:$0x1]
        %s2597 = sor.u32 256, 2
        %2598 = vbcast.lane.b32.xlu0 %v2442, %s2597
        %v2599 = vpop.permute.xlu0 %2598
        %s2601 = sor.u32 256, 10
        %2602 = vbcast.lane.b32.xlu0 %v2442, %s2601
        %v2603 = vpop.permute.xlu0 %2602
        %v2604 = vlaneseq
        %v2605 = vshrl.u32 %v2604, 7
        %v2606 = vsub.s32 0, %v2605
        %v2607 = vrot.slane %v2595, %v2606
        %v2608 = vmul.f32 %v2253, %v2607
        %v2609 = vmul.f32 %v2257, %v2607
        %v2610 = vmul.f32 %v2261, %v2607
        %v2611 = vmul.f32 %v2265, %v2607
        %v2612 = vmul.f32 %v2269, %v2607
        %v2613 = vmul.f32 %v2273, %v2607
        %v2614 = vmul.f32 %v2277, %v2607
        %v2615 = vmul.f32 %v2281, %v2607
        %v2616 = vmul.f32 %v2285, %v2607
        %v2617 = vmul.f32 %v2289, %v2607
        %v2618 = vmul.f32 %v2293, %v2607
        %v2619 = vmul.f32 %v2297, %v2607
        %v2620 = vmul.f32 %v2301, %v2607
        %v2621 = vmul.f32 %v2305, %v2607
        %v2622 = vmul.f32 %v2309, %v2607
        %v2623 = vmul.f32 %v2313, %v2607
        %v2624 = vmul.f32 %v2317, %v2607
        %v2625 = vmul.f32 %v2321, %v2607
        %v2626 = vmul.f32 %v2325, %v2607
        %v2627 = vmul.f32 %v2329, %v2607
        %v2628 = vmul.f32 %v2333, %v2607
        %v2629 = vmul.f32 %v2337, %v2607
        %v2630 = vmul.f32 %v2341, %v2607
        %v2631 = vmul.f32 %v2345, %v2607
        %v2632 = vmul.f32 %v2349, %v2607
        %v2633 = vmul.f32 %v2353, %v2607
        %v2634 = vmul.f32 %v2357, %v2607
        %v2635 = vmul.f32 %v2361, %v2607
        %v2636 = vmul.f32 %v2365, %v2607
        %v2637 = vmul.f32 %v2369, %v2607
        %v2638 = vmul.f32 %v2599, %v2607
        %v2639 = vmul.f32 %v2603, %v2607
        %v2640 = vadd.f32 %v2563, %v2608
        %v2641 = vadd.f32 %v2564, %v2609
        %v2642 = vadd.f32 %v2565, %v2610
        %v2643 = vadd.f32 %v2566, %v2611
        %v2644 = vadd.f32 %v2567, %v2612
        %v2645 = vadd.f32 %v2568, %v2613
        %v2646 = vadd.f32 %v2569, %v2614
        %v2647 = vadd.f32 %v2570, %v2615
        %v2648 = vadd.f32 %v2571, %v2616
        %v2649 = vadd.f32 %v2572, %v2617
        %v2650 = vadd.f32 %v2573, %v2618
        %v2651 = vadd.f32 %v2574, %v2619
        %v2652 = vadd.f32 %v2575, %v2620
        %v2653 = vadd.f32 %v2576, %v2621
        %v2654 = vadd.f32 %v2577, %v2622
        %v2655 = vadd.f32 %v2578, %v2623
        %v2656 = vadd.f32 %v2579, %v2624
        %v2657 = vadd.f32 %v2580, %v2625
        %v2658 = vadd.f32 %v2581, %v2626
        %v2659 = vadd.f32 %v2582, %v2627
        %v2660 = vadd.f32 %v2583, %v2628
        %v2661 = vadd.f32 %v2584, %v2629
        %v2662 = vadd.f32 %v2585, %v2630
        %v2663 = vadd.f32 %v2586, %v2631
        %v2664 = vadd.f32 %v2587, %v2632
        %v2665 = vadd.f32 %v2588, %v2633
        %v2666 = vadd.f32 %v2589, %v2634
        %v2667 = vadd.f32 %v2590, %v2635
        %v2668 = vadd.f32 %v2591, %v2636
        %v2669 = vadd.f32 %v2592, %v2637
        %v2670 = vadd.f32 %v2593, %v2638
        %v2671 = vadd.f32 %v2594, %v2639
        %v2672 = vld [vmem:[%s2 + $0x6] sm:$0x1]
        %v2673 = vlaneseq
        %v2674 = vshrl.u32 %v2673, 7
        %v2675 = vsub.s32 1, %v2674
        %v2676 = vrot.slane %v1798, %v2675
        %2678 = vbcast.lane.b32.xlu0 %v2676, 256
        %v2679 = vpop.permute.xlu0 %2678
        %s2681 = sor.u32 256, 8
        %2682 = vbcast.lane.b32.xlu0 %v2676, %s2681
        %v2683 = vpop.permute.xlu0 %2682
        %v2684 = vlaneseq
        %v2685 = vshrl.u32 %v2684, 7
        %v2686 = vsub.s32 0, %v2685
        %v2687 = vrot.slane %v2672, %v2686
        %v2688 = vmul.f32 %v1828, %v2687
        %v2689 = vmul.f32 %v1832, %v2687
        %v2690 = vmul.f32 %v1839, %v2687
        %v2691 = vmul.f32 %v1843, %v2687
        %v2692 = vmul.f32 %v1850, %v2687
        %v2693 = vmul.f32 %v1854, %v2687
        %v2694 = vmul.f32 %v1861, %v2687
        %v2695 = vmul.f32 %v1865, %v2687
        %v2696 = vmul.f32 %v1872, %v2687
        %v2697 = vmul.f32 %v1876, %v2687
        %v2698 = vmul.f32 %v1883, %v2687
        %v2699 = vmul.f32 %v1887, %v2687
        %v2700 = vmul.f32 %v1894, %v2687
        %v2701 = vmul.f32 %v1898, %v2687
        %v2702 = vmul.f32 %v1905, %v2687
        %v2703 = vmul.f32 %v1909, %v2687
        %v2704 = vmul.f32 %v1916, %v2687
        %v2705 = vmul.f32 %v1920, %v2687
        %v2706 = vmul.f32 %v1927, %v2687
        %v2707 = vmul.f32 %v1931, %v2687
        %v2708 = vmul.f32 %v1938, %v2687
        %v2709 = vmul.f32 %v1942, %v2687
        %v2710 = vmul.f32 %v1949, %v2687
        %v2711 = vmul.f32 %v1953, %v2687
        %v2712 = vmul.f32 %v1960, %v2687
        %v2713 = vmul.f32 %v1964, %v2687
        %v2714 = vmul.f32 %v1971, %v2687
        %v2715 = vmul.f32 %v1975, %v2687
        %v2716 = vmul.f32 %v2445, %v2687
        %v2717 = vmul.f32 %v2449, %v2687
        %v2718 = vmul.f32 %v2679, %v2687
        %v2719 = vmul.f32 %v2683, %v2687
        %v2720 = vadd.f32 %v2640, %v2688
        %v2721 = vadd.f32 %v2641, %v2689
        %v2722 = vadd.f32 %v2642, %v2690
        %v2723 = vadd.f32 %v2643, %v2691
        %v2724 = vadd.f32 %v2644, %v2692
        %v2725 = vadd.f32 %v2645, %v2693
        %v2726 = vadd.f32 %v2646, %v2694
        %v2727 = vadd.f32 %v2647, %v2695
        %v2728 = vadd.f32 %v2648, %v2696
        %v2729 = vadd.f32 %v2649, %v2697
        %v2730 = vadd.f32 %v2650, %v2698
        %v2731 = vadd.f32 %v2651, %v2699
        %v2732 = vadd.f32 %v2652, %v2700
        %v2733 = vadd.f32 %v2653, %v2701
        %v2734 = vadd.f32 %v2654, %v2702
        %v2735 = vadd.f32 %v2655, %v2703
        %v2736 = vadd.f32 %v2656, %v2704
        %v2737 = vadd.f32 %v2657, %v2705
        %v2738 = vadd.f32 %v2658, %v2706
        %v2739 = vadd.f32 %v2659, %v2707
        %v2740 = vadd.f32 %v2660, %v2708
        %v2741 = vadd.f32 %v2661, %v2709
        %v2742 = vadd.f32 %v2662, %v2710
        %v2743 = vadd.f32 %v2663, %v2711
        %v2744 = vadd.f32 %v2664, %v2712
        %v2745 = vadd.f32 %v2665, %v2713
        %v2746 = vadd.f32 %v2666, %v2714
        %v2747 = vadd.f32 %v2667, %v2715
        %v2748 = vadd.f32 %v2668, %v2716
        %v2749 = vadd.f32 %v2669, %v2717
        %v2750 = vadd.f32 %v2670, %v2718
        %v2751 = vadd.f32 %v2671, %v2719
        %v2752 = vld [vmem:[%s2 + $0x7] sm:$0x1]
        %s2754 = sor.u32 256, 1
        %2755 = vbcast.lane.b32.xlu0 %v2676, %s2754
        %v2756 = vpop.permute.xlu0 %2755
        %s2758 = sor.u32 256, 9
        %2759 = vbcast.lane.b32.xlu0 %v2676, %s2758
        %v2760 = vpop.permute.xlu0 %2759
        %v2761 = vlaneseq
        %v2762 = vshrl.u32 %v2761, 7
        %v2763 = vsub.s32 0, %v2762
        %v2764 = vrot.slane %v2752, %v2763
        %v2765 = vmul.f32 %v2064, %v2764
        %v2766 = vmul.f32 %v2068, %v2764
        %v2767 = vmul.f32 %v2072, %v2764
        %v2768 = vmul.f32 %v2076, %v2764
        %v2769 = vmul.f32 %v2080, %v2764
        %v2770 = vmul.f32 %v2084, %v2764
        %v2771 = vmul.f32 %v2088, %v2764
        %v2772 = vmul.f32 %v2092, %v2764
        %v2773 = vmul.f32 %v2096, %v2764
        %v2774 = vmul.f32 %v2100, %v2764
        %v2775 = vmul.f32 %v2104, %v2764
        %v2776 = vmul.f32 %v2108, %v2764
        %v2777 = vmul.f32 %v2112, %v2764
        %v2778 = vmul.f32 %v2116, %v2764
        %v2779 = vmul.f32 %v2120, %v2764
        %v2780 = vmul.f32 %v2124, %v2764
        %v2781 = vmul.f32 %v2128, %v2764
        %v2782 = vmul.f32 %v2132, %v2764
        %v2783 = vmul.f32 %v2136, %v2764
        %v2784 = vmul.f32 %v2140, %v2764
        %v2785 = vmul.f32 %v2144, %v2764
        %v2786 = vmul.f32 %v2148, %v2764
        %v2787 = vmul.f32 %v2152, %v2764
        %v2788 = vmul.f32 %v2156, %v2764
        %v2789 = vmul.f32 %v2160, %v2764
        %v2790 = vmul.f32 %v2164, %v2764
        %v2791 = vmul.f32 %v2168, %v2764
        %v2792 = vmul.f32 %v2172, %v2764
        %v2793 = vmul.f32 %v2522, %v2764
        %v2794 = vmul.f32 %v2526, %v2764
        %v2795 = vmul.f32 %v2756, %v2764
        %v2796 = vmul.f32 %v2760, %v2764
        %v2797 = vadd.f32 %v2720, %v2765
        %v2798 = vadd.f32 %v2721, %v2766
        %v2799 = vadd.f32 %v2722, %v2767
        %v2800 = vadd.f32 %v2723, %v2768
        %v2801 = vadd.f32 %v2724, %v2769
        %v2802 = vadd.f32 %v2725, %v2770
        %v2803 = vadd.f32 %v2726, %v2771
        %v2804 = vadd.f32 %v2727, %v2772
        %v2805 = vadd.f32 %v2728, %v2773
        %v2806 = vadd.f32 %v2729, %v2774
        %v2807 = vadd.f32 %v2730, %v2775
        %v2808 = vadd.f32 %v2731, %v2776
        %v2809 = vadd.f32 %v2732, %v2777
        %v2810 = vadd.f32 %v2733, %v2778
        %v2811 = vadd.f32 %v2734, %v2779
        %v2812 = vadd.f32 %v2735, %v2780
        %v2813 = vadd.f32 %v2736, %v2781
        %v2814 = vadd.f32 %v2737, %v2782
        %v2815 = vadd.f32 %v2738, %v2783
        %v2816 = vadd.f32 %v2739, %v2784
        %v2817 = vadd.f32 %v2740, %v2785
        %v2818 = vadd.f32 %v2741, %v2786
        %v2819 = vadd.f32 %v2742, %v2787
        %v2820 = vadd.f32 %v2743, %v2788
        %v2821 = vadd.f32 %v2744, %v2789
        %v2822 = vadd.f32 %v2745, %v2790
        %v2823 = vadd.f32 %v2746, %v2791
        %v2824 = vadd.f32 %v2747, %v2792
        %v2825 = vadd.f32 %v2748, %v2793
        %v2826 = vadd.f32 %v2749, %v2794
        %v2827 = vadd.f32 %v2750, %v2795
        %v2828 = vadd.f32 %v2751, %v2796
        %v2829 = vld [vmem:[%s2 + $0x8] sm:$0x1]
        %s2831 = sor.u32 256, 2
        %2832 = vbcast.lane.b32.xlu0 %v2676, %s2831
        %v2833 = vpop.permute.xlu0 %2832
        %s2835 = sor.u32 256, 10
        %2836 = vbcast.lane.b32.xlu0 %v2676, %s2835
        %v2837 = vpop.permute.xlu0 %2836
        %v2838 = vlaneseq
        %v2839 = vshrl.u32 %v2838, 7
        %v2840 = vsub.s32 0, %v2839
        %v2841 = vrot.slane %v2829, %v2840
        %v2842 = vmul.f32 %v2261, %v2841
        %v2843 = vmul.f32 %v2265, %v2841
        %v2844 = vmul.f32 %v2269, %v2841
        %v2845 = vmul.f32 %v2273, %v2841
        %v2846 = vmul.f32 %v2277, %v2841
        %v2847 = vmul.f32 %v2281, %v2841
        %v2848 = vmul.f32 %v2285, %v2841
        %v2849 = vmul.f32 %v2289, %v2841
        %v2850 = vmul.f32 %v2293, %v2841
        %v2851 = vmul.f32 %v2297, %v2841
        %v2852 = vmul.f32 %v2301, %v2841
        %v2853 = vmul.f32 %v2305, %v2841
        %v2854 = vmul.f32 %v2309, %v2841
        %v2855 = vmul.f32 %v2313, %v2841
        %v2856 = vmul.f32 %v2317, %v2841
        %v2857 = vmul.f32 %v2321, %v2841
        %v2858 = vmul.f32 %v2325, %v2841
        %v2859 = vmul.f32 %v2329, %v2841
        %v2860 = vmul.f32 %v2333, %v2841
        %v2861 = vmul.f32 %v2337, %v2841
        %v2862 = vmul.f32 %v2341, %v2841
        %v2863 = vmul.f32 %v2345, %v2841
        %v2864 = vmul.f32 %v2349, %v2841
        %v2865 = vmul.f32 %v2353, %v2841
        %v2866 = vmul.f32 %v2357, %v2841
        %v2867 = vmul.f32 %v2361, %v2841
        %v2868 = vmul.f32 %v2365, %v2841
        %v2869 = vmul.f32 %v2369, %v2841
        %v2870 = vmul.f32 %v2599, %v2841
        %v2871 = vmul.f32 %v2603, %v2841
        %v2872 = vmul.f32 %v2833, %v2841
        %v2873 = vmul.f32 %v2837, %v2841
        %v2874 = vadd.f32 %v2797, %v2842
        %v2875 = vadd.f32 %v2798, %v2843
        %v2876 = vadd.f32 %v2799, %v2844
        %v2877 = vadd.f32 %v2800, %v2845
        %v2878 = vadd.f32 %v2801, %v2846
        %v2879 = vadd.f32 %v2802, %v2847
        %v2880 = vadd.f32 %v2803, %v2848
        %v2881 = vadd.f32 %v2804, %v2849
        %v2882 = vadd.f32 %v2805, %v2850
        %v2883 = vadd.f32 %v2806, %v2851
        %v2884 = vadd.f32 %v2807, %v2852
        %v2885 = vadd.f32 %v2808, %v2853
        %v2886 = vadd.f32 %v2809, %v2854
        %v2887 = vadd.f32 %v2810, %v2855
        %v2888 = vadd.f32 %v2811, %v2856
        %v2889 = vadd.f32 %v2812, %v2857
        %v2890 = vadd.f32 %v2813, %v2858
        %v2891 = vadd.f32 %v2814, %v2859
        %v2892 = vadd.f32 %v2815, %v2860
        %v2893 = vadd.f32 %v2816, %v2861
        %v2894 = vadd.f32 %v2817, %v2862
        %v2895 = vadd.f32 %v2818, %v2863
        %v2896 = vadd.f32 %v2819, %v2864
        %v2897 = vadd.f32 %v2820, %v2865
        %v2898 = vadd.f32 %v2821, %v2866
        %v2899 = vadd.f32 %v2822, %v2867
        %v2900 = vadd.f32 %v2823, %v2868
        %v2901 = vadd.f32 %v2824, %v2869
        %v2902 = vadd.f32 %v2825, %v2870
        %v2903 = vadd.f32 %v2826, %v2871
        %v2904 = vadd.f32 %v2827, %v2872
        %v2905 = vadd.f32 %v2828, %v2873
        %v2906 = vld [vmem:[%s3] sm:$0x1]
        %v2908 = vlaneseq
        %v2909 = vshrl.u32 %v2908, 7
        %v2910 = vsub.s32 0, %v2909
        %v2911 = vrot.slane %v2906, %v2910
        %v2913 = vadd.f32 %v2874, %v2911
        %v2914 = vadd.f32 %v2875, %v2911
        %v2915 = vadd.f32 %v2876, %v2911
        %v2916 = vadd.f32 %v2877, %v2911
        %v2917 = vadd.f32 %v2878, %v2911
        %v2918 = vadd.f32 %v2879, %v2911
        %v2919 = vadd.f32 %v2880, %v2911
        %v2920 = vadd.f32 %v2881, %v2911
        %v2921 = vadd.f32 %v2882, %v2911
        %v2922 = vadd.f32 %v2883, %v2911
        %v2923 = vadd.f32 %v2884, %v2911
        %v2924 = vadd.f32 %v2885, %v2911
        %v2925 = vadd.f32 %v2886, %v2911
        %v2926 = vadd.f32 %v2887, %v2911
        %v2927 = vadd.f32 %v2888, %v2911
        %v2928 = vadd.f32 %v2889, %v2911
        %v2929 = vadd.f32 %v2890, %v2911
        %v2930 = vadd.f32 %v2891, %v2911
        %v2931 = vadd.f32 %v2892, %v2911
        %v2932 = vadd.f32 %v2893, %v2911
        %v2933 = vadd.f32 %v2894, %v2911
        %v2934 = vadd.f32 %v2895, %v2911
        %v2935 = vadd.f32 %v2896, %v2911
        %v2936 = vadd.f32 %v2897, %v2911
        %v2937 = vadd.f32 %v2898, %v2911
        %v2938 = vadd.f32 %v2899, %v2911
        %v2939 = vadd.f32 %v2900, %v2911
        %v2940 = vadd.f32 %v2901, %v2911
        %v2941 = vadd.f32 %v2902, %v2911
        %v2942 = vadd.f32 %v2903, %v2911
        %v2943 = vadd.f32 %v2904, %v2911
        %v2944 = vadd.f32 %v2905, %v2911
        %v2945 = vmax.f32 %v2913, 0.0
        %v2946 = vmax.f32 %v2914, 0.0
        %v2947 = vmax.f32 %v2915, 0.0
        %v2948 = vmax.f32 %v2916, 0.0
        %v2949 = vmax.f32 %v2917, 0.0
        %v2950 = vmax.f32 %v2918, 0.0
        %v2951 = vmax.f32 %v2919, 0.0
        %v2952 = vmax.f32 %v2920, 0.0
        %v2953 = vmax.f32 %v2921, 0.0
        %v2954 = vmax.f32 %v2922, 0.0
        %v2955 = vmax.f32 %v2923, 0.0
        %v2956 = vmax.f32 %v2924, 0.0
        %v2957 = vmax.f32 %v2925, 0.0
        %v2958 = vmax.f32 %v2926, 0.0
        %v2959 = vmax.f32 %v2927, 0.0
        %v2960 = vmax.f32 %v2928, 0.0
        %v2961 = vmax.f32 %v2929, 0.0
        %v2962 = vmax.f32 %v2930, 0.0
        %v2963 = vmax.f32 %v2931, 0.0
        %v2964 = vmax.f32 %v2932, 0.0
        %v2965 = vmax.f32 %v2933, 0.0
        %v2966 = vmax.f32 %v2934, 0.0
        %v2967 = vmax.f32 %v2935, 0.0
        %v2968 = vmax.f32 %v2936, 0.0
        %v2969 = vmax.f32 %v2937, 0.0
        %v2970 = vmax.f32 %v2938, 0.0
        %v2971 = vmax.f32 %v2939, 0.0
        %v2972 = vmax.f32 %v2940, 0.0
        %v2973 = vmax.f32 %v2941, 0.0
        %v2974 = vmax.f32 %v2942, 0.0
        %v2975 = vmax.f32 %v2943, 0.0
        %v2976 = vmax.f32 %v2944, 0.0
        %v2977 = vpack.c.bf16 %v2946, %v2945
        %v2978 = vpack.c.bf16 %v2948, %v2947
        %v2979 = vpack.c.bf16 %v2950, %v2949
        %v2980 = vpack.c.bf16 %v2952, %v2951
        %v2981 = vpack.c.bf16 %v2954, %v2953
        %v2982 = vpack.c.bf16 %v2956, %v2955
        %v2983 = vpack.c.bf16 %v2958, %v2957
        %v2984 = vpack.c.bf16 %v2960, %v2959
        %v2985 = vpack.c.bf16 %v2962, %v2961
        %v2986 = vpack.c.bf16 %v2964, %v2963
        %v2987 = vpack.c.bf16 %v2966, %v2965
        %v2988 = vpack.c.bf16 %v2968, %v2967
        %v2989 = vpack.c.bf16 %v2970, %v2969
        %v2990 = vpack.c.bf16 %v2972, %v2971
        %v2991 = vpack.c.bf16 %v2974, %v2973
        %v2992 = vpack.c.bf16 %v2976, %v2975
        %v3009 = vunpack.c.l.b16 %v2977
        %v3010 = vunpack.c.h.b16 %v2977
        %v3011 = vunpack.c.l.b16 %v2978
        %v3012 = vunpack.c.h.b16 %v2978
        %v3013 = vunpack.c.l.b16 %v2979
        %v3014 = vunpack.c.h.b16 %v2979
        %v3015 = vunpack.c.l.b16 %v2980
        %v3016 = vunpack.c.h.b16 %v2980
        %v3017 = vunpack.c.l.b16 %v2981
        %v3018 = vunpack.c.h.b16 %v2981
        %v3019 = vunpack.c.l.b16 %v2982
        %v3020 = vunpack.c.h.b16 %v2982
        %v3021 = vunpack.c.l.b16 %v2983
        %v3022 = vunpack.c.h.b16 %v2983
        %v3023 = vunpack.c.l.b16 %v2984
        %v3024 = vunpack.c.h.b16 %v2984
        %v3025 = vunpack.c.l.b16 %v2985
        %v3026 = vunpack.c.h.b16 %v2985
        %v3027 = vunpack.c.l.b16 %v2986
        %v3028 = vunpack.c.h.b16 %v2986
        %v3029 = vunpack.c.l.b16 %v2987
        %v3030 = vunpack.c.h.b16 %v2987
        %v3031 = vunpack.c.l.b16 %v2988
        %v3032 = vunpack.c.h.b16 %v2988
        %v3033 = vunpack.c.l.b16 %v2989
        %v3034 = vunpack.c.h.b16 %v2989
        %v3035 = vunpack.c.l.b16 %v2990
        %v3036 = vunpack.c.h.b16 %v2990
        %v3037 = vunpack.c.l.b16 %v2991
        %v3038 = vunpack.c.h.b16 %v2991
        %v3039 = vunpack.c.l.b16 %v2992
        %v3040 = vunpack.c.h.b16 %v2992
        %v3041 = vpack.c.b16 %v3009, %v3009
        %v3042 = vpack.c.b16 %v3010, %v3010
        %v3043 = vpack.c.b16 %v3011, %v3011
        %v3044 = vpack.c.b16 %v3012, %v3012
        %v3045 = vpack.c.b16 %v3013, %v3013
        %v3046 = vpack.c.b16 %v3014, %v3014
        %v3047 = vpack.c.b16 %v3015, %v3015
        %v3048 = vpack.c.b16 %v3016, %v3016
        %v3049 = vpack.c.b16 %v3017, %v3017
        %v3050 = vpack.c.b16 %v3018, %v3018
        %v3051 = vpack.c.b16 %v3019, %v3019
        %v3052 = vpack.c.b16 %v3020, %v3020
        %v3053 = vpack.c.b16 %v3021, %v3021
        %v3054 = vpack.c.b16 %v3022, %v3022
        %v3055 = vpack.c.b16 %v3023, %v3023
        %v3056 = vpack.c.b16 %v3024, %v3024
        %v3057 = vpack.c.b16 %v3025, %v3025
        %v3058 = vpack.c.b16 %v3026, %v3026
        %v3059 = vpack.c.b16 %v3027, %v3027
        %v3060 = vpack.c.b16 %v3028, %v3028
        %v3061 = vpack.c.b16 %v3029, %v3029
        %v3062 = vpack.c.b16 %v3030, %v3030
        %v3063 = vpack.c.b16 %v3031, %v3031
        %v3064 = vpack.c.b16 %v3032, %v3032
        %v3065 = vpack.c.b16 %v3033, %v3033
        %v3066 = vpack.c.b16 %v3034, %v3034
        %v3067 = vpack.c.b16 %v3035, %v3035
        %v3068 = vpack.c.b16 %v3036, %v3036
        %v3069 = vpack.c.b16 %v3037, %v3037
        %v3070 = vpack.c.b16 %v3038, %v3038
        %v3071 = vpack.c.b16 %v3039, %v3039
        %v3072 = vpack.c.b16 %v3040, %v3040
        %3105 = vst [vmem:[%s322] sm:$0xf] %v3041
        %3106 = vst [vmem:[%s322 + $0x4] sm:$0xf] %v3042
        %3107 = vst [vmem:[%s322 + $0x8] sm:$0xf] %v3043
        %3108 = vst [vmem:[%s322 + $0xc] sm:$0xf] %v3044
        %3109 = vst [vmem:[%s322 + $0x10] sm:$0xf] %v3045
        %3110 = vst [vmem:[%s322 + $0x14] sm:$0xf] %v3046
        %3111 = vst [vmem:[%s322 + $0x18] sm:$0xf] %v3047
        %3112 = vst [vmem:[%s322 + $0x1c] sm:$0xf] %v3048
        %3113 = vst [vmem:[%s322 + $0x20] sm:$0xf] %v3049
        %3114 = vst [vmem:[%s322 + $0x24] sm:$0xf] %v3050
        %3115 = vst [vmem:[%s322 + $0x28] sm:$0xf] %v3051
        %3116 = vst [vmem:[%s322 + $0x2c] sm:$0xf] %v3052
        %3117 = vst [vmem:[%s322 + $0x30] sm:$0xf] %v3053
        %3118 = vst [vmem:[%s322 + $0x34] sm:$0xf] %v3054
        %3119 = vst [vmem:[%s322 + $0x38] sm:$0xf] %v3055
        %3120 = vst [vmem:[%s322 + $0x3c] sm:$0xf] %v3056
        %3121 = vst [vmem:[%s322 + $0x40] sm:$0xf] %v3057
        %3122 = vst [vmem:[%s322 + $0x44] sm:$0xf] %v3058
        %3123 = vst [vmem:[%s322 + $0x48] sm:$0xf] %v3059
        %3124 = vst [vmem:[%s322 + $0x4c] sm:$0xf] %v3060
        %3125 = vst [vmem:[%s322 + $0x50] sm:$0xf] %v3061
        %3126 = vst [vmem:[%s322 + $0x54] sm:$0xf] %v3062
        %3127 = vst [vmem:[%s322 + $0x58] sm:$0xf] %v3063
        %3128 = vst [vmem:[%s322 + $0x5c] sm:$0xf] %v3064
        %3129 = vst [vmem:[%s322 + $0x60] sm:$0xf] %v3065
        %3130 = vst [vmem:[%s322 + $0x64] sm:$0xf] %v3066
        %3131 = vst [vmem:[%s322 + $0x68] sm:$0xf] %v3067
        %3132 = vst [vmem:[%s322 + $0x6c] sm:$0xf] %v3068
        %3133 = vst [vmem:[%s322 + $0x70] sm:$0xf] %v3069
        %3134 = vst [vmem:[%s322 + $0x74] sm:$0xf] %v3070
        %3135 = vst [vmem:[%s322 + $0x78] sm:$0xf] %v3071
        %3136 = vst [vmem:[%s322 + $0x7c] sm:$0xf] %v3072
        %p3137 = scmp.lt.s32.totalorder %s25, 1
        %s3138 = scalar_select %p3137, %s25, 1
        %s3139 = smul.addr %s3138, 32
        %s3140 = smul.addr %s3139, 4
        %s3141 = scalar_lea.vmem %s4, %s3140
        %p3142 = scmp.lt.s32.totalorder %s25, 1
        %s3143 = scalar_select %p3142, %s25, 1
        %s3144 = smul.addr %s3143, 32
        %s3145 = smul.addr %s3144, 4
        %s3146 = scalar_lea.vmem %s5, %s3145
        // Predicated region
        $region49: #{anime_gan_content_loss.2} parent=35 // pred_check
          %p3147 = pneg %p137
        $region50: #{anime_gan_content_loss.2} parent=35 // pred_check_branch
          %3149 = sbr.rel (%p3147) target = $region52
        $region51: #{anime_gan_content_loss.2} parent=35 // pred_region
          _
        $region52: #{anime_gan_content_loss.2} parent=35 // pred_fallthru
          _
        // Predicated region
        $region53: #{anime_gan_content_loss.2} parent=35 // pred_check
          %p3150 = pneg %p163
        $region54: #{anime_gan_content_loss.2} parent=35 // pred_check_branch
          %3152 = sbr.rel (%p3150) target = $region56
        $region55: #{anime_gan_content_loss.2} parent=35 // pred_region
          _
        $region56: #{anime_gan_content_loss.2} parent=35 // pred_fallthru
          _
        // Predicated region
        $region57: #{anime_gan_content_loss.2} parent=35 // pred_check
          %p3153 = pneg %p184
        $region58: #{anime_gan_content_loss.2} parent=35 // pred_check_branch
          %3155 = sbr.rel (%p3153) target = $region60
        $region59: #{anime_gan_content_loss.2} parent=35 // pred_region
          %s3157 = ssub.s32 16, 16
          %3158 = vsyncadd [#allocation4], %s3157
          %3161 = dma.smem_to_hbm [#allocation7], 16, %s6, [#allocation4]
        $region60: #{anime_gan_content_loss.2} parent=35 // pred_fallthru
          _
        // Predicated region
        $region61: #{anime_gan_content_loss.2} parent=35 // pred_check
          %p3162 = pneg %p184
        $region62: #{anime_gan_content_loss.2} parent=35 // pred_check_branch
          %3164 = sbr.rel (%p3162) target = $region64
        $region63: #{anime_gan_content_loss.2} parent=35 // pred_region
          %3165 = dma.done [#allocation4], 16
        $region64: #{anime_gan_content_loss.2} parent=35 // pred_fallthru
          _
        %3166 = sfence
      $region36: #{anime_gan_content_loss.2} parent=5 // pred_fallthru
        _
      %p3167 = scmp.le.s32.totalorder 2, %s20
      // Predicated region
      $region65: #{anime_gan_content_loss.2} parent=5 // pred_check
        %p3168 = pneg %p3167
      $region66: #{anime_gan_content_loss.2} parent=5 // pred_check_branch
        %3170 = sbr.rel (%p3168) target = $region68
      $region67: #{anime_gan_content_loss.2} parent=5 // pred_region
        %s3171 = ssub.s32 %s20, 2
        // Predicated region
        $region69: #{anime_gan_content_loss.2} parent=67 // pred_check
          %p3172 = pneg %p143
        $region70: #{anime_gan_content_loss.2} parent=67 // pred_check_branch
          %3174 = sbr.rel (%p3172) target = $region72
        $region71: #{anime_gan_content_loss.2} parent=67 // pred_region
          %p3175 = scmp.lt.s32.totalorder %s26, 1
          %s3176 = scalar_select %p3175, %s26, 1
          %s3177 = smul.addr %s3176, 32
          %s3178 = smul.addr %s3177, 4
          %s3179 = scalar_lea.vmem %s4, %s3178
        $region72: #{anime_gan_content_loss.2} parent=67 // pred_fallthru
          _
        // Predicated region
        $region73: #{anime_gan_content_loss.2} parent=67 // pred_check
          %p3180 = pneg %p169
        $region74: #{anime_gan_content_loss.2} parent=67 // pred_check_branch
          %3182 = sbr.rel (%p3180) target = $region76
        $region75: #{anime_gan_content_loss.2} parent=67 // pred_region
          %p3183 = scmp.lt.s32.totalorder %s26, 1
          %s3184 = scalar_select %p3183, %s26, 1
          %s3185 = smul.addr %s3184, 32
          %s3186 = smul.addr %s3185, 4
          %s3187 = scalar_lea.vmem %s5, %s3186
        $region76: #{anime_gan_content_loss.2} parent=67 // pred_fallthru
          _
      $region68: #{anime_gan_content_loss.2} parent=5 // pred_fallthru
        _
    $region6: #{anime_gan_content_loss.2} parent=1 // loop_footer
      %s24 = sadd.s32 1, %s20
    $region7: #{anime_gan_content_loss.2} parent=1 // loop_footer_branch
      %19 = sbr.rel target = $region3
    $region8: #{anime_gan_content_loss.2} parent=1 // loop_exit
      _
    %3188 = vsyncpa [#allocation3], 1
    %s3189 = scalar_lea.sflag [#allocation3], 1
    %3190 = vsyncpa %s3189, 1
    %3191 = vsyncpa [#allocation6], 1
    %s3192 = scalar_lea.sflag [#allocation6], 1
    %3193 = vsyncpa %s3192, 1
    %3194 = vsyncpa [#allocation4], 1
    %s3195 = scalar_lea.sflag [#allocation4], 1
    %3196 = vsyncpa %s3195, 1

// kernel: anime_gan_content_loss.3
$region0: #{anime_gan_content_loss.3}
  #allocation0 [shape = 'u32[]', space=smem, size = 0x4, offset = 0x4, fixed_abs, tag = 'smem constant byte address 0x4 - core index']
  #allocation1 [shape = 'u32[144,128]{1,0:T(1,128)}', space=vmem, size = 0x12000, scoped, tag = 'internal scratch']
  %s0 = inlined_call_operand.vmem [shape: bf16[2,16,16,128], index: 0, kind: input, shape index: {}]
  %s1 = inlined_call_operand.vmem [shape: bf16[2,16,16,128], index: 1, kind: input, shape index: {}]
  %s2 = inlined_call_operand.vmem [shape: bf16[1152,128], index: 2, kind: input, shape index: {}]
  %s3 = inlined_call_operand.vmem [shape: f32[1,128], index: 3, kind: input, shape index: {}]
  %s4 = inlined_call_operand.hbm [shape: f32[1,1], index: 4, kind: output, shape index: {}]
  %s5 = sld [smem:[#allocation0]]
  $region53: #{anime_gan_content_loss.3} parent=0
    _
  %s7 = ssub.s32 1, %s5
  %s8 = scalar_select 0, %s7, %s5
  $region1: #{anime_gan_content_loss.3} parent=0
    #allocation2 [shape = 'u8[512]{0}', space=smem, size = 0x200, scoped, tag = 'output window, operand 0, single buffered']
    #allocation3 [shape = 's32[2]{0}', space=sflag, size = 0x8, scoped, tag = 'scoped memory for anime_gan_content_loss.3']
    %9 = vsyncpa [#allocation3], 0
    loop: start=0, step=1, limit=4
    $region2: #{anime_gan_content_loss.3} parent=1 // loop_pre_header
      _
    $region3: #{anime_gan_content_loss.3} parent=1 // loop_header
      %s11 = sphi 0, %s15
      %p12 = scmp.ge.s32.totalorder %s11, 4
      %s21 = sphi 0, %s23
      %s24 = sphi 0, %s21
      %s25 = sphi 0, %s24
      %s41 = sphi 0, %s25
      %s47 = sphi 0, %s49
      %s50 = sphi 0, %s47
      %s51 = sphi 0, %s50
      %s67 = sphi 0, %s51
      %s71 = sphi 0, %s71
      %s73 = sphi 0, %s71
      %s74 = sphi 0, %s73
      %s88 = sphi 0, %s74
      %s92 = sphi 0, %s92
      %s94 = sphi 0, %s92
      %s95 = sphi 0, %s94
      %s109 = sphi 0, %s95
      %s113 = sphi 0, %s113
      %s115 = sphi 0, %s113
      %s116 = sphi 0, %s115
      %s130 = sphi 0, %s116
    $region4: #{anime_gan_content_loss.3} parent=1 // loop_header_branch
      %14 = sbr.rel (%p12) target = $region8
    $region5: #{anime_gan_content_loss.3} parent=1 // loop_body
      %s16 = ssub.s32 %s11, 1
      %s17 = ssub.s32 %s11, 2
      %s18 = sadd.s32 %s11, 1
      %s19 = ssub.s32 %s11, %s18
      %p20 = scmp.eq.s32.totalorder %s19, 0
      %s22 = sadd.s32 %s21, 1
      %s23 = scalar_select %p20, %s21, %s22
      %p26 = pneg %p20
      %p27 = scmp.eq.s32.totalorder %s11, 1
      %p28 = por %p26, %p27
      %p29 = scmp.ne.s32.totalorder %s21, %s24
      %p30 = scmp.eq.s32.totalorder %s11, 0
      %p31 = por %p29, %p30
      %p32 = scmp.ne.s32.totalorder %s21, %s24
      %p33 = scmp.eq.s32.totalorder %s16, 1
      %p34 = por %p32, %p33
      %p35 = scmp.ne.s32.totalorder %s24, %s25
      %p36 = scmp.eq.s32.totalorder %s16, 0
      %p37 = por %p35, %p36
      %p38 = scmp.ne.s32.totalorder %s24, %s25
      %p39 = scmp.eq.s32.totalorder %s17, 1
      %p40 = por %p38, %p39
      %p42 = scmp.ne.s32.totalorder %s25, %s41
      %p43 = scmp.eq.s32.totalorder %s17, 0
      %p44 = por %p42, %p43
      %s45 = ssub.s32 %s11, %s18
      %p46 = scmp.eq.s32.totalorder %s45, 0
      %s48 = sadd.s32 %s47, 1
      %s49 = scalar_select %p46, %s47, %s48
      %p52 = pneg %p46
      %p53 = scmp.eq.s32.totalorder %s11, 1
      %p54 = por %p52, %p53
      %p55 = scmp.ne.s32.totalorder %s47, %s50
      %p56 = scmp.eq.s32.totalorder %s11, 0
      %p57 = por %p55, %p56
      %p58 = scmp.ne.s32.totalorder %s47, %s50
      %p59 = scmp.eq.s32.totalorder %s16, 1
      %p60 = por %p58, %p59
      %p61 = scmp.ne.s32.totalorder %s50, %s51
      %p62 = scmp.eq.s32.totalorder %s16, 0
      %p63 = por %p61, %p62
      %p64 = scmp.ne.s32.totalorder %s50, %s51
      %p65 = scmp.eq.s32.totalorder %s17, 1
      %p66 = por %p64, %p65
      %p68 = scmp.ne.s32.totalorder %s51, %s67
      %p69 = scmp.eq.s32.totalorder %s17, 0
      %p70 = por %p68, %p69
      %s72 = sadd.s32 %s71, 1
      %p75 = scmp.eq.s32.totalorder %s11, 1
      %p76 = scmp.ne.s32.totalorder %s71, %s73
      %p77 = scmp.eq.s32.totalorder %s11, 0
      %p78 = por %p76, %p77
      %p79 = scmp.ne.s32.totalorder %s71, %s73
      %p80 = scmp.eq.s32.totalorder %s16, 1
      %p81 = por %p79, %p80
      %p82 = scmp.ne.s32.totalorder %s73, %s74
      %p83 = scmp.eq.s32.totalorder %s16, 0
      %p84 = por %p82, %p83
      %p85 = scmp.ne.s32.totalorder %s73, %s74
      %p86 = scmp.eq.s32.totalorder %s17, 1
      %p87 = por %p85, %p86
      %p89 = scmp.ne.s32.totalorder %s74, %s88
      %p90 = scmp.eq.s32.totalorder %s17, 0
      %p91 = por %p89, %p90
      %s93 = sadd.s32 %s92, 1
      %p96 = scmp.eq.s32.totalorder %s11, 1
      %p97 = scmp.ne.s32.totalorder %s92, %s94
      %p98 = scmp.eq.s32.totalorder %s11, 0
      %p99 = por %p97, %p98
      %p100 = scmp.ne.s32.totalorder %s92, %s94
      %p101 = scmp.eq.s32.totalorder %s16, 1
      %p102 = por %p100, %p101
      %p103 = scmp.ne.s32.totalorder %s94, %s95
      %p104 = scmp.eq.s32.totalorder %s16, 0
      %p105 = por %p103, %p104
      %p106 = scmp.ne.s32.totalorder %s94, %s95
      %p107 = scmp.eq.s32.totalorder %s17, 1
      %p108 = por %p106, %p107
      %p110 = scmp.ne.s32.totalorder %s95, %s109
      %p111 = scmp.eq.s32.totalorder %s17, 0
      %p112 = por %p110, %p111
      %s114 = sadd.s32 %s113, 1
      %p117 = scmp.eq.s32.totalorder %s11, 1
      %p118 = scmp.ne.s32.totalorder %s113, %s115
      %p119 = scmp.eq.s32.totalorder %s11, 0
      %p120 = por %p118, %p119
      %p121 = scmp.ne.s32.totalorder %s113, %s115
      %p122 = scmp.eq.s32.totalorder %s16, 1
      %p123 = por %p121, %p122
      %p124 = scmp.ne.s32.totalorder %s115, %s116
      %p125 = scmp.eq.s32.totalorder %s16, 0
      %p126 = por %p124, %p125
      %p127 = scmp.ne.s32.totalorder %s115, %s116
      %p128 = scmp.eq.s32.totalorder %s17, 1
      %p129 = por %p127, %p128
      %p131 = scmp.ne.s32.totalorder %s116, %s130
      %p132 = scmp.eq.s32.totalorder %s17, 0
      %p133 = por %p131, %p132
      %p134 = scmp.le.s32.totalorder 1, %s11
      %p135 = scmp.lt.s32.totalorder %s11, 3
      %p136 = pnand %p134, %p135
      %p137 = pneg %p136
      // Predicated region
      $region9: #{anime_gan_content_loss.3} parent=5 // pred_check
        _
      $region10: #{anime_gan_content_loss.3} parent=5 // pred_check_branch
        %139 = sbr.rel (%p136) target = $region12
      $region11: #{anime_gan_content_loss.3} parent=5 // pred_region
        %s140 = ssub.s32 %s11, 1
        // Predicated region
        $region13: #{anime_gan_content_loss.3} parent=11 // pred_check
          %p141 = pneg %p84
        $region14: #{anime_gan_content_loss.3} parent=11 // pred_check_branch
          %143 = sbr.rel (%p141) target = $region16
        $region15: #{anime_gan_content_loss.3} parent=11 // pred_region
          _
        $region16: #{anime_gan_content_loss.3} parent=11 // pred_fallthru
          _
        // Predicated region
        $region17: #{anime_gan_content_loss.3} parent=11 // pred_check
          %p144 = pneg %p105
        $region18: #{anime_gan_content_loss.3} parent=11 // pred_check_branch
          %146 = sbr.rel (%p144) target = $region20
        $region19: #{anime_gan_content_loss.3} parent=11 // pred_region
          _
        $region20: #{anime_gan_content_loss.3} parent=11 // pred_fallthru
          _
      $region12: #{anime_gan_content_loss.3} parent=5 // pred_fallthru
        _
      %p147 = scmp.lt.s32.totalorder %s11, 2
      // Predicated region
      $region21: #{anime_gan_content_loss.3} parent=5 // pred_check
        %p148 = pneg %p147
      $region22: #{anime_gan_content_loss.3} parent=5 // pred_check_branch
        %150 = sbr.rel (%p148) target = $region24
      $region23: #{anime_gan_content_loss.3} parent=5 // pred_region
        // Predicated region
        $region25: #{anime_gan_content_loss.3} parent=23 // pred_check
          %p151 = pneg %p31
        $region26: #{anime_gan_content_loss.3} parent=23 // pred_check_branch
          %153 = sbr.rel (%p151) target = $region28
        $region27: #{anime_gan_content_loss.3} parent=23 // pred_region
          %p154 = scmp.lt.s32.totalorder %s11, 1
          %s155 = scalar_select %p154, %s11, 1
          %s156 = smul.addr %s155, 32
          %s157 = smul.addr %s156, 4
          %s158 = scalar_lea.vmem %s0, %s157
        $region28: #{anime_gan_content_loss.3} parent=23 // pred_fallthru
          _
        // Predicated region
        $region29: #{anime_gan_content_loss.3} parent=23 // pred_check
          %p159 = pneg %p57
        $region30: #{anime_gan_content_loss.3} parent=23 // pred_check_branch
          %161 = sbr.rel (%p159) target = $region32
        $region31: #{anime_gan_content_loss.3} parent=23 // pred_region
          %p162 = scmp.lt.s32.totalorder %s11, 1
          %s163 = scalar_select %p162, %s11, 1
          %s164 = smul.addr %s163, 32
          %s165 = smul.addr %s164, 4
          %s166 = scalar_lea.vmem %s1, %s165
        $region32: #{anime_gan_content_loss.3} parent=23 // pred_fallthru
          _
      $region24: #{anime_gan_content_loss.3} parent=5 // pred_fallthru
        _
      %p167 = scmp.le.s32.totalorder 1, %s11
      %p168 = scmp.lt.s32.totalorder %s11, 3
      %p169 = pnand %p167, %p168
      %p170 = pneg %p169
      // Predicated region
      $region33: #{anime_gan_content_loss.3} parent=5 // pred_check
        _
      $region34: #{anime_gan_content_loss.3} parent=5 // pred_check_branch
        %172 = sbr.rel (%p169) target = $region36
      $region35: #{anime_gan_content_loss.3} parent=5 // pred_region
        %s173 = ssub.s32 %s11, 1
        %p174 = scmp.lt.s32.totalorder %s16, 1
        %s175 = scalar_select %p174, %s16, 1
        %s176 = smul.addr %s175, 32
        %s177 = smul.addr %s176, 4
        %s178 = scalar_lea.vmem %s0, %s177
        %p179 = pneg %p37
        %p180 = pneg %p34
        %p181 = scmp.lt.s32.totalorder %s16, 1
        %s182 = scalar_select %p181, %s16, 1
        %s183 = smul.addr %s182, 32
        %s184 = smul.addr %s183, 4
        %s185 = scalar_lea.vmem %s1, %s184
        %p186 = pneg %p63
        %p187 = pneg %p60
        %p188 = pneg %p84
        %p189 = pneg %p81
        %p190 = pneg %p105
        %p191 = pneg %p102
        %p192 = pneg %p126
        %p193 = pneg %p123
        %p194 = scmp.lt.s32.totalorder %s16, 1
        %s195 = scalar_select %p194, %s16, 1
        %s196 = smul.addr %s195, 32
        %s197 = smul.addr %s196, 4
        %s198 = scalar_lea.vmem %s0, %s197
        %p199 = scmp.lt.s32.totalorder %s16, 1
        %s200 = scalar_select %p199, %s16, 1
        %s201 = smul.addr %s200, 32
        %s202 = smul.addr %s201, 4
        %s203 = scalar_lea.vmem %s1, %s202
        %p205 = scmp.eq.s32.totalorder %s16, 0
        // Predicated region
        $region37: #{anime_gan_content_loss.3} parent=35 // pred_check
          %p206 = pneg %p205
        $region38: #{anime_gan_content_loss.3} parent=35 // pred_check_branch
          %208 = sbr.rel (%p206) target = $region40
        $region39: #{anime_gan_content_loss.3} parent=35 // pred_region
          %s209 = scalar_lea.smem [#allocation2], 0
          %210 = sst [smem:[%s209]] 0.0
        $region40: #{anime_gan_content_loss.3} parent=35 // pred_fallthru
          _
        %v211 = vld [vmem:[%s198] sm:$0xf]
        %v212 = vld [vmem:[%s198 + $0x4] sm:$0xf]
        %v213 = vld [vmem:[%s198 + $0x8] sm:$0xf]
        %v214 = vld [vmem:[%s198 + $0xc] sm:$0xf]
        %v215 = vld [vmem:[%s198 + $0x10] sm:$0xf]
        %v216 = vld [vmem:[%s198 + $0x14] sm:$0xf]
        %v217 = vld [vmem:[%s198 + $0x18] sm:$0xf]
        %v218 = vld [vmem:[%s198 + $0x1c] sm:$0xf]
        %v219 = vld [vmem:[%s198 + $0x20] sm:$0xf]
        %v220 = vld [vmem:[%s198 + $0x24] sm:$0xf]
        %v221 = vld [vmem:[%s198 + $0x28] sm:$0xf]
        %v222 = vld [vmem:[%s198 + $0x2c] sm:$0xf]
        %v223 = vld [vmem:[%s198 + $0x30] sm:$0xf]
        %v224 = vld [vmem:[%s198 + $0x34] sm:$0xf]
        %v225 = vld [vmem:[%s198 + $0x38] sm:$0xf]
        %v226 = vld [vmem:[%s198 + $0x3c] sm:$0xf]
        %v227 = vld [vmem:[%s198 + $0x40] sm:$0xf]
        %v228 = vld [vmem:[%s198 + $0x44] sm:$0xf]
        %v229 = vld [vmem:[%s198 + $0x48] sm:$0xf]
        %v230 = vld [vmem:[%s198 + $0x4c] sm:$0xf]
        %v231 = vld [vmem:[%s198 + $0x50] sm:$0xf]
        %v232 = vld [vmem:[%s198 + $0x54] sm:$0xf]
        %v233 = vld [vmem:[%s198 + $0x58] sm:$0xf]
        %v234 = vld [vmem:[%s198 + $0x5c] sm:$0xf]
        %v235 = vld [vmem:[%s198 + $0x60] sm:$0xf]
        %v236 = vld [vmem:[%s198 + $0x64] sm:$0xf]
        %v237 = vld [vmem:[%s198 + $0x68] sm:$0xf]
        %v238 = vld [vmem:[%s198 + $0x6c] sm:$0xf]
        %v239 = vld [vmem:[%s198 + $0x70] sm:$0xf]
        %v240 = vld [vmem:[%s198 + $0x74] sm:$0xf]
        %v241 = vld [vmem:[%s198 + $0x78] sm:$0xf]
        %v242 = vld [vmem:[%s198 + $0x7c] sm:$0xf]
        %v275 = vunpack.c.l.b16 %v211
        %v276 = vunpack.c.l.b16 %v212
        %v277 = vunpack.c.l.b16 %v213
        %v278 = vunpack.c.l.b16 %v214
        %v279 = vunpack.c.l.b16 %v215
        %v280 = vunpack.c.l.b16 %v216
        %v281 = vunpack.c.l.b16 %v217
        %v282 = vunpack.c.l.b16 %v218
        %v283 = vunpack.c.l.b16 %v219
        %v284 = vunpack.c.l.b16 %v220
        %v285 = vunpack.c.l.b16 %v221
        %v286 = vunpack.c.l.b16 %v222
        %v287 = vunpack.c.l.b16 %v223
        %v288 = vunpack.c.l.b16 %v224
        %v289 = vunpack.c.l.b16 %v225
        %v290 = vunpack.c.l.b16 %v226
        %v291 = vunpack.c.l.b16 %v227
        %v292 = vunpack.c.l.b16 %v228
        %v293 = vunpack.c.l.b16 %v229
        %v294 = vunpack.c.l.b16 %v230
        %v295 = vunpack.c.l.b16 %v231
        %v296 = vunpack.c.l.b16 %v232
        %v297 = vunpack.c.l.b16 %v233
        %v298 = vunpack.c.l.b16 %v234
        %v299 = vunpack.c.l.b16 %v235
        %v300 = vunpack.c.l.b16 %v236
        %v301 = vunpack.c.l.b16 %v237
        %v302 = vunpack.c.l.b16 %v238
        %v303 = vunpack.c.l.b16 %v239
        %v304 = vunpack.c.l.b16 %v240
        %v305 = vunpack.c.l.b16 %v241
        %v306 = vunpack.c.l.b16 %v242
        %v307 = vpack.c.b16 %v276, %v275
        %v308 = vpack.c.b16 %v278, %v277
        %v309 = vpack.c.b16 %v280, %v279
        %v310 = vpack.c.b16 %v282, %v281
        %v311 = vpack.c.b16 %v284, %v283
        %v312 = vpack.c.b16 %v286, %v285
        %v313 = vpack.c.b16 %v288, %v287
        %v314 = vpack.c.b16 %v290, %v289
        %v315 = vpack.c.b16 %v292, %v291
        %v316 = vpack.c.b16 %v294, %v293
        %v317 = vpack.c.b16 %v296, %v295
        %v318 = vpack.c.b16 %v298, %v297
        %v319 = vpack.c.b16 %v300, %v299
        %v320 = vpack.c.b16 %v302, %v301
        %v321 = vpack.c.b16 %v304, %v303
        %v322 = vpack.c.b16 %v306, %v305
        %v324 = vshrl.u32 0, 16
        %v326 = vrot.slane %v324, 7
        %v327 = vshll.u32 0, 16
        %v329 = vor.u32 %v326, %v327
        %v331 = vshrl.u32 %v307, 16
        %v333 = vrot.slane %v331, 7
        %v334 = vshll.u32 %v307, 16
        %v336 = vor.u32 %v333, %v334
        %v338 = vshrl.u32 %v308, 16
        %v340 = vrot.slane %v338, 7
        %v341 = vshll.u32 %v308, 16
        %v343 = vor.u32 %v340, %v341
        %v345 = vshrl.u32 %v309, 16
        %v347 = vrot.slane %v345, 7
        %v348 = vshll.u32 %v309, 16
        %v350 = vor.u32 %v347, %v348
        %v352 = vshrl.u32 %v310, 16
        %v354 = vrot.slane %v352, 7
        %v355 = vshll.u32 %v310, 16
        %v357 = vor.u32 %v354, %v355
        %v359 = vshrl.u32 %v311, 16
        %v361 = vrot.slane %v359, 7
        %v362 = vshll.u32 %v311, 16
        %v364 = vor.u32 %v361, %v362
        %v366 = vshrl.u32 %v312, 16
        %v368 = vrot.slane %v366, 7
        %v369 = vshll.u32 %v312, 16
        %v371 = vor.u32 %v368, %v369
        %v373 = vshrl.u32 %v313, 16
        %v375 = vrot.slane %v373, 7
        %v376 = vshll.u32 %v313, 16
        %v378 = vor.u32 %v375, %v376
        %v380 = vshrl.u32 %v314, 16
        %v382 = vrot.slane %v380, 7
        %v383 = vshll.u32 %v314, 16
        %v385 = vor.u32 %v382, %v383
        %v387 = vshrl.u32 %v315, 16
        %v389 = vrot.slane %v387, 7
        %v390 = vshll.u32 %v315, 16
        %v392 = vor.u32 %v389, %v390
        %v394 = vshrl.u32 %v316, 16
        %v396 = vrot.slane %v394, 7
        %v397 = vshll.u32 %v316, 16
        %v399 = vor.u32 %v396, %v397
        %v401 = vshrl.u32 %v317, 16
        %v403 = vrot.slane %v401, 7
        %v404 = vshll.u32 %v317, 16
        %v406 = vor.u32 %v403, %v404
        %v408 = vshrl.u32 %v318, 16
        %v410 = vrot.slane %v408, 7
        %v411 = vshll.u32 %v318, 16
        %v413 = vor.u32 %v410, %v411
        %v415 = vshrl.u32 %v319, 16
        %v417 = vrot.slane %v415, 7
        %v418 = vshll.u32 %v319, 16
        %v420 = vor.u32 %v417, %v418
        %v422 = vshrl.u32 %v320, 16
        %v424 = vrot.slane %v422, 7
        %v425 = vshll.u32 %v320, 16
        %v427 = vor.u32 %v424, %v425
        %v429 = vshrl.u32 %v321, 16
        %v431 = vrot.slane %v429, 7
        %v432 = vshll.u32 %v321, 16
        %v434 = vor.u32 %v431, %v432
        %v436 = vshrl.u32 %v322, 16
        %v438 = vrot.slane %v436, 7
        %v439 = vshll.u32 %v322, 16
        %v441 = vor.u32 %v438, %v439
        %vm476 = vcmask 1040384
        %vm477 = vsmask.f32 256
        %vm478 = vmand %vm476, %vm477
        %v479 = vsel %vm478, 0, %v329
        %v480 = vsel %vm478, 0, %v336
        %v481 = vsel %vm478, 0, %v343
        %v482 = vsel %vm478, 0, %v350
        %v483 = vsel %vm478, 0, %v357
        %v484 = vsel %vm478, 0, %v364
        %v485 = vsel %vm478, 0, %v371
        %v486 = vsel %vm478, 0, %v378
        %v487 = vsel %vm478, 0, %v385
        %v488 = vsel %vm478, 0, %v392
        %v489 = vsel %vm478, 0, %v399
        %v490 = vsel %vm478, 0, %v406
        %v491 = vsel %vm478, 0, %v413
        %v492 = vsel %vm478, 0, %v420
        %v493 = vsel %vm478, 0, %v427
        %v494 = vsel %vm478, 0, %v434
        %v495 = vsel %vm478, 0, %v441
        %v496 = vsel %vm478, %v326, 0
        %v497 = vsel %vm478, %v333, 0
        %v498 = vsel %vm478, %v340, 0
        %v499 = vsel %vm478, %v347, 0
        %v500 = vsel %vm478, %v354, 0
        %v501 = vsel %vm478, %v361, 0
        %v502 = vsel %vm478, %v368, 0
        %v503 = vsel %vm478, %v375, 0
        %v504 = vsel %vm478, %v382, 0
        %v505 = vsel %vm478, %v389, 0
        %v506 = vsel %vm478, %v396, 0
        %v507 = vsel %vm478, %v403, 0
        %v508 = vsel %vm478, %v410, 0
        %v509 = vsel %vm478, %v417, 0
        %v510 = vsel %vm478, %v424, 0
        %v511 = vsel %vm478, %v431, 0
        %v512 = vsel %vm478, %v438, 0
        %vm513 = vsmask.f32 7424
        %v515 = vshrl.u32 %v479, 16
        %v517 = vshll.u32 %v479, 16
        %v519 = vrot.slane %v517, 1
        %v520 = vor.u32 %v515, %v519
        %v522 = vshll.u32 %v496, 16
        %v524 = vrot.slane %v522, 1
        %v525 = vsel %vm513, %v520, %v524
        %v527 = vshrl.u32 %v480, 16
        %v529 = vshll.u32 %v480, 16
        %v531 = vrot.slane %v529, 1
        %v532 = vor.u32 %v527, %v531
        %v534 = vshll.u32 %v497, 16
        %v536 = vrot.slane %v534, 1
        %v537 = vsel %vm513, %v532, %v536
        %v539 = vshrl.u32 %v481, 16
        %v541 = vshll.u32 %v481, 16
        %v543 = vrot.slane %v541, 1
        %v544 = vor.u32 %v539, %v543
        %v546 = vshll.u32 %v498, 16
        %v548 = vrot.slane %v546, 1
        %v549 = vsel %vm513, %v544, %v548
        %v551 = vshrl.u32 %v482, 16
        %v553 = vshll.u32 %v482, 16
        %v555 = vrot.slane %v553, 1
        %v556 = vor.u32 %v551, %v555
        %v558 = vshll.u32 %v499, 16
        %v560 = vrot.slane %v558, 1
        %v561 = vsel %vm513, %v556, %v560
        %v563 = vshrl.u32 %v483, 16
        %v565 = vshll.u32 %v483, 16
        %v567 = vrot.slane %v565, 1
        %v568 = vor.u32 %v563, %v567
        %v570 = vshll.u32 %v500, 16
        %v572 = vrot.slane %v570, 1
        %v573 = vsel %vm513, %v568, %v572
        %v575 = vshrl.u32 %v484, 16
        %v577 = vshll.u32 %v484, 16
        %v579 = vrot.slane %v577, 1
        %v580 = vor.u32 %v575, %v579
        %v582 = vshll.u32 %v501, 16
        %v584 = vrot.slane %v582, 1
        %v585 = vsel %vm513, %v580, %v584
        %v587 = vshrl.u32 %v485, 16
        %v589 = vshll.u32 %v485, 16
        %v591 = vrot.slane %v589, 1
        %v592 = vor.u32 %v587, %v591
        %v594 = vshll.u32 %v502, 16
        %v596 = vrot.slane %v594, 1
        %v597 = vsel %vm513, %v592, %v596
        %v599 = vshrl.u32 %v486, 16
        %v601 = vshll.u32 %v486, 16
        %v603 = vrot.slane %v601, 1
        %v604 = vor.u32 %v599, %v603
        %v606 = vshll.u32 %v503, 16
        %v608 = vrot.slane %v606, 1
        %v609 = vsel %vm513, %v604, %v608
        %v611 = vshrl.u32 %v487, 16
        %v613 = vshll.u32 %v487, 16
        %v615 = vrot.slane %v613, 1
        %v616 = vor.u32 %v611, %v615
        %v618 = vshll.u32 %v504, 16
        %v620 = vrot.slane %v618, 1
        %v621 = vsel %vm513, %v616, %v620
        %v623 = vshrl.u32 %v488, 16
        %v625 = vshll.u32 %v488, 16
        %v627 = vrot.slane %v625, 1
        %v628 = vor.u32 %v623, %v627
        %v630 = vshll.u32 %v505, 16
        %v632 = vrot.slane %v630, 1
        %v633 = vsel %vm513, %v628, %v632
        %v635 = vshrl.u32 %v489, 16
        %v637 = vshll.u32 %v489, 16
        %v639 = vrot.slane %v637, 1
        %v640 = vor.u32 %v635, %v639
        %v642 = vshll.u32 %v506, 16
        %v644 = vrot.slane %v642, 1
        %v645 = vsel %vm513, %v640, %v644
        %v647 = vshrl.u32 %v490, 16
        %v649 = vshll.u32 %v490, 16
        %v651 = vrot.slane %v649, 1
        %v652 = vor.u32 %v647, %v651
        %v654 = vshll.u32 %v507, 16
        %v656 = vrot.slane %v654, 1
        %v657 = vsel %vm513, %v652, %v656
        %v659 = vshrl.u32 %v491, 16
        %v661 = vshll.u32 %v491, 16
        %v663 = vrot.slane %v661, 1
        %v664 = vor.u32 %v659, %v663
        %v666 = vshll.u32 %v508, 16
        %v668 = vrot.slane %v666, 1
        %v669 = vsel %vm513, %v664, %v668
        %v671 = vshrl.u32 %v492, 16
        %v673 = vshll.u32 %v492, 16
        %v675 = vrot.slane %v673, 1
        %v676 = vor.u32 %v671, %v675
        %v678 = vshll.u32 %v509, 16
        %v680 = vrot.slane %v678, 1
        %v681 = vsel %vm513, %v676, %v680
        %v683 = vshrl.u32 %v493, 16
        %v685 = vshll.u32 %v493, 16
        %v687 = vrot.slane %v685, 1
        %v688 = vor.u32 %v683, %v687
        %v690 = vshll.u32 %v510, 16
        %v692 = vrot.slane %v690, 1
        %v693 = vsel %vm513, %v688, %v692
        %v695 = vshrl.u32 %v494, 16
        %v697 = vshll.u32 %v494, 16
        %v699 = vrot.slane %v697, 1
        %v700 = vor.u32 %v695, %v699
        %v702 = vshll.u32 %v511, 16
        %v704 = vrot.slane %v702, 1
        %v705 = vsel %vm513, %v700, %v704
        %vm754 = vcmask 1046528
        %v755 = vrot.slane %v479, 1
        %v756 = vrot.slane %v496, 1
        %v757 = vsel %vm754, %v755, %v756
        %v758 = vrot.slane %v480, 1
        %v759 = vrot.slane %v497, 1
        %v760 = vsel %vm754, %v758, %v759
        %v761 = vrot.slane %v481, 1
        %v762 = vrot.slane %v498, 1
        %v763 = vsel %vm754, %v761, %v762
        %v764 = vrot.slane %v482, 1
        %v765 = vrot.slane %v499, 1
        %v766 = vsel %vm754, %v764, %v765
        %v767 = vrot.slane %v483, 1
        %v768 = vrot.slane %v500, 1
        %v769 = vsel %vm754, %v767, %v768
        %v770 = vrot.slane %v484, 1
        %v771 = vrot.slane %v501, 1
        %v772 = vsel %vm754, %v770, %v771
        %v773 = vrot.slane %v485, 1
        %v774 = vrot.slane %v502, 1
        %v775 = vsel %vm754, %v773, %v774
        %v776 = vrot.slane %v486, 1
        %v777 = vrot.slane %v503, 1
        %v778 = vsel %vm754, %v776, %v777
        %v779 = vrot.slane %v487, 1
        %v780 = vrot.slane %v504, 1
        %v781 = vsel %vm754, %v779, %v780
        %v782 = vrot.slane %v488, 1
        %v783 = vrot.slane %v505, 1
        %v784 = vsel %vm754, %v782, %v783
        %v785 = vrot.slane %v489, 1
        %v786 = vrot.slane %v506, 1
        %v787 = vsel %vm754, %v785, %v786
        %v788 = vrot.slane %v490, 1
        %v789 = vrot.slane %v507, 1
        %v790 = vsel %vm754, %v788, %v789
        %v791 = vrot.slane %v491, 1
        %v792 = vrot.slane %v508, 1
        %v793 = vsel %vm754, %v791, %v792
        %v794 = vrot.slane %v492, 1
        %v795 = vrot.slane %v509, 1
        %v796 = vsel %vm754, %v794, %v795
        %v797 = vrot.slane %v493, 1
        %v798 = vrot.slane %v510, 1
        %v799 = vsel %vm754, %v797, %v798
        %v800 = vrot.slane %v494, 1
        %v801 = vrot.slane %v511, 1
        %v802 = vsel %vm754, %v800, %v801
        %v820 = vshrl.u32 %v495, 16
        %v822 = vshll.u32 %v495, 16
        %v824 = vrot.slane %v822, 1
        %v825 = vor.u32 %v820, %v824
        %v827 = vshll.u32 %v512, 16
        %v829 = vrot.slane %v827, 1
        %v830 = vsel %vm513, %v825, %v829
        %v834 = vrot.slane %v495, 1
        %v835 = vrot.slane %v512, 1
        %v836 = vsel %vm754, %v834, %v835
        %v838 = vld [vmem:[%s2] sm:$0xf]
        %v839 = vld [vmem:[%s2 + $0x4] sm:$0xf]
        %v840 = vld [vmem:[%s2 + $0x8] sm:$0xf]
        %v841 = vld [vmem:[%s2 + $0xc] sm:$0xf]
        %v842 = vld [vmem:[%s2 + $0x10] sm:$0xf]
        %v843 = vld [vmem:[%s2 + $0x14] sm:$0xf]
        %v844 = vld [vmem:[%s2 + $0x18] sm:$0xf]
        %v845 = vld [vmem:[%s2 + $0x1c] sm:$0xf]
        %v846 = vld [vmem:[%s2 + $0x20] sm:$0xf]
        %v847 = vld [vmem:[%s2 + $0x24] sm:$0xf]
        %v848 = vld [vmem:[%s2 + $0x28] sm:$0xf]
        %v849 = vld [vmem:[%s2 + $0x2c] sm:$0xf]
        %v850 = vld [vmem:[%s2 + $0x30] sm:$0xf]
        %v851 = vld [vmem:[%s2 + $0x34] sm:$0xf]
        %v852 = vld [vmem:[%s2 + $0x38] sm:$0xf]
        %v853 = vld [vmem:[%s2 + $0x3c] sm:$0xf]
        %v854 = vld [vmem:[%s2 + $0x40] sm:$0xf]
        %v855 = vld [vmem:[%s2 + $0x44] sm:$0xf]
        %v856 = vld [vmem:[%s2 + $0x48] sm:$0xf]
        %v857 = vld [vmem:[%s2 + $0x4c] sm:$0xf]
        %v858 = vld [vmem:[%s2 + $0x50] sm:$0xf]
        %v859 = vld [vmem:[%s2 + $0x54] sm:$0xf]
        %v860 = vld [vmem:[%s2 + $0x58] sm:$0xf]
        %v861 = vld [vmem:[%s2 + $0x5c] sm:$0xf]
        %v862 = vld [vmem:[%s2 + $0x60] sm:$0xf]
        %v863 = vld [vmem:[%s2 + $0x64] sm:$0xf]
        %v864 = vld [vmem:[%s2 + $0x68] sm:$0xf]
        %v865 = vld [vmem:[%s2 + $0x6c] sm:$0xf]
        %v866 = vld [vmem:[%s2 + $0x70] sm:$0xf]
        %v867 = vld [vmem:[%s2 + $0x74] sm:$0xf]
        %v868 = vld [vmem:[%s2 + $0x78] sm:$0xf]
        %v869 = vld [vmem:[%s2 + $0x7c] sm:$0xf]
        %v870 = vld [vmem:[%s2 + $0x80] sm:$0xf]
        %v871 = vld [vmem:[%s2 + $0x84] sm:$0xf]
        %v872 = vld [vmem:[%s2 + $0x88] sm:$0xf]
        %v873 = vld [vmem:[%s2 + $0x8c] sm:$0xf]
        %v874 = vld [vmem:[%s2 + $0x90] sm:$0xf]
        %v875 = vld [vmem:[%s2 + $0x94] sm:$0xf]
        %v876 = vld [vmem:[%s2 + $0x98] sm:$0xf]
        %v877 = vld [vmem:[%s2 + $0x9c] sm:$0xf]
        %v878 = vld [vmem:[%s2 + $0xa0] sm:$0xf]
        %v879 = vld [vmem:[%s2 + $0xa4] sm:$0xf]
        %v880 = vld [vmem:[%s2 + $0xa8] sm:$0xf]
        %v881 = vld [vmem:[%s2 + $0xac] sm:$0xf]
        %v882 = vld [vmem:[%s2 + $0xb0] sm:$0xf]
        %v883 = vld [vmem:[%s2 + $0xb4] sm:$0xf]
        %v884 = vld [vmem:[%s2 + $0xb8] sm:$0xf]
        %v885 = vld [vmem:[%s2 + $0xbc] sm:$0xf]
        %v886 = vld [vmem:[%s2 + $0xc0] sm:$0xf]
        %v887 = vld [vmem:[%s2 + $0xc4] sm:$0xf]
        %v888 = vld [vmem:[%s2 + $0xc8] sm:$0xf]
        %v889 = vld [vmem:[%s2 + $0xcc] sm:$0xf]
        %v890 = vld [vmem:[%s2 + $0xd0] sm:$0xf]
        %v891 = vld [vmem:[%s2 + $0xd4] sm:$0xf]
        %v892 = vld [vmem:[%s2 + $0xd8] sm:$0xf]
        %v893 = vld [vmem:[%s2 + $0xdc] sm:$0xf]
        %v894 = vld [vmem:[%s2 + $0xe0] sm:$0xf]
        %v895 = vld [vmem:[%s2 + $0xe4] sm:$0xf]
        %v896 = vld [vmem:[%s2 + $0xe8] sm:$0xf]
        %v897 = vld [vmem:[%s2 + $0xec] sm:$0xf]
        %v898 = vld [vmem:[%s2 + $0xf0] sm:$0xf]
        %v899 = vld [vmem:[%s2 + $0xf4] sm:$0xf]
        %v900 = vld [vmem:[%s2 + $0xf8] sm:$0xf]
        %v901 = vld [vmem:[%s2 + $0xfc] sm:$0xf]
        %v902 = vld [vmem:[%s2 + $0x100] sm:$0xf]
        %v903 = vld [vmem:[%s2 + $0x104] sm:$0xf]
        %v904 = vld [vmem:[%s2 + $0x108] sm:$0xf]
        %v905 = vld [vmem:[%s2 + $0x10c] sm:$0xf]
        %v906 = vld [vmem:[%s2 + $0x110] sm:$0xf]
        %v907 = vld [vmem:[%s2 + $0x114] sm:$0xf]
        %v908 = vld [vmem:[%s2 + $0x118] sm:$0xf]
        %v909 = vld [vmem:[%s2 + $0x11c] sm:$0xf]
        %v910 = vld [vmem:[%s2 + $0x120] sm:$0xf]
        %v911 = vld [vmem:[%s2 + $0x124] sm:$0xf]
        %v912 = vld [vmem:[%s2 + $0x128] sm:$0xf]
        %v913 = vld [vmem:[%s2 + $0x12c] sm:$0xf]
        %v914 = vld [vmem:[%s2 + $0x130] sm:$0xf]
        %v915 = vld [vmem:[%s2 + $0x134] sm:$0xf]
        %v916 = vld [vmem:[%s2 + $0x138] sm:$0xf]
        %v917 = vld [vmem:[%s2 + $0x13c] sm:$0xf]
        %v918 = vld [vmem:[%s2 + $0x140] sm:$0xf]
        %v919 = vld [vmem:[%s2 + $0x144] sm:$0xf]
        %v920 = vld [vmem:[%s2 + $0x148] sm:$0xf]
        %v921 = vld [vmem:[%s2 + $0x14c] sm:$0xf]
        %v922 = vld [vmem:[%s2 + $0x150] sm:$0xf]
        %v923 = vld [vmem:[%s2 + $0x154] sm:$0xf]
        %v924 = vld [vmem:[%s2 + $0x158] sm:$0xf]
        %v925 = vld [vmem:[%s2 + $0x15c] sm:$0xf]
        %v926 = vld [vmem:[%s2 + $0x160] sm:$0xf]
        %v927 = vld [vmem:[%s2 + $0x164] sm:$0xf]
        %v928 = vld [vmem:[%s2 + $0x168] sm:$0xf]
        %v929 = vld [vmem:[%s2 + $0x16c] sm:$0xf]
        %v930 = vld [vmem:[%s2 + $0x170] sm:$0xf]
        %v931 = vld [vmem:[%s2 + $0x174] sm:$0xf]
        %v932 = vld [vmem:[%s2 + $0x178] sm:$0xf]
        %v933 = vld [vmem:[%s2 + $0x17c] sm:$0xf]
        %v934 = vld [vmem:[%s2 + $0x180] sm:$0xf]
        %v935 = vld [vmem:[%s2 + $0x184] sm:$0xf]
        %v936 = vld [vmem:[%s2 + $0x188] sm:$0xf]
        %v937 = vld [vmem:[%s2 + $0x18c] sm:$0xf]
        %v938 = vld [vmem:[%s2 + $0x190] sm:$0xf]
        %v939 = vld [vmem:[%s2 + $0x194] sm:$0xf]
        %v940 = vld [vmem:[%s2 + $0x198] sm:$0xf]
        %v941 = vld [vmem:[%s2 + $0x19c] sm:$0xf]
        %v942 = vld [vmem:[%s2 + $0x1a0] sm:$0xf]
        %v943 = vld [vmem:[%s2 + $0x1a4] sm:$0xf]
        %v944 = vld [vmem:[%s2 + $0x1a8] sm:$0xf]
        %v945 = vld [vmem:[%s2 + $0x1ac] sm:$0xf]
        %v946 = vld [vmem:[%s2 + $0x1b0] sm:$0xf]
        %v947 = vld [vmem:[%s2 + $0x1b4] sm:$0xf]
        %v948 = vld [vmem:[%s2 + $0x1b8] sm:$0xf]
        %v949 = vld [vmem:[%s2 + $0x1bc] sm:$0xf]
        %v950 = vld [vmem:[%s2 + $0x1c0] sm:$0xf]
        %v951 = vld [vmem:[%s2 + $0x1c4] sm:$0xf]
        %v952 = vld [vmem:[%s2 + $0x1c8] sm:$0xf]
        %v953 = vld [vmem:[%s2 + $0x1cc] sm:$0xf]
        %v954 = vld [vmem:[%s2 + $0x1d0] sm:$0xf]
        %v955 = vld [vmem:[%s2 + $0x1d4] sm:$0xf]
        %v956 = vld [vmem:[%s2 + $0x1d8] sm:$0xf]
        %v957 = vld [vmem:[%s2 + $0x1dc] sm:$0xf]
        %v958 = vld [vmem:[%s2 + $0x1e0] sm:$0xf]
        %v959 = vld [vmem:[%s2 + $0x1e4] sm:$0xf]
        %v960 = vld [vmem:[%s2 + $0x1e8] sm:$0xf]
        %v961 = vld [vmem:[%s2 + $0x1ec] sm:$0xf]
        %v962 = vld [vmem:[%s2 + $0x1f0] sm:$0xf]
        %v963 = vld [vmem:[%s2 + $0x1f4] sm:$0xf]
        %v964 = vld [vmem:[%s2 + $0x1f8] sm:$0xf]
        %v965 = vld [vmem:[%s2 + $0x1fc] sm:$0xf]
        %v966 = vld [vmem:[%s2 + $0x200] sm:$0xf]
        %v967 = vld [vmem:[%s2 + $0x204] sm:$0xf]
        %v968 = vld [vmem:[%s2 + $0x208] sm:$0xf]
        %v969 = vld [vmem:[%s2 + $0x20c] sm:$0xf]
        %v970 = vld [vmem:[%s2 + $0x210] sm:$0xf]
        %v971 = vld [vmem:[%s2 + $0x214] sm:$0xf]
        %v972 = vld [vmem:[%s2 + $0x218] sm:$0xf]
        %v973 = vld [vmem:[%s2 + $0x21c] sm:$0xf]
        %v974 = vld [vmem:[%s2 + $0x220] sm:$0xf]
        %v975 = vld [vmem:[%s2 + $0x224] sm:$0xf]
        %v976 = vld [vmem:[%s2 + $0x228] sm:$0xf]
        %v977 = vld [vmem:[%s2 + $0x22c] sm:$0xf]
        %v978 = vld [vmem:[%s2 + $0x230] sm:$0xf]
        %v979 = vld [vmem:[%s2 + $0x234] sm:$0xf]
        %v980 = vld [vmem:[%s2 + $0x238] sm:$0xf]
        %v981 = vld [vmem:[%s2 + $0x23c] sm:$0xf]
        %v982 = vld [vmem:[%s3] sm:$0x1]
        %v984 = vlaneseq
        %v985 = vshrl.u32 %v984, 7
        %v986 = vsub.s32 0, %v985
        %v987 = vrot.slane %v982, %v986
        %v1133 = vunpack.c.l.b16 %v838
        %v1134 = vunpack.c.l.b16 %v839
        %v1135 = vunpack.c.l.b16 %v840
        %v1136 = vunpack.c.l.b16 %v841
        %v1137 = vunpack.c.l.b16 %v842
        %v1138 = vunpack.c.l.b16 %v843
        %v1139 = vunpack.c.l.b16 %v844
        %v1140 = vunpack.c.l.b16 %v845
        %v1141 = vunpack.c.l.b16 %v846
        %v1142 = vunpack.c.l.b16 %v847
        %v1143 = vunpack.c.l.b16 %v848
        %v1144 = vunpack.c.l.b16 %v849
        %v1145 = vunpack.c.l.b16 %v850
        %v1146 = vunpack.c.l.b16 %v851
        %v1147 = vunpack.c.l.b16 %v852
        %v1148 = vunpack.c.l.b16 %v853
        %v1149 = vunpack.c.l.b16 %v854
        %v1150 = vunpack.c.l.b16 %v855
        %v1151 = vunpack.c.l.b16 %v856
        %v1152 = vunpack.c.l.b16 %v857
        %v1153 = vunpack.c.l.b16 %v858
        %v1154 = vunpack.c.l.b16 %v859
        %v1155 = vunpack.c.l.b16 %v860
        %v1156 = vunpack.c.l.b16 %v861
        %v1157 = vunpack.c.l.b16 %v862
        %v1158 = vunpack.c.l.b16 %v863
        %v1159 = vunpack.c.l.b16 %v864
        %v1160 = vunpack.c.l.b16 %v865
        %v1161 = vunpack.c.l.b16 %v866
        %v1162 = vunpack.c.l.b16 %v867
        %v1163 = vunpack.c.l.b16 %v868
        %v1164 = vunpack.c.l.b16 %v869
        %v1165 = vunpack.c.l.b16 %v870
        %v1166 = vunpack.c.l.b16 %v871
        %v1167 = vunpack.c.l.b16 %v872
        %v1168 = vunpack.c.l.b16 %v873
        %v1169 = vunpack.c.l.b16 %v874
        %v1170 = vunpack.c.l.b16 %v875
        %v1171 = vunpack.c.l.b16 %v876
        %v1172 = vunpack.c.l.b16 %v877
        %v1173 = vunpack.c.l.b16 %v878
        %v1174 = vunpack.c.l.b16 %v879
        %v1175 = vunpack.c.l.b16 %v880
        %v1176 = vunpack.c.l.b16 %v881
        %v1177 = vunpack.c.l.b16 %v882
        %v1178 = vunpack.c.l.b16 %v883
        %v1179 = vunpack.c.l.b16 %v884
        %v1180 = vunpack.c.l.b16 %v885
        %v1181 = vunpack.c.l.b16 %v886
        %v1182 = vunpack.c.l.b16 %v887
        %v1183 = vunpack.c.l.b16 %v888
        %v1184 = vunpack.c.l.b16 %v889
        %v1185 = vunpack.c.l.b16 %v890
        %v1186 = vunpack.c.l.b16 %v891
        %v1187 = vunpack.c.l.b16 %v892
        %v1188 = vunpack.c.l.b16 %v893
        %v1189 = vunpack.c.l.b16 %v894
        %v1190 = vunpack.c.l.b16 %v895
        %v1191 = vunpack.c.l.b16 %v896
        %v1192 = vunpack.c.l.b16 %v897
        %v1193 = vunpack.c.l.b16 %v898
        %v1194 = vunpack.c.l.b16 %v899
        %v1195 = vunpack.c.l.b16 %v900
        %v1196 = vunpack.c.l.b16 %v901
        %v1197 = vunpack.c.l.b16 %v902
        %v1198 = vunpack.c.l.b16 %v903
        %v1199 = vunpack.c.l.b16 %v904
        %v1200 = vunpack.c.l.b16 %v905
        %v1201 = vunpack.c.l.b16 %v906
        %v1202 = vunpack.c.l.b16 %v907
        %v1203 = vunpack.c.l.b16 %v908
        %v1204 = vunpack.c.l.b16 %v909
        %v1205 = vunpack.c.l.b16 %v910
        %v1206 = vunpack.c.l.b16 %v911
        %v1207 = vunpack.c.l.b16 %v912
        %v1208 = vunpack.c.l.b16 %v913
        %v1209 = vunpack.c.l.b16 %v914
        %v1210 = vunpack.c.l.b16 %v915
        %v1211 = vunpack.c.l.b16 %v916
        %v1212 = vunpack.c.l.b16 %v917
        %v1213 = vunpack.c.l.b16 %v918
        %v1214 = vunpack.c.l.b16 %v919
        %v1215 = vunpack.c.l.b16 %v920
        %v1216 = vunpack.c.l.b16 %v921
        %v1217 = vunpack.c.l.b16 %v922
        %v1218 = vunpack.c.l.b16 %v923
        %v1219 = vunpack.c.l.b16 %v924
        %v1220 = vunpack.c.l.b16 %v925
        %v1221 = vunpack.c.l.b16 %v926
        %v1222 = vunpack.c.l.b16 %v927
        %v1223 = vunpack.c.l.b16 %v928
        %v1224 = vunpack.c.l.b16 %v929
        %v1225 = vunpack.c.l.b16 %v930
        %v1226 = vunpack.c.l.b16 %v931
        %v1227 = vunpack.c.l.b16 %v932
        %v1228 = vunpack.c.l.b16 %v933
        %v1229 = vunpack.c.l.b16 %v934
        %v1230 = vunpack.c.l.b16 %v935
        %v1231 = vunpack.c.l.b16 %v936
        %v1232 = vunpack.c.l.b16 %v937
        %v1233 = vunpack.c.l.b16 %v938
        %v1234 = vunpack.c.l.b16 %v939
        %v1235 = vunpack.c.l.b16 %v940
        %v1236 = vunpack.c.l.b16 %v941
        %v1237 = vunpack.c.l.b16 %v942
        %v1238 = vunpack.c.l.b16 %v943
        %v1239 = vunpack.c.l.b16 %v944
        %v1240 = vunpack.c.l.b16 %v945
        %v1241 = vunpack.c.l.b16 %v946
        %v1242 = vunpack.c.l.b16 %v947
        %v1243 = vunpack.c.l.b16 %v948
        %v1244 = vunpack.c.l.b16 %v949
        %v1245 = vunpack.c.l.b16 %v950
        %v1246 = vunpack.c.l.b16 %v951
        %v1247 = vunpack.c.l.b16 %v952
        %v1248 = vunpack.c.l.b16 %v953
        %v1249 = vunpack.c.l.b16 %v954
        %v1250 = vunpack.c.l.b16 %v955
        %v1251 = vunpack.c.l.b16 %v956
        %v1252 = vunpack.c.l.b16 %v957
        %v1253 = vunpack.c.l.b16 %v958
        %v1254 = vunpack.c.l.b16 %v959
        %v1255 = vunpack.c.l.b16 %v960
        %v1256 = vunpack.c.l.b16 %v961
        %v1257 = vunpack.c.l.b16 %v962
        %v1258 = vunpack.c.l.b16 %v963
        %v1259 = vunpack.c.l.b16 %v964
        %v1260 = vunpack.c.l.b16 %v965
        %v1261 = vunpack.c.l.b16 %v966
        %v1262 = vunpack.c.l.b16 %v967
        %v1263 = vunpack.c.l.b16 %v968
        %v1264 = vunpack.c.l.b16 %v969
        %v1265 = vunpack.c.l.b16 %v970
        %v1266 = vunpack.c.l.b16 %v971
        %v1267 = vunpack.c.l.b16 %v972
        %v1268 = vunpack.c.l.b16 %v973
        %v1269 = vunpack.c.l.b16 %v974
        %v1270 = vunpack.c.l.b16 %v975
        %v1271 = vunpack.c.l.b16 %v976
        %v1272 = vunpack.c.l.b16 %v977
        %v1273 = vunpack.c.l.b16 %v978
        %v1274 = vunpack.c.l.b16 %v979
        %v1275 = vunpack.c.l.b16 %v980
        %v1276 = vunpack.c.l.b16 %v981
        %v1277 = vpack.c.b16 %v1134, %v1133
        %v1278 = vpack.c.b16 %v1136, %v1135
        %v1279 = vpack.c.b16 %v1138, %v1137
        %v1280 = vpack.c.b16 %v1140, %v1139
        %v1281 = vpack.c.b16 %v1142, %v1141
        %v1282 = vpack.c.b16 %v1144, %v1143
        %v1283 = vpack.c.b16 %v1146, %v1145
        %v1284 = vpack.c.b16 %v1148, %v1147
        %v1285 = vpack.c.b16 %v1150, %v1149
        %v1286 = vpack.c.b16 %v1152, %v1151
        %v1287 = vpack.c.b16 %v1154, %v1153
        %v1288 = vpack.c.b16 %v1156, %v1155
        %v1289 = vpack.c.b16 %v1158, %v1157
        %v1290 = vpack.c.b16 %v1160, %v1159
        %v1291 = vpack.c.b16 %v1162, %v1161
        %v1292 = vpack.c.b16 %v1164, %v1163
        %v1293 = vpack.c.b16 %v1166, %v1165
        %v1294 = vpack.c.b16 %v1168, %v1167
        %v1295 = vpack.c.b16 %v1170, %v1169
        %v1296 = vpack.c.b16 %v1172, %v1171
        %v1297 = vpack.c.b16 %v1174, %v1173
        %v1298 = vpack.c.b16 %v1176, %v1175
        %v1299 = vpack.c.b16 %v1178, %v1177
        %v1300 = vpack.c.b16 %v1180, %v1179
        %v1301 = vpack.c.b16 %v1182, %v1181
        %v1302 = vpack.c.b16 %v1184, %v1183
        %v1303 = vpack.c.b16 %v1186, %v1185
        %v1304 = vpack.c.b16 %v1188, %v1187
        %v1305 = vpack.c.b16 %v1190, %v1189
        %v1306 = vpack.c.b16 %v1192, %v1191
        %v1307 = vpack.c.b16 %v1194, %v1193
        %v1308 = vpack.c.b16 %v1196, %v1195
        %v1309 = vpack.c.b16 %v1198, %v1197
        %v1310 = vpack.c.b16 %v1200, %v1199
        %v1311 = vpack.c.b16 %v1202, %v1201
        %v1312 = vpack.c.b16 %v1204, %v1203
        %v1313 = vpack.c.b16 %v1206, %v1205
        %v1314 = vpack.c.b16 %v1208, %v1207
        %v1315 = vpack.c.b16 %v1210, %v1209
        %v1316 = vpack.c.b16 %v1212, %v1211
        %v1317 = vpack.c.b16 %v1214, %v1213
        %v1318 = vpack.c.b16 %v1216, %v1215
        %v1319 = vpack.c.b16 %v1218, %v1217
        %v1320 = vpack.c.b16 %v1220, %v1219
        %v1321 = vpack.c.b16 %v1222, %v1221
        %v1322 = vpack.c.b16 %v1224, %v1223
        %v1323 = vpack.c.b16 %v1226, %v1225
        %v1324 = vpack.c.b16 %v1228, %v1227
        %v1325 = vpack.c.b16 %v1230, %v1229
        %v1326 = vpack.c.b16 %v1232, %v1231
        %v1327 = vpack.c.b16 %v1234, %v1233
        %v1328 = vpack.c.b16 %v1236, %v1235
        %v1329 = vpack.c.b16 %v1238, %v1237
        %v1330 = vpack.c.b16 %v1240, %v1239
        %v1331 = vpack.c.b16 %v1242, %v1241
        %v1332 = vpack.c.b16 %v1244, %v1243
        %v1333 = vpack.c.b16 %v1246, %v1245
        %v1334 = vpack.c.b16 %v1248, %v1247
        %v1335 = vpack.c.b16 %v1250, %v1249
        %v1336 = vpack.c.b16 %v1252, %v1251
        %v1337 = vpack.c.b16 %v1254, %v1253
        %v1338 = vpack.c.b16 %v1256, %v1255
        %v1339 = vpack.c.b16 %v1258, %v1257
        %v1340 = vpack.c.b16 %v1260, %v1259
        %v1341 = vpack.c.b16 %v1262, %v1261
        %v1342 = vpack.c.b16 %v1264, %v1263
        %v1343 = vpack.c.b16 %v1266, %v1265
        %v1344 = vpack.c.b16 %v1268, %v1267
        %v1345 = vpack.c.b16 %v1270, %v1269
        %v1346 = vpack.c.b16 %v1272, %v1271
        %v1347 = vpack.c.b16 %v1274, %v1273
        %v1348 = vpack.c.b16 %v1276, %v1275
        %1421 = vmatprep.subr.bf16.mxu0 0
        %1422 = vmatpush1.bf16.msra.mxu0 %v1277
        %1423 = vmatprep.subr.bf16.mxu0 0
        %1424 = vmatpush1.bf16.msra.mxu0 %v1278
        %1425 = vmatprep.subr.bf16.mxu0 0
        %1426 = vmatpush1.bf16.msra.mxu0 %v1279
        %1427 = vmatprep.subr.bf16.mxu0 0
        %1428 = vmatpush1.bf16.msra.mxu0 %v1280
        %1429 = vmatprep.subr.bf16.mxu0 0
        %1430 = vmatpush1.bf16.msra.mxu0 %v1281
        %1431 = vmatprep.subr.bf16.mxu0 0
        %1432 = vmatpush1.bf16.msra.mxu0 %v1282
        %1433 = vmatprep.subr.bf16.mxu0 0
        %1434 = vmatpush1.bf16.msra.mxu0 %v1283
        %1435 = vmatprep.subr.bf16.mxu0 0
        %1436 = vmatpush1.bf16.msra.mxu0 %v1284
        %1437 = vmatprep.subr.bf16.mxu0 0
        %1438 = vmatpush1.bf16.msra.mxu0 %v1285
        %1439 = vmatprep.subr.bf16.mxu0 0
        %1440 = vmatpush1.bf16.msra.mxu0 %v1286
        %1441 = vmatprep.subr.bf16.mxu0 0
        %1442 = vmatpush1.bf16.msra.mxu0 %v1287
        %1443 = vmatprep.subr.bf16.mxu0 0
        %1444 = vmatpush1.bf16.msra.mxu0 %v1288
        %1445 = vmatprep.subr.bf16.mxu0 0
        %1446 = vmatpush1.bf16.msra.mxu0 %v1289
        %1447 = vmatprep.subr.bf16.mxu0 0
        %1448 = vmatpush1.bf16.msra.mxu0 %v1290
        %1449 = vmatprep.subr.bf16.mxu0 0
        %1450 = vmatpush1.bf16.msra.mxu0 %v1291
        %1451 = vmatprep.subr.bf16.mxu0 0
        %1452 = vmatpush1.bf16.msra.mxu0 %v1292
        %1453 = vmatprep.mubr.bf16.mxu0 %v525
        %1454 = vmatmul.mubr.bf16.gmra.mrb[0].mxu0 %v479
        %v1455 = vpop.f32.mrb[0].mxu0
        %v1456 = vadd.f32 %v987, %v1455
        %v1457 = vpop.f32.mrb[0].mxu0
        %v1458 = vpop.f32.mrb[0].mxu0
        %v1459 = vadd.f32 %v987, %v1458
        %v1460 = vpop.f32.mrb[0].mxu0
        %1461 = vmatprep.mubr.bf16.mxu0 %v537
        %1462 = vmatmul.mubr.bf16.gmra.mrb[0].mxu0 %v480
        %v1463 = vpop.f32.mrb[0].mxu0
        %v1464 = vadd.f32 %v987, %v1463
        %v1465 = vpop.f32.mrb[0].mxu0
        %v1466 = vpop.f32.mrb[0].mxu0
        %v1467 = vadd.f32 %v987, %v1466
        %v1468 = vpop.f32.mrb[0].mxu0
        %1469 = vmatprep.mubr.bf16.mxu0 %v549
        %1470 = vmatmul.mubr.bf16.gmra.mrb[0].mxu0 %v481
        %v1471 = vpop.f32.mrb[0].mxu0
        %v1472 = vadd.f32 %v987, %v1471
        %v1473 = vpop.f32.mrb[0].mxu0
        %v1474 = vpop.f32.mrb[0].mxu0
        %v1475 = vadd.f32 %v987, %v1474
        %v1476 = vpop.f32.mrb[0].mxu0
        %1477 = vmatprep.mubr.bf16.mxu0 %v561
        %1478 = vmatmul.mubr.bf16.gmra.mrb[0].mxu0 %v482
        %v1479 = vpop.f32.mrb[0].mxu0
        %v1480 = vadd.f32 %v987, %v1479
        %v1481 = vpop.f32.mrb[0].mxu0
        %v1482 = vpop.f32.mrb[0].mxu0
        %v1483 = vadd.f32 %v987, %v1482
        %v1484 = vpop.f32.mrb[0].mxu0
        %1485 = vmatprep.mubr.bf16.mxu0 %v573
        %1486 = vmatmul.mubr.bf16.gmra.mrb[0].mxu0 %v483
        %v1487 = vpop.f32.mrb[0].mxu0
        %v1488 = vadd.f32 %v987, %v1487
        %v1489 = vpop.f32.mrb[0].mxu0
        %v1490 = vpop.f32.mrb[0].mxu0
        %v1491 = vadd.f32 %v987, %v1490
        %v1492 = vpop.f32.mrb[0].mxu0
        %1493 = vmatprep.mubr.bf16.mxu0 %v585
        %1494 = vmatmul.mubr.bf16.gmra.mrb[0].mxu0 %v484
        %v1495 = vpop.f32.mrb[0].mxu0
        %v1496 = vadd.f32 %v987, %v1495
        %v1497 = vpop.f32.mrb[0].mxu0
        %v1498 = vpop.f32.mrb[0].mxu0
        %v1499 = vadd.f32 %v987, %v1498
        %v1500 = vpop.f32.mrb[0].mxu0
        %1501 = vmatprep.mubr.bf16.mxu0 %v597
        %1502 = vmatmul.mubr.bf16.gmra.mrb[0].mxu0 %v485
        %v1503 = vpop.f32.mrb[0].mxu0
        %v1504 = vadd.f32 %v987, %v1503
        %v1505 = vpop.f32.mrb[0].mxu0
        %v1506 = vpop.f32.mrb[0].mxu0
        %v1507 = vadd.f32 %v987, %v1506
        %v1508 = vpop.f32.mrb[0].mxu0
        %1509 = vmatprep.mubr.bf16.mxu0 %v609
        %1510 = vmatmul.mubr.bf16.gmra.mrb[0].mxu0 %v486
        %v1511 = vpop.f32.mrb[0].mxu0
        %v1512 = vadd.f32 %v987, %v1511
        %v1513 = vpop.f32.mrb[0].mxu0
        %v1514 = vpop.f32.mrb[0].mxu0
        %v1515 = vadd.f32 %v987, %v1514
        %v1516 = vpop.f32.mrb[0].mxu0
        %1517 = vmatprep.mubr.bf16.mxu0 %v621
        %1518 = vmatmul.mubr.bf16.gmra.mrb[0].mxu0 %v487
        %v1519 = vpop.f32.mrb[0].mxu0
        %v1520 = vadd.f32 %v987, %v1519
        %v1521 = vpop.f32.mrb[0].mxu0
        %v1522 = vpop.f32.mrb[0].mxu0
        %v1523 = vadd.f32 %v987, %v1522
        %v1524 = vpop.f32.mrb[0].mxu0
        %1525 = vmatprep.mubr.bf16.mxu0 %v633
        %1526 = vmatmul.mubr.bf16.gmra.mrb[0].mxu0 %v488
        %v1527 = vpop.f32.mrb[0].mxu0
        %v1528 = vadd.f32 %v987, %v1527
        %v1529 = vpop.f32.mrb[0].mxu0
        %v1530 = vpop.f32.mrb[0].mxu0
        %v1531 = vadd.f32 %v987, %v1530
        %v1532 = vpop.f32.mrb[0].mxu0
        %1533 = vmatprep.mubr.bf16.mxu0 %v645
        %1534 = vmatmul.mubr.bf16.gmra.mrb[0].mxu0 %v489
        %v1535 = vpop.f32.mrb[0].mxu0
        %v1536 = vadd.f32 %v987, %v1535
        %v1537 = vpop.f32.mrb[0].mxu0
        %v1538 = vpop.f32.mrb[0].mxu0
        %v1539 = vadd.f32 %v987, %v1538
        %v1540 = vpop.f32.mrb[0].mxu0
        %1541 = vmatprep.mubr.bf16.mxu0 %v657
        %1542 = vmatmul.mubr.bf16.gmra.mrb[0].mxu0 %v490
        %v1543 = vpop.f32.mrb[0].mxu0
        %v1544 = vadd.f32 %v987, %v1543
        %v1545 = vpop.f32.mrb[0].mxu0
        %v1546 = vpop.f32.mrb[0].mxu0
        %v1547 = vadd.f32 %v987, %v1546
        %v1548 = vpop.f32.mrb[0].mxu0
        %1549 = vmatprep.mubr.bf16.mxu0 %v669
        %1550 = vmatmul.mubr.bf16.gmra.mrb[0].mxu0 %v491
        %v1551 = vpop.f32.mrb[0].mxu0
        %v1552 = vadd.f32 %v987, %v1551
        %v1553 = vpop.f32.mrb[0].mxu0
        %v1554 = vpop.f32.mrb[0].mxu0
        %v1555 = vadd.f32 %v987, %v1554
        %v1556 = vpop.f32.mrb[0].mxu0
        %1557 = vmatprep.mubr.bf16.mxu0 %v681
        %1558 = vmatmul.mubr.bf16.gmra.mrb[0].mxu0 %v492
        %v1559 = vpop.f32.mrb[0].mxu0
        %v1560 = vadd.f32 %v987, %v1559
        %v1561 = vpop.f32.mrb[0].mxu0
        %v1562 = vpop.f32.mrb[0].mxu0
        %v1563 = vadd.f32 %v987, %v1562
        %v1564 = vpop.f32.mrb[0].mxu0
        %1565 = vmatprep.mubr.bf16.mxu0 %v693
        %1566 = vmatmul.mubr.bf16.gmra.mrb[0].mxu0 %v493
        %v1567 = vpop.f32.mrb[0].mxu0
        %v1568 = vadd.f32 %v987, %v1567
        %v1569 = vpop.f32.mrb[0].mxu0
        %v1570 = vpop.f32.mrb[0].mxu0
        %v1571 = vadd.f32 %v987, %v1570
        %v1572 = vpop.f32.mrb[0].mxu0
        %1573 = vmatprep.mubr.bf16.mxu0 %v705
        %1574 = vmatmul.mubr.bf16.gmra.mrb[0].mxu0 %v494
        %v1575 = vpop.f32.mrb[0].mxu0
        %v1576 = vadd.f32 %v987, %v1575
        %v1577 = vpop.f32.mrb[0].mxu0
        %v1578 = vpop.f32.mrb[0].mxu0
        %v1579 = vadd.f32 %v987, %v1578
        %v1580 = vpop.f32.mrb[0].mxu0
        %1581 = vdwg.mxu0
        %1582 = vmatprep.subr.bf16.mxu0 0
        %1583 = vmatpush1.bf16.msra.mxu0 %v1293
        %1584 = vmatprep.subr.bf16.mxu0 0
        %1585 = vmatpush1.bf16.msra.mxu0 %v1294
        %1586 = vmatprep.subr.bf16.mxu0 0
        %1587 = vmatpush1.bf16.msra.mxu0 %v1295
        %1588 = vmatprep.subr.bf16.mxu0 0
        %1589 = vmatpush1.bf16.msra.mxu0 %v1296
        %1590 = vmatprep.subr.bf16.mxu0 0
        %1591 = vmatpush1.bf16.msra.mxu0 %v1297
        %1592 = vmatprep.subr.bf16.mxu0 0
        %1593 = vmatpush1.bf16.msra.mxu0 %v1298
        %1594 = vmatprep.subr.bf16.mxu0 0
        %1595 = vmatpush1.bf16.msra.mxu0 %v1299
        %1596 = vmatprep.subr.bf16.mxu0 0
        %1597 = vmatpush1.bf16.msra.mxu0 %v1300
        %1598 = vmatprep.subr.bf16.mxu0 0
        %1599 = vmatpush1.bf16.msra.mxu0 %v1301
        %1600 = vmatprep.subr.bf16.mxu0 0
        %1601 = vmatpush1.bf16.msra.mxu0 %v1302
        %1602 = vmatprep.subr.bf16.mxu0 0
        %1603 = vmatpush1.bf16.msra.mxu0 %v1303
        %1604 = vmatprep.subr.bf16.mxu0 0
        %1605 = vmatpush1.bf16.msra.mxu0 %v1304
        %1606 = vmatprep.subr.bf16.mxu0 0
        %1607 = vmatpush1.bf16.msra.mxu0 %v1305
        %1608 = vmatprep.subr.bf16.mxu0 0
        %1609 = vmatpush1.bf16.msra.mxu0 %v1306
        %1610 = vmatprep.subr.bf16.mxu0 0
        %1611 = vmatpush1.bf16.msra.mxu0 %v1307
        %1612 = vmatprep.subr.bf16.mxu0 0
        %1613 = vmatpush1.bf16.msra.mxu0 %v1308
        %1614 = vmatprep.mubr.bf16.mxu0 %v480
        %1615 = vmatmul.mubr.bf16.gmra.mrb[0].mxu0 %v757
        %v1616 = vpop.f32.mrb[0].mxu0
        %v1617 = vadd.f32 %v1456, %v1616
        %v1618 = vpop.f32.mrb[0].mxu0
        %v1619 = vpop.f32.mrb[0].mxu0
        %v1620 = vadd.f32 %v1459, %v1619
        %v1621 = vpop.f32.mrb[0].mxu0
        %1622 = vmatprep.mubr.bf16.mxu0 %v481
        %1623 = vmatmul.mubr.bf16.gmra.mrb[0].mxu0 %v760
        %v1624 = vpop.f32.mrb[0].mxu0
        %v1625 = vadd.f32 %v1464, %v1624
        %v1626 = vpop.f32.mrb[0].mxu0
        %v1627 = vpop.f32.mrb[0].mxu0
        %v1628 = vadd.f32 %v1467, %v1627
        %v1629 = vpop.f32.mrb[0].mxu0
        %1630 = vmatprep.mubr.bf16.mxu0 %v482
        %1631 = vmatmul.mubr.bf16.gmra.mrb[0].mxu0 %v763
        %v1632 = vpop.f32.mrb[0].mxu0
        %v1633 = vadd.f32 %v1472, %v1632
        %v1634 = vpop.f32.mrb[0].mxu0
        %v1635 = vpop.f32.mrb[0].mxu0
        %v1636 = vadd.f32 %v1475, %v1635
        %v1637 = vpop.f32.mrb[0].mxu0
        %1638 = vmatprep.mubr.bf16.mxu0 %v483
        %1639 = vmatmul.mubr.bf16.gmra.mrb[0].mxu0 %v766
        %v1640 = vpop.f32.mrb[0].mxu0
        %v1641 = vadd.f32 %v1480, %v1640
        %v1642 = vpop.f32.mrb[0].mxu0
        %v1643 = vpop.f32.mrb[0].mxu0
        %v1644 = vadd.f32 %v1483, %v1643
        %v1645 = vpop.f32.mrb[0].mxu0
        %1646 = vmatprep.mubr.bf16.mxu0 %v484
        %1647 = vmatmul.mubr.bf16.gmra.mrb[0].mxu0 %v769
        %v1648 = vpop.f32.mrb[0].mxu0
        %v1649 = vadd.f32 %v1488, %v1648
        %v1650 = vpop.f32.mrb[0].mxu0
        %v1651 = vpop.f32.mrb[0].mxu0
        %v1652 = vadd.f32 %v1491, %v1651
        %v1653 = vpop.f32.mrb[0].mxu0
        %1654 = vmatprep.mubr.bf16.mxu0 %v485
        %1655 = vmatmul.mubr.bf16.gmra.mrb[0].mxu0 %v772
        %v1656 = vpop.f32.mrb[0].mxu0
        %v1657 = vadd.f32 %v1496, %v1656
        %v1658 = vpop.f32.mrb[0].mxu0
        %v1659 = vpop.f32.mrb[0].mxu0
        %v1660 = vadd.f32 %v1499, %v1659
        %v1661 = vpop.f32.mrb[0].mxu0
        %1662 = vmatprep.mubr.bf16.mxu0 %v486
        %1663 = vmatmul.mubr.bf16.gmra.mrb[0].mxu0 %v775
        %v1664 = vpop.f32.mrb[0].mxu0
        %v1665 = vadd.f32 %v1504, %v1664
        %v1666 = vpop.f32.mrb[0].mxu0
        %v1667 = vpop.f32.mrb[0].mxu0
        %v1668 = vadd.f32 %v1507, %v1667
        %v1669 = vpop.f32.mrb[0].mxu0
        %1670 = vmatprep.mubr.bf16.mxu0 %v487
        %1671 = vmatmul.mubr.bf16.gmra.mrb[0].mxu0 %v778
        %v1672 = vpop.f32.mrb[0].mxu0
        %v1673 = vadd.f32 %v1512, %v1672
        %v1674 = vpop.f32.mrb[0].mxu0
        %v1675 = vpop.f32.mrb[0].mxu0
        %v1676 = vadd.f32 %v1515, %v1675
        %v1677 = vpop.f32.mrb[0].mxu0
        %1678 = vmatprep.mubr.bf16.mxu0 %v488
        %1679 = vmatmul.mubr.bf16.gmra.mrb[0].mxu0 %v781
        %v1680 = vpop.f32.mrb[0].mxu0
        %v1681 = vadd.f32 %v1520, %v1680
        %v1682 = vpop.f32.mrb[0].mxu0
        %v1683 = vpop.f32.mrb[0].mxu0
        %v1684 = vadd.f32 %v1523, %v1683
        %v1685 = vpop.f32.mrb[0].mxu0
        %1686 = vmatprep.mubr.bf16.mxu0 %v489
        %1687 = vmatmul.mubr.bf16.gmra.mrb[0].mxu0 %v784
        %v1688 = vpop.f32.mrb[0].mxu0
        %v1689 = vadd.f32 %v1528, %v1688
        %v1690 = vpop.f32.mrb[0].mxu0
        %v1691 = vpop.f32.mrb[0].mxu0
        %v1692 = vadd.f32 %v1531, %v1691
        %v1693 = vpop.f32.mrb[0].mxu0
        %1694 = vmatprep.mubr.bf16.mxu0 %v490
        %1695 = vmatmul.mubr.bf16.gmra.mrb[0].mxu0 %v787
        %v1696 = vpop.f32.mrb[0].mxu0
        %v1697 = vadd.f32 %v1536, %v1696
        %v1698 = vpop.f32.mrb[0].mxu0
        %v1699 = vpop.f32.mrb[0].mxu0
        %v1700 = vadd.f32 %v1539, %v1699
        %v1701 = vpop.f32.mrb[0].mxu0
        %1702 = vmatprep.mubr.bf16.mxu0 %v491
        %1703 = vmatmul.mubr.bf16.gmra.mrb[0].mxu0 %v790
        %v1704 = vpop.f32.mrb[0].mxu0
        %v1705 = vadd.f32 %v1544, %v1704
        %v1706 = vpop.f32.mrb[0].mxu0
        %v1707 = vpop.f32.mrb[0].mxu0
        %v1708 = vadd.f32 %v1547, %v1707
        %v1709 = vpop.f32.mrb[0].mxu0
        %1710 = vmatprep.mubr.bf16.mxu0 %v492
        %1711 = vmatmul.mubr.bf16.gmra.mrb[0].mxu0 %v793
        %v1712 = vpop.f32.mrb[0].mxu0
        %v1713 = vadd.f32 %v1552, %v1712
        %v1714 = vpop.f32.mrb[0].mxu0
        %v1715 = vpop.f32.mrb[0].mxu0
        %v1716 = vadd.f32 %v1555, %v1715
        %v1717 = vpop.f32.mrb[0].mxu0
        %1718 = vmatprep.mubr.bf16.mxu0 %v493
        %1719 = vmatmul.mubr.bf16.gmra.mrb[0].mxu0 %v796
        %v1720 = vpop.f32.mrb[0].mxu0
        %v1721 = vadd.f32 %v1560, %v1720
        %v1722 = vpop.f32.mrb[0].mxu0
        %v1723 = vpop.f32.mrb[0].mxu0
        %v1724 = vadd.f32 %v1563, %v1723
        %v1725 = vpop.f32.mrb[0].mxu0
        %1726 = vmatprep.mubr.bf16.mxu0 %v494
        %1727 = vmatmul.mubr.bf16.gmra.mrb[0].mxu0 %v799
        %v1728 = vpop.f32.mrb[0].mxu0
        %v1729 = vadd.f32 %v1568, %v1728
        %v1730 = vpop.f32.mrb[0].mxu0
        %v1731 = vpop.f32.mrb[0].mxu0
        %v1732 = vadd.f32 %v1571, %v1731
        %v1733 = vpop.f32.mrb[0].mxu0
        %1734 = vmatprep.mubr.bf16.mxu0 %v495
        %1735 = vmatmul.mubr.bf16.gmra.mrb[0].mxu0 %v802
        %v1736 = vpop.f32.mrb[0].mxu0
        %v1737 = vadd.f32 %v1576, %v1736
        %v1738 = vpop.f32.mrb[0].mxu0
        %v1739 = vpop.f32.mrb[0].mxu0
        %v1740 = vadd.f32 %v1579, %v1739
        %v1741 = vpop.f32.mrb[0].mxu0
        %1742 = vdwg.mxu0
        %1743 = vmatprep.subr.bf16.mxu0 0
        %1744 = vmatpush1.bf16.msra.mxu0 %v1309
        %1745 = vmatprep.subr.bf16.mxu0 0
        %1746 = vmatpush1.bf16.msra.mxu0 %v1310
        %1747 = vmatprep.subr.bf16.mxu0 0
        %1748 = vmatpush1.bf16.msra.mxu0 %v1311
        %1749 = vmatprep.subr.bf16.mxu0 0
        %1750 = vmatpush1.bf16.msra.mxu0 %v1312
        %1751 = vmatprep.subr.bf16.mxu0 0
        %1752 = vmatpush1.bf16.msra.mxu0 %v1313
        %1753 = vmatprep.subr.bf16.mxu0 0
        %1754 = vmatpush1.bf16.msra.mxu0 %v1314
        %1755 = vmatprep.subr.bf16.mxu0 0
        %1756 = vmatpush1.bf16.msra.mxu0 %v1315
        %1757 = vmatprep.subr.bf16.mxu0 0
        %1758 = vmatpush1.bf16.msra.mxu0 %v1316
        %1759 = vmatprep.subr.bf16.mxu0 0
        %1760 = vmatpush1.bf16.msra.mxu0 %v1317
        %1761 = vmatprep.subr.bf16.mxu0 0
        %1762 = vmatpush1.bf16.msra.mxu0 %v1318
        %1763 = vmatprep.subr.bf16.mxu0 0
        %1764 = vmatpush1.bf16.msra.mxu0 %v1319
        %1765 = vmatprep.subr.bf16.mxu0 0
        %1766 = vmatpush1.bf16.msra.mxu0 %v1320
        %1767 = vmatprep.subr.bf16.mxu0 0
        %1768 = vmatpush1.bf16.msra.mxu0 %v1321
        %1769 = vmatprep.subr.bf16.mxu0 0
        %1770 = vmatpush1.bf16.msra.mxu0 %v1322
        %1771 = vmatprep.subr.bf16.mxu0 0
        %1772 = vmatpush1.bf16.msra.mxu0 %v1323
        %1773 = vmatprep.subr.bf16.mxu0 0
        %1774 = vmatpush1.bf16.msra.mxu0 %v1324
        %1775 = vmatprep.mubr.bf16.mxu0 %v760
        %1776 = vmatmul.mubr.bf16.gmra.mrb[0].mxu0 %v537
        %v1777 = vpop.f32.mrb[0].mxu0
        %v1778 = vadd.f32 %v1617, %v1777
        %v1779 = vpop.f32.mrb[0].mxu0
        %v1780 = vpop.f32.mrb[0].mxu0
        %v1781 = vadd.f32 %v1620, %v1780
        %v1782 = vpop.f32.mrb[0].mxu0
        %1783 = vmatprep.mubr.bf16.mxu0 %v763
        %1784 = vmatmul.mubr.bf16.gmra.mrb[0].mxu0 %v549
        %v1785 = vpop.f32.mrb[0].mxu0
        %v1786 = vadd.f32 %v1625, %v1785
        %v1787 = vpop.f32.mrb[0].mxu0
        %v1788 = vpop.f32.mrb[0].mxu0
        %v1789 = vadd.f32 %v1628, %v1788
        %v1790 = vpop.f32.mrb[0].mxu0
        %1791 = vmatprep.mubr.bf16.mxu0 %v766
        %1792 = vmatmul.mubr.bf16.gmra.mrb[0].mxu0 %v561
        %v1793 = vpop.f32.mrb[0].mxu0
        %v1794 = vadd.f32 %v1633, %v1793
        %v1795 = vpop.f32.mrb[0].mxu0
        %v1796 = vpop.f32.mrb[0].mxu0
        %v1797 = vadd.f32 %v1636, %v1796
        %v1798 = vpop.f32.mrb[0].mxu0
        %1799 = vmatprep.mubr.bf16.mxu0 %v769
        %1800 = vmatmul.mubr.bf16.gmra.mrb[0].mxu0 %v573
        %v1801 = vpop.f32.mrb[0].mxu0
        %v1802 = vadd.f32 %v1641, %v1801
        %v1803 = vpop.f32.mrb[0].mxu0
        %v1804 = vpop.f32.mrb[0].mxu0
        %v1805 = vadd.f32 %v1644, %v1804
        %v1806 = vpop.f32.mrb[0].mxu0
        %1807 = vmatprep.mubr.bf16.mxu0 %v772
        %1808 = vmatmul.mubr.bf16.gmra.mrb[0].mxu0 %v585
        %v1809 = vpop.f32.mrb[0].mxu0
        %v1810 = vadd.f32 %v1649, %v1809
        %v1811 = vpop.f32.mrb[0].mxu0
        %v1812 = vpop.f32.mrb[0].mxu0
        %v1813 = vadd.f32 %v1652, %v1812
        %v1814 = vpop.f32.mrb[0].mxu0
        %1815 = vmatprep.mubr.bf16.mxu0 %v775
        %1816 = vmatmul.mubr.bf16.gmra.mrb[0].mxu0 %v597
        %v1817 = vpop.f32.mrb[0].mxu0
        %v1818 = vadd.f32 %v1657, %v1817
        %v1819 = vpop.f32.mrb[0].mxu0
        %v1820 = vpop.f32.mrb[0].mxu0
        %v1821 = vadd.f32 %v1660, %v1820
        %v1822 = vpop.f32.mrb[0].mxu0
        %1823 = vmatprep.mubr.bf16.mxu0 %v778
        %1824 = vmatmul.mubr.bf16.gmra.mrb[0].mxu0 %v609
        %v1825 = vpop.f32.mrb[0].mxu0
        %v1826 = vadd.f32 %v1665, %v1825
        %v1827 = vpop.f32.mrb[0].mxu0
        %v1828 = vpop.f32.mrb[0].mxu0
        %v1829 = vadd.f32 %v1668, %v1828
        %v1830 = vpop.f32.mrb[0].mxu0
        %1831 = vmatprep.mubr.bf16.mxu0 %v781
        %1832 = vmatmul.mubr.bf16.gmra.mrb[0].mxu0 %v621
        %v1833 = vpop.f32.mrb[0].mxu0
        %v1834 = vadd.f32 %v1673, %v1833
        %v1835 = vpop.f32.mrb[0].mxu0
        %v1836 = vpop.f32.mrb[0].mxu0
        %v1837 = vadd.f32 %v1676, %v1836
        %v1838 = vpop.f32.mrb[0].mxu0
        %1839 = vmatprep.mubr.bf16.mxu0 %v784
        %1840 = vmatmul.mubr.bf16.gmra.mrb[0].mxu0 %v633
        %v1841 = vpop.f32.mrb[0].mxu0
        %v1842 = vadd.f32 %v1681, %v1841
        %v1843 = vpop.f32.mrb[0].mxu0
        %v1844 = vpop.f32.mrb[0].mxu0
        %v1845 = vadd.f32 %v1684, %v1844
        %v1846 = vpop.f32.mrb[0].mxu0
        %1847 = vmatprep.mubr.bf16.mxu0 %v787
        %1848 = vmatmul.mubr.bf16.gmra.mrb[0].mxu0 %v645
        %v1849 = vpop.f32.mrb[0].mxu0
        %v1850 = vadd.f32 %v1689, %v1849
        %v1851 = vpop.f32.mrb[0].mxu0
        %v1852 = vpop.f32.mrb[0].mxu0
        %v1853 = vadd.f32 %v1692, %v1852
        %v1854 = vpop.f32.mrb[0].mxu0
        %1855 = vmatprep.mubr.bf16.mxu0 %v790
        %1856 = vmatmul.mubr.bf16.gmra.mrb[0].mxu0 %v657
        %v1857 = vpop.f32.mrb[0].mxu0
        %v1858 = vadd.f32 %v1697, %v1857
        %v1859 = vpop.f32.mrb[0].mxu0
        %v1860 = vpop.f32.mrb[0].mxu0
        %v1861 = vadd.f32 %v1700, %v1860
        %v1862 = vpop.f32.mrb[0].mxu0
        %1863 = vmatprep.mubr.bf16.mxu0 %v793
        %1864 = vmatmul.mubr.bf16.gmra.mrb[0].mxu0 %v669
        %v1865 = vpop.f32.mrb[0].mxu0
        %v1866 = vadd.f32 %v1705, %v1865
        %v1867 = vpop.f32.mrb[0].mxu0
        %v1868 = vpop.f32.mrb[0].mxu0
        %v1869 = vadd.f32 %v1708, %v1868
        %v1870 = vpop.f32.mrb[0].mxu0
        %1871 = vmatprep.mubr.bf16.mxu0 %v796
        %1872 = vmatmul.mubr.bf16.gmra.mrb[0].mxu0 %v681
        %v1873 = vpop.f32.mrb[0].mxu0
        %v1874 = vadd.f32 %v1713, %v1873
        %v1875 = vpop.f32.mrb[0].mxu0
        %v1876 = vpop.f32.mrb[0].mxu0
        %v1877 = vadd.f32 %v1716, %v1876
        %v1878 = vpop.f32.mrb[0].mxu0
        %1879 = vmatprep.mubr.bf16.mxu0 %v799
        %1880 = vmatmul.mubr.bf16.gmra.mrb[0].mxu0 %v693
        %v1881 = vpop.f32.mrb[0].mxu0
        %v1882 = vadd.f32 %v1721, %v1881
        %v1883 = vpop.f32.mrb[0].mxu0
        %v1884 = vpop.f32.mrb[0].mxu0
        %v1885 = vadd.f32 %v1724, %v1884
        %v1886 = vpop.f32.mrb[0].mxu0
        %1887 = vmatprep.mubr.bf16.mxu0 %v802
        %1888 = vmatmul.mubr.bf16.gmra.mrb[0].mxu0 %v705
        %v1889 = vpop.f32.mrb[0].mxu0
        %v1890 = vadd.f32 %v1729, %v1889
        %v1891 = vpop.f32.mrb[0].mxu0
        %v1892 = vpop.f32.mrb[0].mxu0
        %v1893 = vadd.f32 %v1732, %v1892
        %v1894 = vpop.f32.mrb[0].mxu0
        %1895 = vmatprep.mubr.bf16.mxu0 %v836
        %1896 = vmatmul.mubr.bf16.gmra.mrb[0].mxu0 %v830
        %v1897 = vpop.f32.mrb[0].mxu0
        %v1898 = vadd.f32 %v1737, %v1897
        %v1899 = vpop.f32.mrb[0].mxu0
        %v1900 = vpop.f32.mrb[0].mxu0
        %v1901 = vadd.f32 %v1740, %v1900
        %v1902 = vpop.f32.mrb[0].mxu0
        %1903 = vdwg.mxu0
        %1904 = vmatprep.subr.bf16.mxu0 0
        %1905 = vmatpush1.bf16.msra.mxu0 %v1325
        %1906 = vmatprep.subr.bf16.mxu0 0
        %1907 = vmatpush1.bf16.msra.mxu0 %v1326
        %1908 = vmatprep.subr.bf16.mxu0 0
        %1909 = vmatpush1.bf16.msra.mxu0 %v1327
        %1910 = vmatprep.subr.bf16.mxu0 0
        %1911 = vmatpush1.bf16.msra.mxu0 %v1328
        %1912 = vmatprep.subr.bf16.mxu0 0
        %1913 = vmatpush1.bf16.msra.mxu0 %v1329
        %1914 = vmatprep.subr.bf16.mxu0 0
        %1915 = vmatpush1.bf16.msra.mxu0 %v1330
        %1916 = vmatprep.subr.bf16.mxu0 0
        %1917 = vmatpush1.bf16.msra.mxu0 %v1331
        %1918 = vmatprep.subr.bf16.mxu0 0
        %1919 = vmatpush1.bf16.msra.mxu0 %v1332
        %1920 = vmatprep.subr.bf16.mxu0 0
        %1921 = vmatpush1.bf16.msra.mxu0 %v1333
        %1922 = vmatprep.subr.bf16.mxu0 0
        %1923 = vmatpush1.bf16.msra.mxu0 %v1334
        %1924 = vmatprep.subr.bf16.mxu0 0
        %1925 = vmatpush1.bf16.msra.mxu0 %v1335
        %1926 = vmatprep.subr.bf16.mxu0 0
        %1927 = vmatpush1.bf16.msra.mxu0 %v1336
        %1928 = vmatprep.subr.bf16.mxu0 0
        %1929 = vmatpush1.bf16.msra.mxu0 %v1337
        %1930 = vmatprep.subr.bf16.mxu0 0
        %1931 = vmatpush1.bf16.msra.mxu0 %v1338
        %1932 = vmatprep.subr.bf16.mxu0 0
        %1933 = vmatpush1.bf16.msra.mxu0 %v1339
        %1934 = vmatprep.subr.bf16.mxu0 0
        %1935 = vmatpush1.bf16.msra.mxu0 %v1340
        %1936 = vmatprep.mubr.bf16.mxu0 %v549
        %1937 = vmatmul.mubr.bf16.gmra.mrb[0].mxu0 %v481
        %v1938 = vpop.f32.mrb[0].mxu0
        %v1939 = vadd.f32 %v1778, %v1938
        %v1940 = vpop.f32.mrb[0].mxu0
        %v1941 = vpop.f32.mrb[0].mxu0
        %v1942 = vadd.f32 %v1781, %v1941
        %v1943 = vpop.f32.mrb[0].mxu0
        %1944 = vmatprep.mubr.bf16.mxu0 %v561
        %1945 = vmatmul.mubr.bf16.gmra.mrb[0].mxu0 %v482
        %v1946 = vpop.f32.mrb[0].mxu0
        %v1947 = vadd.f32 %v1786, %v1946
        %v1948 = vpop.f32.mrb[0].mxu0
        %v1949 = vpop.f32.mrb[0].mxu0
        %v1950 = vadd.f32 %v1789, %v1949
        %v1951 = vpop.f32.mrb[0].mxu0
        %1952 = vmatprep.mubr.bf16.mxu0 %v573
        %1953 = vmatmul.mubr.bf16.gmra.mrb[0].mxu0 %v483
        %v1954 = vpop.f32.mrb[0].mxu0
        %v1955 = vadd.f32 %v1794, %v1954
        %v1956 = vpop.f32.mrb[0].mxu0
        %v1957 = vpop.f32.mrb[0].mxu0
        %v1958 = vadd.f32 %v1797, %v1957
        %v1959 = vpop.f32.mrb[0].mxu0
        %1960 = vmatprep.mubr.bf16.mxu0 %v585
        %1961 = vmatmul.mubr.bf16.gmra.mrb[0].mxu0 %v484
        %v1962 = vpop.f32.mrb[0].mxu0
        %v1963 = vadd.f32 %v1802, %v1962
        %v1964 = vpop.f32.mrb[0].mxu0
        %v1965 = vpop.f32.mrb[0].mxu0
        %v1966 = vadd.f32 %v1805, %v1965
        %v1967 = vpop.f32.mrb[0].mxu0
        %1968 = vmatprep.mubr.bf16.mxu0 %v597
        %1969 = vmatmul.mubr.bf16.gmra.mrb[0].mxu0 %v485
        %v1970 = vpop.f32.mrb[0].mxu0
        %v1971 = vadd.f32 %v1810, %v1970
        %v1972 = vpop.f32.mrb[0].mxu0
        %v1973 = vpop.f32.mrb[0].mxu0
        %v1974 = vadd.f32 %v1813, %v1973
        %v1975 = vpop.f32.mrb[0].mxu0
        %1976 = vmatprep.mubr.bf16.mxu0 %v609
        %1977 = vmatmul.mubr.bf16.gmra.mrb[0].mxu0 %v486
        %v1978 = vpop.f32.mrb[0].mxu0
        %v1979 = vadd.f32 %v1818, %v1978
        %v1980 = vpop.f32.mrb[0].mxu0
        %v1981 = vpop.f32.mrb[0].mxu0
        %v1982 = vadd.f32 %v1821, %v1981
        %v1983 = vpop.f32.mrb[0].mxu0
        %1984 = vmatprep.mubr.bf16.mxu0 %v621
        %1985 = vmatmul.mubr.bf16.gmra.mrb[0].mxu0 %v487
        %v1986 = vpop.f32.mrb[0].mxu0
        %v1987 = vadd.f32 %v1826, %v1986
        %v1988 = vpop.f32.mrb[0].mxu0
        %v1989 = vpop.f32.mrb[0].mxu0
        %v1990 = vadd.f32 %v1829, %v1989
        %v1991 = vpop.f32.mrb[0].mxu0
        %1992 = vmatprep.mubr.bf16.mxu0 %v633
        %1993 = vmatmul.mubr.bf16.gmra.mrb[0].mxu0 %v488
        %v1994 = vpop.f32.mrb[0].mxu0
        %v1995 = vadd.f32 %v1834, %v1994
        %v1996 = vpop.f32.mrb[0].mxu0
        %v1997 = vpop.f32.mrb[0].mxu0
        %v1998 = vadd.f32 %v1837, %v1997
        %v1999 = vpop.f32.mrb[0].mxu0
        %2000 = vmatprep.mubr.bf16.mxu0 %v645
        %2001 = vmatmul.mubr.bf16.gmra.mrb[0].mxu0 %v489
        %v2002 = vpop.f32.mrb[0].mxu0
        %v2003 = vadd.f32 %v1842, %v2002
        %v2004 = vpop.f32.mrb[0].mxu0
        %v2005 = vpop.f32.mrb[0].mxu0
        %v2006 = vadd.f32 %v1845, %v2005
        %v2007 = vpop.f32.mrb[0].mxu0
        %2008 = vmatprep.mubr.bf16.mxu0 %v657
        %2009 = vmatmul.mubr.bf16.gmra.mrb[0].mxu0 %v490
        %v2010 = vpop.f32.mrb[0].mxu0
        %v2011 = vadd.f32 %v1850, %v2010
        %v2012 = vpop.f32.mrb[0].mxu0
        %v2013 = vpop.f32.mrb[0].mxu0
        %v2014 = vadd.f32 %v1853, %v2013
        %v2015 = vpop.f32.mrb[0].mxu0
        %2016 = vmatprep.mubr.bf16.mxu0 %v669
        %2017 = vmatmul.mubr.bf16.gmra.mrb[0].mxu0 %v491
        %v2018 = vpop.f32.mrb[0].mxu0
        %v2019 = vadd.f32 %v1858, %v2018
        %v2020 = vpop.f32.mrb[0].mxu0
        %v2021 = vpop.f32.mrb[0].mxu0
        %v2022 = vadd.f32 %v1861, %v2021
        %v2023 = vpop.f32.mrb[0].mxu0
        %2024 = vmatprep.mubr.bf16.mxu0 %v681
        %2025 = vmatmul.mubr.bf16.gmra.mrb[0].mxu0 %v492
        %v2026 = vpop.f32.mrb[0].mxu0
        %v2027 = vadd.f32 %v1866, %v2026
        %v2028 = vpop.f32.mrb[0].mxu0
        %v2029 = vpop.f32.mrb[0].mxu0
        %v2030 = vadd.f32 %v1869, %v2029
        %v2031 = vpop.f32.mrb[0].mxu0
        %2032 = vmatprep.mubr.bf16.mxu0 %v693
        %2033 = vmatmul.mubr.bf16.gmra.mrb[0].mxu0 %v493
        %v2034 = vpop.f32.mrb[0].mxu0
        %v2035 = vadd.f32 %v1874, %v2034
        %v2036 = vpop.f32.mrb[0].mxu0
        %v2037 = vpop.f32.mrb[0].mxu0
        %v2038 = vadd.f32 %v1877, %v2037
        %v2039 = vpop.f32.mrb[0].mxu0
        %2040 = vmatprep.mubr.bf16.mxu0 %v705
        %2041 = vmatmul.mubr.bf16.gmra.mrb[0].mxu0 %v494
        %v2042 = vpop.f32.mrb[0].mxu0
        %v2043 = vadd.f32 %v1882, %v2042
        %v2044 = vpop.f32.mrb[0].mxu0
        %v2045 = vpop.f32.mrb[0].mxu0
        %v2046 = vadd.f32 %v1885, %v2045
        %v2047 = vpop.f32.mrb[0].mxu0
        %2048 = vmatprep.mubr.bf16.mxu0 %v830
        %2049 = vmatmul.mubr.bf16.gmra.mrb[0].mxu0 %v495
        %v2050 = vpop.f32.mrb[0].mxu0
        %v2051 = vadd.f32 %v1890, %v2050
        %v2052 = vpop.f32.mrb[0].mxu0
        %v2053 = vpop.f32.mrb[0].mxu0
        %v2054 = vadd.f32 %v1893, %v2053
        %v2055 = vpop.f32.mrb[0].mxu0
        %2056 = vmatprep.mubr.bf16.mxu0 %v525
        %2057 = vmatmul.mubr.bf16.gmra.mrb[0].mxu0 %v479
        %v2058 = vpop.f32.mrb[0].mxu0
        %v2059 = vadd.f32 %v1898, %v2058
        %v2060 = vpop.f32.mrb[0].mxu0
        %v2061 = vpop.f32.mrb[0].mxu0
        %v2062 = vadd.f32 %v1901, %v2061
        %v2063 = vpop.f32.mrb[0].mxu0
        %2064 = vdwg.mxu0
        %2065 = vmatprep.subr.bf16.mxu0 0
        %2066 = vmatpush1.bf16.msra.mxu0 %v1341
        %2067 = vmatprep.subr.bf16.mxu0 0
        %2068 = vmatpush1.bf16.msra.mxu0 %v1342
        %2069 = vmatprep.subr.bf16.mxu0 0
        %2070 = vmatpush1.bf16.msra.mxu0 %v1343
        %2071 = vmatprep.subr.bf16.mxu0 0
        %2072 = vmatpush1.bf16.msra.mxu0 %v1344
        %2073 = vmatprep.subr.bf16.mxu0 0
        %2074 = vmatpush1.bf16.msra.mxu0 %v1345
        %2075 = vmatprep.subr.bf16.mxu0 0
        %2076 = vmatpush1.bf16.msra.mxu0 %v1346
        %2077 = vmatprep.subr.bf16.mxu0 0
        %2078 = vmatpush1.bf16.msra.mxu0 %v1347
        %2079 = vmatprep.subr.bf16.mxu0 0
        %2080 = vmatpush1.bf16.msra.mxu0 %v1348
        %2081 = vmatprep.subr.bf16.mxu0 0
        %2082 = vmatpush1.bf16.msra.mxu0 0
        %2083 = vmatprep.subr.bf16.mxu0 0
        %2084 = vmatpush1.bf16.msra.mxu0 0
        %2085 = vmatprep.subr.bf16.mxu0 0
        %2086 = vmatpush1.bf16.msra.mxu0 0
        %2087 = vmatprep.subr.bf16.mxu0 0
        %2088 = vmatpush1.bf16.msra.mxu0 0
        %2089 = vmatprep.subr.bf16.mxu0 0
        %2090 = vmatpush1.bf16.msra.mxu0 0
        %2091 = vmatprep.subr.bf16.mxu0 0
        %2092 = vmatpush1.bf16.msra.mxu0 0
        %2093 = vmatprep.subr.bf16.mxu0 0
        %2094 = vmatpush1.bf16.msra.mxu0 0
        %2095 = vmatprep.subr.bf16.mxu0 0
        %2096 = vmatpush1.bf16.msra.mxu0 0
        %2097 = vmatprep.mubr.bf16.mxu0 0
        %2098 = vmatmul.mubr.bf16.gmra.mrb[0].mxu0 %v763
        %v2099 = vpop.f32.mrb[0].mxu0
        %v2100 = vadd.f32 %v1939, %v2099
        %v2101 = vpop.f32.mrb[0].mxu0
        %v2102 = vpop.f32.mrb[0].mxu0
        %v2103 = vadd.f32 %v1942, %v2102
        %v2104 = vpop.f32.mrb[0].mxu0
        %2105 = vmatprep.mubr.bf16.mxu0 0
        %2106 = vmatmul.mubr.bf16.gmra.mrb[0].mxu0 %v766
        %v2107 = vpop.f32.mrb[0].mxu0
        %v2108 = vadd.f32 %v1947, %v2107
        %v2109 = vpop.f32.mrb[0].mxu0
        %v2110 = vpop.f32.mrb[0].mxu0
        %v2111 = vadd.f32 %v1950, %v2110
        %v2112 = vpop.f32.mrb[0].mxu0
        %2113 = vmatprep.mubr.bf16.mxu0 0
        %2114 = vmatmul.mubr.bf16.gmra.mrb[0].mxu0 %v769
        %v2115 = vpop.f32.mrb[0].mxu0
        %v2116 = vadd.f32 %v1955, %v2115
        %v2117 = vpop.f32.mrb[0].mxu0
        %v2118 = vpop.f32.mrb[0].mxu0
        %v2119 = vadd.f32 %v1958, %v2118
        %v2120 = vpop.f32.mrb[0].mxu0
        %2121 = vmatprep.mubr.bf16.mxu0 0
        %2122 = vmatmul.mubr.bf16.gmra.mrb[0].mxu0 %v772
        %v2123 = vpop.f32.mrb[0].mxu0
        %v2124 = vadd.f32 %v1963, %v2123
        %v2125 = vpop.f32.mrb[0].mxu0
        %v2126 = vpop.f32.mrb[0].mxu0
        %v2127 = vadd.f32 %v1966, %v2126
        %v2128 = vpop.f32.mrb[0].mxu0
        %2129 = vmatprep.mubr.bf16.mxu0 0
        %2130 = vmatmul.mubr.bf16.gmra.mrb[0].mxu0 %v775
        %v2131 = vpop.f32.mrb[0].mxu0
        %v2132 = vadd.f32 %v1971, %v2131
        %v2133 = vpop.f32.mrb[0].mxu0
        %v2134 = vpop.f32.mrb[0].mxu0
        %v2135 = vadd.f32 %v1974, %v2134
        %v2136 = vpop.f32.mrb[0].mxu0
        %2137 = vmatprep.mubr.bf16.mxu0 0
        %2138 = vmatmul.mubr.bf16.gmra.mrb[0].mxu0 %v778
        %v2139 = vpop.f32.mrb[0].mxu0
        %v2140 = vadd.f32 %v1979, %v2139
        %v2141 = vpop.f32.mrb[0].mxu0
        %v2142 = vpop.f32.mrb[0].mxu0
        %v2143 = vadd.f32 %v1982, %v2142
        %v2144 = vpop.f32.mrb[0].mxu0
        %2145 = vmatprep.mubr.bf16.mxu0 0
        %2146 = vmatmul.mubr.bf16.gmra.mrb[0].mxu0 %v781
        %v2147 = vpop.f32.mrb[0].mxu0
        %v2148 = vadd.f32 %v1987, %v2147
        %v2149 = vpop.f32.mrb[0].mxu0
        %v2150 = vpop.f32.mrb[0].mxu0
        %v2151 = vadd.f32 %v1990, %v2150
        %v2152 = vpop.f32.mrb[0].mxu0
        %2153 = vmatprep.mubr.bf16.mxu0 0
        %2154 = vmatmul.mubr.bf16.gmra.mrb[0].mxu0 %v784
        %v2155 = vpop.f32.mrb[0].mxu0
        %v2156 = vadd.f32 %v1995, %v2155
        %v2157 = vpop.f32.mrb[0].mxu0
        %v2158 = vpop.f32.mrb[0].mxu0
        %v2159 = vadd.f32 %v1998, %v2158
        %v2160 = vpop.f32.mrb[0].mxu0
        %2161 = vmatprep.mubr.bf16.mxu0 0
        %2162 = vmatmul.mubr.bf16.gmra.mrb[0].mxu0 %v787
        %v2163 = vpop.f32.mrb[0].mxu0
        %v2164 = vadd.f32 %v2003, %v2163
        %v2165 = vpop.f32.mrb[0].mxu0
        %v2166 = vpop.f32.mrb[0].mxu0
        %v2167 = vadd.f32 %v2006, %v2166
        %v2168 = vpop.f32.mrb[0].mxu0
        %2169 = vmatprep.mubr.bf16.mxu0 0
        %2170 = vmatmul.mubr.bf16.gmra.mrb[0].mxu0 %v790
        %v2171 = vpop.f32.mrb[0].mxu0
        %v2172 = vadd.f32 %v2011, %v2171
        %v2173 = vpop.f32.mrb[0].mxu0
        %v2174 = vpop.f32.mrb[0].mxu0
        %v2175 = vadd.f32 %v2014, %v2174
        %v2176 = vpop.f32.mrb[0].mxu0
        %2177 = vmatprep.mubr.bf16.mxu0 0
        %2178 = vmatmul.mubr.bf16.gmra.mrb[0].mxu0 %v793
        %v2179 = vpop.f32.mrb[0].mxu0
        %v2180 = vadd.f32 %v2019, %v2179
        %v2181 = vpop.f32.mrb[0].mxu0
        %v2182 = vpop.f32.mrb[0].mxu0
        %v2183 = vadd.f32 %v2022, %v2182
        %v2184 = vpop.f32.mrb[0].mxu0
        %2185 = vmatprep.mubr.bf16.mxu0 0
        %2186 = vmatmul.mubr.bf16.gmra.mrb[0].mxu0 %v796
        %v2187 = vpop.f32.mrb[0].mxu0
        %v2188 = vadd.f32 %v2027, %v2187
        %v2189 = vpop.f32.mrb[0].mxu0
        %v2190 = vpop.f32.mrb[0].mxu0
        %v2191 = vadd.f32 %v2030, %v2190
        %v2192 = vpop.f32.mrb[0].mxu0
        %2193 = vmatprep.mubr.bf16.mxu0 0
        %2194 = vmatmul.mubr.bf16.gmra.mrb[0].mxu0 %v799
        %v2195 = vpop.f32.mrb[0].mxu0
        %v2196 = vadd.f32 %v2035, %v2195
        %v2197 = vpop.f32.mrb[0].mxu0
        %v2198 = vpop.f32.mrb[0].mxu0
        %v2199 = vadd.f32 %v2038, %v2198
        %v2200 = vpop.f32.mrb[0].mxu0
        %2201 = vmatprep.mubr.bf16.mxu0 0
        %2202 = vmatmul.mubr.bf16.gmra.mrb[0].mxu0 %v802
        %v2203 = vpop.f32.mrb[0].mxu0
        %v2204 = vadd.f32 %v2043, %v2203
        %v2205 = vpop.f32.mrb[0].mxu0
        %v2206 = vpop.f32.mrb[0].mxu0
        %v2207 = vadd.f32 %v2046, %v2206
        %v2208 = vpop.f32.mrb[0].mxu0
        %2209 = vmatprep.mubr.bf16.mxu0 0
        %2210 = vmatmul.mubr.bf16.gmra.mrb[0].mxu0 %v836
        %v2211 = vpop.f32.mrb[0].mxu0
        %v2212 = vadd.f32 %v2051, %v2211
        %v2213 = vpop.f32.mrb[0].mxu0
        %v2214 = vpop.f32.mrb[0].mxu0
        %v2215 = vadd.f32 %v2054, %v2214
        %v2216 = vpop.f32.mrb[0].mxu0
        %2217 = vmatprep.mubr.bf16.mxu0 0
        %2218 = vmatmul.mubr.bf16.gmra.mrb[0].mxu0 %v757
        %v2219 = vpop.f32.mrb[0].mxu0
        %v2220 = vadd.f32 %v2059, %v2219
        %v2221 = vpop.f32.mrb[0].mxu0
        %v2222 = vpop.f32.mrb[0].mxu0
        %v2223 = vadd.f32 %v2062, %v2222
        %v2224 = vpop.f32.mrb[0].mxu0
        %2225 = vdwg.mxu0
        %v2226 = vmax.f32 %v2100, 0.0
        %v2227 = vmax.f32 %v2103, 0.0
        %v2228 = vmax.f32 %v2108, 0.0
        %v2229 = vmax.f32 %v2111, 0.0
        %v2230 = vmax.f32 %v2116, 0.0
        %v2231 = vmax.f32 %v2119, 0.0
        %v2232 = vmax.f32 %v2124, 0.0
        %v2233 = vmax.f32 %v2127, 0.0
        %v2234 = vmax.f32 %v2132, 0.0
        %v2235 = vmax.f32 %v2135, 0.0
        %v2236 = vmax.f32 %v2140, 0.0
        %v2237 = vmax.f32 %v2143, 0.0
        %v2238 = vmax.f32 %v2148, 0.0
        %v2239 = vmax.f32 %v2151, 0.0
        %v2240 = vmax.f32 %v2156, 0.0
        %v2241 = vmax.f32 %v2159, 0.0
        %v2242 = vmax.f32 %v2164, 0.0
        %v2243 = vmax.f32 %v2167, 0.0
        %v2244 = vmax.f32 %v2172, 0.0
        %v2245 = vmax.f32 %v2175, 0.0
        %v2246 = vmax.f32 %v2180, 0.0
        %v2247 = vmax.f32 %v2183, 0.0
        %v2248 = vmax.f32 %v2188, 0.0
        %v2249 = vmax.f32 %v2191, 0.0
        %v2250 = vmax.f32 %v2196, 0.0
        %v2251 = vmax.f32 %v2199, 0.0
        %v2252 = vmax.f32 %v2204, 0.0
        %v2253 = vmax.f32 %v2207, 0.0
        %v2254 = vmax.f32 %v2212, 0.0
        %v2255 = vmax.f32 %v2215, 0.0
        %v2256 = vmax.f32 %v2220, 0.0
        %v2257 = vmax.f32 %v2223, 0.0
        %v2258 = vld [vmem:[%s203] sm:$0xf]
        %v2259 = vld [vmem:[%s203 + $0x4] sm:$0xf]
        %v2260 = vld [vmem:[%s203 + $0x8] sm:$0xf]
        %v2261 = vld [vmem:[%s203 + $0xc] sm:$0xf]
        %v2262 = vld [vmem:[%s203 + $0x10] sm:$0xf]
        %v2263 = vld [vmem:[%s203 + $0x14] sm:$0xf]
        %v2264 = vld [vmem:[%s203 + $0x18] sm:$0xf]
        %v2265 = vld [vmem:[%s203 + $0x1c] sm:$0xf]
        %v2266 = vld [vmem:[%s203 + $0x20] sm:$0xf]
        %v2267 = vld [vmem:[%s203 + $0x24] sm:$0xf]
        %v2268 = vld [vmem:[%s203 + $0x28] sm:$0xf]
        %v2269 = vld [vmem:[%s203 + $0x2c] sm:$0xf]
        %v2270 = vld [vmem:[%s203 + $0x30] sm:$0xf]
        %v2271 = vld [vmem:[%s203 + $0x34] sm:$0xf]
        %v2272 = vld [vmem:[%s203 + $0x38] sm:$0xf]
        %v2273 = vld [vmem:[%s203 + $0x3c] sm:$0xf]
        %v2274 = vld [vmem:[%s203 + $0x40] sm:$0xf]
        %v2275 = vld [vmem:[%s203 + $0x44] sm:$0xf]
        %v2276 = vld [vmem:[%s203 + $0x48] sm:$0xf]
        %v2277 = vld [vmem:[%s203 + $0x4c] sm:$0xf]
        %v2278 = vld [vmem:[%s203 + $0x50] sm:$0xf]
        %v2279 = vld [vmem:[%s203 + $0x54] sm:$0xf]
        %v2280 = vld [vmem:[%s203 + $0x58] sm:$0xf]
        %v2281 = vld [vmem:[%s203 + $0x5c] sm:$0xf]
        %v2282 = vld [vmem:[%s203 + $0x60] sm:$0xf]
        %v2283 = vld [vmem:[%s203 + $0x64] sm:$0xf]
        %v2284 = vld [vmem:[%s203 + $0x68] sm:$0xf]
        %v2285 = vld [vmem:[%s203 + $0x6c] sm:$0xf]
        %v2286 = vld [vmem:[%s203 + $0x70] sm:$0xf]
        %v2287 = vld [vmem:[%s203 + $0x74] sm:$0xf]
        %v2288 = vld [vmem:[%s203 + $0x78] sm:$0xf]
        %v2289 = vld [vmem:[%s203 + $0x7c] sm:$0xf]
        %v2322 = vunpack.c.l.b16 %v2258
        %v2323 = vunpack.c.l.b16 %v2259
        %v2324 = vunpack.c.l.b16 %v2260
        %v2325 = vunpack.c.l.b16 %v2261
        %v2326 = vunpack.c.l.b16 %v2262
        %v2327 = vunpack.c.l.b16 %v2263
        %v2328 = vunpack.c.l.b16 %v2264
        %v2329 = vunpack.c.l.b16 %v2265
        %v2330 = vunpack.c.l.b16 %v2266
        %v2331 = vunpack.c.l.b16 %v2267
        %v2332 = vunpack.c.l.b16 %v2268
        %v2333 = vunpack.c.l.b16 %v2269
        %v2334 = vunpack.c.l.b16 %v2270
        %v2335 = vunpack.c.l.b16 %v2271
        %v2336 = vunpack.c.l.b16 %v2272
        %v2337 = vunpack.c.l.b16 %v2273
        %v2338 = vunpack.c.l.b16 %v2274
        %v2339 = vunpack.c.l.b16 %v2275
        %v2340 = vunpack.c.l.b16 %v2276
        %v2341 = vunpack.c.l.b16 %v2277
        %v2342 = vunpack.c.l.b16 %v2278
        %v2343 = vunpack.c.l.b16 %v2279
        %v2344 = vunpack.c.l.b16 %v2280
        %v2345 = vunpack.c.l.b16 %v2281
        %v2346 = vunpack.c.l.b16 %v2282
        %v2347 = vunpack.c.l.b16 %v2283
        %v2348 = vunpack.c.l.b16 %v2284
        %v2349 = vunpack.c.l.b16 %v2285
        %v2350 = vunpack.c.l.b16 %v2286
        %v2351 = vunpack.c.l.b16 %v2287
        %v2352 = vunpack.c.l.b16 %v2288
        %v2353 = vunpack.c.l.b16 %v2289
        %v2354 = vpack.c.b16 %v2323, %v2322
        %v2355 = vpack.c.b16 %v2325, %v2324
        %v2356 = vpack.c.b16 %v2327, %v2326
        %v2357 = vpack.c.b16 %v2329, %v2328
        %v2358 = vpack.c.b16 %v2331, %v2330
        %v2359 = vpack.c.b16 %v2333, %v2332
        %v2360 = vpack.c.b16 %v2335, %v2334
        %v2361 = vpack.c.b16 %v2337, %v2336
        %v2362 = vpack.c.b16 %v2339, %v2338
        %v2363 = vpack.c.b16 %v2341, %v2340
        %v2364 = vpack.c.b16 %v2343, %v2342
        %v2365 = vpack.c.b16 %v2345, %v2344
        %v2366 = vpack.c.b16 %v2347, %v2346
        %v2367 = vpack.c.b16 %v2349, %v2348
        %v2368 = vpack.c.b16 %v2351, %v2350
        %v2369 = vpack.c.b16 %v2353, %v2352
        %v2371 = vshrl.u32 %v2354, 16
        %v2373 = vrot.slane %v2371, 7
        %v2374 = vshll.u32 %v2354, 16
        %v2376 = vor.u32 %v2373, %v2374
        %v2378 = vshrl.u32 %v2355, 16
        %v2380 = vrot.slane %v2378, 7
        %v2381 = vshll.u32 %v2355, 16
        %v2383 = vor.u32 %v2380, %v2381
        %v2385 = vshrl.u32 %v2356, 16
        %v2387 = vrot.slane %v2385, 7
        %v2388 = vshll.u32 %v2356, 16
        %v2390 = vor.u32 %v2387, %v2388
        %v2392 = vshrl.u32 %v2357, 16
        %v2394 = vrot.slane %v2392, 7
        %v2395 = vshll.u32 %v2357, 16
        %v2397 = vor.u32 %v2394, %v2395
        %v2399 = vshrl.u32 %v2358, 16
        %v2401 = vrot.slane %v2399, 7
        %v2402 = vshll.u32 %v2358, 16
        %v2404 = vor.u32 %v2401, %v2402
        %v2406 = vshrl.u32 %v2359, 16
        %v2408 = vrot.slane %v2406, 7
        %v2409 = vshll.u32 %v2359, 16
        %v2411 = vor.u32 %v2408, %v2409
        %v2413 = vshrl.u32 %v2360, 16
        %v2415 = vrot.slane %v2413, 7
        %v2416 = vshll.u32 %v2360, 16
        %v2418 = vor.u32 %v2415, %v2416
        %v2420 = vshrl.u32 %v2361, 16
        %v2422 = vrot.slane %v2420, 7
        %v2423 = vshll.u32 %v2361, 16
        %v2425 = vor.u32 %v2422, %v2423
        %v2427 = vshrl.u32 %v2362, 16
        %v2429 = vrot.slane %v2427, 7
        %v2430 = vshll.u32 %v2362, 16
        %v2432 = vor.u32 %v2429, %v2430
        %v2434 = vshrl.u32 %v2363, 16
        %v2436 = vrot.slane %v2434, 7
        %v2437 = vshll.u32 %v2363, 16
        %v2439 = vor.u32 %v2436, %v2437
        %v2441 = vshrl.u32 %v2364, 16
        %v2443 = vrot.slane %v2441, 7
        %v2444 = vshll.u32 %v2364, 16
        %v2446 = vor.u32 %v2443, %v2444
        %v2448 = vshrl.u32 %v2365, 16
        %v2450 = vrot.slane %v2448, 7
        %v2451 = vshll.u32 %v2365, 16
        %v2453 = vor.u32 %v2450, %v2451
        %v2455 = vshrl.u32 %v2366, 16
        %v2457 = vrot.slane %v2455, 7
        %v2458 = vshll.u32 %v2366, 16
        %v2460 = vor.u32 %v2457, %v2458
        %v2462 = vshrl.u32 %v2367, 16
        %v2464 = vrot.slane %v2462, 7
        %v2465 = vshll.u32 %v2367, 16
        %v2467 = vor.u32 %v2464, %v2465
        %v2469 = vshrl.u32 %v2368, 16
        %v2471 = vrot.slane %v2469, 7
        %v2472 = vshll.u32 %v2368, 16
        %v2474 = vor.u32 %v2471, %v2472
        %v2476 = vshrl.u32 %v2369, 16
        %v2478 = vrot.slane %v2476, 7
        %v2479 = vshll.u32 %v2369, 16
        %v2481 = vor.u32 %v2478, %v2479
        %v2514 = vsel %vm478, 0, %v2376
        %v2515 = vsel %vm478, 0, %v2383
        %v2516 = vsel %vm478, 0, %v2390
        %v2517 = vsel %vm478, 0, %v2397
        %v2518 = vsel %vm478, 0, %v2404
        %v2519 = vsel %vm478, 0, %v2411
        %v2520 = vsel %vm478, 0, %v2418
        %v2521 = vsel %vm478, 0, %v2425
        %v2522 = vsel %vm478, 0, %v2432
        %v2523 = vsel %vm478, 0, %v2439
        %v2524 = vsel %vm478, 0, %v2446
        %v2525 = vsel %vm478, 0, %v2453
        %v2526 = vsel %vm478, 0, %v2460
        %v2527 = vsel %vm478, 0, %v2467
        %v2528 = vsel %vm478, 0, %v2474
        %v2529 = vsel %vm478, 0, %v2481
        %v2530 = vsel %vm478, %v2373, 0
        %v2531 = vsel %vm478, %v2380, 0
        %v2532 = vsel %vm478, %v2387, 0
        %v2533 = vsel %vm478, %v2394, 0
        %v2534 = vsel %vm478, %v2401, 0
        %v2535 = vsel %vm478, %v2408, 0
        %v2536 = vsel %vm478, %v2415, 0
        %v2537 = vsel %vm478, %v2422, 0
        %v2538 = vsel %vm478, %v2429, 0
        %v2539 = vsel %vm478, %v2436, 0
        %v2540 = vsel %vm478, %v2443, 0
        %v2541 = vsel %vm478, %v2450, 0
        %v2542 = vsel %vm478, %v2457, 0
        %v2543 = vsel %vm478, %v2464, 0
        %v2544 = vsel %vm478, %v2471, 0
        %v2545 = vsel %vm478, %v2478, 0
        %v2547 = vshrl.u32 %v2514, 16
        %v2549 = vshll.u32 %v2514, 16
        %v2551 = vrot.slane %v2549, 1
        %v2552 = vor.u32 %v2547, %v2551
        %v2554 = vshll.u32 %v2530, 16
        %v2556 = vrot.slane %v2554, 1
        %v2557 = vsel %vm513, %v2552, %v2556
        %v2559 = vshrl.u32 %v2515, 16
        %v2561 = vshll.u32 %v2515, 16
        %v2563 = vrot.slane %v2561, 1
        %v2564 = vor.u32 %v2559, %v2563
        %v2566 = vshll.u32 %v2531, 16
        %v2568 = vrot.slane %v2566, 1
        %v2569 = vsel %vm513, %v2564, %v2568
        %v2571 = vshrl.u32 %v2516, 16
        %v2573 = vshll.u32 %v2516, 16
        %v2575 = vrot.slane %v2573, 1
        %v2576 = vor.u32 %v2571, %v2575
        %v2578 = vshll.u32 %v2532, 16
        %v2580 = vrot.slane %v2578, 1
        %v2581 = vsel %vm513, %v2576, %v2580
        %v2583 = vshrl.u32 %v2517, 16
        %v2585 = vshll.u32 %v2517, 16
        %v2587 = vrot.slane %v2585, 1
        %v2588 = vor.u32 %v2583, %v2587
        %v2590 = vshll.u32 %v2533, 16
        %v2592 = vrot.slane %v2590, 1
        %v2593 = vsel %vm513, %v2588, %v2592
        %v2595 = vshrl.u32 %v2518, 16
        %v2597 = vshll.u32 %v2518, 16
        %v2599 = vrot.slane %v2597, 1
        %v2600 = vor.u32 %v2595, %v2599
        %v2602 = vshll.u32 %v2534, 16
        %v2604 = vrot.slane %v2602, 1
        %v2605 = vsel %vm513, %v2600, %v2604
        %v2607 = vshrl.u32 %v2519, 16
        %v2609 = vshll.u32 %v2519, 16
        %v2611 = vrot.slane %v2609, 1
        %v2612 = vor.u32 %v2607, %v2611
        %v2614 = vshll.u32 %v2535, 16
        %v2616 = vrot.slane %v2614, 1
        %v2617 = vsel %vm513, %v2612, %v2616
        %v2619 = vshrl.u32 %v2520, 16
        %v2621 = vshll.u32 %v2520, 16
        %v2623 = vrot.slane %v2621, 1
        %v2624 = vor.u32 %v2619, %v2623
        %v2626 = vshll.u32 %v2536, 16
        %v2628 = vrot.slane %v2626, 1
        %v2629 = vsel %vm513, %v2624, %v2628
        %v2631 = vshrl.u32 %v2521, 16
        %v2633 = vshll.u32 %v2521, 16
        %v2635 = vrot.slane %v2633, 1
        %v2636 = vor.u32 %v2631, %v2635
        %v2638 = vshll.u32 %v2537, 16
        %v2640 = vrot.slane %v2638, 1
        %v2641 = vsel %vm513, %v2636, %v2640
        %v2643 = vshrl.u32 %v2522, 16
        %v2645 = vshll.u32 %v2522, 16
        %v2647 = vrot.slane %v2645, 1
        %v2648 = vor.u32 %v2643, %v2647
        %v2650 = vshll.u32 %v2538, 16
        %v2652 = vrot.slane %v2650, 1
        %v2653 = vsel %vm513, %v2648, %v2652
        %v2655 = vshrl.u32 %v2523, 16
        %v2657 = vshll.u32 %v2523, 16
        %v2659 = vrot.slane %v2657, 1
        %v2660 = vor.u32 %v2655, %v2659
        %v2662 = vshll.u32 %v2539, 16
        %v2664 = vrot.slane %v2662, 1
        %v2665 = vsel %vm513, %v2660, %v2664
        %v2667 = vshrl.u32 %v2524, 16
        %v2669 = vshll.u32 %v2524, 16
        %v2671 = vrot.slane %v2669, 1
        %v2672 = vor.u32 %v2667, %v2671
        %v2674 = vshll.u32 %v2540, 16
        %v2676 = vrot.slane %v2674, 1
        %v2677 = vsel %vm513, %v2672, %v2676
        %v2679 = vshrl.u32 %v2525, 16
        %v2681 = vshll.u32 %v2525, 16
        %v2683 = vrot.slane %v2681, 1
        %v2684 = vor.u32 %v2679, %v2683
        %v2686 = vshll.u32 %v2541, 16
        %v2688 = vrot.slane %v2686, 1
        %v2689 = vsel %vm513, %v2684, %v2688
        %v2691 = vshrl.u32 %v2526, 16
        %v2693 = vshll.u32 %v2526, 16
        %v2695 = vrot.slane %v2693, 1
        %v2696 = vor.u32 %v2691, %v2695
        %v2698 = vshll.u32 %v2542, 16
        %v2700 = vrot.slane %v2698, 1
        %v2701 = vsel %vm513, %v2696, %v2700
        %v2703 = vshrl.u32 %v2527, 16
        %v2705 = vshll.u32 %v2527, 16
        %v2707 = vrot.slane %v2705, 1
        %v2708 = vor.u32 %v2703, %v2707
        %v2710 = vshll.u32 %v2543, 16
        %v2712 = vrot.slane %v2710, 1
        %v2713 = vsel %vm513, %v2708, %v2712
        %v2715 = vshrl.u32 %v2528, 16
        %v2717 = vshll.u32 %v2528, 16
        %v2719 = vrot.slane %v2717, 1
        %v2720 = vor.u32 %v2715, %v2719
        %v2722 = vshll.u32 %v2544, 16
        %v2724 = vrot.slane %v2722, 1
        %v2725 = vsel %vm513, %v2720, %v2724
        %v2771 = vrot.slane %v2514, 1
        %v2772 = vrot.slane %v2530, 1
        %v2773 = vsel %vm754, %v2771, %v2772
        %v2774 = vrot.slane %v2515, 1
        %v2775 = vrot.slane %v2531, 1
        %v2776 = vsel %vm754, %v2774, %v2775
        %v2777 = vrot.slane %v2516, 1
        %v2778 = vrot.slane %v2532, 1
        %v2779 = vsel %vm754, %v2777, %v2778
        %v2780 = vrot.slane %v2517, 1
        %v2781 = vrot.slane %v2533, 1
        %v2782 = vsel %vm754, %v2780, %v2781
        %v2783 = vrot.slane %v2518, 1
        %v2784 = vrot.slane %v2534, 1
        %v2785 = vsel %vm754, %v2783, %v2784
        %v2786 = vrot.slane %v2519, 1
        %v2787 = vrot.slane %v2535, 1
        %v2788 = vsel %vm754, %v2786, %v2787
        %v2789 = vrot.slane %v2520, 1
        %v2790 = vrot.slane %v2536, 1
        %v2791 = vsel %vm754, %v2789, %v2790
        %v2792 = vrot.slane %v2521, 1
        %v2793 = vrot.slane %v2537, 1
        %v2794 = vsel %vm754, %v2792, %v2793
        %v2795 = vrot.slane %v2522, 1
        %v2796 = vrot.slane %v2538, 1
        %v2797 = vsel %vm754, %v2795, %v2796
        %v2798 = vrot.slane %v2523, 1
        %v2799 = vrot.slane %v2539, 1
        %v2800 = vsel %vm754, %v2798, %v2799
        %v2801 = vrot.slane %v2524, 1
        %v2802 = vrot.slane %v2540, 1
        %v2803 = vsel %vm754, %v2801, %v2802
        %v2804 = vrot.slane %v2525, 1
        %v2805 = vrot.slane %v2541, 1
        %v2806 = vsel %vm754, %v2804, %v2805
        %v2807 = vrot.slane %v2526, 1
        %v2808 = vrot.slane %v2542, 1
        %v2809 = vsel %vm754, %v2807, %v2808
        %v2810 = vrot.slane %v2527, 1
        %v2811 = vrot.slane %v2543, 1
        %v2812 = vsel %vm754, %v2810, %v2811
        %v2813 = vrot.slane %v2528, 1
        %v2814 = vrot.slane %v2544, 1
        %v2815 = vsel %vm754, %v2813, %v2814
        %v2832 = vshrl.u32 %v2529, 16
        %v2834 = vshll.u32 %v2529, 16
        %v2836 = vrot.slane %v2834, 1
        %v2837 = vor.u32 %v2832, %v2836
        %v2839 = vshll.u32 %v2545, 16
        %v2841 = vrot.slane %v2839, 1
        %v2842 = vsel %vm513, %v2837, %v2841
        %v2846 = vrot.slane %v2529, 1
        %v2847 = vrot.slane %v2545, 1
        %v2848 = vsel %vm754, %v2846, %v2847
        %2850 = vmatprep.subr.bf16.mxu0 0
        %2851 = vmatpush1.bf16.msra.mxu0 %v1277
        %2852 = vmatprep.subr.bf16.mxu0 0
        %2853 = vmatpush1.bf16.msra.mxu0 %v1278
        %2854 = vmatprep.subr.bf16.mxu0 0
        %2855 = vmatpush1.bf16.msra.mxu0 %v1279
        %2856 = vmatprep.subr.bf16.mxu0 0
        %2857 = vmatpush1.bf16.msra.mxu0 %v1280
        %2858 = vmatprep.subr.bf16.mxu0 0
        %2859 = vmatpush1.bf16.msra.mxu0 %v1281
        %2860 = vmatprep.subr.bf16.mxu0 0
        %2861 = vmatpush1.bf16.msra.mxu0 %v1282
        %2862 = vmatprep.subr.bf16.mxu0 0
        %2863 = vmatpush1.bf16.msra.mxu0 %v1283
        %2864 = vmatprep.subr.bf16.mxu0 0
        %2865 = vmatpush1.bf16.msra.mxu0 %v1284
        %2866 = vmatprep.subr.bf16.mxu0 0
        %2867 = vmatpush1.bf16.msra.mxu0 %v1285
        %2868 = vmatprep.subr.bf16.mxu0 0
        %2869 = vmatpush1.bf16.msra.mxu0 %v1286
        %2870 = vmatprep.subr.bf16.mxu0 0
        %2871 = vmatpush1.bf16.msra.mxu0 %v1287
        %2872 = vmatprep.subr.bf16.mxu0 0
        %2873 = vmatpush1.bf16.msra.mxu0 %v1288
        %2874 = vmatprep.subr.bf16.mxu0 0
        %2875 = vmatpush1.bf16.msra.mxu0 %v1289
        %2876 = vmatprep.subr.bf16.mxu0 0
        %2877 = vmatpush1.bf16.msra.mxu0 %v1290
        %2878 = vmatprep.subr.bf16.mxu0 0
        %2879 = vmatpush1.bf16.msra.mxu0 %v1291
        %2880 = vmatprep.subr.bf16.mxu0 0
        %2881 = vmatpush1.bf16.msra.mxu0 %v1292
        %2882 = vmatprep.mubr.bf16.mxu0 %v525
        %2883 = vmatmul.mubr.bf16.gmra.mrb[0].mxu0 %v479
        %v2884 = vpop.f32.mrb[0].mxu0
        %v2885 = vadd.f32 %v987, %v2884
        %v2886 = vpop.f32.mrb[0].mxu0
        %v2887 = vpop.f32.mrb[0].mxu0
        %v2888 = vadd.f32 %v987, %v2887
        %v2889 = vpop.f32.mrb[0].mxu0
        %2890 = vmatprep.mubr.bf16.mxu0 %v2557
        %2891 = vmatmul.mubr.bf16.gmra.mrb[0].mxu0 %v2514
        %v2892 = vpop.f32.mrb[0].mxu0
        %v2893 = vadd.f32 %v987, %v2892
        %v2894 = vpop.f32.mrb[0].mxu0
        %v2895 = vpop.f32.mrb[0].mxu0
        %v2896 = vadd.f32 %v987, %v2895
        %v2897 = vpop.f32.mrb[0].mxu0
        %2898 = vmatprep.mubr.bf16.mxu0 %v2569
        %2899 = vmatmul.mubr.bf16.gmra.mrb[0].mxu0 %v2515
        %v2900 = vpop.f32.mrb[0].mxu0
        %v2901 = vadd.f32 %v987, %v2900
        %v2902 = vpop.f32.mrb[0].mxu0
        %v2903 = vpop.f32.mrb[0].mxu0
        %v2904 = vadd.f32 %v987, %v2903
        %v2905 = vpop.f32.mrb[0].mxu0
        %2906 = vmatprep.mubr.bf16.mxu0 %v2581
        %2907 = vmatmul.mubr.bf16.gmra.mrb[0].mxu0 %v2516
        %v2908 = vpop.f32.mrb[0].mxu0
        %v2909 = vadd.f32 %v987, %v2908
        %v2910 = vpop.f32.mrb[0].mxu0
        %v2911 = vpop.f32.mrb[0].mxu0
        %v2912 = vadd.f32 %v987, %v2911
        %v2913 = vpop.f32.mrb[0].mxu0
        %2914 = vmatprep.mubr.bf16.mxu0 %v2593
        %2915 = vmatmul.mubr.bf16.gmra.mrb[0].mxu0 %v2517
        %v2916 = vpop.f32.mrb[0].mxu0
        %v2917 = vadd.f32 %v987, %v2916
        %v2918 = vpop.f32.mrb[0].mxu0
        %v2919 = vpop.f32.mrb[0].mxu0
        %v2920 = vadd.f32 %v987, %v2919
        %v2921 = vpop.f32.mrb[0].mxu0
        %2922 = vmatprep.mubr.bf16.mxu0 %v2605
        %2923 = vmatmul.mubr.bf16.gmra.mrb[0].mxu0 %v2518
        %v2924 = vpop.f32.mrb[0].mxu0
        %v2925 = vadd.f32 %v987, %v2924
        %v2926 = vpop.f32.mrb[0].mxu0
        %v2927 = vpop.f32.mrb[0].mxu0
        %v2928 = vadd.f32 %v987, %v2927
        %v2929 = vpop.f32.mrb[0].mxu0
        %2930 = vmatprep.mubr.bf16.mxu0 %v2617
        %2931 = vmatmul.mubr.bf16.gmra.mrb[0].mxu0 %v2519
        %v2932 = vpop.f32.mrb[0].mxu0
        %v2933 = vadd.f32 %v987, %v2932
        %v2934 = vpop.f32.mrb[0].mxu0
        %v2935 = vpop.f32.mrb[0].mxu0
        %v2936 = vadd.f32 %v987, %v2935
        %v2937 = vpop.f32.mrb[0].mxu0
        %2938 = vmatprep.mubr.bf16.mxu0 %v2629
        %2939 = vmatmul.mubr.bf16.gmra.mrb[0].mxu0 %v2520
        %v2940 = vpop.f32.mrb[0].mxu0
        %v2941 = vadd.f32 %v987, %v2940
        %v2942 = vpop.f32.mrb[0].mxu0
        %v2943 = vpop.f32.mrb[0].mxu0
        %v2944 = vadd.f32 %v987, %v2943
        %v2945 = vpop.f32.mrb[0].mxu0
        %2946 = vmatprep.mubr.bf16.mxu0 %v2641
        %2947 = vmatmul.mubr.bf16.gmra.mrb[0].mxu0 %v2521
        %v2948 = vpop.f32.mrb[0].mxu0
        %v2949 = vadd.f32 %v987, %v2948
        %v2950 = vpop.f32.mrb[0].mxu0
        %v2951 = vpop.f32.mrb[0].mxu0
        %v2952 = vadd.f32 %v987, %v2951
        %v2953 = vpop.f32.mrb[0].mxu0
        %2954 = vmatprep.mubr.bf16.mxu0 %v2653
        %2955 = vmatmul.mubr.bf16.gmra.mrb[0].mxu0 %v2522
        %v2956 = vpop.f32.mrb[0].mxu0
        %v2957 = vadd.f32 %v987, %v2956
        %v2958 = vpop.f32.mrb[0].mxu0
        %v2959 = vpop.f32.mrb[0].mxu0
        %v2960 = vadd.f32 %v987, %v2959
        %v2961 = vpop.f32.mrb[0].mxu0
        %2962 = vmatprep.mubr.bf16.mxu0 %v2665
        %2963 = vmatmul.mubr.bf16.gmra.mrb[0].mxu0 %v2523
        %v2964 = vpop.f32.mrb[0].mxu0
        %v2965 = vadd.f32 %v987, %v2964
        %v2966 = vpop.f32.mrb[0].mxu0
        %v2967 = vpop.f32.mrb[0].mxu0
        %v2968 = vadd.f32 %v987, %v2967
        %v2969 = vpop.f32.mrb[0].mxu0
        %2970 = vmatprep.mubr.bf16.mxu0 %v2677
        %2971 = vmatmul.mubr.bf16.gmra.mrb[0].mxu0 %v2524
        %v2972 = vpop.f32.mrb[0].mxu0
        %v2973 = vadd.f32 %v987, %v2972
        %v2974 = vpop.f32.mrb[0].mxu0
        %v2975 = vpop.f32.mrb[0].mxu0
        %v2976 = vadd.f32 %v987, %v2975
        %v2977 = vpop.f32.mrb[0].mxu0
        %2978 = vmatprep.mubr.bf16.mxu0 %v2689
        %2979 = vmatmul.mubr.bf16.gmra.mrb[0].mxu0 %v2525
        %v2980 = vpop.f32.mrb[0].mxu0
        %v2981 = vadd.f32 %v987, %v2980
        %v2982 = vpop.f32.mrb[0].mxu0
        %v2983 = vpop.f32.mrb[0].mxu0
        %v2984 = vadd.f32 %v987, %v2983
        %v2985 = vpop.f32.mrb[0].mxu0
        %2986 = vmatprep.mubr.bf16.mxu0 %v2701
        %2987 = vmatmul.mubr.bf16.gmra.mrb[0].mxu0 %v2526
        %v2988 = vpop.f32.mrb[0].mxu0
        %v2989 = vadd.f32 %v987, %v2988
        %v2990 = vpop.f32.mrb[0].mxu0
        %v2991 = vpop.f32.mrb[0].mxu0
        %v2992 = vadd.f32 %v987, %v2991
        %v2993 = vpop.f32.mrb[0].mxu0
        %2994 = vmatprep.mubr.bf16.mxu0 %v2713
        %2995 = vmatmul.mubr.bf16.gmra.mrb[0].mxu0 %v2527
        %v2996 = vpop.f32.mrb[0].mxu0
        %v2997 = vadd.f32 %v987, %v2996
        %v2998 = vpop.f32.mrb[0].mxu0
        %v2999 = vpop.f32.mrb[0].mxu0
        %v3000 = vadd.f32 %v987, %v2999
        %v3001 = vpop.f32.mrb[0].mxu0
        %3002 = vmatprep.mubr.bf16.mxu0 %v2725
        %3003 = vmatmul.mubr.bf16.gmra.mrb[0].mxu0 %v2528
        %v3004 = vpop.f32.mrb[0].mxu0
        %v3005 = vadd.f32 %v987, %v3004
        %v3006 = vpop.f32.mrb[0].mxu0
        %v3007 = vpop.f32.mrb[0].mxu0
        %v3008 = vadd.f32 %v987, %v3007
        %v3009 = vpop.f32.mrb[0].mxu0
        %3010 = vdwg.mxu0
        %3011 = vmatprep.subr.bf16.mxu0 0
        %3012 = vmatpush1.bf16.msra.mxu0 %v1293
        %3013 = vmatprep.subr.bf16.mxu0 0
        %3014 = vmatpush1.bf16.msra.mxu0 %v1294
        %3015 = vmatprep.subr.bf16.mxu0 0
        %3016 = vmatpush1.bf16.msra.mxu0 %v1295
        %3017 = vmatprep.subr.bf16.mxu0 0
        %3018 = vmatpush1.bf16.msra.mxu0 %v1296
        %3019 = vmatprep.subr.bf16.mxu0 0
        %3020 = vmatpush1.bf16.msra.mxu0 %v1297
        %3021 = vmatprep.subr.bf16.mxu0 0
        %3022 = vmatpush1.bf16.msra.mxu0 %v1298
        %3023 = vmatprep.subr.bf16.mxu0 0
        %3024 = vmatpush1.bf16.msra.mxu0 %v1299
        %3025 = vmatprep.subr.bf16.mxu0 0
        %3026 = vmatpush1.bf16.msra.mxu0 %v1300
        %3027 = vmatprep.subr.bf16.mxu0 0
        %3028 = vmatpush1.bf16.msra.mxu0 %v1301
        %3029 = vmatprep.subr.bf16.mxu0 0
        %3030 = vmatpush1.bf16.msra.mxu0 %v1302
        %3031 = vmatprep.subr.bf16.mxu0 0
        %3032 = vmatpush1.bf16.msra.mxu0 %v1303
        %3033 = vmatprep.subr.bf16.mxu0 0
        %3034 = vmatpush1.bf16.msra.mxu0 %v1304
        %3035 = vmatprep.subr.bf16.mxu0 0
        %3036 = vmatpush1.bf16.msra.mxu0 %v1305
        %3037 = vmatprep.subr.bf16.mxu0 0
        %3038 = vmatpush1.bf16.msra.mxu0 %v1306
        %3039 = vmatprep.subr.bf16.mxu0 0
        %3040 = vmatpush1.bf16.msra.mxu0 %v1307
        %3041 = vmatprep.subr.bf16.mxu0 0
        %3042 = vmatpush1.bf16.msra.mxu0 %v1308
        %3043 = vmatprep.mubr.bf16.mxu0 %v2514
        %3044 = vmatmul.mubr.bf16.gmra.mrb[0].mxu0 %v757
        %v3045 = vpop.f32.mrb[0].mxu0
        %v3046 = vadd.f32 %v2885, %v3045
        %v3047 = vpop.f32.mrb[0].mxu0
        %v3048 = vpop.f32.mrb[0].mxu0
        %v3049 = vadd.f32 %v2888, %v3048
        %v3050 = vpop.f32.mrb[0].mxu0
        %3051 = vmatprep.mubr.bf16.mxu0 %v2515
        %3052 = vmatmul.mubr.bf16.gmra.mrb[0].mxu0 %v2773
        %v3053 = vpop.f32.mrb[0].mxu0
        %v3054 = vadd.f32 %v2893, %v3053
        %v3055 = vpop.f32.mrb[0].mxu0
        %v3056 = vpop.f32.mrb[0].mxu0
        %v3057 = vadd.f32 %v2896, %v3056
        %v3058 = vpop.f32.mrb[0].mxu0
        %3059 = vmatprep.mubr.bf16.mxu0 %v2516
        %3060 = vmatmul.mubr.bf16.gmra.mrb[0].mxu0 %v2776
        %v3061 = vpop.f32.mrb[0].mxu0
        %v3062 = vadd.f32 %v2901, %v3061
        %v3063 = vpop.f32.mrb[0].mxu0
        %v3064 = vpop.f32.mrb[0].mxu0
        %v3065 = vadd.f32 %v2904, %v3064
        %v3066 = vpop.f32.mrb[0].mxu0
        %3067 = vmatprep.mubr.bf16.mxu0 %v2517
        %3068 = vmatmul.mubr.bf16.gmra.mrb[0].mxu0 %v2779
        %v3069 = vpop.f32.mrb[0].mxu0
        %v3070 = vadd.f32 %v2909, %v3069
        %v3071 = vpop.f32.mrb[0].mxu0
        %v3072 = vpop.f32.mrb[0].mxu0
        %v3073 = vadd.f32 %v2912, %v3072
        %v3074 = vpop.f32.mrb[0].mxu0
        %3075 = vmatprep.mubr.bf16.mxu0 %v2518
        %3076 = vmatmul.mubr.bf16.gmra.mrb[0].mxu0 %v2782
        %v3077 = vpop.f32.mrb[0].mxu0
        %v3078 = vadd.f32 %v2917, %v3077
        %v3079 = vpop.f32.mrb[0].mxu0
        %v3080 = vpop.f32.mrb[0].mxu0
        %v3081 = vadd.f32 %v2920, %v3080
        %v3082 = vpop.f32.mrb[0].mxu0
        %3083 = vmatprep.mubr.bf16.mxu0 %v2519
        %3084 = vmatmul.mubr.bf16.gmra.mrb[0].mxu0 %v2785
        %v3085 = vpop.f32.mrb[0].mxu0
        %v3086 = vadd.f32 %v2925, %v3085
        %v3087 = vpop.f32.mrb[0].mxu0
        %v3088 = vpop.f32.mrb[0].mxu0
        %v3089 = vadd.f32 %v2928, %v3088
        %v3090 = vpop.f32.mrb[0].mxu0
        %3091 = vmatprep.mubr.bf16.mxu0 %v2520
        %3092 = vmatmul.mubr.bf16.gmra.mrb[0].mxu0 %v2788
        %v3093 = vpop.f32.mrb[0].mxu0
        %v3094 = vadd.f32 %v2933, %v3093
        %v3095 = vpop.f32.mrb[0].mxu0
        %v3096 = vpop.f32.mrb[0].mxu0
        %v3097 = vadd.f32 %v2936, %v3096
        %v3098 = vpop.f32.mrb[0].mxu0
        %3099 = vmatprep.mubr.bf16.mxu0 %v2521
        %3100 = vmatmul.mubr.bf16.gmra.mrb[0].mxu0 %v2791
        %v3101 = vpop.f32.mrb[0].mxu0
        %v3102 = vadd.f32 %v2941, %v3101
        %v3103 = vpop.f32.mrb[0].mxu0
        %v3104 = vpop.f32.mrb[0].mxu0
        %v3105 = vadd.f32 %v2944, %v3104
        %v3106 = vpop.f32.mrb[0].mxu0
        %3107 = vmatprep.mubr.bf16.mxu0 %v2522
        %3108 = vmatmul.mubr.bf16.gmra.mrb[0].mxu0 %v2794
        %v3109 = vpop.f32.mrb[0].mxu0
        %v3110 = vadd.f32 %v2949, %v3109
        %v3111 = vpop.f32.mrb[0].mxu0
        %v3112 = vpop.f32.mrb[0].mxu0
        %v3113 = vadd.f32 %v2952, %v3112
        %v3114 = vpop.f32.mrb[0].mxu0
        %3115 = vmatprep.mubr.bf16.mxu0 %v2523
        %3116 = vmatmul.mubr.bf16.gmra.mrb[0].mxu0 %v2797
        %v3117 = vpop.f32.mrb[0].mxu0
        %v3118 = vadd.f32 %v2957, %v3117
        %v3119 = vpop.f32.mrb[0].mxu0
        %v3120 = vpop.f32.mrb[0].mxu0
        %v3121 = vadd.f32 %v2960, %v3120
        %v3122 = vpop.f32.mrb[0].mxu0
        %3123 = vmatprep.mubr.bf16.mxu0 %v2524
        %3124 = vmatmul.mubr.bf16.gmra.mrb[0].mxu0 %v2800
        %v3125 = vpop.f32.mrb[0].mxu0
        %v3126 = vadd.f32 %v2965, %v3125
        %v3127 = vpop.f32.mrb[0].mxu0
        %v3128 = vpop.f32.mrb[0].mxu0
        %v3129 = vadd.f32 %v2968, %v3128
        %v3130 = vpop.f32.mrb[0].mxu0
        %3131 = vmatprep.mubr.bf16.mxu0 %v2525
        %3132 = vmatmul.mubr.bf16.gmra.mrb[0].mxu0 %v2803
        %v3133 = vpop.f32.mrb[0].mxu0
        %v3134 = vadd.f32 %v2973, %v3133
        %v3135 = vpop.f32.mrb[0].mxu0
        %v3136 = vpop.f32.mrb[0].mxu0
        %v3137 = vadd.f32 %v2976, %v3136
        %v3138 = vpop.f32.mrb[0].mxu0
        %3139 = vmatprep.mubr.bf16.mxu0 %v2526
        %3140 = vmatmul.mubr.bf16.gmra.mrb[0].mxu0 %v2806
        %v3141 = vpop.f32.mrb[0].mxu0
        %v3142 = vadd.f32 %v2981, %v3141
        %v3143 = vpop.f32.mrb[0].mxu0
        %v3144 = vpop.f32.mrb[0].mxu0
        %v3145 = vadd.f32 %v2984, %v3144
        %v3146 = vpop.f32.mrb[0].mxu0
        %3147 = vmatprep.mubr.bf16.mxu0 %v2527
        %3148 = vmatmul.mubr.bf16.gmra.mrb[0].mxu0 %v2809
        %v3149 = vpop.f32.mrb[0].mxu0
        %v3150 = vadd.f32 %v2989, %v3149
        %v3151 = vpop.f32.mrb[0].mxu0
        %v3152 = vpop.f32.mrb[0].mxu0
        %v3153 = vadd.f32 %v2992, %v3152
        %v3154 = vpop.f32.mrb[0].mxu0
        %3155 = vmatprep.mubr.bf16.mxu0 %v2528
        %3156 = vmatmul.mubr.bf16.gmra.mrb[0].mxu0 %v2812
        %v3157 = vpop.f32.mrb[0].mxu0
        %v3158 = vadd.f32 %v2997, %v3157
        %v3159 = vpop.f32.mrb[0].mxu0
        %v3160 = vpop.f32.mrb[0].mxu0
        %v3161 = vadd.f32 %v3000, %v3160
        %v3162 = vpop.f32.mrb[0].mxu0
        %3163 = vmatprep.mubr.bf16.mxu0 %v2529
        %3164 = vmatmul.mubr.bf16.gmra.mrb[0].mxu0 %v2815
        %v3165 = vpop.f32.mrb[0].mxu0
        %v3166 = vadd.f32 %v3005, %v3165
        %v3167 = vpop.f32.mrb[0].mxu0
        %v3168 = vpop.f32.mrb[0].mxu0
        %v3169 = vadd.f32 %v3008, %v3168
        %v3170 = vpop.f32.mrb[0].mxu0
        %3171 = vdwg.mxu0
        %3172 = vmatprep.subr.bf16.mxu0 0
        %3173 = vmatpush1.bf16.msra.mxu0 %v1309
        %3174 = vmatprep.subr.bf16.mxu0 0
        %3175 = vmatpush1.bf16.msra.mxu0 %v1310
        %3176 = vmatprep.subr.bf16.mxu0 0
        %3177 = vmatpush1.bf16.msra.mxu0 %v1311
        %3178 = vmatprep.subr.bf16.mxu0 0
        %3179 = vmatpush1.bf16.msra.mxu0 %v1312
        %3180 = vmatprep.subr.bf16.mxu0 0
        %3181 = vmatpush1.bf16.msra.mxu0 %v1313
        %3182 = vmatprep.subr.bf16.mxu0 0
        %3183 = vmatpush1.bf16.msra.mxu0 %v1314
        %3184 = vmatprep.subr.bf16.mxu0 0
        %3185 = vmatpush1.bf16.msra.mxu0 %v1315
        %3186 = vmatprep.subr.bf16.mxu0 0
        %3187 = vmatpush1.bf16.msra.mxu0 %v1316
        %3188 = vmatprep.subr.bf16.mxu0 0
        %3189 = vmatpush1.bf16.msra.mxu0 %v1317
        %3190 = vmatprep.subr.bf16.mxu0 0
        %3191 = vmatpush1.bf16.msra.mxu0 %v1318
        %3192 = vmatprep.subr.bf16.mxu0 0
        %3193 = vmatpush1.bf16.msra.mxu0 %v1319
        %3194 = vmatprep.subr.bf16.mxu0 0
        %3195 = vmatpush1.bf16.msra.mxu0 %v1320
        %3196 = vmatprep.subr.bf16.mxu0 0
        %3197 = vmatpush1.bf16.msra.mxu0 %v1321
        %3198 = vmatprep.subr.bf16.mxu0 0
        %3199 = vmatpush1.bf16.msra.mxu0 %v1322
        %3200 = vmatprep.subr.bf16.mxu0 0
        %3201 = vmatpush1.bf16.msra.mxu0 %v1323
        %3202 = vmatprep.subr.bf16.mxu0 0
        %3203 = vmatpush1.bf16.msra.mxu0 %v1324
        %3204 = vmatprep.mubr.bf16.mxu0 %v2773
        %3205 = vmatmul.mubr.bf16.gmra.mrb[0].mxu0 %v2557
        %v3206 = vpop.f32.mrb[0].mxu0
        %v3207 = vadd.f32 %v3046, %v3206
        %v3208 = vpop.f32.mrb[0].mxu0
        %v3209 = vpop.f32.mrb[0].mxu0
        %v3210 = vadd.f32 %v3049, %v3209
        %v3211 = vpop.f32.mrb[0].mxu0
        %3212 = vmatprep.mubr.bf16.mxu0 %v2776
        %3213 = vmatmul.mubr.bf16.gmra.mrb[0].mxu0 %v2569
        %v3214 = vpop.f32.mrb[0].mxu0
        %v3215 = vadd.f32 %v3054, %v3214
        %v3216 = vpop.f32.mrb[0].mxu0
        %v3217 = vpop.f32.mrb[0].mxu0
        %v3218 = vadd.f32 %v3057, %v3217
        %v3219 = vpop.f32.mrb[0].mxu0
        %3220 = vmatprep.mubr.bf16.mxu0 %v2779
        %3221 = vmatmul.mubr.bf16.gmra.mrb[0].mxu0 %v2581
        %v3222 = vpop.f32.mrb[0].mxu0
        %v3223 = vadd.f32 %v3062, %v3222
        %v3224 = vpop.f32.mrb[0].mxu0
        %v3225 = vpop.f32.mrb[0].mxu0
        %v3226 = vadd.f32 %v3065, %v3225
        %v3227 = vpop.f32.mrb[0].mxu0
        %3228 = vmatprep.mubr.bf16.mxu0 %v2782
        %3229 = vmatmul.mubr.bf16.gmra.mrb[0].mxu0 %v2593
        %v3230 = vpop.f32.mrb[0].mxu0
        %v3231 = vadd.f32 %v3070, %v3230
        %v3232 = vpop.f32.mrb[0].mxu0
        %v3233 = vpop.f32.mrb[0].mxu0
        %v3234 = vadd.f32 %v3073, %v3233
        %v3235 = vpop.f32.mrb[0].mxu0
        %3236 = vmatprep.mubr.bf16.mxu0 %v2785
        %3237 = vmatmul.mubr.bf16.gmra.mrb[0].mxu0 %v2605
        %v3238 = vpop.f32.mrb[0].mxu0
        %v3239 = vadd.f32 %v3078, %v3238
        %v3240 = vpop.f32.mrb[0].mxu0
        %v3241 = vpop.f32.mrb[0].mxu0
        %v3242 = vadd.f32 %v3081, %v3241
        %v3243 = vpop.f32.mrb[0].mxu0
        %3244 = vmatprep.mubr.bf16.mxu0 %v2788
        %3245 = vmatmul.mubr.bf16.gmra.mrb[0].mxu0 %v2617
        %v3246 = vpop.f32.mrb[0].mxu0
        %v3247 = vadd.f32 %v3086, %v3246
        %v3248 = vpop.f32.mrb[0].mxu0
        %v3249 = vpop.f32.mrb[0].mxu0
        %v3250 = vadd.f32 %v3089, %v3249
        %v3251 = vpop.f32.mrb[0].mxu0
        %3252 = vmatprep.mubr.bf16.mxu0 %v2791
        %3253 = vmatmul.mubr.bf16.gmra.mrb[0].mxu0 %v2629
        %v3254 = vpop.f32.mrb[0].mxu0
        %v3255 = vadd.f32 %v3094, %v3254
        %v3256 = vpop.f32.mrb[0].mxu0
        %v3257 = vpop.f32.mrb[0].mxu0
        %v3258 = vadd.f32 %v3097, %v3257
        %v3259 = vpop.f32.mrb[0].mxu0
        %3260 = vmatprep.mubr.bf16.mxu0 %v2794
        %3261 = vmatmul.mubr.bf16.gmra.mrb[0].mxu0 %v2641
        %v3262 = vpop.f32.mrb[0].mxu0
        %v3263 = vadd.f32 %v3102, %v3262
        %v3264 = vpop.f32.mrb[0].mxu0
        %v3265 = vpop.f32.mrb[0].mxu0
        %v3266 = vadd.f32 %v3105, %v3265
        %v3267 = vpop.f32.mrb[0].mxu0
        %3268 = vmatprep.mubr.bf16.mxu0 %v2797
        %3269 = vmatmul.mubr.bf16.gmra.mrb[0].mxu0 %v2653
        %v3270 = vpop.f32.mrb[0].mxu0
        %v3271 = vadd.f32 %v3110, %v3270
        %v3272 = vpop.f32.mrb[0].mxu0
        %v3273 = vpop.f32.mrb[0].mxu0
        %v3274 = vadd.f32 %v3113, %v3273
        %v3275 = vpop.f32.mrb[0].mxu0
        %3276 = vmatprep.mubr.bf16.mxu0 %v2800
        %3277 = vmatmul.mubr.bf16.gmra.mrb[0].mxu0 %v2665
        %v3278 = vpop.f32.mrb[0].mxu0
        %v3279 = vadd.f32 %v3118, %v3278
        %v3280 = vpop.f32.mrb[0].mxu0
        %v3281 = vpop.f32.mrb[0].mxu0
        %v3282 = vadd.f32 %v3121, %v3281
        %v3283 = vpop.f32.mrb[0].mxu0
        %3284 = vmatprep.mubr.bf16.mxu0 %v2803
        %3285 = vmatmul.mubr.bf16.gmra.mrb[0].mxu0 %v2677
        %v3286 = vpop.f32.mrb[0].mxu0
        %v3287 = vadd.f32 %v3126, %v3286
        %v3288 = vpop.f32.mrb[0].mxu0
        %v3289 = vpop.f32.mrb[0].mxu0
        %v3290 = vadd.f32 %v3129, %v3289
        %v3291 = vpop.f32.mrb[0].mxu0
        %3292 = vmatprep.mubr.bf16.mxu0 %v2806
        %3293 = vmatmul.mubr.bf16.gmra.mrb[0].mxu0 %v2689
        %v3294 = vpop.f32.mrb[0].mxu0
        %v3295 = vadd.f32 %v3134, %v3294
        %v3296 = vpop.f32.mrb[0].mxu0
        %v3297 = vpop.f32.mrb[0].mxu0
        %v3298 = vadd.f32 %v3137, %v3297
        %v3299 = vpop.f32.mrb[0].mxu0
        %3300 = vmatprep.mubr.bf16.mxu0 %v2809
        %3301 = vmatmul.mubr.bf16.gmra.mrb[0].mxu0 %v2701
        %v3302 = vpop.f32.mrb[0].mxu0
        %v3303 = vadd.f32 %v3142, %v3302
        %v3304 = vpop.f32.mrb[0].mxu0
        %v3305 = vpop.f32.mrb[0].mxu0
        %v3306 = vadd.f32 %v3145, %v3305
        %v3307 = vpop.f32.mrb[0].mxu0
        %3308 = vmatprep.mubr.bf16.mxu0 %v2812
        %3309 = vmatmul.mubr.bf16.gmra.mrb[0].mxu0 %v2713
        %v3310 = vpop.f32.mrb[0].mxu0
        %v3311 = vadd.f32 %v3150, %v3310
        %v3312 = vpop.f32.mrb[0].mxu0
        %v3313 = vpop.f32.mrb[0].mxu0
        %v3314 = vadd.f32 %v3153, %v3313
        %v3315 = vpop.f32.mrb[0].mxu0
        %3316 = vmatprep.mubr.bf16.mxu0 %v2815
        %3317 = vmatmul.mubr.bf16.gmra.mrb[0].mxu0 %v2725
        %v3318 = vpop.f32.mrb[0].mxu0
        %v3319 = vadd.f32 %v3158, %v3318
        %v3320 = vpop.f32.mrb[0].mxu0
        %v3321 = vpop.f32.mrb[0].mxu0
        %v3322 = vadd.f32 %v3161, %v3321
        %v3323 = vpop.f32.mrb[0].mxu0
        %3324 = vmatprep.mubr.bf16.mxu0 %v2848
        %3325 = vmatmul.mubr.bf16.gmra.mrb[0].mxu0 %v2842
        %v3326 = vpop.f32.mrb[0].mxu0
        %v3327 = vadd.f32 %v3166, %v3326
        %v3328 = vpop.f32.mrb[0].mxu0
        %v3329 = vpop.f32.mrb[0].mxu0
        %v3330 = vadd.f32 %v3169, %v3329
        %v3331 = vpop.f32.mrb[0].mxu0
        %3332 = vdwg.mxu0
        %3333 = vmatprep.subr.bf16.mxu0 0
        %3334 = vmatpush1.bf16.msra.mxu0 %v1325
        %3335 = vmatprep.subr.bf16.mxu0 0
        %3336 = vmatpush1.bf16.msra.mxu0 %v1326
        %3337 = vmatprep.subr.bf16.mxu0 0
        %3338 = vmatpush1.bf16.msra.mxu0 %v1327
        %3339 = vmatprep.subr.bf16.mxu0 0
        %3340 = vmatpush1.bf16.msra.mxu0 %v1328
        %3341 = vmatprep.subr.bf16.mxu0 0
        %3342 = vmatpush1.bf16.msra.mxu0 %v1329
        %3343 = vmatprep.subr.bf16.mxu0 0
        %3344 = vmatpush1.bf16.msra.mxu0 %v1330
        %3345 = vmatprep.subr.bf16.mxu0 0
        %3346 = vmatpush1.bf16.msra.mxu0 %v1331
        %3347 = vmatprep.subr.bf16.mxu0 0
        %3348 = vmatpush1.bf16.msra.mxu0 %v1332
        %3349 = vmatprep.subr.bf16.mxu0 0
        %3350 = vmatpush1.bf16.msra.mxu0 %v1333
        %3351 = vmatprep.subr.bf16.mxu0 0
        %3352 = vmatpush1.bf16.msra.mxu0 %v1334
        %3353 = vmatprep.subr.bf16.mxu0 0
        %3354 = vmatpush1.bf16.msra.mxu0 %v1335
        %3355 = vmatprep.subr.bf16.mxu0 0
        %3356 = vmatpush1.bf16.msra.mxu0 %v1336
        %3357 = vmatprep.subr.bf16.mxu0 0
        %3358 = vmatpush1.bf16.msra.mxu0 %v1337
        %3359 = vmatprep.subr.bf16.mxu0 0
        %3360 = vmatpush1.bf16.msra.mxu0 %v1338
        %3361 = vmatprep.subr.bf16.mxu0 0
        %3362 = vmatpush1.bf16.msra.mxu0 %v1339
        %3363 = vmatprep.subr.bf16.mxu0 0
        %3364 = vmatpush1.bf16.msra.mxu0 %v1340
        %3365 = vmatprep.mubr.bf16.mxu0 %v2569
        %3366 = vmatmul.mubr.bf16.gmra.mrb[0].mxu0 %v2515
        %v3367 = vpop.f32.mrb[0].mxu0
        %v3368 = vadd.f32 %v3207, %v3367
        %v3369 = vpop.f32.mrb[0].mxu0
        %v3370 = vpop.f32.mrb[0].mxu0
        %v3371 = vadd.f32 %v3210, %v3370
        %v3372 = vpop.f32.mrb[0].mxu0
        %3373 = vmatprep.mubr.bf16.mxu0 %v2581
        %3374 = vmatmul.mubr.bf16.gmra.mrb[0].mxu0 %v2516
        %v3375 = vpop.f32.mrb[0].mxu0
        %v3376 = vadd.f32 %v3215, %v3375
        %v3377 = vpop.f32.mrb[0].mxu0
        %v3378 = vpop.f32.mrb[0].mxu0
        %v3379 = vadd.f32 %v3218, %v3378
        %v3380 = vpop.f32.mrb[0].mxu0
        %3381 = vmatprep.mubr.bf16.mxu0 %v2593
        %3382 = vmatmul.mubr.bf16.gmra.mrb[0].mxu0 %v2517
        %v3383 = vpop.f32.mrb[0].mxu0
        %v3384 = vadd.f32 %v3223, %v3383
        %v3385 = vpop.f32.mrb[0].mxu0
        %v3386 = vpop.f32.mrb[0].mxu0
        %v3387 = vadd.f32 %v3226, %v3386
        %v3388 = vpop.f32.mrb[0].mxu0
        %3389 = vmatprep.mubr.bf16.mxu0 %v2605
        %3390 = vmatmul.mubr.bf16.gmra.mrb[0].mxu0 %v2518
        %v3391 = vpop.f32.mrb[0].mxu0
        %v3392 = vadd.f32 %v3231, %v3391
        %v3393 = vpop.f32.mrb[0].mxu0
        %v3394 = vpop.f32.mrb[0].mxu0
        %v3395 = vadd.f32 %v3234, %v3394
        %v3396 = vpop.f32.mrb[0].mxu0
        %3397 = vmatprep.mubr.bf16.mxu0 %v2617
        %3398 = vmatmul.mubr.bf16.gmra.mrb[0].mxu0 %v2519
        %v3399 = vpop.f32.mrb[0].mxu0
        %v3400 = vadd.f32 %v3239, %v3399
        %v3401 = vpop.f32.mrb[0].mxu0
        %v3402 = vpop.f32.mrb[0].mxu0
        %v3403 = vadd.f32 %v3242, %v3402
        %v3404 = vpop.f32.mrb[0].mxu0
        %3405 = vmatprep.mubr.bf16.mxu0 %v2629
        %3406 = vmatmul.mubr.bf16.gmra.mrb[0].mxu0 %v2520
        %v3407 = vpop.f32.mrb[0].mxu0
        %v3408 = vadd.f32 %v3247, %v3407
        %v3409 = vpop.f32.mrb[0].mxu0
        %v3410 = vpop.f32.mrb[0].mxu0
        %v3411 = vadd.f32 %v3250, %v3410
        %v3412 = vpop.f32.mrb[0].mxu0
        %3413 = vmatprep.mubr.bf16.mxu0 %v2641
        %3414 = vmatmul.mubr.bf16.gmra.mrb[0].mxu0 %v2521
        %v3415 = vpop.f32.mrb[0].mxu0
        %v3416 = vadd.f32 %v3255, %v3415
        %v3417 = vpop.f32.mrb[0].mxu0
        %v3418 = vpop.f32.mrb[0].mxu0
        %v3419 = vadd.f32 %v3258, %v3418
        %v3420 = vpop.f32.mrb[0].mxu0
        %3421 = vmatprep.mubr.bf16.mxu0 %v2653
        %3422 = vmatmul.mubr.bf16.gmra.mrb[0].mxu0 %v2522
        %v3423 = vpop.f32.mrb[0].mxu0
        %v3424 = vadd.f32 %v3263, %v3423
        %v3425 = vpop.f32.mrb[0].mxu0
        %v3426 = vpop.f32.mrb[0].mxu0
        %v3427 = vadd.f32 %v3266, %v3426
        %v3428 = vpop.f32.mrb[0].mxu0
        %3429 = vmatprep.mubr.bf16.mxu0 %v2665
        %3430 = vmatmul.mubr.bf16.gmra.mrb[0].mxu0 %v2523
        %v3431 = vpop.f32.mrb[0].mxu0
        %v3432 = vadd.f32 %v3271, %v3431
        %v3433 = vpop.f32.mrb[0].mxu0
        %v3434 = vpop.f32.mrb[0].mxu0
        %v3435 = vadd.f32 %v3274, %v3434
        %v3436 = vpop.f32.mrb[0].mxu0
        %3437 = vmatprep.mubr.bf16.mxu0 %v2677
        %3438 = vmatmul.mubr.bf16.gmra.mrb[0].mxu0 %v2524
        %v3439 = vpop.f32.mrb[0].mxu0
        %v3440 = vadd.f32 %v3279, %v3439
        %v3441 = vpop.f32.mrb[0].mxu0
        %v3442 = vpop.f32.mrb[0].mxu0
        %v3443 = vadd.f32 %v3282, %v3442
        %v3444 = vpop.f32.mrb[0].mxu0
        %3445 = vmatprep.mubr.bf16.mxu0 %v2689
        %3446 = vmatmul.mubr.bf16.gmra.mrb[0].mxu0 %v2525
        %v3447 = vpop.f32.mrb[0].mxu0
        %v3448 = vadd.f32 %v3287, %v3447
        %v3449 = vpop.f32.mrb[0].mxu0
        %v3450 = vpop.f32.mrb[0].mxu0
        %v3451 = vadd.f32 %v3290, %v3450
        %v3452 = vpop.f32.mrb[0].mxu0
        %3453 = vmatprep.mubr.bf16.mxu0 %v2701
        %3454 = vmatmul.mubr.bf16.gmra.mrb[0].mxu0 %v2526
        %v3455 = vpop.f32.mrb[0].mxu0
        %v3456 = vadd.f32 %v3295, %v3455
        %v3457 = vpop.f32.mrb[0].mxu0
        %v3458 = vpop.f32.mrb[0].mxu0
        %v3459 = vadd.f32 %v3298, %v3458
        %v3460 = vpop.f32.mrb[0].mxu0
        %3461 = vmatprep.mubr.bf16.mxu0 %v2713
        %3462 = vmatmul.mubr.bf16.gmra.mrb[0].mxu0 %v2527
        %v3463 = vpop.f32.mrb[0].mxu0
        %v3464 = vadd.f32 %v3303, %v3463
        %v3465 = vpop.f32.mrb[0].mxu0
        %v3466 = vpop.f32.mrb[0].mxu0
        %v3467 = vadd.f32 %v3306, %v3466
        %v3468 = vpop.f32.mrb[0].mxu0
        %3469 = vmatprep.mubr.bf16.mxu0 %v2725
        %3470 = vmatmul.mubr.bf16.gmra.mrb[0].mxu0 %v2528
        %v3471 = vpop.f32.mrb[0].mxu0
        %v3472 = vadd.f32 %v3311, %v3471
        %v3473 = vpop.f32.mrb[0].mxu0
        %v3474 = vpop.f32.mrb[0].mxu0
        %v3475 = vadd.f32 %v3314, %v3474
        %v3476 = vpop.f32.mrb[0].mxu0
        %3477 = vmatprep.mubr.bf16.mxu0 %v2842
        %3478 = vmatmul.mubr.bf16.gmra.mrb[0].mxu0 %v2529
        %v3479 = vpop.f32.mrb[0].mxu0
        %v3480 = vadd.f32 %v3319, %v3479
        %v3481 = vpop.f32.mrb[0].mxu0
        %v3482 = vpop.f32.mrb[0].mxu0
        %v3483 = vadd.f32 %v3322, %v3482
        %v3484 = vpop.f32.mrb[0].mxu0
        %3485 = vmatprep.mubr.bf16.mxu0 %v525
        %3486 = vmatmul.mubr.bf16.gmra.mrb[0].mxu0 %v479
        %v3487 = vpop.f32.mrb[0].mxu0
        %v3488 = vadd.f32 %v3327, %v3487
        %v3489 = vpop.f32.mrb[0].mxu0
        %v3490 = vpop.f32.mrb[0].mxu0
        %v3491 = vadd.f32 %v3330, %v3490
        %v3492 = vpop.f32.mrb[0].mxu0
        %3493 = vdwg.mxu0
        %3494 = vmatprep.subr.bf16.mxu0 0
        %3495 = vmatpush1.bf16.msra.mxu0 %v1341
        %3496 = vmatprep.subr.bf16.mxu0 0
        %3497 = vmatpush1.bf16.msra.mxu0 %v1342
        %3498 = vmatprep.subr.bf16.mxu0 0
        %3499 = vmatpush1.bf16.msra.mxu0 %v1343
        %3500 = vmatprep.subr.bf16.mxu0 0
        %3501 = vmatpush1.bf16.msra.mxu0 %v1344
        %3502 = vmatprep.subr.bf16.mxu0 0
        %3503 = vmatpush1.bf16.msra.mxu0 %v1345
        %3504 = vmatprep.subr.bf16.mxu0 0
        %3505 = vmatpush1.bf16.msra.mxu0 %v1346
        %3506 = vmatprep.subr.bf16.mxu0 0
        %3507 = vmatpush1.bf16.msra.mxu0 %v1347
        %3508 = vmatprep.subr.bf16.mxu0 0
        %3509 = vmatpush1.bf16.msra.mxu0 %v1348
        %3510 = vmatprep.subr.bf16.mxu0 0
        %3511 = vmatpush1.bf16.msra.mxu0 0
        %3512 = vmatprep.subr.bf16.mxu0 0
        %3513 = vmatpush1.bf16.msra.mxu0 0
        %3514 = vmatprep.subr.bf16.mxu0 0
        %3515 = vmatpush1.bf16.msra.mxu0 0
        %3516 = vmatprep.subr.bf16.mxu0 0
        %3517 = vmatpush1.bf16.msra.mxu0 0
        %3518 = vmatprep.subr.bf16.mxu0 0
        %3519 = vmatpush1.bf16.msra.mxu0 0
        %3520 = vmatprep.subr.bf16.mxu0 0
        %3521 = vmatpush1.bf16.msra.mxu0 0
        %3522 = vmatprep.subr.bf16.mxu0 0
        %3523 = vmatpush1.bf16.msra.mxu0 0
        %3524 = vmatprep.subr.bf16.mxu0 0
        %3525 = vmatpush1.bf16.msra.mxu0 0
        %3526 = vmatprep.mubr.bf16.mxu0 0
        %3527 = vmatmul.mubr.bf16.gmra.mrb[0].mxu0 %v2776
        %v3528 = vpop.f32.mrb[0].mxu0
        %v3529 = vadd.f32 %v3368, %v3528
        %v3530 = vpop.f32.mrb[0].mxu0
        %v3531 = vpop.f32.mrb[0].mxu0
        %v3532 = vadd.f32 %v3371, %v3531
        %v3533 = vpop.f32.mrb[0].mxu0
        %3534 = vmatprep.mubr.bf16.mxu0 0
        %3535 = vmatmul.mubr.bf16.gmra.mrb[0].mxu0 %v2779
        %v3536 = vpop.f32.mrb[0].mxu0
        %v3537 = vadd.f32 %v3376, %v3536
        %v3538 = vpop.f32.mrb[0].mxu0
        %v3539 = vpop.f32.mrb[0].mxu0
        %v3540 = vadd.f32 %v3379, %v3539
        %v3541 = vpop.f32.mrb[0].mxu0
        %3542 = vmatprep.mubr.bf16.mxu0 0
        %3543 = vmatmul.mubr.bf16.gmra.mrb[0].mxu0 %v2782
        %v3544 = vpop.f32.mrb[0].mxu0
        %v3545 = vadd.f32 %v3384, %v3544
        %v3546 = vpop.f32.mrb[0].mxu0
        %v3547 = vpop.f32.mrb[0].mxu0
        %v3548 = vadd.f32 %v3387, %v3547
        %v3549 = vpop.f32.mrb[0].mxu0
        %3550 = vmatprep.mubr.bf16.mxu0 0
        %3551 = vmatmul.mubr.bf16.gmra.mrb[0].mxu0 %v2785
        %v3552 = vpop.f32.mrb[0].mxu0
        %v3553 = vadd.f32 %v3392, %v3552
        %v3554 = vpop.f32.mrb[0].mxu0
        %v3555 = vpop.f32.mrb[0].mxu0
        %v3556 = vadd.f32 %v3395, %v3555
        %v3557 = vpop.f32.mrb[0].mxu0
        %3558 = vmatprep.mubr.bf16.mxu0 0
        %3559 = vmatmul.mubr.bf16.gmra.mrb[0].mxu0 %v2788
        %v3560 = vpop.f32.mrb[0].mxu0
        %v3561 = vadd.f32 %v3400, %v3560
        %v3562 = vpop.f32.mrb[0].mxu0
        %v3563 = vpop.f32.mrb[0].mxu0
        %v3564 = vadd.f32 %v3403, %v3563
        %v3565 = vpop.f32.mrb[0].mxu0
        %3566 = vmatprep.mubr.bf16.mxu0 0
        %3567 = vmatmul.mubr.bf16.gmra.mrb[0].mxu0 %v2791
        %v3568 = vpop.f32.mrb[0].mxu0
        %v3569 = vadd.f32 %v3408, %v3568
        %v3570 = vpop.f32.mrb[0].mxu0
        %v3571 = vpop.f32.mrb[0].mxu0
        %v3572 = vadd.f32 %v3411, %v3571
        %v3573 = vpop.f32.mrb[0].mxu0
        %3574 = vmatprep.mubr.bf16.mxu0 0
        %3575 = vmatmul.mubr.bf16.gmra.mrb[0].mxu0 %v2794
        %v3576 = vpop.f32.mrb[0].mxu0
        %v3577 = vadd.f32 %v3416, %v3576
        %v3578 = vpop.f32.mrb[0].mxu0
        %v3579 = vpop.f32.mrb[0].mxu0
        %v3580 = vadd.f32 %v3419, %v3579
        %v3581 = vpop.f32.mrb[0].mxu0
        %3582 = vmatprep.mubr.bf16.mxu0 0
        %3583 = vmatmul.mubr.bf16.gmra.mrb[0].mxu0 %v2797
        %v3584 = vpop.f32.mrb[0].mxu0
        %v3585 = vadd.f32 %v3424, %v3584
        %v3586 = vpop.f32.mrb[0].mxu0
        %v3587 = vpop.f32.mrb[0].mxu0
        %v3588 = vadd.f32 %v3427, %v3587
        %v3589 = vpop.f32.mrb[0].mxu0
        %3590 = vmatprep.mubr.bf16.mxu0 0
        %3591 = vmatmul.mubr.bf16.gmra.mrb[0].mxu0 %v2800
        %v3592 = vpop.f32.mrb[0].mxu0
        %v3593 = vadd.f32 %v3432, %v3592
        %v3594 = vpop.f32.mrb[0].mxu0
        %v3595 = vpop.f32.mrb[0].mxu0
        %v3596 = vadd.f32 %v3435, %v3595
        %v3597 = vpop.f32.mrb[0].mxu0
        %3598 = vmatprep.mubr.bf16.mxu0 0
        %3599 = vmatmul.mubr.bf16.gmra.mrb[0].mxu0 %v2803
        %v3600 = vpop.f32.mrb[0].mxu0
        %v3601 = vadd.f32 %v3440, %v3600
        %v3602 = vpop.f32.mrb[0].mxu0
        %v3603 = vpop.f32.mrb[0].mxu0
        %v3604 = vadd.f32 %v3443, %v3603
        %v3605 = vpop.f32.mrb[0].mxu0
        %3606 = vmatprep.mubr.bf16.mxu0 0
        %3607 = vmatmul.mubr.bf16.gmra.mrb[0].mxu0 %v2806
        %v3608 = vpop.f32.mrb[0].mxu0
        %v3609 = vadd.f32 %v3448, %v3608
        %v3610 = vpop.f32.mrb[0].mxu0
        %v3611 = vpop.f32.mrb[0].mxu0
        %v3612 = vadd.f32 %v3451, %v3611
        %v3613 = vpop.f32.mrb[0].mxu0
        %3614 = vmatprep.mubr.bf16.mxu0 0
        %3615 = vmatmul.mubr.bf16.gmra.mrb[0].mxu0 %v2809
        %v3616 = vpop.f32.mrb[0].mxu0
        %v3617 = vadd.f32 %v3456, %v3616
        %v3618 = vpop.f32.mrb[0].mxu0
        %v3619 = vpop.f32.mrb[0].mxu0
        %v3620 = vadd.f32 %v3459, %v3619
        %v3621 = vpop.f32.mrb[0].mxu0
        %3622 = vmatprep.mubr.bf16.mxu0 0
        %3623 = vmatmul.mubr.bf16.gmra.mrb[0].mxu0 %v2812
        %v3624 = vpop.f32.mrb[0].mxu0
        %v3625 = vadd.f32 %v3464, %v3624
        %v3626 = vpop.f32.mrb[0].mxu0
        %v3627 = vpop.f32.mrb[0].mxu0
        %v3628 = vadd.f32 %v3467, %v3627
        %v3629 = vpop.f32.mrb[0].mxu0
        %3630 = vmatprep.mubr.bf16.mxu0 0
        %3631 = vmatmul.mubr.bf16.gmra.mrb[0].mxu0 %v2815
        %v3632 = vpop.f32.mrb[0].mxu0
        %v3633 = vadd.f32 %v3472, %v3632
        %v3634 = vpop.f32.mrb[0].mxu0
        %v3635 = vpop.f32.mrb[0].mxu0
        %v3636 = vadd.f32 %v3475, %v3635
        %v3637 = vpop.f32.mrb[0].mxu0
        %3638 = vmatprep.mubr.bf16.mxu0 0
        %3639 = vmatmul.mubr.bf16.gmra.mrb[0].mxu0 %v2848
        %v3640 = vpop.f32.mrb[0].mxu0
        %v3641 = vadd.f32 %v3480, %v3640
        %v3642 = vpop.f32.mrb[0].mxu0
        %v3643 = vpop.f32.mrb[0].mxu0
        %v3644 = vadd.f32 %v3483, %v3643
        %v3645 = vpop.f32.mrb[0].mxu0
        %3646 = vmatprep.mubr.bf16.mxu0 0
        %3647 = vmatmul.mubr.bf16.gmra.mrb[0].mxu0 %v757
        %v3648 = vpop.f32.mrb[0].mxu0
        %v3649 = vadd.f32 %v3488, %v3648
        %v3650 = vpop.f32.mrb[0].mxu0
        %v3651 = vpop.f32.mrb[0].mxu0
        %v3652 = vadd.f32 %v3491, %v3651
        %v3653 = vpop.f32.mrb[0].mxu0
        %3654 = vdwg.mxu0
        %v3655 = vmax.f32 %v3529, 0.0
        %v3656 = vmax.f32 %v3532, 0.0
        %v3657 = vmax.f32 %v3537, 0.0
        %v3658 = vmax.f32 %v3540, 0.0
        %v3659 = vmax.f32 %v3545, 0.0
        %v3660 = vmax.f32 %v3548, 0.0
        %v3661 = vmax.f32 %v3553, 0.0
        %v3662 = vmax.f32 %v3556, 0.0
        %v3663 = vmax.f32 %v3561, 0.0
        %v3664 = vmax.f32 %v3564, 0.0
        %v3665 = vmax.f32 %v3569, 0.0
        %v3666 = vmax.f32 %v3572, 0.0
        %v3667 = vmax.f32 %v3577, 0.0
        %v3668 = vmax.f32 %v3580, 0.0
        %v3669 = vmax.f32 %v3585, 0.0
        %v3670 = vmax.f32 %v3588, 0.0
        %v3671 = vmax.f32 %v3593, 0.0
        %v3672 = vmax.f32 %v3596, 0.0
        %v3673 = vmax.f32 %v3601, 0.0
        %v3674 = vmax.f32 %v3604, 0.0
        %v3675 = vmax.f32 %v3609, 0.0
        %v3676 = vmax.f32 %v3612, 0.0
        %v3677 = vmax.f32 %v3617, 0.0
        %v3678 = vmax.f32 %v3620, 0.0
        %v3679 = vmax.f32 %v3625, 0.0
        %v3680 = vmax.f32 %v3628, 0.0
        %v3681 = vmax.f32 %v3633, 0.0
        %v3682 = vmax.f32 %v3636, 0.0
        %v3683 = vmax.f32 %v3641, 0.0
        %v3684 = vmax.f32 %v3644, 0.0
        %v3685 = vmax.f32 %v3649, 0.0
        %v3686 = vmax.f32 %v3652, 0.0
        %s3687 = sld [smem:[#allocation2]]
        %v3688 = vsub.f32 %v2226, %v3655
        %v3689 = vsub.f32 %v2227, %v3656
        %v3690 = vsub.f32 %v2228, %v3657
        %v3691 = vsub.f32 %v2229, %v3658
        %v3692 = vsub.f32 %v2230, %v3659
        %v3693 = vsub.f32 %v2231, %v3660
        %v3694 = vsub.f32 %v2232, %v3661
        %v3695 = vsub.f32 %v2233, %v3662
        %v3696 = vsub.f32 %v2234, %v3663
        %v3697 = vsub.f32 %v2235, %v3664
        %v3698 = vsub.f32 %v2236, %v3665
        %v3699 = vsub.f32 %v2237, %v3666
        %v3700 = vsub.f32 %v2238, %v3667
        %v3701 = vsub.f32 %v2239, %v3668
        %v3702 = vsub.f32 %v2240, %v3669
        %v3703 = vsub.f32 %v2241, %v3670
        %v3704 = vsub.f32 %v2242, %v3671
        %v3705 = vsub.f32 %v2243, %v3672
        %v3706 = vsub.f32 %v2244, %v3673
        %v3707 = vsub.f32 %v2245, %v3674
        %v3708 = vsub.f32 %v2246, %v3675
        %v3709 = vsub.f32 %v2247, %v3676
        %v3710 = vsub.f32 %v2248, %v3677
        %v3711 = vsub.f32 %v2249, %v3678
        %v3712 = vsub.f32 %v2250, %v3679
        %v3713 = vsub.f32 %v2251, %v3680
        %v3714 = vsub.f32 %v2252, %v3681
        %v3715 = vsub.f32 %v2253, %v3682
        %v3716 = vsub.f32 %v2254, %v3683
        %v3717 = vsub.f32 %v2255, %v3684
        %v3718 = vsub.f32 %v2256, %v3685
        %v3719 = vsub.f32 %v2257, %v3686
        %v3720 = vand.u32 2147483647, %v3688
        %v3721 = vand.u32 2147483647, %v3689
        %v3722 = vand.u32 2147483647, %v3690
        %v3723 = vand.u32 2147483647, %v3691
        %v3724 = vand.u32 2147483647, %v3692
        %v3725 = vand.u32 2147483647, %v3693
        %v3726 = vand.u32 2147483647, %v3694
        %v3727 = vand.u32 2147483647, %v3695
        %v3728 = vand.u32 2147483647, %v3696
        %v3729 = vand.u32 2147483647, %v3697
        %v3730 = vand.u32 2147483647, %v3698
        %v3731 = vand.u32 2147483647, %v3699
        %v3732 = vand.u32 2147483647, %v3700
        %v3733 = vand.u32 2147483647, %v3701
        %v3734 = vand.u32 2147483647, %v3702
        %v3735 = vand.u32 2147483647, %v3703
        %v3736 = vand.u32 2147483647, %v3704
        %v3737 = vand.u32 2147483647, %v3705
        %v3738 = vand.u32 2147483647, %v3706
        %v3739 = vand.u32 2147483647, %v3707
        %v3740 = vand.u32 2147483647, %v3708
        %v3741 = vand.u32 2147483647, %v3709
        %v3742 = vand.u32 2147483647, %v3710
        %v3743 = vand.u32 2147483647, %v3711
        %v3744 = vand.u32 2147483647, %v3712
        %v3745 = vand.u32 2147483647, %v3713
        %v3746 = vand.u32 2147483647, %v3714
        %v3747 = vand.u32 2147483647, %v3715
        %v3748 = vand.u32 2147483647, %v3716
        %v3749 = vand.u32 2147483647, %v3717
        %v3750 = vand.u32 2147483647, %v3718
        %v3751 = vand.u32 2147483647, %v3719
        %v3752 = vadd.f32 %v3720, %v3721
        %v3753 = vadd.f32 %v3752, %v3722
        %v3754 = vadd.f32 %v3753, %v3723
        %v3755 = vadd.f32 %v3754, %v3724
        %v3756 = vadd.f32 %v3755, %v3725
        %v3757 = vadd.f32 %v3756, %v3726
        %v3758 = vadd.f32 %v3757, %v3727
        %v3759 = vadd.f32 %v3758, %v3728
        %v3760 = vadd.f32 %v3759, %v3729
        %v3761 = vadd.f32 %v3760, %v3730
        %v3762 = vadd.f32 %v3761, %v3731
        %v3763 = vadd.f32 %v3762, %v3732
        %v3764 = vadd.f32 %v3763, %v3733
        %v3765 = vadd.f32 %v3764, %v3734
        %v3766 = vadd.f32 %v3765, %v3735
        %v3767 = vadd.f32 %v3766, %v3736
        %v3768 = vadd.f32 %v3767, %v3737
        %v3769 = vadd.f32 %v3768, %v3738
        %v3770 = vadd.f32 %v3769, %v3739
        %v3771 = vadd.f32 %v3770, %v3740
        %v3772 = vadd.f32 %v3771, %v3741
        %v3773 = vadd.f32 %v3772, %v3742
        %v3774 = vadd.f32 %v3773, %v3743
        %v3775 = vadd.f32 %v3774, %v3744
        %v3776 = vadd.f32 %v3775, %v3745
        %v3777 = vadd.f32 %v3776, %v3746
        %v3778 = vadd.f32 %v3777, %v3747
        %v3779 = vadd.f32 %v3778, %v3748
        %v3780 = vadd.f32 %v3779, %v3749
        %v3781 = vadd.f32 %v3780, %v3750
        %v3782 = vadd.f32 %v3781, %v3751
        %3783 = vadd.xlane.f32.xlu0 %v3782
        %v3784 = vpop.xlane.xlu0 %3783
        %v3785 = vrot.slane %v3784, 4
        %v3786 = vadd.f32 %v3784, %v3785
        %v3787 = vrot.slane %v3786, 2
        %v3788 = vadd.f32 %v3786, %v3787
        %v3789 = vrot.slane %v3788, 1
        %v3790 = vadd.f32 %v3788, %v3789
        %s3791 = vtos %v3790
        %s3792 = sadd.f32 %s3687, %s3791
        %s3793 = scalar_lea.smem [#allocation2], 0
        %3794 = sst [smem:[%s3793]] %s3792
        // Predicated region
        $region41: #{anime_gan_content_loss.3} parent=35 // pred_check
          %p3795 = pneg %p123
        $region42: #{anime_gan_content_loss.3} parent=35 // pred_check_branch
          %3797 = sbr.rel (%p3795) target = $region44
        $region43: #{anime_gan_content_loss.3} parent=35 // pred_region
          %s3799 = ssub.s32 16, 16
          %3800 = vsyncadd [#allocation3], %s3799
          %3803 = dma.smem_to_hbm [#allocation2], 16, %s4, [#allocation3]
        $region44: #{anime_gan_content_loss.3} parent=35 // pred_fallthru
          _
        // Predicated region
        $region45: #{anime_gan_content_loss.3} parent=35 // pred_check
          %p3804 = pneg %p123
        $region46: #{anime_gan_content_loss.3} parent=35 // pred_check_branch
          %3806 = sbr.rel (%p3804) target = $region48
        $region47: #{anime_gan_content_loss.3} parent=35 // pred_region
          %3807 = dma.done [#allocation3], 16
        $region48: #{anime_gan_content_loss.3} parent=35 // pred_fallthru
          _
        %3808 = sfence
      $region36: #{anime_gan_content_loss.3} parent=5 // pred_fallthru
        _
      %p3809 = scmp.le.s32.totalorder 2, %s11
      // Predicated region
      $region49: #{anime_gan_content_loss.3} parent=5 // pred_check
        %p3810 = pneg %p3809
      $region50: #{anime_gan_content_loss.3} parent=5 // pred_check_branch
        %3812 = sbr.rel (%p3810) target = $region52
      $region51: #{anime_gan_content_loss.3} parent=5 // pred_region
        %s3813 = ssub.s32 %s11, 2
      $region52: #{anime_gan_content_loss.3} parent=5 // pred_fallthru
        _
    $region6: #{anime_gan_content_loss.3} parent=1 // loop_footer
      %s15 = sadd.s32 1, %s11
    $region7: #{anime_gan_content_loss.3} parent=1 // loop_footer_branch
      %10 = sbr.rel target = $region3
    $region8: #{anime_gan_content_loss.3} parent=1 // loop_exit
      _
    %3814 = vsyncpa [#allocation3], 1
    %s3815 = scalar_lea.sflag [#allocation3], 1
    %3816 = vsyncpa %s3815, 1

</llo_original>
